<compile_context>
chip_gen: v5e
topology: v5e:2x2
jax: 0.10.0
libtpu: 0.0.40
codegen_flags: <defaults>
</compile_context>

<pallas_src>
import functools

import jax
import jax.numpy as jnp
from jax.experimental import pallas as pl
from jax.experimental.pallas import tpu as pltpu  # noqa: F401  (TPU tuning hooks)

# ----------------------------- configuration --------------------------------
HIDDEN     = 32          # bert.config.hidden_size (tiny synthetic)
NUM_HEADS  = 4
HEAD_DIM   = HIDDEN // NUM_HEADS
INTER      = 64
NUM_LAYERS = 2
VOCAB      = 100
MAX_POS    = 16
TYPE_VOCAB = 2

BATCH    = 2             # bags
MAX_SENT = 4             # max sentences per bag
SEQ_LEN  = 8             # tokens per sentence (<= MAX_POS)

NEG_INF = -1.0e9         # python float only — never capture jnp arrays in kernels

assert HIDDEN % NUM_HEADS == 0


# --------------------------- in-kernel helpers -------------------------------
def _layer_norm(x, g, b, eps=1e-12):
    m = jnp.mean(x, axis=-1, keepdims=True)
    v = jnp.mean(jnp.square(x - m), axis=-1, keepdims=True)
    return (x - m) * jax.lax.rsqrt(v + eps) * g + b


def _gelu(x):
    # tanh approximation (EUP-friendly), literals only.
    c = 0.7978845608028654
    return 0.5 * x * (1.0 + jnp.tanh(c * (x + 0.044715 * x * x * x)))


# ------------------------------ fused kernel ---------------------------------
def _fused_forward_kernel(
    B, S, L,                                     # static (bound via partial)
    emb_ref, amask_ref, bagmask_ref,             # activations / masks
    embg_ref, embb_ref,                          # embedding LayerNorm
    wqkv_ref, bqkv_ref, wo_ref, bo_ref,          # per-layer attention params
    ln1g_ref, ln1b_ref,
    wi_ref, bi_ref, wf_ref, bf_ref,              # per-layer FFN params
    ln2g_ref, ln2b_ref,
    poolw_ref, poolb_ref,                        # pooler
    attw_ref, attb_ref, query_ref,               # bag-level selective attention
    out_ref,                                     # [B, H] bag representation
):
    f32 = jnp.float32
    bf16 = jnp.bfloat16
    n_sent = B * S
    tokens = n_sent * L
    num_layers = wqkv_ref.shape[0]
    scale = 1.0 / float(HEAD_DIM) ** 0.5

    # embedding LayerNorm (tokens stay [tokens, H]: sublane=token, lane=hidden)
    h = _layer_norm(emb_ref[...], embg_ref[...], embb_ref[...])          # [T, H] f32
    amask_b = amask_ref[...][:, None, :]                                 # [N, 1, L] additive

    for lyr in range(num_layers):
        # -------- fused QKV projection: one lane-dense [T, 3H] MXU call ------
        qkv = jnp.dot(h.astype(bf16), wqkv_ref[lyr],
                      preferred_element_type=f32) + bqkv_ref[lyr]        # [T, 3H]
        q = qkv[:, 0 * HIDDEN:1 * HIDDEN].reshape(n_sent, L, HIDDEN)
        k = qkv[:, 1 * HIDDEN:2 * HIDDEN].reshape(n_sent, L, HIDDEN)
        v = qkv[:, 2 * HIDDEN:3 * HIDDEN].reshape(n_sent, L, HIDDEN)

        # -------- multi-head self-attention, all sentences batched -----------
        ctx_heads = []
        for hd in range(NUM_HEADS):
            lo = hd * HEAD_DIM
            qh = q[:, :, lo:lo + HEAD_DIM]                               # [N, L, DH]
            kh = k[:, :, lo:lo + HEAD_DIM]
            vh = v[:, :, lo:lo + HEAD_DIM]
            s = jnp.einsum('nqd,nkd->nqk', qh, kh,
                           preferred_element_type=f32) * scale           # [N, L, L]
            s = s + amask_b                                              # additive mask
            s = s - jnp.max(s, axis=-1, keepdims=True)
            e = jnp.exp(s)
            p = e / jnp.sum(e, axis=-1, keepdims=True)
            ctx_heads.append(jnp.einsum('nqk,nkd->nqd', p, vh,
                                        preferred_element_type=f32))
        ctx = jnp.concatenate(ctx_heads, axis=-1).reshape(tokens, HIDDEN)

        attn_out = jnp.dot(ctx.astype(bf16), wo_ref[lyr],
                           preferred_element_type=f32) + bo_ref[lyr]
        h = _layer_norm(h + attn_out, ln1g_ref[lyr], ln1b_ref[lyr])

        # -------- FFN ---------------------------------------------------------
        inter = jnp.dot(h.astype(bf16), wi_ref[lyr],
                        preferred_element_type=f32) + bi_ref[lyr]
        inter = _gelu(inter)
        ffn = jnp.dot(inter.astype(bf16), wf_ref[lyr],
                      preferred_element_type=f32) + bf_ref[lyr]
        h = _layer_norm(h + ffn, ln2g_ref[lyr], ln2b_ref[lyr])

    # -------- BERT pooler on the [CLS] token of every sentence ---------------
    h3 = h.reshape(n_sent, L, HIDDEN)
    cls = h3[:, 0:1, :].reshape(n_sent, HIDDEN)                          # [N, H]
    pooled = jnp.tanh(jnp.dot(cls.astype(bf16), poolw_ref[...],
                              preferred_element_type=f32) + poolb_ref[...])

    # -------- bag-level selective attention ----------------------------------
    att_in = jnp.dot(pooled.astype(bf16), attw_ref[...],
                     preferred_element_type=f32) + attb_ref[...]         # [N, H]
    att_in3 = att_in.reshape(B, S, HIDDEN)
    rep3 = pooled.reshape(B, S, HIDDEN)
    score = jnp.sum(att_in3 * query_ref[...][None, :, :],
                    axis=-1, keepdims=True)                              # [B, S, 1]
    score = score + bagmask_ref[...]                                     # additive bag mask
    score = score - jnp.max(score, axis=1, keepdims=True)
    e = jnp.exp(score)
    wgt = e / jnp.sum(e, axis=1, keepdims=True)                          # [B, S, 1]
    out_ref[...] = jnp.sum(wgt * rep3, axis=1).astype(out_ref.dtype)     # [B, H]


# --------------------- ChineseBagBertEncoder.forward -------------------------
def chinese_bag_bert_encoder(params, input_ids, attention_mask, sentence_count):
    """input_ids / attention_mask: [B, S, L]; sentence_count: [B] -> bag_repr [B, H]."""
    B, S, L = input_ids.shape
    flat_ids = input_ids.reshape(B * S, L)
    flat_mask = attention_mask.reshape(B * S, L).astype(jnp.float32)

    # Embedding gather stays in plain JAX (glue); everything else is one kernel.
    tok = jnp.take(params['word_emb'], flat_ids, axis=0)                 # (N, L, H)
    pos = params['pos_emb'][:L][None, :, :]
    typ = params['type_emb'][0][None, None, :]                           # token_type always 0
    emb = (tok + pos + typ).reshape(B * S * L, HIDDEN)

    # additive self-attention mask: 0 where valid, -1e9 where padded
    amask = (1.0 - flat_mask) * NEG_INF                                  # (N, L)

    # additive bag mask from sentence_count (vectorized form of the python loop)
    bag_valid = jnp.arange(S)[None, :] < sentence_count[:, None]
    bagmask = jnp.where(bag_valid, 0.0, NEG_INF).astype(jnp.float32)[:, :, None]  # (B, S, 1)

    kernel = functools.partial(_fused_forward_kernel, B, S, L)
    return pl.pallas_call(
        kernel,
        out_shape=jax.ShapeDtypeStruct((B, HIDDEN), jnp.float32),
    )(emb, amask, bagmask,
      params['emb_ln_g'], params['emb_ln_b'],
      params['wqkv'], params['bqkv'], params['wo'], params['bo'],
      params['ln1_g'], params['ln1_b'],
      params['wi'], params['bi'], params['wf'], params['bf'],
      params['ln2_g'], params['ln2_b'],
      params['pool_w'], params['pool_b'],
      params['att_w'], params['att_b'], params['query'])


# ----------------------------- parameter init --------------------------------
def init_params(key):
    keys = iter(jax.random.split(key, 64))
    nk = lambda: next(keys)
    nrm = lambda k, shape, s=0.02: s * jax.random.normal(k, shape, jnp.float32)
    bf16 = jnp.bfloat16

    wqkv, bqkv, wo, bo, ln1g, ln1b = [], [], [], [], [], []
    wi, bi, wf, bf_, ln2g, ln2b = [], [], [], [], [], []
    for _ in range(NUM_LAYERS):
        wqkv.append(jnp.concatenate([nrm(nk(), (HIDDEN, HIDDEN)) for _ in range(3)],
                                    axis=1))                              # [H, 3H]
        bqkv.append(jnp.zeros((1, 3 * HIDDEN), jnp.float32))
        wo.append(nrm(nk(), (HIDDEN, HIDDEN)))
        bo.append(jnp.zeros((1, HIDDEN), jnp.float32))
        ln1g.append(jnp.ones((1, HIDDEN), jnp.float32))
        ln1b.append(jnp.zeros((1, HIDDEN), jnp.float32))
        wi.append(nrm(nk(), (HIDDEN, INTER)))
        bi.append(jnp.zeros((1, INTER), jnp.float32))
        wf.append(nrm(nk(), (INTER, HIDDEN)))
        bf_.append(jnp.zeros((1, HIDDEN), jnp.float32))
        ln2g.append(jnp.ones((1, HIDDEN), jnp.float32))
        ln2b.append(jnp.zeros((1, HIDDEN), jnp.float32))

    stack = lambda xs: jnp.stack(xs, axis=0)
    return dict(
        word_emb=nrm(nk(), (VOCAB, HIDDEN)),
        pos_emb=nrm(nk(), (MAX_POS, HIDDEN)),
        type_emb=nrm(nk(), (TYPE_VOCAB, HIDDEN)),
        emb_ln_g=jnp.ones((1, HIDDEN), jnp.float32),
        emb_ln_b=jnp.zeros((1, HIDDEN), jnp.float32),
        # matmul weights stored bf16 (MXU operands); accumulation stays f32
        wqkv=stack(wqkv).astype(bf16), bqkv=stack(bqkv),
        wo=stack(wo).astype(bf16),     bo=stack(bo),
        ln1_g=stack(ln1g), ln1_b=stack(ln1b),
        wi=stack(wi).astype(bf16),     bi=stack(bi),
        wf=stack(wf).astype(bf16),     bf=stack(bf_),
        ln2_g=stack(ln2g), ln2_b=stack(ln2b),
        pool_w=nrm(nk(), (HIDDEN, HIDDEN)).astype(bf16),
        pool_b=jnp.zeros((1, HIDDEN), jnp.float32),
        # module-level params: self.attention (Linear) and self.query (randn)
        att_w=nrm(nk(), (HIDDEN, HIDDEN)).astype(bf16),
        att_b=jnp.zeros((1, HIDDEN), jnp.float32),
        query=jax.random.normal(nk(), (1, HIDDEN), jnp.float32),
    )


# ----------------------------------- main -------------------------------------
if __name__ == "__main__":
    key = jax.random.PRNGKey(0)
    pkey, ikey, lkey = jax.random.split(key, 3)

    params = init_params(pkey)

    input_ids = jax.random.randint(ikey, (BATCH, MAX_SENT, SEQ_LEN), 0, VOCAB,
                                   dtype=jnp.int32)
    lens = jax.random.randint(lkey, (BATCH, MAX_SENT), 1, SEQ_LEN + 1,
                              dtype=jnp.int32)
    attention_mask = (jnp.arange(SEQ_LEN)[None, None, :] < lens[:, :, None]
                      ).astype(jnp.float32)
    sentence_count = jnp.array([3, 2], dtype=jnp.int32)

    fwd = jax.jit(functools.partial(chinese_bag_bert_encoder, params))
    bag_repr = jax.block_until_ready(fwd(input_ids, attention_mask, sentence_count))

    assert bag_repr.shape == (BATCH, HIDDEN), bag_repr.shape
    assert bool(jnp.all(jnp.isfinite(bag_repr)))
    print("KERNEL_OK")
</pallas_src>

<mosaic_0001>
module attributes {stable_mosaic.version = 11 : i64} {
  func.func @_fused_forward_kernel(%arg0: memref<64x32xf32, #tpu.memory_space<vmem>>, %arg1: memref<8x8xf32, #tpu.memory_space<vmem>>, %arg2: memref<2x4x1xf32, #tpu.memory_space<vmem>>, %arg3: memref<1x32xf32, #tpu.memory_space<vmem>>, %arg4: memref<1x32xf32, #tpu.memory_space<vmem>>, %arg5: memref<2x32x96xbf16, #tpu.memory_space<vmem>>, %arg6: memref<2x1x96xf32, #tpu.memory_space<vmem>>, %arg7: memref<2x32x32xbf16, #tpu.memory_space<vmem>>, %arg8: memref<2x1x32xf32, #tpu.memory_space<vmem>>, %arg9: memref<2x1x32xf32, #tpu.memory_space<vmem>>, %arg10: memref<2x1x32xf32, #tpu.memory_space<vmem>>, %arg11: memref<2x32x64xbf16, #tpu.memory_space<vmem>>, %arg12: memref<2x1x64xf32, #tpu.memory_space<vmem>>, %arg13: memref<2x64x32xbf16, #tpu.memory_space<vmem>>, %arg14: memref<2x1x32xf32, #tpu.memory_space<vmem>>, %arg15: memref<2x1x32xf32, #tpu.memory_space<vmem>>, %arg16: memref<2x1x32xf32, #tpu.memory_space<vmem>>, %arg17: memref<32x32xbf16, #tpu.memory_space<vmem>>, %arg18: memref<1x32xf32, #tpu.memory_space<vmem>>, %arg19: memref<32x32xbf16, #tpu.memory_space<vmem>>, %arg20: memref<1x32xf32, #tpu.memory_space<vmem>>, %arg21: memref<1x32xf32, #tpu.memory_space<vmem>>, %arg22: memref<2x32xf32, #tpu.memory_space<vmem>>) attributes {dimension_semantics = [], scalar_prefetch = 0 : i64, scratch_operands = 0 : i64, tpu.core_type = #tpu.core_type<tc>} {
    %c0 = arith.constant 0 : index
    %c0_0 = arith.constant 0 : index
    %0 = vector.load %arg0[%c0, %c0_0] : memref<64x32xf32, #tpu.memory_space<vmem>>, vector<64x32xf32>
    %c0_1 = arith.constant 0 : index
    %c0_2 = arith.constant 0 : index
    %1 = vector.load %arg3[%c0_1, %c0_2] : memref<1x32xf32, #tpu.memory_space<vmem>>, vector<1x32xf32>
    %c0_3 = arith.constant 0 : index
    %c0_4 = arith.constant 0 : index
    %2 = vector.load %arg4[%c0_3, %c0_4] : memref<1x32xf32, #tpu.memory_space<vmem>>, vector<1x32xf32>
    %cst = arith.constant dense<0.000000e+00> : vector<64xf32>
    %3 = vector.multi_reduction <add>, %0, %cst [1] : vector<64x32xf32> to vector<64xf32>
    %4 = vector.shape_cast %3 : vector<64xf32> to vector<64x1xf32>
    %cst_5 = arith.constant 3.200000e+01 : f32
    %5 = vector.broadcast %cst_5 : f32 to vector<64x1xf32>
    %6 = arith.divf %4, %5 : vector<64x1xf32>
    %7 = vector.broadcast %6 : vector<64x1xf32> to vector<64x32xf32>
    %8 = arith.subf %0, %7 : vector<64x32xf32>
    %9 = arith.mulf %8, %8 : vector<64x32xf32>
    %cst_6 = arith.constant dense<0.000000e+00> : vector<64xf32>
    %10 = vector.multi_reduction <add>, %9, %cst_6 [1] : vector<64x32xf32> to vector<64xf32>
    %11 = vector.shape_cast %10 : vector<64xf32> to vector<64x1xf32>
    %cst_7 = arith.constant 3.200000e+01 : f32
    %12 = vector.broadcast %cst_7 : f32 to vector<64x1xf32>
    %13 = arith.divf %11, %12 : vector<64x1xf32>
    %14 = vector.broadcast %6 : vector<64x1xf32> to vector<64x32xf32>
    %15 = arith.subf %0, %14 : vector<64x32xf32>
    %cst_8 = arith.constant 9.99999996E-13 : f32
    %16 = vector.broadcast %cst_8 : f32 to vector<64x1xf32>
    %17 = arith.addf %13, %16 : vector<64x1xf32>
    %18 = math.rsqrt %17 : vector<64x1xf32>
    %19 = vector.broadcast %18 : vector<64x1xf32> to vector<64x32xf32>
    %20 = arith.mulf %15, %19 : vector<64x32xf32>
    %21 = vector.broadcast %1 : vector<1x32xf32> to vector<64x32xf32>
    %22 = arith.mulf %20, %21 : vector<64x32xf32>
    %23 = vector.broadcast %2 : vector<1x32xf32> to vector<64x32xf32>
    %24 = arith.addf %22, %23 : vector<64x32xf32>
    %c0_9 = arith.constant 0 : index
    %c0_10 = arith.constant 0 : index
    %25 = vector.load %arg1[%c0_9, %c0_10] : memref<8x8xf32, #tpu.memory_space<vmem>>, vector<8x8xf32>
    %26 = vector.shape_cast %25 : vector<8x8xf32> to vector<8x1x8xf32>
    %27 = arith.truncf %24 : vector<64x32xf32> to vector<64x32xbf16>
    %c0_11 = arith.constant 0 : index
    %c0_12 = arith.constant 0 : index
    %c0_13 = arith.constant 0 : index
    %28 = vector.load %arg5[%c0_11, %c0_12, %c0_13] : memref<2x32x96xbf16, #tpu.memory_space<vmem>>, vector<1x32x96xbf16>
    %29 = vector.shape_cast %28 : vector<1x32x96xbf16> to vector<32x96xbf16>
    %cst_14 = arith.constant dense<0.000000e+00> : vector<64x96xf32>
    %30 = tpu.matmul %27, %29, %cst_14 {dimension_numbers = #tpu.dot_dimension_numbers<[1], [0], [0], [1], [0, 0, 1, 1], [], []>} : vector<64x32xbf16>, vector<32x96xbf16>, vector<64x96xf32> -> vector<64x96xf32>
    %c0_15 = arith.constant 0 : index
    %c0_16 = arith.constant 0 : index
    %c0_17 = arith.constant 0 : index
    %31 = vector.load %arg6[%c0_15, %c0_16, %c0_17] : memref<2x1x96xf32, #tpu.memory_space<vmem>>, vector<1x1x96xf32>
    %32 = vector.shape_cast %31 : vector<1x1x96xf32> to vector<1x96xf32>
    %33 = vector.broadcast %32 : vector<1x96xf32> to vector<64x96xf32>
    %34 = arith.addf %30, %33 : vector<64x96xf32>
    %35 = vector.extract_strided_slice %34 {offsets = [0, 0], sizes = [64, 32], strides = [1, 1]} : vector<64x96xf32> to vector<64x32xf32>
    %36 = vector.shape_cast %35 : vector<64x32xf32> to vector<8x8x32xf32>
    %37 = vector.extract_strided_slice %34 {offsets = [0, 32], sizes = [64, 32], strides = [1, 1]} : vector<64x96xf32> to vector<64x32xf32>
    %38 = vector.shape_cast %37 : vector<64x32xf32> to vector<8x8x32xf32>
    %39 = vector.extract_strided_slice %34 {offsets = [0, 64], sizes = [64, 32], strides = [1, 1]} : vector<64x96xf32> to vector<64x32xf32>
    %40 = vector.shape_cast %39 : vector<64x32xf32> to vector<8x8x32xf32>
    %41 = vector.extract_strided_slice %36 {offsets = [0, 0, 0], sizes = [8, 8, 8], strides = [1, 1, 1]} : vector<8x8x32xf32> to vector<8x8x8xf32>
    %42 = vector.extract_strided_slice %38 {offsets = [0, 0, 0], sizes = [8, 8, 8], strides = [1, 1, 1]} : vector<8x8x32xf32> to vector<8x8x8xf32>
    %43 = vector.extract_strided_slice %40 {offsets = [0, 0, 0], sizes = [8, 8, 8], strides = [1, 1, 1]} : vector<8x8x32xf32> to vector<8x8x8xf32>
    "tpu.trace_start"() <{level = 10 : i32, message = "nqd,nkd->nqk"}> : () -> ()
    %cst_18 = arith.constant dense<0.000000e+00> : vector<8x8x8xf32>
    %44 = tpu.matmul %41, %42, %cst_18 {dimension_numbers = #tpu.dot_dimension_numbers<[2], [2], [1], [1], [0, 0, 0, 1, 1, 1], [0], [0]>} : vector<8x8x8xf32>, vector<8x8x8xf32>, vector<8x8x8xf32> -> vector<8x8x8xf32>
    "tpu.trace_stop"() : () -> ()
    %cst_19 = arith.constant 0.353553385 : f32
    %45 = vector.broadcast %cst_19 : f32 to vector<8x8x8xf32>
    %46 = arith.mulf %44, %45 : vector<8x8x8xf32>
    %47 = vector.broadcast %26 : vector<8x1x8xf32> to vector<8x8x8xf32>
    %48 = arith.addf %46, %47 : vector<8x8x8xf32>
    %cst_20 = arith.constant dense<0xFF800000> : vector<8x8xf32>
    %49 = vector.multi_reduction <maximumf>, %48, %cst_20 [2] : vector<8x8x8xf32> to vector<8x8xf32>
    %50 = vector.shape_cast %49 : vector<8x8xf32> to vector<8x8x1xf32>
    %51 = vector.broadcast %50 : vector<8x8x1xf32> to vector<8x8x8xf32>
    %52 = arith.subf %48, %51 : vector<8x8x8xf32>
    %53 = math.exp %52 : vector<8x8x8xf32>
    %cst_21 = arith.constant dense<0.000000e+00> : vector<8x8xf32>
    %54 = vector.multi_reduction <add>, %53, %cst_21 [2] : vector<8x8x8xf32> to vector<8x8xf32>
    %55 = vector.shape_cast %54 : vector<8x8xf32> to vector<8x8x1xf32>
    %56 = vector.broadcast %55 : vector<8x8x1xf32> to vector<8x8x8xf32>
    %57 = arith.divf %53, %56 : vector<8x8x8xf32>
    "tpu.trace_start"() <{level = 10 : i32, message = "nqk,nkd->nqd"}> : () -> ()
    %cst_22 = arith.constant dense<0.000000e+00> : vector<8x8x8xf32>
    %58 = tpu.matmul %57, %43, %cst_22 {dimension_numbers = #tpu.dot_dimension_numbers<[2], [1], [1], [2], [0, 0, 0, 1, 1, 2], [0], [0]>} : vector<8x8x8xf32>, vector<8x8x8xf32>, vector<8x8x8xf32> -> vector<8x8x8xf32>
    "tpu.trace_stop"() : () -> ()
    %59 = vector.extract_strided_slice %36 {offsets = [0, 0, 8], sizes = [8, 8, 8], strides = [1, 1, 1]} : vector<8x8x32xf32> to vector<8x8x8xf32>
    %60 = vector.extract_strided_slice %38 {offsets = [0, 0, 8], sizes = [8, 8, 8], strides = [1, 1, 1]} : vector<8x8x32xf32> to vector<8x8x8xf32>
    %61 = vector.extract_strided_slice %40 {offsets = [0, 0, 8], sizes = [8, 8, 8], strides = [1, 1, 1]} : vector<8x8x32xf32> to vector<8x8x8xf32>
    "tpu.trace_start"() <{level = 10 : i32, message = "nqd,nkd->nqk"}> : () -> ()
    %cst_23 = arith.constant dense<0.000000e+00> : vector<8x8x8xf32>
    %62 = tpu.matmul %59, %60, %cst_23 {dimension_numbers = #tpu.dot_dimension_numbers<[2], [2], [1], [1], [0, 0, 0, 1, 1, 1], [0], [0]>} : vector<8x8x8xf32>, vector<8x8x8xf32>, vector<8x8x8xf32> -> vector<8x8x8xf32>
    "tpu.trace_stop"() : () -> ()
    %cst_24 = arith.constant 0.353553385 : f32
    %63 = vector.broadcast %cst_24 : f32 to vector<8x8x8xf32>
    %64 = arith.mulf %62, %63 : vector<8x8x8xf32>
    %65 = vector.broadcast %26 : vector<8x1x8xf32> to vector<8x8x8xf32>
    %66 = arith.addf %64, %65 : vector<8x8x8xf32>
    %cst_25 = arith.constant dense<0xFF800000> : vector<8x8xf32>
    %67 = vector.multi_reduction <maximumf>, %66, %cst_25 [2] : vector<8x8x8xf32> to vector<8x8xf32>
    %68 = vector.shape_cast %67 : vector<8x8xf32> to vector<8x8x1xf32>
    %69 = vector.broadcast %68 : vector<8x8x1xf32> to vector<8x8x8xf32>
    %70 = arith.subf %66, %69 : vector<8x8x8xf32>
    %71 = math.exp %70 : vector<8x8x8xf32>
    %cst_26 = arith.constant dense<0.000000e+00> : vector<8x8xf32>
    %72 = vector.multi_reduction <add>, %71, %cst_26 [2] : vector<8x8x8xf32> to vector<8x8xf32>
    %73 = vector.shape_cast %72 : vector<8x8xf32> to vector<8x8x1xf32>
    %74 = vector.broadcast %73 : vector<8x8x1xf32> to vector<8x8x8xf32>
    %75 = arith.divf %71, %74 : vector<8x8x8xf32>
    "tpu.trace_start"() <{level = 10 : i32, message = "nqk,nkd->nqd"}> : () -> ()
    %cst_27 = arith.constant dense<0.000000e+00> : vector<8x8x8xf32>
    %76 = tpu.matmul %75, %61, %cst_27 {dimension_numbers = #tpu.dot_dimension_numbers<[2], [1], [1], [2], [0, 0, 0, 1, 1, 2], [0], [0]>} : vector<8x8x8xf32>, vector<8x8x8xf32>, vector<8x8x8xf32> -> vector<8x8x8xf32>
    "tpu.trace_stop"() : () -> ()
    %77 = vector.extract_strided_slice %36 {offsets = [0, 0, 16], sizes = [8, 8, 8], strides = [1, 1, 1]} : vector<8x8x32xf32> to vector<8x8x8xf32>
    %78 = vector.extract_strided_slice %38 {offsets = [0, 0, 16], sizes = [8, 8, 8], strides = [1, 1, 1]} : vector<8x8x32xf32> to vector<8x8x8xf32>
    %79 = vector.extract_strided_slice %40 {offsets = [0, 0, 16], sizes = [8, 8, 8], strides = [1, 1, 1]} : vector<8x8x32xf32> to vector<8x8x8xf32>
    "tpu.trace_start"() <{level = 10 : i32, message = "nqd,nkd->nqk"}> : () -> ()
    %cst_28 = arith.constant dense<0.000000e+00> : vector<8x8x8xf32>
    %80 = tpu.matmul %77, %78, %cst_28 {dimension_numbers = #tpu.dot_dimension_numbers<[2], [2], [1], [1], [0, 0, 0, 1, 1, 1], [0], [0]>} : vector<8x8x8xf32>, vector<8x8x8xf32>, vector<8x8x8xf32> -> vector<8x8x8xf32>
    "tpu.trace_stop"() : () -> ()
    %cst_29 = arith.constant 0.353553385 : f32
    %81 = vector.broadcast %cst_29 : f32 to vector<8x8x8xf32>
    %82 = arith.mulf %80, %81 : vector<8x8x8xf32>
    %83 = vector.broadcast %26 : vector<8x1x8xf32> to vector<8x8x8xf32>
    %84 = arith.addf %82, %83 : vector<8x8x8xf32>
    %cst_30 = arith.constant dense<0xFF800000> : vector<8x8xf32>
    %85 = vector.multi_reduction <maximumf>, %84, %cst_30 [2] : vector<8x8x8xf32> to vector<8x8xf32>
    %86 = vector.shape_cast %85 : vector<8x8xf32> to vector<8x8x1xf32>
    %87 = vector.broadcast %86 : vector<8x8x1xf32> to vector<8x8x8xf32>
    %88 = arith.subf %84, %87 : vector<8x8x8xf32>
    %89 = math.exp %88 : vector<8x8x8xf32>
    %cst_31 = arith.constant dense<0.000000e+00> : vector<8x8xf32>
    %90 = vector.multi_reduction <add>, %89, %cst_31 [2] : vector<8x8x8xf32> to vector<8x8xf32>
    %91 = vector.shape_cast %90 : vector<8x8xf32> to vector<8x8x1xf32>
    %92 = vector.broadcast %91 : vector<8x8x1xf32> to vector<8x8x8xf32>
    %93 = arith.divf %89, %92 : vector<8x8x8xf32>
    "tpu.trace_start"() <{level = 10 : i32, message = "nqk,nkd->nqd"}> : () -> ()
    %cst_32 = arith.constant dense<0.000000e+00> : vector<8x8x8xf32>
    %94 = tpu.matmul %93, %79, %cst_32 {dimension_numbers = #tpu.dot_dimension_numbers<[2], [1], [1], [2], [0, 0, 0, 1, 1, 2], [0], [0]>} : vector<8x8x8xf32>, vector<8x8x8xf32>, vector<8x8x8xf32> -> vector<8x8x8xf32>
    "tpu.trace_stop"() : () -> ()
    %95 = vector.extract_strided_slice %36 {offsets = [0, 0, 24], sizes = [8, 8, 8], strides = [1, 1, 1]} : vector<8x8x32xf32> to vector<8x8x8xf32>
    %96 = vector.extract_strided_slice %38 {offsets = [0, 0, 24], sizes = [8, 8, 8], strides = [1, 1, 1]} : vector<8x8x32xf32> to vector<8x8x8xf32>
    %97 = vector.extract_strided_slice %40 {offsets = [0, 0, 24], sizes = [8, 8, 8], strides = [1, 1, 1]} : vector<8x8x32xf32> to vector<8x8x8xf32>
    "tpu.trace_start"() <{level = 10 : i32, message = "nqd,nkd->nqk"}> : () -> ()
    %cst_33 = arith.constant dense<0.000000e+00> : vector<8x8x8xf32>
    %98 = tpu.matmul %95, %96, %cst_33 {dimension_numbers = #tpu.dot_dimension_numbers<[2], [2], [1], [1], [0, 0, 0, 1, 1, 1], [0], [0]>} : vector<8x8x8xf32>, vector<8x8x8xf32>, vector<8x8x8xf32> -> vector<8x8x8xf32>
    "tpu.trace_stop"() : () -> ()
    %cst_34 = arith.constant 0.353553385 : f32
    %99 = vector.broadcast %cst_34 : f32 to vector<8x8x8xf32>
    %100 = arith.mulf %98, %99 : vector<8x8x8xf32>
    %101 = vector.broadcast %26 : vector<8x1x8xf32> to vector<8x8x8xf32>
    %102 = arith.addf %100, %101 : vector<8x8x8xf32>
    %cst_35 = arith.constant dense<0xFF800000> : vector<8x8xf32>
    %103 = vector.multi_reduction <maximumf>, %102, %cst_35 [2] : vector<8x8x8xf32> to vector<8x8xf32>
    %104 = vector.shape_cast %103 : vector<8x8xf32> to vector<8x8x1xf32>
    %105 = vector.broadcast %104 : vector<8x8x1xf32> to vector<8x8x8xf32>
    %106 = arith.subf %102, %105 : vector<8x8x8xf32>
    %107 = math.exp %106 : vector<8x8x8xf32>
    %cst_36 = arith.constant dense<0.000000e+00> : vector<8x8xf32>
    %108 = vector.multi_reduction <add>, %107, %cst_36 [2] : vector<8x8x8xf32> to vector<8x8xf32>
    %109 = vector.shape_cast %108 : vector<8x8xf32> to vector<8x8x1xf32>
    %110 = vector.broadcast %109 : vector<8x8x1xf32> to vector<8x8x8xf32>
    %111 = arith.divf %107, %110 : vector<8x8x8xf32>
    "tpu.trace_start"() <{level = 10 : i32, message = "nqk,nkd->nqd"}> : () -> ()
    %cst_37 = arith.constant dense<0.000000e+00> : vector<8x8x8xf32>
    %112 = tpu.matmul %111, %97, %cst_37 {dimension_numbers = #tpu.dot_dimension_numbers<[2], [1], [1], [2], [0, 0, 0, 1, 1, 2], [0], [0]>} : vector<8x8x8xf32>, vector<8x8x8xf32>, vector<8x8x8xf32> -> vector<8x8x8xf32>
    "tpu.trace_stop"() : () -> ()
    %113 = tpu.concatenate %58, %76, %94, %112 in 2 : vector<8x8x8xf32>, vector<8x8x8xf32>, vector<8x8x8xf32>, vector<8x8x8xf32> -> vector<8x8x32xf32>
    %114 = vector.shape_cast %113 : vector<8x8x32xf32> to vector<64x32xf32>
    %115 = arith.truncf %114 : vector<64x32xf32> to vector<64x32xbf16>
    %c0_38 = arith.constant 0 : index
    %c0_39 = arith.constant 0 : index
    %c0_40 = arith.constant 0 : index
    %116 = vector.load %arg7[%c0_38, %c0_39, %c0_40] : memref<2x32x32xbf16, #tpu.memory_space<vmem>>, vector<1x32x32xbf16>
    %117 = vector.shape_cast %116 : vector<1x32x32xbf16> to vector<32x32xbf16>
    %cst_41 = arith.constant dense<0.000000e+00> : vector<64x32xf32>
    %118 = tpu.matmul %115, %117, %cst_41 {dimension_numbers = #tpu.dot_dimension_numbers<[1], [0], [0], [1], [0, 0, 1, 1], [], []>} : vector<64x32xbf16>, vector<32x32xbf16>, vector<64x32xf32> -> vector<64x32xf32>
    %c0_42 = arith.constant 0 : index
    %c0_43 = arith.constant 0 : index
    %c0_44 = arith.constant 0 : index
    %119 = vector.load %arg8[%c0_42, %c0_43, %c0_44] : memref<2x1x32xf32, #tpu.memory_space<vmem>>, vector<1x1x32xf32>
    %120 = vector.shape_cast %119 : vector<1x1x32xf32> to vector<1x32xf32>
    %121 = vector.broadcast %120 : vector<1x32xf32> to vector<64x32xf32>
    %122 = arith.addf %118, %121 : vector<64x32xf32>
    %123 = arith.addf %24, %122 : vector<64x32xf32>
    %c0_45 = arith.constant 0 : index
    %c0_46 = arith.constant 0 : index
    %c0_47 = arith.constant 0 : index
    %124 = vector.load %arg9[%c0_45, %c0_46, %c0_47] : memref<2x1x32xf32, #tpu.memory_space<vmem>>, vector<1x1x32xf32>
    %125 = vector.shape_cast %124 : vector<1x1x32xf32> to vector<1x32xf32>
    %c0_48 = arith.constant 0 : index
    %c0_49 = arith.constant 0 : index
    %c0_50 = arith.constant 0 : index
    %126 = vector.load %arg10[%c0_48, %c0_49, %c0_50] : memref<2x1x32xf32, #tpu.memory_space<vmem>>, vector<1x1x32xf32>
    %127 = vector.shape_cast %126 : vector<1x1x32xf32> to vector<1x32xf32>
    %cst_51 = arith.constant dense<0.000000e+00> : vector<64xf32>
    %128 = vector.multi_reduction <add>, %123, %cst_51 [1] : vector<64x32xf32> to vector<64xf32>
    %129 = vector.shape_cast %128 : vector<64xf32> to vector<64x1xf32>
    %cst_52 = arith.constant 3.200000e+01 : f32
    %130 = vector.broadcast %cst_52 : f32 to vector<64x1xf32>
    %131 = arith.divf %129, %130 : vector<64x1xf32>
    %132 = vector.broadcast %131 : vector<64x1xf32> to vector<64x32xf32>
    %133 = arith.subf %123, %132 : vector<64x32xf32>
    %134 = arith.mulf %133, %133 : vector<64x32xf32>
    %cst_53 = arith.constant dense<0.000000e+00> : vector<64xf32>
    %135 = vector.multi_reduction <add>, %134, %cst_53 [1] : vector<64x32xf32> to vector<64xf32>
    %136 = vector.shape_cast %135 : vector<64xf32> to vector<64x1xf32>
    %cst_54 = arith.constant 3.200000e+01 : f32
    %137 = vector.broadcast %cst_54 : f32 to vector<64x1xf32>
    %138 = arith.divf %136, %137 : vector<64x1xf32>
    %139 = vector.broadcast %131 : vector<64x1xf32> to vector<64x32xf32>
    %140 = arith.subf %123, %139 : vector<64x32xf32>
    %cst_55 = arith.constant 9.99999996E-13 : f32
    %141 = vector.broadcast %cst_55 : f32 to vector<64x1xf32>
    %142 = arith.addf %138, %141 : vector<64x1xf32>
    %143 = math.rsqrt %142 : vector<64x1xf32>
    %144 = vector.broadcast %143 : vector<64x1xf32> to vector<64x32xf32>
    %145 = arith.mulf %140, %144 : vector<64x32xf32>
    %146 = vector.broadcast %125 : vector<1x32xf32> to vector<64x32xf32>
    %147 = arith.mulf %145, %146 : vector<64x32xf32>
    %148 = vector.broadcast %127 : vector<1x32xf32> to vector<64x32xf32>
    %149 = arith.addf %147, %148 : vector<64x32xf32>
    %150 = arith.truncf %149 : vector<64x32xf32> to vector<64x32xbf16>
    %c0_56 = arith.constant 0 : index
    %c0_57 = arith.constant 0 : index
    %c0_58 = arith.constant 0 : index
    %151 = vector.load %arg11[%c0_56, %c0_57, %c0_58] : memref<2x32x64xbf16, #tpu.memory_space<vmem>>, vector<1x32x64xbf16>
    %152 = vector.shape_cast %151 : vector<1x32x64xbf16> to vector<32x64xbf16>
    %cst_59 = arith.constant dense<0.000000e+00> : vector<64x64xf32>
    %153 = tpu.matmul %150, %152, %cst_59 {dimension_numbers = #tpu.dot_dimension_numbers<[1], [0], [0], [1], [0, 0, 1, 1], [], []>} : vector<64x32xbf16>, vector<32x64xbf16>, vector<64x64xf32> -> vector<64x64xf32>
    %c0_60 = arith.constant 0 : index
    %c0_61 = arith.constant 0 : index
    %c0_62 = arith.constant 0 : index
    %154 = vector.load %arg12[%c0_60, %c0_61, %c0_62] : memref<2x1x64xf32, #tpu.memory_space<vmem>>, vector<1x1x64xf32>
    %155 = vector.shape_cast %154 : vector<1x1x64xf32> to vector<1x64xf32>
    %156 = vector.broadcast %155 : vector<1x64xf32> to vector<64x64xf32>
    %157 = arith.addf %153, %156 : vector<64x64xf32>
    %cst_63 = arith.constant 5.000000e-01 : f32
    %158 = vector.broadcast %cst_63 : f32 to vector<64x64xf32>
    %159 = arith.mulf %158, %157 : vector<64x64xf32>
    %cst_64 = arith.constant 4.471500e-02 : f32
    %160 = vector.broadcast %cst_64 : f32 to vector<64x64xf32>
    %161 = arith.mulf %160, %157 : vector<64x64xf32>
    %162 = arith.mulf %161, %157 : vector<64x64xf32>
    %163 = arith.mulf %162, %157 : vector<64x64xf32>
    %164 = arith.addf %157, %163 : vector<64x64xf32>
    %cst_65 = arith.constant 0.797884583 : f32
    %165 = vector.broadcast %cst_65 : f32 to vector<64x64xf32>
    %166 = arith.mulf %165, %164 : vector<64x64xf32>
    %167 = math.tanh %166 : vector<64x64xf32>
    %cst_66 = arith.constant 1.000000e+00 : f32
    %168 = vector.broadcast %cst_66 : f32 to vector<64x64xf32>
    %169 = arith.addf %168, %167 : vector<64x64xf32>
    %170 = arith.mulf %159, %169 : vector<64x64xf32>
    %171 = arith.truncf %170 : vector<64x64xf32> to vector<64x64xbf16>
    %c0_67 = arith.constant 0 : index
    %c0_68 = arith.constant 0 : index
    %c0_69 = arith.constant 0 : index
    %172 = vector.load %arg13[%c0_67, %c0_68, %c0_69] : memref<2x64x32xbf16, #tpu.memory_space<vmem>>, vector<1x64x32xbf16>
    %173 = vector.shape_cast %172 : vector<1x64x32xbf16> to vector<64x32xbf16>
    %cst_70 = arith.constant dense<0.000000e+00> : vector<64x32xf32>
    %174 = tpu.matmul %171, %173, %cst_70 {dimension_numbers = #tpu.dot_dimension_numbers<[1], [0], [0], [1], [0, 0, 1, 1], [], []>} : vector<64x64xbf16>, vector<64x32xbf16>, vector<64x32xf32> -> vector<64x32xf32>
    %c0_71 = arith.constant 0 : index
    %c0_72 = arith.constant 0 : index
    %c0_73 = arith.constant 0 : index
    %175 = vector.load %arg14[%c0_71, %c0_72, %c0_73] : memref<2x1x32xf32, #tpu.memory_space<vmem>>, vector<1x1x32xf32>
    %176 = vector.shape_cast %175 : vector<1x1x32xf32> to vector<1x32xf32>
    %177 = vector.broadcast %176 : vector<1x32xf32> to vector<64x32xf32>
    %178 = arith.addf %174, %177 : vector<64x32xf32>
    %179 = arith.addf %149, %178 : vector<64x32xf32>
    %c0_74 = arith.constant 0 : index
    %c0_75 = arith.constant 0 : index
    %c0_76 = arith.constant 0 : index
    %180 = vector.load %arg15[%c0_74, %c0_75, %c0_76] : memref<2x1x32xf32, #tpu.memory_space<vmem>>, vector<1x1x32xf32>
    %181 = vector.shape_cast %180 : vector<1x1x32xf32> to vector<1x32xf32>
    %c0_77 = arith.constant 0 : index
    %c0_78 = arith.constant 0 : index
    %c0_79 = arith.constant 0 : index
    %182 = vector.load %arg16[%c0_77, %c0_78, %c0_79] : memref<2x1x32xf32, #tpu.memory_space<vmem>>, vector<1x1x32xf32>
    %183 = vector.shape_cast %182 : vector<1x1x32xf32> to vector<1x32xf32>
    %cst_80 = arith.constant dense<0.000000e+00> : vector<64xf32>
    %184 = vector.multi_reduction <add>, %179, %cst_80 [1] : vector<64x32xf32> to vector<64xf32>
    %185 = vector.shape_cast %184 : vector<64xf32> to vector<64x1xf32>
    %cst_81 = arith.constant 3.200000e+01 : f32
    %186 = vector.broadcast %cst_81 : f32 to vector<64x1xf32>
    %187 = arith.divf %185, %186 : vector<64x1xf32>
    %188 = vector.broadcast %187 : vector<64x1xf32> to vector<64x32xf32>
    %189 = arith.subf %179, %188 : vector<64x32xf32>
    %190 = arith.mulf %189, %189 : vector<64x32xf32>
    %cst_82 = arith.constant dense<0.000000e+00> : vector<64xf32>
    %191 = vector.multi_reduction <add>, %190, %cst_82 [1] : vector<64x32xf32> to vector<64xf32>
    %192 = vector.shape_cast %191 : vector<64xf32> to vector<64x1xf32>
    %cst_83 = arith.constant 3.200000e+01 : f32
    %193 = vector.broadcast %cst_83 : f32 to vector<64x1xf32>
    %194 = arith.divf %192, %193 : vector<64x1xf32>
    %195 = vector.broadcast %187 : vector<64x1xf32> to vector<64x32xf32>
    %196 = arith.subf %179, %195 : vector<64x32xf32>
    %cst_84 = arith.constant 9.99999996E-13 : f32
    %197 = vector.broadcast %cst_84 : f32 to vector<64x1xf32>
    %198 = arith.addf %194, %197 : vector<64x1xf32>
    %199 = math.rsqrt %198 : vector<64x1xf32>
    %200 = vector.broadcast %199 : vector<64x1xf32> to vector<64x32xf32>
    %201 = arith.mulf %196, %200 : vector<64x32xf32>
    %202 = vector.broadcast %181 : vector<1x32xf32> to vector<64x32xf32>
    %203 = arith.mulf %201, %202 : vector<64x32xf32>
    %204 = vector.broadcast %183 : vector<1x32xf32> to vector<64x32xf32>
    %205 = arith.addf %203, %204 : vector<64x32xf32>
    %206 = arith.truncf %205 : vector<64x32xf32> to vector<64x32xbf16>
    %c1 = arith.constant 1 : index
    %c0_85 = arith.constant 0 : index
    %c0_86 = arith.constant 0 : index
    %207 = vector.load %arg5[%c1, %c0_85, %c0_86] : memref<2x32x96xbf16, #tpu.memory_space<vmem>>, vector<1x32x96xbf16>
    %208 = vector.shape_cast %207 : vector<1x32x96xbf16> to vector<32x96xbf16>
    %cst_87 = arith.constant dense<0.000000e+00> : vector<64x96xf32>
    %209 = tpu.matmul %206, %208, %cst_87 {dimension_numbers = #tpu.dot_dimension_numbers<[1], [0], [0], [1], [0, 0, 1, 1], [], []>} : vector<64x32xbf16>, vector<32x96xbf16>, vector<64x96xf32> -> vector<64x96xf32>
    %c1_88 = arith.constant 1 : index
    %c0_89 = arith.constant 0 : index
    %c0_90 = arith.constant 0 : index
    %210 = vector.load %arg6[%c1_88, %c0_89, %c0_90] : memref<2x1x96xf32, #tpu.memory_space<vmem>>, vector<1x1x96xf32>
    %211 = vector.shape_cast %210 : vector<1x1x96xf32> to vector<1x96xf32>
    %212 = vector.broadcast %211 : vector<1x96xf32> to vector<64x96xf32>
    %213 = arith.addf %209, %212 : vector<64x96xf32>
    %214 = vector.extract_strided_slice %213 {offsets = [0, 0], sizes = [64, 32], strides = [1, 1]} : vector<64x96xf32> to vector<64x32xf32>
    %215 = vector.shape_cast %214 : vector<64x32xf32> to vector<8x8x32xf32>
    %216 = vector.extract_strided_slice %213 {offsets = [0, 32], sizes = [64, 32], strides = [1, 1]} : vector<64x96xf32> to vector<64x32xf32>
    %217 = vector.shape_cast %216 : vector<64x32xf32> to vector<8x8x32xf32>
    %218 = vector.extract_strided_slice %213 {offsets = [0, 64], sizes = [64, 32], strides = [1, 1]} : vector<64x96xf32> to vector<64x32xf32>
    %219 = vector.shape_cast %218 : vector<64x32xf32> to vector<8x8x32xf32>
    %220 = vector.extract_strided_slice %215 {offsets = [0, 0, 0], sizes = [8, 8, 8], strides = [1, 1, 1]} : vector<8x8x32xf32> to vector<8x8x8xf32>
    %221 = vector.extract_strided_slice %217 {offsets = [0, 0, 0], sizes = [8, 8, 8], strides = [1, 1, 1]} : vector<8x8x32xf32> to vector<8x8x8xf32>
    %222 = vector.extract_strided_slice %219 {offsets = [0, 0, 0], sizes = [8, 8, 8], strides = [1, 1, 1]} : vector<8x8x32xf32> to vector<8x8x8xf32>
    "tpu.trace_start"() <{level = 10 : i32, message = "nqd,nkd->nqk"}> : () -> ()
    %cst_91 = arith.constant dense<0.000000e+00> : vector<8x8x8xf32>
    %223 = tpu.matmul %220, %221, %cst_91 {dimension_numbers = #tpu.dot_dimension_numbers<[2], [2], [1], [1], [0, 0, 0, 1, 1, 1], [0], [0]>} : vector<8x8x8xf32>, vector<8x8x8xf32>, vector<8x8x8xf32> -> vector<8x8x8xf32>
    "tpu.trace_stop"() : () -> ()
    %cst_92 = arith.constant 0.353553385 : f32
    %224 = vector.broadcast %cst_92 : f32 to vector<8x8x8xf32>
    %225 = arith.mulf %223, %224 : vector<8x8x8xf32>
    %226 = vector.broadcast %26 : vector<8x1x8xf32> to vector<8x8x8xf32>
    %227 = arith.addf %225, %226 : vector<8x8x8xf32>
    %cst_93 = arith.constant dense<0xFF800000> : vector<8x8xf32>
    %228 = vector.multi_reduction <maximumf>, %227, %cst_93 [2] : vector<8x8x8xf32> to vector<8x8xf32>
    %229 = vector.shape_cast %228 : vector<8x8xf32> to vector<8x8x1xf32>
    %230 = vector.broadcast %229 : vector<8x8x1xf32> to vector<8x8x8xf32>
    %231 = arith.subf %227, %230 : vector<8x8x8xf32>
    %232 = math.exp %231 : vector<8x8x8xf32>
    %cst_94 = arith.constant dense<0.000000e+00> : vector<8x8xf32>
    %233 = vector.multi_reduction <add>, %232, %cst_94 [2] : vector<8x8x8xf32> to vector<8x8xf32>
    %234 = vector.shape_cast %233 : vector<8x8xf32> to vector<8x8x1xf32>
    %235 = vector.broadcast %234 : vector<8x8x1xf32> to vector<8x8x8xf32>
    %236 = arith.divf %232, %235 : vector<8x8x8xf32>
    "tpu.trace_start"() <{level = 10 : i32, message = "nqk,nkd->nqd"}> : () -> ()
    %cst_95 = arith.constant dense<0.000000e+00> : vector<8x8x8xf32>
    %237 = tpu.matmul %236, %222, %cst_95 {dimension_numbers = #tpu.dot_dimension_numbers<[2], [1], [1], [2], [0, 0, 0, 1, 1, 2], [0], [0]>} : vector<8x8x8xf32>, vector<8x8x8xf32>, vector<8x8x8xf32> -> vector<8x8x8xf32>
    "tpu.trace_stop"() : () -> ()
    %238 = vector.extract_strided_slice %215 {offsets = [0, 0, 8], sizes = [8, 8, 8], strides = [1, 1, 1]} : vector<8x8x32xf32> to vector<8x8x8xf32>
    %239 = vector.extract_strided_slice %217 {offsets = [0, 0, 8], sizes = [8, 8, 8], strides = [1, 1, 1]} : vector<8x8x32xf32> to vector<8x8x8xf32>
    %240 = vector.extract_strided_slice %219 {offsets = [0, 0, 8], sizes = [8, 8, 8], strides = [1, 1, 1]} : vector<8x8x32xf32> to vector<8x8x8xf32>
    "tpu.trace_start"() <{level = 10 : i32, message = "nqd,nkd->nqk"}> : () -> ()
    %cst_96 = arith.constant dense<0.000000e+00> : vector<8x8x8xf32>
    %241 = tpu.matmul %238, %239, %cst_96 {dimension_numbers = #tpu.dot_dimension_numbers<[2], [2], [1], [1], [0, 0, 0, 1, 1, 1], [0], [0]>} : vector<8x8x8xf32>, vector<8x8x8xf32>, vector<8x8x8xf32> -> vector<8x8x8xf32>
    "tpu.trace_stop"() : () -> ()
    %cst_97 = arith.constant 0.353553385 : f32
    %242 = vector.broadcast %cst_97 : f32 to vector<8x8x8xf32>
    %243 = arith.mulf %241, %242 : vector<8x8x8xf32>
    %244 = vector.broadcast %26 : vector<8x1x8xf32> to vector<8x8x8xf32>
    %245 = arith.addf %243, %244 : vector<8x8x8xf32>
    %cst_98 = arith.constant dense<0xFF800000> : vector<8x8xf32>
    %246 = vector.multi_reduction <maximumf>, %245, %cst_98 [2] : vector<8x8x8xf32> to vector<8x8xf32>
    %247 = vector.shape_cast %246 : vector<8x8xf32> to vector<8x8x1xf32>
    %248 = vector.broadcast %247 : vector<8x8x1xf32> to vector<8x8x8xf32>
    %249 = arith.subf %245, %248 : vector<8x8x8xf32>
    %250 = math.exp %249 : vector<8x8x8xf32>
    %cst_99 = arith.constant dense<0.000000e+00> : vector<8x8xf32>
    %251 = vector.multi_reduction <add>, %250, %cst_99 [2] : vector<8x8x8xf32> to vector<8x8xf32>
    %252 = vector.shape_cast %251 : vector<8x8xf32> to vector<8x8x1xf32>
    %253 = vector.broadcast %252 : vector<8x8x1xf32> to vector<8x8x8xf32>
    %254 = arith.divf %250, %253 : vector<8x8x8xf32>
    "tpu.trace_start"() <{level = 10 : i32, message = "nqk,nkd->nqd"}> : () -> ()
    %cst_100 = arith.constant dense<0.000000e+00> : vector<8x8x8xf32>
    %255 = tpu.matmul %254, %240, %cst_100 {dimension_numbers = #tpu.dot_dimension_numbers<[2], [1], [1], [2], [0, 0, 0, 1, 1, 2], [0], [0]>} : vector<8x8x8xf32>, vector<8x8x8xf32>, vector<8x8x8xf32> -> vector<8x8x8xf32>
    "tpu.trace_stop"() : () -> ()
    %256 = vector.extract_strided_slice %215 {offsets = [0, 0, 16], sizes = [8, 8, 8], strides = [1, 1, 1]} : vector<8x8x32xf32> to vector<8x8x8xf32>
    %257 = vector.extract_strided_slice %217 {offsets = [0, 0, 16], sizes = [8, 8, 8], strides = [1, 1, 1]} : vector<8x8x32xf32> to vector<8x8x8xf32>
    %258 = vector.extract_strided_slice %219 {offsets = [0, 0, 16], sizes = [8, 8, 8], strides = [1, 1, 1]} : vector<8x8x32xf32> to vector<8x8x8xf32>
    "tpu.trace_start"() <{level = 10 : i32, message = "nqd,nkd->nqk"}> : () -> ()
    %cst_101 = arith.constant dense<0.000000e+00> : vector<8x8x8xf32>
    %259 = tpu.matmul %256, %257, %cst_101 {dimension_numbers = #tpu.dot_dimension_numbers<[2], [2], [1], [1], [0, 0, 0, 1, 1, 1], [0], [0]>} : vector<8x8x8xf32>, vector<8x8x8xf32>, vector<8x8x8xf32> -> vector<8x8x8xf32>
    "tpu.trace_stop"() : () -> ()
    %cst_102 = arith.constant 0.353553385 : f32
    %260 = vector.broadcast %cst_102 : f32 to vector<8x8x8xf32>
    %261 = arith.mulf %259, %260 : vector<8x8x8xf32>
    %262 = vector.broadcast %26 : vector<8x1x8xf32> to vector<8x8x8xf32>
    %263 = arith.addf %261, %262 : vector<8x8x8xf32>
    %cst_103 = arith.constant dense<0xFF800000> : vector<8x8xf32>
    %264 = vector.multi_reduction <maximumf>, %263, %cst_103 [2] : vector<8x8x8xf32> to vector<8x8xf32>
    %265 = vector.shape_cast %264 : vector<8x8xf32> to vector<8x8x1xf32>
    %266 = vector.broadcast %265 : vector<8x8x1xf32> to vector<8x8x8xf32>
    %267 = arith.subf %263, %266 : vector<8x8x8xf32>
    %268 = math.exp %267 : vector<8x8x8xf32>
    %cst_104 = arith.constant dense<0.000000e+00> : vector<8x8xf32>
    %269 = vector.multi_reduction <add>, %268, %cst_104 [2] : vector<8x8x8xf32> to vector<8x8xf32>
    %270 = vector.shape_cast %269 : vector<8x8xf32> to vector<8x8x1xf32>
    %271 = vector.broadcast %270 : vector<8x8x1xf32> to vector<8x8x8xf32>
    %272 = arith.divf %268, %271 : vector<8x8x8xf32>
    "tpu.trace_start"() <{level = 10 : i32, message = "nqk,nkd->nqd"}> : () -> ()
    %cst_105 = arith.constant dense<0.000000e+00> : vector<8x8x8xf32>
    %273 = tpu.matmul %272, %258, %cst_105 {dimension_numbers = #tpu.dot_dimension_numbers<[2], [1], [1], [2], [0, 0, 0, 1, 1, 2], [0], [0]>} : vector<8x8x8xf32>, vector<8x8x8xf32>, vector<8x8x8xf32> -> vector<8x8x8xf32>
    "tpu.trace_stop"() : () -> ()
    %274 = vector.extract_strided_slice %215 {offsets = [0, 0, 24], sizes = [8, 8, 8], strides = [1, 1, 1]} : vector<8x8x32xf32> to vector<8x8x8xf32>
    %275 = vector.extract_strided_slice %217 {offsets = [0, 0, 24], sizes = [8, 8, 8], strides = [1, 1, 1]} : vector<8x8x32xf32> to vector<8x8x8xf32>
    %276 = vector.extract_strided_slice %219 {offsets = [0, 0, 24], sizes = [8, 8, 8], strides = [1, 1, 1]} : vector<8x8x32xf32> to vector<8x8x8xf32>
    "tpu.trace_start"() <{level = 10 : i32, message = "nqd,nkd->nqk"}> : () -> ()
    %cst_106 = arith.constant dense<0.000000e+00> : vector<8x8x8xf32>
    %277 = tpu.matmul %274, %275, %cst_106 {dimension_numbers = #tpu.dot_dimension_numbers<[2], [2], [1], [1], [0, 0, 0, 1, 1, 1], [0], [0]>} : vector<8x8x8xf32>, vector<8x8x8xf32>, vector<8x8x8xf32> -> vector<8x8x8xf32>
    "tpu.trace_stop"() : () -> ()
    %cst_107 = arith.constant 0.353553385 : f32
    %278 = vector.broadcast %cst_107 : f32 to vector<8x8x8xf32>
    %279 = arith.mulf %277, %278 : vector<8x8x8xf32>
    %280 = vector.broadcast %26 : vector<8x1x8xf32> to vector<8x8x8xf32>
    %281 = arith.addf %279, %280 : vector<8x8x8xf32>
    %cst_108 = arith.constant dense<0xFF800000> : vector<8x8xf32>
    %282 = vector.multi_reduction <maximumf>, %281, %cst_108 [2] : vector<8x8x8xf32> to vector<8x8xf32>
    %283 = vector.shape_cast %282 : vector<8x8xf32> to vector<8x8x1xf32>
    %284 = vector.broadcast %283 : vector<8x8x1xf32> to vector<8x8x8xf32>
    %285 = arith.subf %281, %284 : vector<8x8x8xf32>
    %286 = math.exp %285 : vector<8x8x8xf32>
    %cst_109 = arith.constant dense<0.000000e+00> : vector<8x8xf32>
    %287 = vector.multi_reduction <add>, %286, %cst_109 [2] : vector<8x8x8xf32> to vector<8x8xf32>
    %288 = vector.shape_cast %287 : vector<8x8xf32> to vector<8x8x1xf32>
    %289 = vector.broadcast %288 : vector<8x8x1xf32> to vector<8x8x8xf32>
    %290 = arith.divf %286, %289 : vector<8x8x8xf32>
    "tpu.trace_start"() <{level = 10 : i32, message = "nqk,nkd->nqd"}> : () -> ()
    %cst_110 = arith.constant dense<0.000000e+00> : vector<8x8x8xf32>
    %291 = tpu.matmul %290, %276, %cst_110 {dimension_numbers = #tpu.dot_dimension_numbers<[2], [1], [1], [2], [0, 0, 0, 1, 1, 2], [0], [0]>} : vector<8x8x8xf32>, vector<8x8x8xf32>, vector<8x8x8xf32> -> vector<8x8x8xf32>
    "tpu.trace_stop"() : () -> ()
    %292 = tpu.concatenate %237, %255, %273, %291 in 2 : vector<8x8x8xf32>, vector<8x8x8xf32>, vector<8x8x8xf32>, vector<8x8x8xf32> -> vector<8x8x32xf32>
    %293 = vector.shape_cast %292 : vector<8x8x32xf32> to vector<64x32xf32>
    %294 = arith.truncf %293 : vector<64x32xf32> to vector<64x32xbf16>
    %c1_111 = arith.constant 1 : index
    %c0_112 = arith.constant 0 : index
    %c0_113 = arith.constant 0 : index
    %295 = vector.load %arg7[%c1_111, %c0_112, %c0_113] : memref<2x32x32xbf16, #tpu.memory_space<vmem>>, vector<1x32x32xbf16>
    %296 = vector.shape_cast %295 : vector<1x32x32xbf16> to vector<32x32xbf16>
    %cst_114 = arith.constant dense<0.000000e+00> : vector<64x32xf32>
    %297 = tpu.matmul %294, %296, %cst_114 {dimension_numbers = #tpu.dot_dimension_numbers<[1], [0], [0], [1], [0, 0, 1, 1], [], []>} : vector<64x32xbf16>, vector<32x32xbf16>, vector<64x32xf32> -> vector<64x32xf32>
    %c1_115 = arith.constant 1 : index
    %c0_116 = arith.constant 0 : index
    %c0_117 = arith.constant 0 : index
    %298 = vector.load %arg8[%c1_115, %c0_116, %c0_117] : memref<2x1x32xf32, #tpu.memory_space<vmem>>, vector<1x1x32xf32>
    %299 = vector.shape_cast %298 : vector<1x1x32xf32> to vector<1x32xf32>
    %300 = vector.broadcast %299 : vector<1x32xf32> to vector<64x32xf32>
    %301 = arith.addf %297, %300 : vector<64x32xf32>
    %302 = arith.addf %205, %301 : vector<64x32xf32>
    %c1_118 = arith.constant 1 : index
    %c0_119 = arith.constant 0 : index
    %c0_120 = arith.constant 0 : index
    %303 = vector.load %arg9[%c1_118, %c0_119, %c0_120] : memref<2x1x32xf32, #tpu.memory_space<vmem>>, vector<1x1x32xf32>
    %304 = vector.shape_cast %303 : vector<1x1x32xf32> to vector<1x32xf32>
    %c1_121 = arith.constant 1 : index
    %c0_122 = arith.constant 0 : index
    %c0_123 = arith.constant 0 : index
    %305 = vector.load %arg10[%c1_121, %c0_122, %c0_123] : memref<2x1x32xf32, #tpu.memory_space<vmem>>, vector<1x1x32xf32>
    %306 = vector.shape_cast %305 : vector<1x1x32xf32> to vector<1x32xf32>
    %cst_124 = arith.constant dense<0.000000e+00> : vector<64xf32>
    %307 = vector.multi_reduction <add>, %302, %cst_124 [1] : vector<64x32xf32> to vector<64xf32>
    %308 = vector.shape_cast %307 : vector<64xf32> to vector<64x1xf32>
    %cst_125 = arith.constant 3.200000e+01 : f32
    %309 = vector.broadcast %cst_125 : f32 to vector<64x1xf32>
    %310 = arith.divf %308, %309 : vector<64x1xf32>
    %311 = vector.broadcast %310 : vector<64x1xf32> to vector<64x32xf32>
    %312 = arith.subf %302, %311 : vector<64x32xf32>
    %313 = arith.mulf %312, %312 : vector<64x32xf32>
    %cst_126 = arith.constant dense<0.000000e+00> : vector<64xf32>
    %314 = vector.multi_reduction <add>, %313, %cst_126 [1] : vector<64x32xf32> to vector<64xf32>
    %315 = vector.shape_cast %314 : vector<64xf32> to vector<64x1xf32>
    %cst_127 = arith.constant 3.200000e+01 : f32
    %316 = vector.broadcast %cst_127 : f32 to vector<64x1xf32>
    %317 = arith.divf %315, %316 : vector<64x1xf32>
    %318 = vector.broadcast %310 : vector<64x1xf32> to vector<64x32xf32>
    %319 = arith.subf %302, %318 : vector<64x32xf32>
    %cst_128 = arith.constant 9.99999996E-13 : f32
    %320 = vector.broadcast %cst_128 : f32 to vector<64x1xf32>
    %321 = arith.addf %317, %320 : vector<64x1xf32>
    %322 = math.rsqrt %321 : vector<64x1xf32>
    %323 = vector.broadcast %322 : vector<64x1xf32> to vector<64x32xf32>
    %324 = arith.mulf %319, %323 : vector<64x32xf32>
    %325 = vector.broadcast %304 : vector<1x32xf32> to vector<64x32xf32>
    %326 = arith.mulf %324, %325 : vector<64x32xf32>
    %327 = vector.broadcast %306 : vector<1x32xf32> to vector<64x32xf32>
    %328 = arith.addf %326, %327 : vector<64x32xf32>
    %329 = arith.truncf %328 : vector<64x32xf32> to vector<64x32xbf16>
    %c1_129 = arith.constant 1 : index
    %c0_130 = arith.constant 0 : index
    %c0_131 = arith.constant 0 : index
    %330 = vector.load %arg11[%c1_129, %c0_130, %c0_131] : memref<2x32x64xbf16, #tpu.memory_space<vmem>>, vector<1x32x64xbf16>
    %331 = vector.shape_cast %330 : vector<1x32x64xbf16> to vector<32x64xbf16>
    %cst_132 = arith.constant dense<0.000000e+00> : vector<64x64xf32>
    %332 = tpu.matmul %329, %331, %cst_132 {dimension_numbers = #tpu.dot_dimension_numbers<[1], [0], [0], [1], [0, 0, 1, 1], [], []>} : vector<64x32xbf16>, vector<32x64xbf16>, vector<64x64xf32> -> vector<64x64xf32>
    %c1_133 = arith.constant 1 : index
    %c0_134 = arith.constant 0 : index
    %c0_135 = arith.constant 0 : index
    %333 = vector.load %arg12[%c1_133, %c0_134, %c0_135] : memref<2x1x64xf32, #tpu.memory_space<vmem>>, vector<1x1x64xf32>
    %334 = vector.shape_cast %333 : vector<1x1x64xf32> to vector<1x64xf32>
    %335 = vector.broadcast %334 : vector<1x64xf32> to vector<64x64xf32>
    %336 = arith.addf %332, %335 : vector<64x64xf32>
    %cst_136 = arith.constant 5.000000e-01 : f32
    %337 = vector.broadcast %cst_136 : f32 to vector<64x64xf32>
    %338 = arith.mulf %337, %336 : vector<64x64xf32>
    %cst_137 = arith.constant 4.471500e-02 : f32
    %339 = vector.broadcast %cst_137 : f32 to vector<64x64xf32>
    %340 = arith.mulf %339, %336 : vector<64x64xf32>
    %341 = arith.mulf %340, %336 : vector<64x64xf32>
    %342 = arith.mulf %341, %336 : vector<64x64xf32>
    %343 = arith.addf %336, %342 : vector<64x64xf32>
    %cst_138 = arith.constant 0.797884583 : f32
    %344 = vector.broadcast %cst_138 : f32 to vector<64x64xf32>
    %345 = arith.mulf %344, %343 : vector<64x64xf32>
    %346 = math.tanh %345 : vector<64x64xf32>
    %cst_139 = arith.constant 1.000000e+00 : f32
    %347 = vector.broadcast %cst_139 : f32 to vector<64x64xf32>
    %348 = arith.addf %347, %346 : vector<64x64xf32>
    %349 = arith.mulf %338, %348 : vector<64x64xf32>
    %350 = arith.truncf %349 : vector<64x64xf32> to vector<64x64xbf16>
    %c1_140 = arith.constant 1 : index
    %c0_141 = arith.constant 0 : index
    %c0_142 = arith.constant 0 : index
    %351 = vector.load %arg13[%c1_140, %c0_141, %c0_142] : memref<2x64x32xbf16, #tpu.memory_space<vmem>>, vector<1x64x32xbf16>
    %352 = vector.shape_cast %351 : vector<1x64x32xbf16> to vector<64x32xbf16>
    %cst_143 = arith.constant dense<0.000000e+00> : vector<64x32xf32>
    %353 = tpu.matmul %350, %352, %cst_143 {dimension_numbers = #tpu.dot_dimension_numbers<[1], [0], [0], [1], [0, 0, 1, 1], [], []>} : vector<64x64xbf16>, vector<64x32xbf16>, vector<64x32xf32> -> vector<64x32xf32>
    %c1_144 = arith.constant 1 : index
    %c0_145 = arith.constant 0 : index
    %c0_146 = arith.constant 0 : index
    %354 = vector.load %arg14[%c1_144, %c0_145, %c0_146] : memref<2x1x32xf32, #tpu.memory_space<vmem>>, vector<1x1x32xf32>
    %355 = vector.shape_cast %354 : vector<1x1x32xf32> to vector<1x32xf32>
    %356 = vector.broadcast %355 : vector<1x32xf32> to vector<64x32xf32>
    %357 = arith.addf %353, %356 : vector<64x32xf32>
    %358 = arith.addf %328, %357 : vector<64x32xf32>
    %c1_147 = arith.constant 1 : index
    %c0_148 = arith.constant 0 : index
    %c0_149 = arith.constant 0 : index
    %359 = vector.load %arg15[%c1_147, %c0_148, %c0_149] : memref<2x1x32xf32, #tpu.memory_space<vmem>>, vector<1x1x32xf32>
    %360 = vector.shape_cast %359 : vector<1x1x32xf32> to vector<1x32xf32>
    %c1_150 = arith.constant 1 : index
    %c0_151 = arith.constant 0 : index
    %c0_152 = arith.constant 0 : index
    %361 = vector.load %arg16[%c1_150, %c0_151, %c0_152] : memref<2x1x32xf32, #tpu.memory_space<vmem>>, vector<1x1x32xf32>
    %362 = vector.shape_cast %361 : vector<1x1x32xf32> to vector<1x32xf32>
    %cst_153 = arith.constant dense<0.000000e+00> : vector<64xf32>
    %363 = vector.multi_reduction <add>, %358, %cst_153 [1] : vector<64x32xf32> to vector<64xf32>
    %364 = vector.shape_cast %363 : vector<64xf32> to vector<64x1xf32>
    %cst_154 = arith.constant 3.200000e+01 : f32
    %365 = vector.broadcast %cst_154 : f32 to vector<64x1xf32>
    %366 = arith.divf %364, %365 : vector<64x1xf32>
    %367 = vector.broadcast %366 : vector<64x1xf32> to vector<64x32xf32>
    %368 = arith.subf %358, %367 : vector<64x32xf32>
    %369 = arith.mulf %368, %368 : vector<64x32xf32>
    %cst_155 = arith.constant dense<0.000000e+00> : vector<64xf32>
    %370 = vector.multi_reduction <add>, %369, %cst_155 [1] : vector<64x32xf32> to vector<64xf32>
    %371 = vector.shape_cast %370 : vector<64xf32> to vector<64x1xf32>
    %cst_156 = arith.constant 3.200000e+01 : f32
    %372 = vector.broadcast %cst_156 : f32 to vector<64x1xf32>
    %373 = arith.divf %371, %372 : vector<64x1xf32>
    %374 = vector.broadcast %366 : vector<64x1xf32> to vector<64x32xf32>
    %375 = arith.subf %358, %374 : vector<64x32xf32>
    %cst_157 = arith.constant 9.99999996E-13 : f32
    %376 = vector.broadcast %cst_157 : f32 to vector<64x1xf32>
    %377 = arith.addf %373, %376 : vector<64x1xf32>
    %378 = math.rsqrt %377 : vector<64x1xf32>
    %379 = vector.broadcast %378 : vector<64x1xf32> to vector<64x32xf32>
    %380 = arith.mulf %375, %379 : vector<64x32xf32>
    %381 = vector.broadcast %360 : vector<1x32xf32> to vector<64x32xf32>
    %382 = arith.mulf %380, %381 : vector<64x32xf32>
    %383 = vector.broadcast %362 : vector<1x32xf32> to vector<64x32xf32>
    %384 = arith.addf %382, %383 : vector<64x32xf32>
    %385 = vector.shape_cast %384 : vector<64x32xf32> to vector<8x8x32xf32>
    %386 = vector.extract_strided_slice %385 {offsets = [0, 0, 0], sizes = [8, 1, 32], strides = [1, 1, 1]} : vector<8x8x32xf32> to vector<8x1x32xf32>
    %387 = vector.shape_cast %386 : vector<8x1x32xf32> to vector<8x32xf32>
    %388 = arith.truncf %387 : vector<8x32xf32> to vector<8x32xbf16>
    %c0_158 = arith.constant 0 : index
    %c0_159 = arith.constant 0 : index
    %389 = vector.load %arg17[%c0_158, %c0_159] : memref<32x32xbf16, #tpu.memory_space<vmem>>, vector<32x32xbf16>
    %cst_160 = arith.constant dense<0.000000e+00> : vector<8x32xf32>
    %390 = tpu.matmul %388, %389, %cst_160 {dimension_numbers = #tpu.dot_dimension_numbers<[1], [0], [0], [1], [0, 0, 1, 1], [], []>} : vector<8x32xbf16>, vector<32x32xbf16>, vector<8x32xf32> -> vector<8x32xf32>
    %c0_161 = arith.constant 0 : index
    %c0_162 = arith.constant 0 : index
    %391 = vector.load %arg18[%c0_161, %c0_162] : memref<1x32xf32, #tpu.memory_space<vmem>>, vector<1x32xf32>
    %392 = vector.broadcast %391 : vector<1x32xf32> to vector<8x32xf32>
    %393 = arith.addf %390, %392 : vector<8x32xf32>
    %394 = math.tanh %393 : vector<8x32xf32>
    %395 = arith.truncf %394 : vector<8x32xf32> to vector<8x32xbf16>
    %c0_163 = arith.constant 0 : index
    %c0_164 = arith.constant 0 : index
    %396 = vector.load %arg19[%c0_163, %c0_164] : memref<32x32xbf16, #tpu.memory_space<vmem>>, vector<32x32xbf16>
    %cst_165 = arith.constant dense<0.000000e+00> : vector<8x32xf32>
    %397 = tpu.matmul %395, %396, %cst_165 {dimension_numbers = #tpu.dot_dimension_numbers<[1], [0], [0], [1], [0, 0, 1, 1], [], []>} : vector<8x32xbf16>, vector<32x32xbf16>, vector<8x32xf32> -> vector<8x32xf32>
    %c0_166 = arith.constant 0 : index
    %c0_167 = arith.constant 0 : index
    %398 = vector.load %arg20[%c0_166, %c0_167] : memref<1x32xf32, #tpu.memory_space<vmem>>, vector<1x32xf32>
    %399 = vector.broadcast %398 : vector<1x32xf32> to vector<8x32xf32>
    %400 = arith.addf %397, %399 : vector<8x32xf32>
    %401 = vector.shape_cast %400 : vector<8x32xf32> to vector<2x4x32xf32>
    %402 = vector.shape_cast %394 : vector<8x32xf32> to vector<2x4x32xf32>
    %c0_168 = arith.constant 0 : index
    %c0_169 = arith.constant 0 : index
    %403 = vector.load %arg21[%c0_168, %c0_169] : memref<1x32xf32, #tpu.memory_space<vmem>>, vector<1x32xf32>
    %404 = vector.shape_cast %403 : vector<1x32xf32> to vector<1x1x32xf32>
    %405 = vector.broadcast %404 : vector<1x1x32xf32> to vector<2x4x32xf32>
    %406 = arith.mulf %401, %405 : vector<2x4x32xf32>
    %cst_170 = arith.constant dense<0.000000e+00> : vector<2x4xf32>
    %407 = vector.multi_reduction <add>, %406, %cst_170 [2] : vector<2x4x32xf32> to vector<2x4xf32>
    %408 = vector.shape_cast %407 : vector<2x4xf32> to vector<2x4x1xf32>
    %c0_171 = arith.constant 0 : index
    %c0_172 = arith.constant 0 : index
    %c0_173 = arith.constant 0 : index
    %409 = vector.load %arg2[%c0_171, %c0_172, %c0_173] : memref<2x4x1xf32, #tpu.memory_space<vmem>>, vector<2x4x1xf32>
    %410 = arith.addf %408, %409 : vector<2x4x1xf32>
    %cst_174 = arith.constant dense<0xFF800000> : vector<2x1xf32>
    %411 = vector.multi_reduction <maximumf>, %410, %cst_174 [1] : vector<2x4x1xf32> to vector<2x1xf32>
    %412 = vector.shape_cast %411 : vector<2x1xf32> to vector<2x1x1xf32>
    %413 = vector.broadcast %412 : vector<2x1x1xf32> to vector<2x4x1xf32>
    %414 = arith.subf %410, %413 : vector<2x4x1xf32>
    %415 = math.exp %414 : vector<2x4x1xf32>
    %cst_175 = arith.constant dense<0.000000e+00> : vector<2x1xf32>
    %416 = vector.multi_reduction <add>, %415, %cst_175 [1] : vector<2x4x1xf32> to vector<2x1xf32>
    %417 = vector.shape_cast %416 : vector<2x1xf32> to vector<2x1x1xf32>
    %418 = vector.broadcast %417 : vector<2x1x1xf32> to vector<2x4x1xf32>
    %419 = arith.divf %415, %418 : vector<2x4x1xf32>
    %420 = vector.broadcast %419 : vector<2x4x1xf32> to vector<2x4x32xf32>
    %421 = arith.mulf %420, %402 : vector<2x4x32xf32>
    %cst_176 = arith.constant dense<0.000000e+00> : vector<2x32xf32>
    %422 = vector.multi_reduction <add>, %421, %cst_176 [1] : vector<2x4x32xf32> to vector<2x32xf32>
    %c0_177 = arith.constant 0 : index
    %c0_178 = arith.constant 0 : index
    %423 = vector.load %arg22[%c0_177, %c0_178] : memref<2x32xf32, #tpu.memory_space<vmem>>, vector<2x32xf32>
    tpu.vector_store %arg22[%c0_177, %c0_178], %422 {strides = array<i32>} : memref<2x32xf32, #tpu.memory_space<vmem>>, vector<2x32xf32>,
    return
  }
}

</mosaic_0001>

<llo_original>
// kernel: chinese_bag_bert_encoder.1
$region0: #{chinese_bag_bert_encoder.1}
  #allocation0 [shape = 'u32[]', space=smem, size = 0x4, offset = 0x4, fixed_abs, tag = 'smem constant byte address 0x4 - core index']
  #allocation1 [shape = 'u32[72,128]{1,0:T(1,128)}', space=vmem, size = 0x9000, scoped, tag = 'internal scratch']
  %s0 = inlined_call_operand.vmem [shape: f32[64,32], index: 0, kind: input, shape index: {}]
  %s1 = inlined_call_operand.vmem [shape: f32[8,8], index: 1, kind: input, shape index: {}]
  %s2 = inlined_call_operand.vmem [shape: f32[2,4,1], index: 2, kind: input, shape index: {}]
  %s3 = inlined_call_operand.vmem [shape: f32[1,32], index: 3, kind: input, shape index: {}]
  %s4 = inlined_call_operand.vmem [shape: f32[1,32], index: 4, kind: input, shape index: {}, may-alias: {4,18,20}]
  %s5 = inlined_call_operand.vmem [shape: bf16[2,32,96], index: 5, kind: input, shape index: {}]
  %s6 = inlined_call_operand.vmem [shape: f32[2,1,96], index: 6, kind: input, shape index: {}]
  %s7 = inlined_call_operand.vmem [shape: bf16[2,32,32], index: 7, kind: input, shape index: {}]
  %s8 = inlined_call_operand.vmem [shape: f32[2,1,32], index: 8, kind: input, shape index: {}, may-alias: {8,10,14,16}]
  %s9 = inlined_call_operand.vmem [shape: f32[2,1,32], index: 9, kind: input, shape index: {}, may-alias: {9,15}]
  %s10 = inlined_call_operand.vmem [shape: f32[2,1,32], index: 10, kind: input, shape index: {}, may-alias: {8,10,14,16}]
  %s11 = inlined_call_operand.vmem [shape: bf16[2,32,64], index: 11, kind: input, shape index: {}]
  %s12 = inlined_call_operand.vmem [shape: f32[2,1,64], index: 12, kind: input, shape index: {}]
  %s13 = inlined_call_operand.vmem [shape: bf16[2,64,32], index: 13, kind: input, shape index: {}]
  %s14 = inlined_call_operand.vmem [shape: f32[2,1,32], index: 14, kind: input, shape index: {}, may-alias: {8,10,14,16}]
  %s15 = inlined_call_operand.vmem [shape: f32[2,1,32], index: 15, kind: input, shape index: {}, may-alias: {9,15}]
  %s16 = inlined_call_operand.vmem [shape: f32[2,1,32], index: 16, kind: input, shape index: {}, may-alias: {8,10,14,16}]
  %s17 = inlined_call_operand.vmem [shape: bf16[32,32], index: 17, kind: input, shape index: {}]
  %s18 = inlined_call_operand.vmem [shape: f32[1,32], index: 18, kind: input, shape index: {}, may-alias: {4,18,20}]
  %s19 = inlined_call_operand.vmem [shape: bf16[32,32], index: 19, kind: input, shape index: {}]
  %s20 = inlined_call_operand.vmem [shape: f32[1,32], index: 20, kind: input, shape index: {}, may-alias: {4,18,20}]
  %s21 = inlined_call_operand.vmem [shape: f32[1,32], index: 21, kind: input, shape index: {}]
  %s22 = inlined_call_operand.hbm [shape: f32[2,32], index: 22, kind: output, shape index: {}]
  %s23 = sld [smem:[#allocation0]]
  $region98: #{chinese_bag_bert_encoder.1} parent=0
    _
  %s25 = ssub.s32 1, %s23
  %s26 = scalar_select 0, %s25, %s23
  $region1: #{chinese_bag_bert_encoder.1} parent=0
    #allocation2 [shape = 'u8[1024]{0}', space=vmem, size = 0x400, scoped, tag = 'output window, operand 0, single buffered']
    #allocation3 [shape = 's32[1]{0}', space=sflag, size = 0x4, scoped, tag = 'scoped memory for chinese_bag_bert_encoder.1']
    %27 = vsyncpa [#allocation3], 0
    // Predicated region
    $region2: #{chinese_bag_bert_encoder.1} parent=1 // pred_check
      _
    $region3: #{chinese_bag_bert_encoder.1} parent=1 // pred_check_branch
      %29 = sbr.rel (0) target = $region5
    $region4: #{chinese_bag_bert_encoder.1} parent=1 // pred_region
      _
    $region5: #{chinese_bag_bert_encoder.1} parent=1 // pred_fallthru
      _
    // Predicated region
    $region6: #{chinese_bag_bert_encoder.1} parent=1 // pred_check
      _
    $region7: #{chinese_bag_bert_encoder.1} parent=1 // pred_check_branch
      %31 = sbr.rel (0) target = $region9
    $region8: #{chinese_bag_bert_encoder.1} parent=1 // pred_region
      _
    $region9: #{chinese_bag_bert_encoder.1} parent=1 // pred_fallthru
      _
    // Predicated region
    $region10: #{chinese_bag_bert_encoder.1} parent=1 // pred_check
      _
    $region11: #{chinese_bag_bert_encoder.1} parent=1 // pred_check_branch
      %33 = sbr.rel (0) target = $region13
    $region12: #{chinese_bag_bert_encoder.1} parent=1 // pred_region
      _
    $region13: #{chinese_bag_bert_encoder.1} parent=1 // pred_fallthru
      _
    // Predicated region
    $region14: #{chinese_bag_bert_encoder.1} parent=1 // pred_check
      _
    $region15: #{chinese_bag_bert_encoder.1} parent=1 // pred_check_branch
      %35 = sbr.rel (0) target = $region17
    $region16: #{chinese_bag_bert_encoder.1} parent=1 // pred_region
      _
    $region17: #{chinese_bag_bert_encoder.1} parent=1 // pred_fallthru
      _
    // Predicated region
    $region18: #{chinese_bag_bert_encoder.1} parent=1 // pred_check
      _
    $region19: #{chinese_bag_bert_encoder.1} parent=1 // pred_check_branch
      %37 = sbr.rel (0) target = $region21
    $region20: #{chinese_bag_bert_encoder.1} parent=1 // pred_region
      _
    $region21: #{chinese_bag_bert_encoder.1} parent=1 // pred_fallthru
      _
    // Predicated region
    $region22: #{chinese_bag_bert_encoder.1} parent=1 // pred_check
      _
    $region23: #{chinese_bag_bert_encoder.1} parent=1 // pred_check_branch
      %39 = sbr.rel (0) target = $region25
    $region24: #{chinese_bag_bert_encoder.1} parent=1 // pred_region
      _
    $region25: #{chinese_bag_bert_encoder.1} parent=1 // pred_fallthru
      _
    // Predicated region
    $region26: #{chinese_bag_bert_encoder.1} parent=1 // pred_check
      _
    $region27: #{chinese_bag_bert_encoder.1} parent=1 // pred_check_branch
      %41 = sbr.rel (0) target = $region29
    $region28: #{chinese_bag_bert_encoder.1} parent=1 // pred_region
      _
    $region29: #{chinese_bag_bert_encoder.1} parent=1 // pred_fallthru
      _
    // Predicated region
    $region30: #{chinese_bag_bert_encoder.1} parent=1 // pred_check
      _
    $region31: #{chinese_bag_bert_encoder.1} parent=1 // pred_check_branch
      %43 = sbr.rel (0) target = $region33
    $region32: #{chinese_bag_bert_encoder.1} parent=1 // pred_region
      _
    $region33: #{chinese_bag_bert_encoder.1} parent=1 // pred_fallthru
      _
    // Predicated region
    $region34: #{chinese_bag_bert_encoder.1} parent=1 // pred_check
      _
    $region35: #{chinese_bag_bert_encoder.1} parent=1 // pred_check_branch
      %45 = sbr.rel (0) target = $region37
    $region36: #{chinese_bag_bert_encoder.1} parent=1 // pred_region
      _
    $region37: #{chinese_bag_bert_encoder.1} parent=1 // pred_fallthru
      _
    // Predicated region
    $region38: #{chinese_bag_bert_encoder.1} parent=1 // pred_check
      _
    $region39: #{chinese_bag_bert_encoder.1} parent=1 // pred_check_branch
      %47 = sbr.rel (0) target = $region41
    $region40: #{chinese_bag_bert_encoder.1} parent=1 // pred_region
      _
    $region41: #{chinese_bag_bert_encoder.1} parent=1 // pred_fallthru
      _
    // Predicated region
    $region42: #{chinese_bag_bert_encoder.1} parent=1 // pred_check
      _
    $region43: #{chinese_bag_bert_encoder.1} parent=1 // pred_check_branch
      %49 = sbr.rel (0) target = $region45
    $region44: #{chinese_bag_bert_encoder.1} parent=1 // pred_region
      _
    $region45: #{chinese_bag_bert_encoder.1} parent=1 // pred_fallthru
      _
    // Predicated region
    $region46: #{chinese_bag_bert_encoder.1} parent=1 // pred_check
      _
    $region47: #{chinese_bag_bert_encoder.1} parent=1 // pred_check_branch
      %51 = sbr.rel (0) target = $region49
    $region48: #{chinese_bag_bert_encoder.1} parent=1 // pred_region
      _
    $region49: #{chinese_bag_bert_encoder.1} parent=1 // pred_fallthru
      _
    // Predicated region
    $region50: #{chinese_bag_bert_encoder.1} parent=1 // pred_check
      _
    $region51: #{chinese_bag_bert_encoder.1} parent=1 // pred_check_branch
      %53 = sbr.rel (0) target = $region53
    $region52: #{chinese_bag_bert_encoder.1} parent=1 // pred_region
      _
    $region53: #{chinese_bag_bert_encoder.1} parent=1 // pred_fallthru
      _
    // Predicated region
    $region54: #{chinese_bag_bert_encoder.1} parent=1 // pred_check
      _
    $region55: #{chinese_bag_bert_encoder.1} parent=1 // pred_check_branch
      %55 = sbr.rel (0) target = $region57
    $region56: #{chinese_bag_bert_encoder.1} parent=1 // pred_region
      _
    $region57: #{chinese_bag_bert_encoder.1} parent=1 // pred_fallthru
      _
    // Predicated region
    $region58: #{chinese_bag_bert_encoder.1} parent=1 // pred_check
      _
    $region59: #{chinese_bag_bert_encoder.1} parent=1 // pred_check_branch
      %57 = sbr.rel (0) target = $region61
    $region60: #{chinese_bag_bert_encoder.1} parent=1 // pred_region
      _
    $region61: #{chinese_bag_bert_encoder.1} parent=1 // pred_fallthru
      _
    // Predicated region
    $region62: #{chinese_bag_bert_encoder.1} parent=1 // pred_check
      _
    $region63: #{chinese_bag_bert_encoder.1} parent=1 // pred_check_branch
      %59 = sbr.rel (0) target = $region65
    $region64: #{chinese_bag_bert_encoder.1} parent=1 // pred_region
      _
    $region65: #{chinese_bag_bert_encoder.1} parent=1 // pred_fallthru
      _
    // Predicated region
    $region66: #{chinese_bag_bert_encoder.1} parent=1 // pred_check
      _
    $region67: #{chinese_bag_bert_encoder.1} parent=1 // pred_check_branch
      %61 = sbr.rel (0) target = $region69
    $region68: #{chinese_bag_bert_encoder.1} parent=1 // pred_region
      _
    $region69: #{chinese_bag_bert_encoder.1} parent=1 // pred_fallthru
      _
    // Predicated region
    $region70: #{chinese_bag_bert_encoder.1} parent=1 // pred_check
      _
    $region71: #{chinese_bag_bert_encoder.1} parent=1 // pred_check_branch
      %63 = sbr.rel (0) target = $region73
    $region72: #{chinese_bag_bert_encoder.1} parent=1 // pred_region
      _
    $region73: #{chinese_bag_bert_encoder.1} parent=1 // pred_fallthru
      _
    // Predicated region
    $region74: #{chinese_bag_bert_encoder.1} parent=1 // pred_check
      _
    $region75: #{chinese_bag_bert_encoder.1} parent=1 // pred_check_branch
      %65 = sbr.rel (0) target = $region77
    $region76: #{chinese_bag_bert_encoder.1} parent=1 // pred_region
      _
    $region77: #{chinese_bag_bert_encoder.1} parent=1 // pred_fallthru
      _
    // Predicated region
    $region78: #{chinese_bag_bert_encoder.1} parent=1 // pred_check
      _
    $region79: #{chinese_bag_bert_encoder.1} parent=1 // pred_check_branch
      %67 = sbr.rel (0) target = $region81
    $region80: #{chinese_bag_bert_encoder.1} parent=1 // pred_region
      _
    $region81: #{chinese_bag_bert_encoder.1} parent=1 // pred_fallthru
      _
    // Predicated region
    $region82: #{chinese_bag_bert_encoder.1} parent=1 // pred_check
      _
    $region83: #{chinese_bag_bert_encoder.1} parent=1 // pred_check_branch
      %69 = sbr.rel (0) target = $region85
    $region84: #{chinese_bag_bert_encoder.1} parent=1 // pred_region
      _
    $region85: #{chinese_bag_bert_encoder.1} parent=1 // pred_fallthru
      _
    // Predicated region
    $region86: #{chinese_bag_bert_encoder.1} parent=1 // pred_check
      _
    $region87: #{chinese_bag_bert_encoder.1} parent=1 // pred_check_branch
      %71 = sbr.rel (0) target = $region89
    $region88: #{chinese_bag_bert_encoder.1} parent=1 // pred_region
      _
    $region89: #{chinese_bag_bert_encoder.1} parent=1 // pred_fallthru
      _
    %v73 = vld [vmem:[%s0] sm:$0xff]
    %v74 = vld [vmem:[%s0 + $0x8] sm:$0xff]
    %v75 = vld [vmem:[%s0 + $0x10] sm:$0xff]
    %v76 = vld [vmem:[%s0 + $0x18] sm:$0xff]
    %v77 = vld [vmem:[%s0 + $0x20] sm:$0xff]
    %v78 = vld [vmem:[%s0 + $0x28] sm:$0xff]
    %v79 = vld [vmem:[%s0 + $0x30] sm:$0xff]
    %v80 = vld [vmem:[%s0 + $0x38] sm:$0xff]
    %v81 = vld [vmem:[%s3] sm:$0x1]
    %v82 = vld [vmem:[%s4] sm:$0x1]
    %vm83 = vcmask 261120
    %v84 = vsel %vm83, %v73, 0.0
    %85 = vadd.xlane.f32.xlu0 %v84
    %v86 = vpop.xlane.xlu0 %85
    %v87 = vsel %vm83, %v74, 0.0
    %88 = vadd.xlane.f32.xlu0 %v87
    %v89 = vpop.xlane.xlu0 %88
    %v90 = vsel %vm83, %v75, 0.0
    %91 = vadd.xlane.f32.xlu0 %v90
    %v92 = vpop.xlane.xlu0 %91
    %v93 = vsel %vm83, %v76, 0.0
    %94 = vadd.xlane.f32.xlu0 %v93
    %v95 = vpop.xlane.xlu0 %94
    %v96 = vsel %vm83, %v77, 0.0
    %97 = vadd.xlane.f32.xlu0 %v96
    %v98 = vpop.xlane.xlu0 %97
    %v99 = vsel %vm83, %v78, 0.0
    %100 = vadd.xlane.f32.xlu0 %v99
    %v101 = vpop.xlane.xlu0 %100
    %v102 = vsel %vm83, %v79, 0.0
    %103 = vadd.xlane.f32.xlu0 %v102
    %v104 = vpop.xlane.xlu0 %103
    %v105 = vsel %vm83, %v80, 0.0
    %106 = vadd.xlane.f32.xlu0 %v105
    %v107 = vpop.xlane.xlu0 %106
    %v108 = vrcp.pop 32.0
    %v109 = vmul.f32 32.0, %v108
    %v110 = vsub.f32 1.0, %v109
    %v111 = vmul.f32 %v108, %v110
    %v112 = vadd.f32 %v108, %v111
    %vm113 = vweird.f32 %v108
    %v114 = vsel %vm113, %v108, %v112
    %v115 = vmul.f32 %v86, %v114
    %v116 = vmul.f32 %v89, %v114
    %v117 = vmul.f32 %v92, %v114
    %v118 = vmul.f32 %v95, %v114
    %v119 = vmul.f32 %v98, %v114
    %v120 = vmul.f32 %v101, %v114
    %v121 = vmul.f32 %v104, %v114
    %v122 = vmul.f32 %v107, %v114
    %v123 = vsub.f32 %v73, %v115
    %v124 = vsub.f32 %v74, %v116
    %v125 = vsub.f32 %v75, %v117
    %v126 = vsub.f32 %v76, %v118
    %v127 = vsub.f32 %v77, %v119
    %v128 = vsub.f32 %v78, %v120
    %v129 = vsub.f32 %v79, %v121
    %v130 = vsub.f32 %v80, %v122
    %v131 = vmul.f32 %v123, %v123
    %v132 = vmul.f32 %v124, %v124
    %v133 = vmul.f32 %v125, %v125
    %v134 = vmul.f32 %v126, %v126
    %v135 = vmul.f32 %v127, %v127
    %v136 = vmul.f32 %v128, %v128
    %v137 = vmul.f32 %v129, %v129
    %v138 = vmul.f32 %v130, %v130
    %v139 = vsel %vm83, %v131, 0.0
    %140 = vadd.xlane.f32.xlu0 %v139
    %v141 = vpop.xlane.xlu0 %140
    %v142 = vsel %vm83, %v132, 0.0
    %143 = vadd.xlane.f32.xlu0 %v142
    %v144 = vpop.xlane.xlu0 %143
    %v145 = vsel %vm83, %v133, 0.0
    %146 = vadd.xlane.f32.xlu0 %v145
    %v147 = vpop.xlane.xlu0 %146
    %v148 = vsel %vm83, %v134, 0.0
    %149 = vadd.xlane.f32.xlu0 %v148
    %v150 = vpop.xlane.xlu0 %149
    %v151 = vsel %vm83, %v135, 0.0
    %152 = vadd.xlane.f32.xlu0 %v151
    %v153 = vpop.xlane.xlu0 %152
    %v154 = vsel %vm83, %v136, 0.0
    %155 = vadd.xlane.f32.xlu0 %v154
    %v156 = vpop.xlane.xlu0 %155
    %v157 = vsel %vm83, %v137, 0.0
    %158 = vadd.xlane.f32.xlu0 %v157
    %v159 = vpop.xlane.xlu0 %158
    %v160 = vsel %vm83, %v138, 0.0
    %161 = vadd.xlane.f32.xlu0 %v160
    %v162 = vpop.xlane.xlu0 %161
    %v163 = vmul.f32 %v141, %v114
    %v164 = vmul.f32 %v144, %v114
    %v165 = vmul.f32 %v147, %v114
    %v166 = vmul.f32 %v150, %v114
    %v167 = vmul.f32 %v153, %v114
    %v168 = vmul.f32 %v156, %v114
    %v169 = vmul.f32 %v159, %v114
    %v170 = vmul.f32 %v162, %v114
    %v171 = vadd.f32 %v163, 1e-12
    %v172 = vadd.f32 %v164, 1e-12
    %v173 = vadd.f32 %v165, 1e-12
    %v174 = vadd.f32 %v166, 1e-12
    %v175 = vadd.f32 %v167, 1e-12
    %v176 = vadd.f32 %v168, 1e-12
    %v177 = vadd.f32 %v169, 1e-12
    %v178 = vadd.f32 %v170, 1e-12
    %v179 = vrsqrt.pop %v171
    %v180 = vmul.f32 %v179, %v171
    %v181 = vmul.f32 %v180, %v179
    %v182 = vmul.f32 0.5, %v181
    %v183 = vsub.f32 1.5, %v182
    %v184 = vmul.f32 %v179, %v183
    %vm185 = vweird.f32 %v171
    %vm186 = vweird.f32 %v179
    %vm187 = vmor %vm185, %vm186
    %v188 = vsel %vm187, %v179, %v184
    %v189 = vrsqrt.pop %v172
    %v190 = vmul.f32 %v189, %v172
    %v191 = vmul.f32 %v190, %v189
    %v192 = vmul.f32 0.5, %v191
    %v193 = vsub.f32 1.5, %v192
    %v194 = vmul.f32 %v189, %v193
    %vm195 = vweird.f32 %v172
    %vm196 = vweird.f32 %v189
    %vm197 = vmor %vm195, %vm196
    %v198 = vsel %vm197, %v189, %v194
    %v199 = vrsqrt.pop %v173
    %v200 = vmul.f32 %v199, %v173
    %v201 = vmul.f32 %v200, %v199
    %v202 = vmul.f32 0.5, %v201
    %v203 = vsub.f32 1.5, %v202
    %v204 = vmul.f32 %v199, %v203
    %vm205 = vweird.f32 %v173
    %vm206 = vweird.f32 %v199
    %vm207 = vmor %vm205, %vm206
    %v208 = vsel %vm207, %v199, %v204
    %v209 = vrsqrt.pop %v174
    %v210 = vmul.f32 %v209, %v174
    %v211 = vmul.f32 %v210, %v209
    %v212 = vmul.f32 0.5, %v211
    %v213 = vsub.f32 1.5, %v212
    %v214 = vmul.f32 %v209, %v213
    %vm215 = vweird.f32 %v174
    %vm216 = vweird.f32 %v209
    %vm217 = vmor %vm215, %vm216
    %v218 = vsel %vm217, %v209, %v214
    %v219 = vrsqrt.pop %v175
    %v220 = vmul.f32 %v219, %v175
    %v221 = vmul.f32 %v220, %v219
    %v222 = vmul.f32 0.5, %v221
    %v223 = vsub.f32 1.5, %v222
    %v224 = vmul.f32 %v219, %v223
    %vm225 = vweird.f32 %v175
    %vm226 = vweird.f32 %v219
    %vm227 = vmor %vm225, %vm226
    %v228 = vsel %vm227, %v219, %v224
    %v229 = vrsqrt.pop %v176
    %v230 = vmul.f32 %v229, %v176
    %v231 = vmul.f32 %v230, %v229
    %v232 = vmul.f32 0.5, %v231
    %v233 = vsub.f32 1.5, %v232
    %v234 = vmul.f32 %v229, %v233
    %vm235 = vweird.f32 %v176
    %vm236 = vweird.f32 %v229
    %vm237 = vmor %vm235, %vm236
    %v238 = vsel %vm237, %v229, %v234
    %v239 = vrsqrt.pop %v177
    %v240 = vmul.f32 %v239, %v177
    %v241 = vmul.f32 %v240, %v239
    %v242 = vmul.f32 0.5, %v241
    %v243 = vsub.f32 1.5, %v242
    %v244 = vmul.f32 %v239, %v243
    %vm245 = vweird.f32 %v177
    %vm246 = vweird.f32 %v239
    %vm247 = vmor %vm245, %vm246
    %v248 = vsel %vm247, %v239, %v244
    %v249 = vrsqrt.pop %v178
    %v250 = vmul.f32 %v249, %v178
    %v251 = vmul.f32 %v250, %v249
    %v252 = vmul.f32 0.5, %v251
    %v253 = vsub.f32 1.5, %v252
    %v254 = vmul.f32 %v249, %v253
    %vm255 = vweird.f32 %v178
    %vm256 = vweird.f32 %v249
    %vm257 = vmor %vm255, %vm256
    %v258 = vsel %vm257, %v249, %v254
    %v259 = vmul.f32 %v123, %v188
    %v260 = vmul.f32 %v124, %v198
    %v261 = vmul.f32 %v125, %v208
    %v262 = vmul.f32 %v126, %v218
    %v263 = vmul.f32 %v127, %v228
    %v264 = vmul.f32 %v128, %v238
    %v265 = vmul.f32 %v129, %v248
    %v266 = vmul.f32 %v130, %v258
    %v268 = vperm.slane %v81, 0
    %v270 = vmul.f32 %v259, %v268
    %v271 = vmul.f32 %v260, %v268
    %v272 = vmul.f32 %v261, %v268
    %v273 = vmul.f32 %v262, %v268
    %v274 = vmul.f32 %v263, %v268
    %v275 = vmul.f32 %v264, %v268
    %v276 = vmul.f32 %v265, %v268
    %v277 = vmul.f32 %v266, %v268
    %v279 = vperm.slane %v82, 0
    %v281 = vadd.f32 %v270, %v279
    %v282 = vadd.f32 %v271, %v279
    %v283 = vadd.f32 %v272, %v279
    %v284 = vadd.f32 %v273, %v279
    %v285 = vadd.f32 %v274, %v279
    %v286 = vadd.f32 %v275, %v279
    %v287 = vadd.f32 %v276, %v279
    %v288 = vadd.f32 %v277, %v279
    %v289 = vld [vmem:[%s1] sm:$0xff]
    %v291 = vrot.slane %v289, 1
    %v292 = vrot.slane %v289, 2
    %v293 = vrot.slane %v289, 3
    %v294 = vrot.slane %v289, 4
    %v295 = vrot.slane %v289, 5
    %v296 = vrot.slane %v289, 6
    %v297 = vrot.slane %v289, 7
    %v298 = vpack.c.bf16 %v282, %v281
    %v299 = vpack.c.bf16 %v284, %v283
    %v300 = vpack.c.bf16 %v286, %v285
    %v301 = vpack.c.bf16 %v288, %v287
    %v302 = vld [vmem:[%s5] sm:$0xf]
    %v303 = vld [vmem:[%s5 + $0x4] sm:$0xf]
    %v304 = vld [vmem:[%s5 + $0x8] sm:$0xf]
    %v305 = vld [vmem:[%s5 + $0xc] sm:$0xf]
    %v306 = vld [vmem:[%s6] sm:$0x1]
    %v308 = vperm.slane %v306, 0
    %v314 = vunpack.c.l.b16 %v302
    %v315 = vunpack.c.l.b16 %v303
    %v316 = vunpack.c.l.b16 %v304
    %v317 = vunpack.c.l.b16 %v305
    %v318 = vpack.c.b16 %v315, %v314
    %v319 = vpack.c.b16 %v317, %v316
    %v323 = vsel %vm83, %v298, 0
    %v326 = vsel %vm83, %v299, 0
    %v329 = vsel %vm83, %v300, 0
    %v332 = vsel %vm83, %v301, 0
    %334 = vmatpush.bf16.msra.mxu0 0
    %335 = vmatpush.bf16.msra.mxu0 0
    %336 = vmatpush.bf16.msra.mxu0 0
    %337 = vmatpush.bf16.msra.mxu0 0
    %338 = vmatpush.bf16.msra.mxu0 0
    %339 = vmatpush.bf16.msra.mxu0 0
    %340 = vmatpush.bf16.msra.mxu0 %v319
    %341 = vmatpush.bf16.msra.mxu0 %v318
    %342 = vmatmul.bf16.gmra.mxu0 %v323
    %v343 = vpop.f32.mrf.mxu0
    %v344 = vadd.f32 %v308, %v343
    %v345 = vpop.f32.mrf.mxu0
    %v346 = vadd.f32 %v308, %v345
    %347 = vmatmul.bf16.gmra.mxu0 %v326
    %v348 = vpop.f32.mrf.mxu0
    %v349 = vadd.f32 %v308, %v348
    %v350 = vpop.f32.mrf.mxu0
    %v351 = vadd.f32 %v308, %v350
    %352 = vmatmul.bf16.gmra.mxu0 %v329
    %v353 = vpop.f32.mrf.mxu0
    %v354 = vadd.f32 %v308, %v353
    %v355 = vpop.f32.mrf.mxu0
    %v356 = vadd.f32 %v308, %v355
    %357 = vmatmul.bf16.gmra.mxu0 %v332
    %v358 = vpop.f32.mrf.mxu0
    %v359 = vadd.f32 %v308, %v358
    %v360 = vpop.f32.mrf.mxu0
    %v361 = vadd.f32 %v308, %v360
    %362 = vdwg.mxu0
    %364 = vrot.lane.b32.xlu0 %v344, 96
    %v365 = vpop.permute.xlu0 %364
    %vm366 = vcmask 64512
    %v367 = vsel %vm366, %v344, 0
    %v369 = vsel %vm366, %v365, 0
    %371 = vmatpush.xpose.msra.mxu0 0.0
    %372 = vmatpush.xpose.msra.mxu0 0.0
    %373 = vmatpush.xpose.msra.mxu0 0.0
    %374 = vmatpush.xpose.msra.mxu0 0.0
    %375 = vmatpush.xpose.msra.mxu0 0.0
    %376 = vmatpush.xpose.msra.mxu0 0.0
    %377 = vmatpush.xpose.msra.mxu0 0.0
    %378 = vmatpush.xpose.msra.mxu0 0.0
    %379 = vmatpush.xpose.msra.mxu0 0.0
    %380 = vmatpush.xpose.msra.mxu0 0.0
    %381 = vmatpush.xpose.msra.mxu0 0.0
    %382 = vmatpush.xpose.msra.mxu0 0.0
    %383 = vmatpush.xpose.msra.mxu0 0.0
    %384 = vmatpush.xpose.msra.mxu0 0.0
    %385 = vmatpush.xpose.msra.mxu0 0.0
    %386 = vmatpush.xpose.msra.mxu0 %v369
    %387 = vmatmul.f32.gmra.mxu0 %v367
    %v388 = vpop.f32.mrf.mxu0
    %v389 = vadd.f32 0.0, %v388
    %390 = vdwg.mxu0
    %392 = vrot.lane.b32.xlu0 %v346, 96
    %v393 = vpop.permute.xlu0 %392
    %v394 = vsel %vm366, %v346, 0
    %v396 = vsel %vm366, %v393, 0
    %398 = vmatpush.xpose.msra.mxu0 0.0
    %399 = vmatpush.xpose.msra.mxu0 0.0
    %400 = vmatpush.xpose.msra.mxu0 0.0
    %401 = vmatpush.xpose.msra.mxu0 0.0
    %402 = vmatpush.xpose.msra.mxu0 0.0
    %403 = vmatpush.xpose.msra.mxu0 0.0
    %404 = vmatpush.xpose.msra.mxu0 0.0
    %405 = vmatpush.xpose.msra.mxu0 0.0
    %406 = vmatpush.xpose.msra.mxu0 0.0
    %407 = vmatpush.xpose.msra.mxu0 0.0
    %408 = vmatpush.xpose.msra.mxu0 0.0
    %409 = vmatpush.xpose.msra.mxu0 0.0
    %410 = vmatpush.xpose.msra.mxu0 0.0
    %411 = vmatpush.xpose.msra.mxu0 0.0
    %412 = vmatpush.xpose.msra.mxu0 0.0
    %413 = vmatpush.xpose.msra.mxu0 %v396
    %414 = vmatmul.f32.gmra.mxu0 %v394
    %v415 = vpop.f32.mrf.mxu0
    %v416 = vadd.f32 0.0, %v415
    %417 = vdwg.mxu0
    %419 = vrot.lane.b32.xlu0 %v349, 96
    %v420 = vpop.permute.xlu0 %419
    %v421 = vsel %vm366, %v349, 0
    %v423 = vsel %vm366, %v420, 0
    %425 = vmatpush.xpose.msra.mxu0 0.0
    %426 = vmatpush.xpose.msra.mxu0 0.0
    %427 = vmatpush.xpose.msra.mxu0 0.0
    %428 = vmatpush.xpose.msra.mxu0 0.0
    %429 = vmatpush.xpose.msra.mxu0 0.0
    %430 = vmatpush.xpose.msra.mxu0 0.0
    %431 = vmatpush.xpose.msra.mxu0 0.0
    %432 = vmatpush.xpose.msra.mxu0 0.0
    %433 = vmatpush.xpose.msra.mxu0 0.0
    %434 = vmatpush.xpose.msra.mxu0 0.0
    %435 = vmatpush.xpose.msra.mxu0 0.0
    %436 = vmatpush.xpose.msra.mxu0 0.0
    %437 = vmatpush.xpose.msra.mxu0 0.0
    %438 = vmatpush.xpose.msra.mxu0 0.0
    %439 = vmatpush.xpose.msra.mxu0 0.0
    %440 = vmatpush.xpose.msra.mxu0 %v423
    %441 = vmatmul.f32.gmra.mxu0 %v421
    %v442 = vpop.f32.mrf.mxu0
    %v443 = vadd.f32 0.0, %v442
    %444 = vdwg.mxu0
    %446 = vrot.lane.b32.xlu0 %v351, 96
    %v447 = vpop.permute.xlu0 %446
    %v448 = vsel %vm366, %v351, 0
    %v450 = vsel %vm366, %v447, 0
    %452 = vmatpush.xpose.msra.mxu0 0.0
    %453 = vmatpush.xpose.msra.mxu0 0.0
    %454 = vmatpush.xpose.msra.mxu0 0.0
    %455 = vmatpush.xpose.msra.mxu0 0.0
    %456 = vmatpush.xpose.msra.mxu0 0.0
    %457 = vmatpush.xpose.msra.mxu0 0.0
    %458 = vmatpush.xpose.msra.mxu0 0.0
    %459 = vmatpush.xpose.msra.mxu0 0.0
    %460 = vmatpush.xpose.msra.mxu0 0.0
    %461 = vmatpush.xpose.msra.mxu0 0.0
    %462 = vmatpush.xpose.msra.mxu0 0.0
    %463 = vmatpush.xpose.msra.mxu0 0.0
    %464 = vmatpush.xpose.msra.mxu0 0.0
    %465 = vmatpush.xpose.msra.mxu0 0.0
    %466 = vmatpush.xpose.msra.mxu0 0.0
    %467 = vmatpush.xpose.msra.mxu0 %v450
    %468 = vmatmul.f32.gmra.mxu0 %v448
    %v469 = vpop.f32.mrf.mxu0
    %v470 = vadd.f32 0.0, %v469
    %471 = vdwg.mxu0
    %473 = vrot.lane.b32.xlu0 %v354, 96
    %v474 = vpop.permute.xlu0 %473
    %v475 = vsel %vm366, %v354, 0
    %v477 = vsel %vm366, %v474, 0
    %479 = vmatpush.xpose.msra.mxu0 0.0
    %480 = vmatpush.xpose.msra.mxu0 0.0
    %481 = vmatpush.xpose.msra.mxu0 0.0
    %482 = vmatpush.xpose.msra.mxu0 0.0
    %483 = vmatpush.xpose.msra.mxu0 0.0
    %484 = vmatpush.xpose.msra.mxu0 0.0
    %485 = vmatpush.xpose.msra.mxu0 0.0
    %486 = vmatpush.xpose.msra.mxu0 0.0
    %487 = vmatpush.xpose.msra.mxu0 0.0
    %488 = vmatpush.xpose.msra.mxu0 0.0
    %489 = vmatpush.xpose.msra.mxu0 0.0
    %490 = vmatpush.xpose.msra.mxu0 0.0
    %491 = vmatpush.xpose.msra.mxu0 0.0
    %492 = vmatpush.xpose.msra.mxu0 0.0
    %493 = vmatpush.xpose.msra.mxu0 0.0
    %494 = vmatpush.xpose.msra.mxu0 %v477
    %495 = vmatmul.f32.gmra.mxu0 %v475
    %v496 = vpop.f32.mrf.mxu0
    %v497 = vadd.f32 0.0, %v496
    %498 = vdwg.mxu0
    %500 = vrot.lane.b32.xlu0 %v356, 96
    %v501 = vpop.permute.xlu0 %500
    %v502 = vsel %vm366, %v356, 0
    %v504 = vsel %vm366, %v501, 0
    %506 = vmatpush.xpose.msra.mxu0 0.0
    %507 = vmatpush.xpose.msra.mxu0 0.0
    %508 = vmatpush.xpose.msra.mxu0 0.0
    %509 = vmatpush.xpose.msra.mxu0 0.0
    %510 = vmatpush.xpose.msra.mxu0 0.0
    %511 = vmatpush.xpose.msra.mxu0 0.0
    %512 = vmatpush.xpose.msra.mxu0 0.0
    %513 = vmatpush.xpose.msra.mxu0 0.0
    %514 = vmatpush.xpose.msra.mxu0 0.0
    %515 = vmatpush.xpose.msra.mxu0 0.0
    %516 = vmatpush.xpose.msra.mxu0 0.0
    %517 = vmatpush.xpose.msra.mxu0 0.0
    %518 = vmatpush.xpose.msra.mxu0 0.0
    %519 = vmatpush.xpose.msra.mxu0 0.0
    %520 = vmatpush.xpose.msra.mxu0 0.0
    %521 = vmatpush.xpose.msra.mxu0 %v504
    %522 = vmatmul.f32.gmra.mxu0 %v502
    %v523 = vpop.f32.mrf.mxu0
    %v524 = vadd.f32 0.0, %v523
    %525 = vdwg.mxu0
    %527 = vrot.lane.b32.xlu0 %v359, 96
    %v528 = vpop.permute.xlu0 %527
    %v529 = vsel %vm366, %v359, 0
    %v531 = vsel %vm366, %v528, 0
    %533 = vmatpush.xpose.msra.mxu0 0.0
    %534 = vmatpush.xpose.msra.mxu0 0.0
    %535 = vmatpush.xpose.msra.mxu0 0.0
    %536 = vmatpush.xpose.msra.mxu0 0.0
    %537 = vmatpush.xpose.msra.mxu0 0.0
    %538 = vmatpush.xpose.msra.mxu0 0.0
    %539 = vmatpush.xpose.msra.mxu0 0.0
    %540 = vmatpush.xpose.msra.mxu0 0.0
    %541 = vmatpush.xpose.msra.mxu0 0.0
    %542 = vmatpush.xpose.msra.mxu0 0.0
    %543 = vmatpush.xpose.msra.mxu0 0.0
    %544 = vmatpush.xpose.msra.mxu0 0.0
    %545 = vmatpush.xpose.msra.mxu0 0.0
    %546 = vmatpush.xpose.msra.mxu0 0.0
    %547 = vmatpush.xpose.msra.mxu0 0.0
    %548 = vmatpush.xpose.msra.mxu0 %v531
    %549 = vmatmul.f32.gmra.mxu0 %v529
    %v550 = vpop.f32.mrf.mxu0
    %v551 = vadd.f32 0.0, %v550
    %552 = vdwg.mxu0
    %554 = vrot.lane.b32.xlu0 %v361, 96
    %v555 = vpop.permute.xlu0 %554
    %v556 = vsel %vm366, %v361, 0
    %v558 = vsel %vm366, %v555, 0
    %560 = vmatpush.xpose.msra.mxu0 0.0
    %561 = vmatpush.xpose.msra.mxu0 0.0
    %562 = vmatpush.xpose.msra.mxu0 0.0
    %563 = vmatpush.xpose.msra.mxu0 0.0
    %564 = vmatpush.xpose.msra.mxu0 0.0
    %565 = vmatpush.xpose.msra.mxu0 0.0
    %566 = vmatpush.xpose.msra.mxu0 0.0
    %567 = vmatpush.xpose.msra.mxu0 0.0
    %568 = vmatpush.xpose.msra.mxu0 0.0
    %569 = vmatpush.xpose.msra.mxu0 0.0
    %570 = vmatpush.xpose.msra.mxu0 0.0
    %571 = vmatpush.xpose.msra.mxu0 0.0
    %572 = vmatpush.xpose.msra.mxu0 0.0
    %573 = vmatpush.xpose.msra.mxu0 0.0
    %574 = vmatpush.xpose.msra.mxu0 0.0
    %575 = vmatpush.xpose.msra.mxu0 %v558
    %576 = vmatmul.f32.gmra.mxu0 %v556
    %v577 = vpop.f32.mrf.mxu0
    %v578 = vadd.f32 0.0, %v577
    %579 = vdwg.mxu0
    %v580 = vmul.f32 %v389, 0.35355338
    %v581 = vmul.f32 %v416, 0.35355338
    %v582 = vmul.f32 %v443, 0.35355338
    %v583 = vmul.f32 %v470, 0.35355338
    %v584 = vmul.f32 %v497, 0.35355338
    %v585 = vmul.f32 %v524, 0.35355338
    %v586 = vmul.f32 %v551, 0.35355338
    %v587 = vmul.f32 %v578, 0.35355338
    %v588 = vperm.slane %v289, 0
    %v589 = vperm.slane %v291, 0
    %v590 = vperm.slane %v292, 0
    %v591 = vperm.slane %v293, 0
    %v592 = vperm.slane %v294, 0
    %v593 = vperm.slane %v295, 0
    %v594 = vperm.slane %v296, 0
    %v595 = vperm.slane %v297, 0
    %v604 = vadd.f32 %v580, %v588
    %v605 = vadd.f32 %v581, %v589
    %v606 = vadd.f32 %v582, %v590
    %v607 = vadd.f32 %v583, %v591
    %v608 = vadd.f32 %v584, %v592
    %v609 = vadd.f32 %v585, %v593
    %v610 = vadd.f32 %v586, %v594
    %v611 = vadd.f32 %v587, %v595
    %v612 = vsel %vm366, %v604, -inf
    %613 = vmax.xlane.f32.xlu0 %v612
    %v614 = vpop.xlane.xlu0 %613
    %v615 = vsel %vm366, %v605, -inf
    %616 = vmax.xlane.f32.xlu0 %v615
    %v617 = vpop.xlane.xlu0 %616
    %v618 = vsel %vm366, %v606, -inf
    %619 = vmax.xlane.f32.xlu0 %v618
    %v620 = vpop.xlane.xlu0 %619
    %v621 = vsel %vm366, %v607, -inf
    %622 = vmax.xlane.f32.xlu0 %v621
    %v623 = vpop.xlane.xlu0 %622
    %v624 = vsel %vm366, %v608, -inf
    %625 = vmax.xlane.f32.xlu0 %v624
    %v626 = vpop.xlane.xlu0 %625
    %v627 = vsel %vm366, %v609, -inf
    %628 = vmax.xlane.f32.xlu0 %v627
    %v629 = vpop.xlane.xlu0 %628
    %v630 = vsel %vm366, %v610, -inf
    %631 = vmax.xlane.f32.xlu0 %v630
    %v632 = vpop.xlane.xlu0 %631
    %v633 = vsel %vm366, %v611, -inf
    %634 = vmax.xlane.f32.xlu0 %v633
    %v635 = vpop.xlane.xlu0 %634
    %v636 = vsub.f32 %v604, %v614
    %v637 = vsub.f32 %v605, %v617
    %v638 = vsub.f32 %v606, %v620
    %v639 = vsub.f32 %v607, %v623
    %v640 = vsub.f32 %v608, %v626
    %v641 = vsub.f32 %v609, %v629
    %v642 = vsub.f32 %v610, %v632
    %v643 = vsub.f32 %v611, %v635
    %v644 = vmul.f32 %v636, 1.442695
    %v645 = vpow.pop %v644
    %v646 = vmul.f32 %v637, 1.442695
    %v647 = vpow.pop %v646
    %v648 = vmul.f32 %v638, 1.442695
    %v649 = vpow.pop %v648
    %v650 = vmul.f32 %v639, 1.442695
    %v651 = vpow.pop %v650
    %v652 = vmul.f32 %v640, 1.442695
    %v653 = vpow.pop %v652
    %v654 = vmul.f32 %v641, 1.442695
    %v655 = vpow.pop %v654
    %v656 = vmul.f32 %v642, 1.442695
    %v657 = vpow.pop %v656
    %v658 = vmul.f32 %v643, 1.442695
    %v659 = vpow.pop %v658
    %v660 = vsel %vm366, %v645, 0.0
    %661 = vadd.xlane.f32.xlu0 %v660
    %v662 = vpop.xlane.xlu0 %661
    %v663 = vsel %vm366, %v647, 0.0
    %664 = vadd.xlane.f32.xlu0 %v663
    %v665 = vpop.xlane.xlu0 %664
    %v666 = vsel %vm366, %v649, 0.0
    %667 = vadd.xlane.f32.xlu0 %v666
    %v668 = vpop.xlane.xlu0 %667
    %v669 = vsel %vm366, %v651, 0.0
    %670 = vadd.xlane.f32.xlu0 %v669
    %v671 = vpop.xlane.xlu0 %670
    %v672 = vsel %vm366, %v653, 0.0
    %673 = vadd.xlane.f32.xlu0 %v672
    %v674 = vpop.xlane.xlu0 %673
    %v675 = vsel %vm366, %v655, 0.0
    %676 = vadd.xlane.f32.xlu0 %v675
    %v677 = vpop.xlane.xlu0 %676
    %v678 = vsel %vm366, %v657, 0.0
    %679 = vadd.xlane.f32.xlu0 %v678
    %v680 = vpop.xlane.xlu0 %679
    %v681 = vsel %vm366, %v659, 0.0
    %682 = vadd.xlane.f32.xlu0 %v681
    %v683 = vpop.xlane.xlu0 %682
    %v684 = vrcp.pop %v662
    %v685 = vmul.f32 %v662, %v684
    %v686 = vsub.f32 1.0, %v685
    %v687 = vmul.f32 %v684, %v686
    %v688 = vadd.f32 %v684, %v687
    %vm689 = vweird.f32 %v662
    %vm690 = vweird.f32 %v684
    %vm691 = vmor %vm689, %vm690
    %v692 = vsel %vm691, %v684, %v688
    %v693 = vand.u32 2147483647, %v662
    %vm694 = vcmp.eq.f32.partialorder %v693, 8.507059e+37
    %v695 = vand.u32 %v662, 2147483648
    %v696 = vor.u32 1.1754944e-38, %v695
    %v697 = vsel %vm694, %v696, %v692
    %v698 = vmul.f32 %v645, %v697
    %v699 = vrcp.pop %v665
    %v700 = vmul.f32 %v665, %v699
    %v701 = vsub.f32 1.0, %v700
    %v702 = vmul.f32 %v699, %v701
    %v703 = vadd.f32 %v699, %v702
    %vm704 = vweird.f32 %v665
    %vm705 = vweird.f32 %v699
    %vm706 = vmor %vm704, %vm705
    %v707 = vsel %vm706, %v699, %v703
    %v708 = vand.u32 2147483647, %v665
    %vm709 = vcmp.eq.f32.partialorder %v708, 8.507059e+37
    %v710 = vand.u32 %v665, 2147483648
    %v711 = vor.u32 1.1754944e-38, %v710
    %v712 = vsel %vm709, %v711, %v707
    %v713 = vmul.f32 %v647, %v712
    %v714 = vrcp.pop %v668
    %v715 = vmul.f32 %v668, %v714
    %v716 = vsub.f32 1.0, %v715
    %v717 = vmul.f32 %v714, %v716
    %v718 = vadd.f32 %v714, %v717
    %vm719 = vweird.f32 %v668
    %vm720 = vweird.f32 %v714
    %vm721 = vmor %vm719, %vm720
    %v722 = vsel %vm721, %v714, %v718
    %v723 = vand.u32 2147483647, %v668
    %vm724 = vcmp.eq.f32.partialorder %v723, 8.507059e+37
    %v725 = vand.u32 %v668, 2147483648
    %v726 = vor.u32 1.1754944e-38, %v725
    %v727 = vsel %vm724, %v726, %v722
    %v728 = vmul.f32 %v649, %v727
    %v729 = vrcp.pop %v671
    %v730 = vmul.f32 %v671, %v729
    %v731 = vsub.f32 1.0, %v730
    %v732 = vmul.f32 %v729, %v731
    %v733 = vadd.f32 %v729, %v732
    %vm734 = vweird.f32 %v671
    %vm735 = vweird.f32 %v729
    %vm736 = vmor %vm734, %vm735
    %v737 = vsel %vm736, %v729, %v733
    %v738 = vand.u32 2147483647, %v671
    %vm739 = vcmp.eq.f32.partialorder %v738, 8.507059e+37
    %v740 = vand.u32 %v671, 2147483648
    %v741 = vor.u32 1.1754944e-38, %v740
    %v742 = vsel %vm739, %v741, %v737
    %v743 = vmul.f32 %v651, %v742
    %v744 = vrcp.pop %v674
    %v745 = vmul.f32 %v674, %v744
    %v746 = vsub.f32 1.0, %v745
    %v747 = vmul.f32 %v744, %v746
    %v748 = vadd.f32 %v744, %v747
    %vm749 = vweird.f32 %v674
    %vm750 = vweird.f32 %v744
    %vm751 = vmor %vm749, %vm750
    %v752 = vsel %vm751, %v744, %v748
    %v753 = vand.u32 2147483647, %v674
    %vm754 = vcmp.eq.f32.partialorder %v753, 8.507059e+37
    %v755 = vand.u32 %v674, 2147483648
    %v756 = vor.u32 1.1754944e-38, %v755
    %v757 = vsel %vm754, %v756, %v752
    %v758 = vmul.f32 %v653, %v757
    %v759 = vrcp.pop %v677
    %v760 = vmul.f32 %v677, %v759
    %v761 = vsub.f32 1.0, %v760
    %v762 = vmul.f32 %v759, %v761
    %v763 = vadd.f32 %v759, %v762
    %vm764 = vweird.f32 %v677
    %vm765 = vweird.f32 %v759
    %vm766 = vmor %vm764, %vm765
    %v767 = vsel %vm766, %v759, %v763
    %v768 = vand.u32 2147483647, %v677
    %vm769 = vcmp.eq.f32.partialorder %v768, 8.507059e+37
    %v770 = vand.u32 %v677, 2147483648
    %v771 = vor.u32 1.1754944e-38, %v770
    %v772 = vsel %vm769, %v771, %v767
    %v773 = vmul.f32 %v655, %v772
    %v774 = vrcp.pop %v680
    %v775 = vmul.f32 %v680, %v774
    %v776 = vsub.f32 1.0, %v775
    %v777 = vmul.f32 %v774, %v776
    %v778 = vadd.f32 %v774, %v777
    %vm779 = vweird.f32 %v680
    %vm780 = vweird.f32 %v774
    %vm781 = vmor %vm779, %vm780
    %v782 = vsel %vm781, %v774, %v778
    %v783 = vand.u32 2147483647, %v680
    %vm784 = vcmp.eq.f32.partialorder %v783, 8.507059e+37
    %v785 = vand.u32 %v680, 2147483648
    %v786 = vor.u32 1.1754944e-38, %v785
    %v787 = vsel %vm784, %v786, %v782
    %v788 = vmul.f32 %v657, %v787
    %v789 = vrcp.pop %v683
    %v790 = vmul.f32 %v683, %v789
    %v791 = vsub.f32 1.0, %v790
    %v792 = vmul.f32 %v789, %v791
    %v793 = vadd.f32 %v789, %v792
    %vm794 = vweird.f32 %v683
    %vm795 = vweird.f32 %v789
    %vm796 = vmor %vm794, %vm795
    %v797 = vsel %vm796, %v789, %v793
    %v798 = vand.u32 2147483647, %v683
    %vm799 = vcmp.eq.f32.partialorder %v798, 8.507059e+37
    %v800 = vand.u32 %v683, 2147483648
    %v801 = vor.u32 1.1754944e-38, %v800
    %v802 = vsel %vm799, %v801, %v797
    %v803 = vmul.f32 %v659, %v802
    %804 = vrot.lane.b32.xlu0 %v344, 64
    %v805 = vpop.permute.xlu0 %804
    %v808 = vsel %vm366, %v698, 0
    %810 = vmatpush.msra.mxu0 0.0
    %811 = vmatpush.msra.mxu0 0.0
    %812 = vmatpush.msra.mxu0 0.0
    %813 = vmatpush.msra.mxu0 0.0
    %814 = vmatpush.msra.mxu0 0.0
    %815 = vmatpush.msra.mxu0 0.0
    %816 = vmatpush.msra.mxu0 0.0
    %817 = vmatpush.msra.mxu0 0.0
    %818 = vmatpush.msra.mxu0 0.0
    %819 = vmatpush.msra.mxu0 0.0
    %820 = vmatpush.msra.mxu0 0.0
    %821 = vmatpush.msra.mxu0 0.0
    %822 = vmatpush.msra.mxu0 0.0
    %823 = vmatpush.msra.mxu0 0.0
    %824 = vmatpush.msra.mxu0 0.0
    %825 = vmatpush.msra.mxu0 %v805
    %826 = vmatmul.f32.gmra.mxu0 %v808
    %v827 = vpop.f32.mrf.mxu0
    %v828 = vadd.f32 0.0, %v827
    %829 = vdwg.mxu0
    %830 = vrot.lane.b32.xlu0 %v346, 64
    %v831 = vpop.permute.xlu0 %830
    %v834 = vsel %vm366, %v713, 0
    %836 = vmatpush.msra.mxu0 0.0
    %837 = vmatpush.msra.mxu0 0.0
    %838 = vmatpush.msra.mxu0 0.0
    %839 = vmatpush.msra.mxu0 0.0
    %840 = vmatpush.msra.mxu0 0.0
    %841 = vmatpush.msra.mxu0 0.0
    %842 = vmatpush.msra.mxu0 0.0
    %843 = vmatpush.msra.mxu0 0.0
    %844 = vmatpush.msra.mxu0 0.0
    %845 = vmatpush.msra.mxu0 0.0
    %846 = vmatpush.msra.mxu0 0.0
    %847 = vmatpush.msra.mxu0 0.0
    %848 = vmatpush.msra.mxu0 0.0
    %849 = vmatpush.msra.mxu0 0.0
    %850 = vmatpush.msra.mxu0 0.0
    %851 = vmatpush.msra.mxu0 %v831
    %852 = vmatmul.f32.gmra.mxu0 %v834
    %v853 = vpop.f32.mrf.mxu0
    %v854 = vadd.f32 0.0, %v853
    %855 = vdwg.mxu0
    %856 = vrot.lane.b32.xlu0 %v349, 64
    %v857 = vpop.permute.xlu0 %856
    %v860 = vsel %vm366, %v728, 0
    %862 = vmatpush.msra.mxu0 0.0
    %863 = vmatpush.msra.mxu0 0.0
    %864 = vmatpush.msra.mxu0 0.0
    %865 = vmatpush.msra.mxu0 0.0
    %866 = vmatpush.msra.mxu0 0.0
    %867 = vmatpush.msra.mxu0 0.0
    %868 = vmatpush.msra.mxu0 0.0
    %869 = vmatpush.msra.mxu0 0.0
    %870 = vmatpush.msra.mxu0 0.0
    %871 = vmatpush.msra.mxu0 0.0
    %872 = vmatpush.msra.mxu0 0.0
    %873 = vmatpush.msra.mxu0 0.0
    %874 = vmatpush.msra.mxu0 0.0
    %875 = vmatpush.msra.mxu0 0.0
    %876 = vmatpush.msra.mxu0 0.0
    %877 = vmatpush.msra.mxu0 %v857
    %878 = vmatmul.f32.gmra.mxu0 %v860
    %v879 = vpop.f32.mrf.mxu0
    %v880 = vadd.f32 0.0, %v879
    %881 = vdwg.mxu0
    %882 = vrot.lane.b32.xlu0 %v351, 64
    %v883 = vpop.permute.xlu0 %882
    %v886 = vsel %vm366, %v743, 0
    %888 = vmatpush.msra.mxu0 0.0
    %889 = vmatpush.msra.mxu0 0.0
    %890 = vmatpush.msra.mxu0 0.0
    %891 = vmatpush.msra.mxu0 0.0
    %892 = vmatpush.msra.mxu0 0.0
    %893 = vmatpush.msra.mxu0 0.0
    %894 = vmatpush.msra.mxu0 0.0
    %895 = vmatpush.msra.mxu0 0.0
    %896 = vmatpush.msra.mxu0 0.0
    %897 = vmatpush.msra.mxu0 0.0
    %898 = vmatpush.msra.mxu0 0.0
    %899 = vmatpush.msra.mxu0 0.0
    %900 = vmatpush.msra.mxu0 0.0
    %901 = vmatpush.msra.mxu0 0.0
    %902 = vmatpush.msra.mxu0 0.0
    %903 = vmatpush.msra.mxu0 %v883
    %904 = vmatmul.f32.gmra.mxu0 %v886
    %v905 = vpop.f32.mrf.mxu0
    %v906 = vadd.f32 0.0, %v905
    %907 = vdwg.mxu0
    %908 = vrot.lane.b32.xlu0 %v354, 64
    %v909 = vpop.permute.xlu0 %908
    %v912 = vsel %vm366, %v758, 0
    %914 = vmatpush.msra.mxu0 0.0
    %915 = vmatpush.msra.mxu0 0.0
    %916 = vmatpush.msra.mxu0 0.0
    %917 = vmatpush.msra.mxu0 0.0
    %918 = vmatpush.msra.mxu0 0.0
    %919 = vmatpush.msra.mxu0 0.0
    %920 = vmatpush.msra.mxu0 0.0
    %921 = vmatpush.msra.mxu0 0.0
    %922 = vmatpush.msra.mxu0 0.0
    %923 = vmatpush.msra.mxu0 0.0
    %924 = vmatpush.msra.mxu0 0.0
    %925 = vmatpush.msra.mxu0 0.0
    %926 = vmatpush.msra.mxu0 0.0
    %927 = vmatpush.msra.mxu0 0.0
    %928 = vmatpush.msra.mxu0 0.0
    %929 = vmatpush.msra.mxu0 %v909
    %930 = vmatmul.f32.gmra.mxu0 %v912
    %v931 = vpop.f32.mrf.mxu0
    %v932 = vadd.f32 0.0, %v931
    %933 = vdwg.mxu0
    %934 = vrot.lane.b32.xlu0 %v356, 64
    %v935 = vpop.permute.xlu0 %934
    %v938 = vsel %vm366, %v773, 0
    %940 = vmatpush.msra.mxu0 0.0
    %941 = vmatpush.msra.mxu0 0.0
    %942 = vmatpush.msra.mxu0 0.0
    %943 = vmatpush.msra.mxu0 0.0
    %944 = vmatpush.msra.mxu0 0.0
    %945 = vmatpush.msra.mxu0 0.0
    %946 = vmatpush.msra.mxu0 0.0
    %947 = vmatpush.msra.mxu0 0.0
    %948 = vmatpush.msra.mxu0 0.0
    %949 = vmatpush.msra.mxu0 0.0
    %950 = vmatpush.msra.mxu0 0.0
    %951 = vmatpush.msra.mxu0 0.0
    %952 = vmatpush.msra.mxu0 0.0
    %953 = vmatpush.msra.mxu0 0.0
    %954 = vmatpush.msra.mxu0 0.0
    %955 = vmatpush.msra.mxu0 %v935
    %956 = vmatmul.f32.gmra.mxu0 %v938
    %v957 = vpop.f32.mrf.mxu0
    %v958 = vadd.f32 0.0, %v957
    %959 = vdwg.mxu0
    %960 = vrot.lane.b32.xlu0 %v359, 64
    %v961 = vpop.permute.xlu0 %960
    %v964 = vsel %vm366, %v788, 0
    %966 = vmatpush.msra.mxu0 0.0
    %967 = vmatpush.msra.mxu0 0.0
    %968 = vmatpush.msra.mxu0 0.0
    %969 = vmatpush.msra.mxu0 0.0
    %970 = vmatpush.msra.mxu0 0.0
    %971 = vmatpush.msra.mxu0 0.0
    %972 = vmatpush.msra.mxu0 0.0
    %973 = vmatpush.msra.mxu0 0.0
    %974 = vmatpush.msra.mxu0 0.0
    %975 = vmatpush.msra.mxu0 0.0
    %976 = vmatpush.msra.mxu0 0.0
    %977 = vmatpush.msra.mxu0 0.0
    %978 = vmatpush.msra.mxu0 0.0
    %979 = vmatpush.msra.mxu0 0.0
    %980 = vmatpush.msra.mxu0 0.0
    %981 = vmatpush.msra.mxu0 %v961
    %982 = vmatmul.f32.gmra.mxu0 %v964
    %v983 = vpop.f32.mrf.mxu0
    %v984 = vadd.f32 0.0, %v983
    %985 = vdwg.mxu0
    %986 = vrot.lane.b32.xlu0 %v361, 64
    %v987 = vpop.permute.xlu0 %986
    %v990 = vsel %vm366, %v803, 0
    %992 = vmatpush.msra.mxu0 0.0
    %993 = vmatpush.msra.mxu0 0.0
    %994 = vmatpush.msra.mxu0 0.0
    %995 = vmatpush.msra.mxu0 0.0
    %996 = vmatpush.msra.mxu0 0.0
    %997 = vmatpush.msra.mxu0 0.0
    %998 = vmatpush.msra.mxu0 0.0
    %999 = vmatpush.msra.mxu0 0.0
    %1000 = vmatpush.msra.mxu0 0.0
    %1001 = vmatpush.msra.mxu0 0.0
    %1002 = vmatpush.msra.mxu0 0.0
    %1003 = vmatpush.msra.mxu0 0.0
    %1004 = vmatpush.msra.mxu0 0.0
    %1005 = vmatpush.msra.mxu0 0.0
    %1006 = vmatpush.msra.mxu0 0.0
    %1007 = vmatpush.msra.mxu0 %v987
    %1008 = vmatmul.f32.gmra.mxu0 %v990
    %v1009 = vpop.f32.mrf.mxu0
    %v1010 = vadd.f32 0.0, %v1009
    %1011 = vdwg.mxu0
    %1012 = vrot.lane.b32.xlu0 %v344, 120
    %v1013 = vpop.permute.xlu0 %1012
    %1014 = vrot.lane.b32.xlu0 %v344, 88
    %v1015 = vpop.permute.xlu0 %1014
    %v1016 = vsel %vm366, %v1013, 0
    %v1018 = vsel %vm366, %v1015, 0
    %1020 = vmatpush.xpose.msra.mxu0 0.0
    %1021 = vmatpush.xpose.msra.mxu0 0.0
    %1022 = vmatpush.xpose.msra.mxu0 0.0
    %1023 = vmatpush.xpose.msra.mxu0 0.0
    %1024 = vmatpush.xpose.msra.mxu0 0.0
    %1025 = vmatpush.xpose.msra.mxu0 0.0
    %1026 = vmatpush.xpose.msra.mxu0 0.0
    %1027 = vmatpush.xpose.msra.mxu0 0.0
    %1028 = vmatpush.xpose.msra.mxu0 0.0
    %1029 = vmatpush.xpose.msra.mxu0 0.0
    %1030 = vmatpush.xpose.msra.mxu0 0.0
    %1031 = vmatpush.xpose.msra.mxu0 0.0
    %1032 = vmatpush.xpose.msra.mxu0 0.0
    %1033 = vmatpush.xpose.msra.mxu0 0.0
    %1034 = vmatpush.xpose.msra.mxu0 0.0
    %1035 = vmatpush.xpose.msra.mxu0 %v1018
    %1036 = vmatmul.f32.gmra.mxu0 %v1016
    %v1037 = vpop.f32.mrf.mxu0
    %v1038 = vadd.f32 0.0, %v1037
    %1039 = vdwg.mxu0
    %1040 = vrot.lane.b32.xlu0 %v346, 120
    %v1041 = vpop.permute.xlu0 %1040
    %1042 = vrot.lane.b32.xlu0 %v346, 88
    %v1043 = vpop.permute.xlu0 %1042
    %v1044 = vsel %vm366, %v1041, 0
    %v1046 = vsel %vm366, %v1043, 0
    %1048 = vmatpush.xpose.msra.mxu0 0.0
    %1049 = vmatpush.xpose.msra.mxu0 0.0
    %1050 = vmatpush.xpose.msra.mxu0 0.0
    %1051 = vmatpush.xpose.msra.mxu0 0.0
    %1052 = vmatpush.xpose.msra.mxu0 0.0
    %1053 = vmatpush.xpose.msra.mxu0 0.0
    %1054 = vmatpush.xpose.msra.mxu0 0.0
    %1055 = vmatpush.xpose.msra.mxu0 0.0
    %1056 = vmatpush.xpose.msra.mxu0 0.0
    %1057 = vmatpush.xpose.msra.mxu0 0.0
    %1058 = vmatpush.xpose.msra.mxu0 0.0
    %1059 = vmatpush.xpose.msra.mxu0 0.0
    %1060 = vmatpush.xpose.msra.mxu0 0.0
    %1061 = vmatpush.xpose.msra.mxu0 0.0
    %1062 = vmatpush.xpose.msra.mxu0 0.0
    %1063 = vmatpush.xpose.msra.mxu0 %v1046
    %1064 = vmatmul.f32.gmra.mxu0 %v1044
    %v1065 = vpop.f32.mrf.mxu0
    %v1066 = vadd.f32 0.0, %v1065
    %1067 = vdwg.mxu0
    %1068 = vrot.lane.b32.xlu0 %v349, 120
    %v1069 = vpop.permute.xlu0 %1068
    %1070 = vrot.lane.b32.xlu0 %v349, 88
    %v1071 = vpop.permute.xlu0 %1070
    %v1072 = vsel %vm366, %v1069, 0
    %v1074 = vsel %vm366, %v1071, 0
    %1076 = vmatpush.xpose.msra.mxu0 0.0
    %1077 = vmatpush.xpose.msra.mxu0 0.0
    %1078 = vmatpush.xpose.msra.mxu0 0.0
    %1079 = vmatpush.xpose.msra.mxu0 0.0
    %1080 = vmatpush.xpose.msra.mxu0 0.0
    %1081 = vmatpush.xpose.msra.mxu0 0.0
    %1082 = vmatpush.xpose.msra.mxu0 0.0
    %1083 = vmatpush.xpose.msra.mxu0 0.0
    %1084 = vmatpush.xpose.msra.mxu0 0.0
    %1085 = vmatpush.xpose.msra.mxu0 0.0
    %1086 = vmatpush.xpose.msra.mxu0 0.0
    %1087 = vmatpush.xpose.msra.mxu0 0.0
    %1088 = vmatpush.xpose.msra.mxu0 0.0
    %1089 = vmatpush.xpose.msra.mxu0 0.0
    %1090 = vmatpush.xpose.msra.mxu0 0.0
    %1091 = vmatpush.xpose.msra.mxu0 %v1074
    %1092 = vmatmul.f32.gmra.mxu0 %v1072
    %v1093 = vpop.f32.mrf.mxu0
    %v1094 = vadd.f32 0.0, %v1093
    %1095 = vdwg.mxu0
    %1096 = vrot.lane.b32.xlu0 %v351, 120
    %v1097 = vpop.permute.xlu0 %1096
    %1098 = vrot.lane.b32.xlu0 %v351, 88
    %v1099 = vpop.permute.xlu0 %1098
    %v1100 = vsel %vm366, %v1097, 0
    %v1102 = vsel %vm366, %v1099, 0
    %1104 = vmatpush.xpose.msra.mxu0 0.0
    %1105 = vmatpush.xpose.msra.mxu0 0.0
    %1106 = vmatpush.xpose.msra.mxu0 0.0
    %1107 = vmatpush.xpose.msra.mxu0 0.0
    %1108 = vmatpush.xpose.msra.mxu0 0.0
    %1109 = vmatpush.xpose.msra.mxu0 0.0
    %1110 = vmatpush.xpose.msra.mxu0 0.0
    %1111 = vmatpush.xpose.msra.mxu0 0.0
    %1112 = vmatpush.xpose.msra.mxu0 0.0
    %1113 = vmatpush.xpose.msra.mxu0 0.0
    %1114 = vmatpush.xpose.msra.mxu0 0.0
    %1115 = vmatpush.xpose.msra.mxu0 0.0
    %1116 = vmatpush.xpose.msra.mxu0 0.0
    %1117 = vmatpush.xpose.msra.mxu0 0.0
    %1118 = vmatpush.xpose.msra.mxu0 0.0
    %1119 = vmatpush.xpose.msra.mxu0 %v1102
    %1120 = vmatmul.f32.gmra.mxu0 %v1100
    %v1121 = vpop.f32.mrf.mxu0
    %v1122 = vadd.f32 0.0, %v1121
    %1123 = vdwg.mxu0
    %1124 = vrot.lane.b32.xlu0 %v354, 120
    %v1125 = vpop.permute.xlu0 %1124
    %1126 = vrot.lane.b32.xlu0 %v354, 88
    %v1127 = vpop.permute.xlu0 %1126
    %v1128 = vsel %vm366, %v1125, 0
    %v1130 = vsel %vm366, %v1127, 0
    %1132 = vmatpush.xpose.msra.mxu0 0.0
    %1133 = vmatpush.xpose.msra.mxu0 0.0
    %1134 = vmatpush.xpose.msra.mxu0 0.0
    %1135 = vmatpush.xpose.msra.mxu0 0.0
    %1136 = vmatpush.xpose.msra.mxu0 0.0
    %1137 = vmatpush.xpose.msra.mxu0 0.0
    %1138 = vmatpush.xpose.msra.mxu0 0.0
    %1139 = vmatpush.xpose.msra.mxu0 0.0
    %1140 = vmatpush.xpose.msra.mxu0 0.0
    %1141 = vmatpush.xpose.msra.mxu0 0.0
    %1142 = vmatpush.xpose.msra.mxu0 0.0
    %1143 = vmatpush.xpose.msra.mxu0 0.0
    %1144 = vmatpush.xpose.msra.mxu0 0.0
    %1145 = vmatpush.xpose.msra.mxu0 0.0
    %1146 = vmatpush.xpose.msra.mxu0 0.0
    %1147 = vmatpush.xpose.msra.mxu0 %v1130
    %1148 = vmatmul.f32.gmra.mxu0 %v1128
    %v1149 = vpop.f32.mrf.mxu0
    %v1150 = vadd.f32 0.0, %v1149
    %1151 = vdwg.mxu0
    %1152 = vrot.lane.b32.xlu0 %v356, 120
    %v1153 = vpop.permute.xlu0 %1152
    %1154 = vrot.lane.b32.xlu0 %v356, 88
    %v1155 = vpop.permute.xlu0 %1154
    %v1156 = vsel %vm366, %v1153, 0
    %v1158 = vsel %vm366, %v1155, 0
    %1160 = vmatpush.xpose.msra.mxu0 0.0
    %1161 = vmatpush.xpose.msra.mxu0 0.0
    %1162 = vmatpush.xpose.msra.mxu0 0.0
    %1163 = vmatpush.xpose.msra.mxu0 0.0
    %1164 = vmatpush.xpose.msra.mxu0 0.0
    %1165 = vmatpush.xpose.msra.mxu0 0.0
    %1166 = vmatpush.xpose.msra.mxu0 0.0
    %1167 = vmatpush.xpose.msra.mxu0 0.0
    %1168 = vmatpush.xpose.msra.mxu0 0.0
    %1169 = vmatpush.xpose.msra.mxu0 0.0
    %1170 = vmatpush.xpose.msra.mxu0 0.0
    %1171 = vmatpush.xpose.msra.mxu0 0.0
    %1172 = vmatpush.xpose.msra.mxu0 0.0
    %1173 = vmatpush.xpose.msra.mxu0 0.0
    %1174 = vmatpush.xpose.msra.mxu0 0.0
    %1175 = vmatpush.xpose.msra.mxu0 %v1158
    %1176 = vmatmul.f32.gmra.mxu0 %v1156
    %v1177 = vpop.f32.mrf.mxu0
    %v1178 = vadd.f32 0.0, %v1177
    %1179 = vdwg.mxu0
    %1180 = vrot.lane.b32.xlu0 %v359, 120
    %v1181 = vpop.permute.xlu0 %1180
    %1182 = vrot.lane.b32.xlu0 %v359, 88
    %v1183 = vpop.permute.xlu0 %1182
    %v1184 = vsel %vm366, %v1181, 0
    %v1186 = vsel %vm366, %v1183, 0
    %1188 = vmatpush.xpose.msra.mxu0 0.0
    %1189 = vmatpush.xpose.msra.mxu0 0.0
    %1190 = vmatpush.xpose.msra.mxu0 0.0
    %1191 = vmatpush.xpose.msra.mxu0 0.0
    %1192 = vmatpush.xpose.msra.mxu0 0.0
    %1193 = vmatpush.xpose.msra.mxu0 0.0
    %1194 = vmatpush.xpose.msra.mxu0 0.0
    %1195 = vmatpush.xpose.msra.mxu0 0.0
    %1196 = vmatpush.xpose.msra.mxu0 0.0
    %1197 = vmatpush.xpose.msra.mxu0 0.0
    %1198 = vmatpush.xpose.msra.mxu0 0.0
    %1199 = vmatpush.xpose.msra.mxu0 0.0
    %1200 = vmatpush.xpose.msra.mxu0 0.0
    %1201 = vmatpush.xpose.msra.mxu0 0.0
    %1202 = vmatpush.xpose.msra.mxu0 0.0
    %1203 = vmatpush.xpose.msra.mxu0 %v1186
    %1204 = vmatmul.f32.gmra.mxu0 %v1184
    %v1205 = vpop.f32.mrf.mxu0
    %v1206 = vadd.f32 0.0, %v1205
    %1207 = vdwg.mxu0
    %1208 = vrot.lane.b32.xlu0 %v361, 120
    %v1209 = vpop.permute.xlu0 %1208
    %1210 = vrot.lane.b32.xlu0 %v361, 88
    %v1211 = vpop.permute.xlu0 %1210
    %v1212 = vsel %vm366, %v1209, 0
    %v1214 = vsel %vm366, %v1211, 0
    %1216 = vmatpush.xpose.msra.mxu0 0.0
    %1217 = vmatpush.xpose.msra.mxu0 0.0
    %1218 = vmatpush.xpose.msra.mxu0 0.0
    %1219 = vmatpush.xpose.msra.mxu0 0.0
    %1220 = vmatpush.xpose.msra.mxu0 0.0
    %1221 = vmatpush.xpose.msra.mxu0 0.0
    %1222 = vmatpush.xpose.msra.mxu0 0.0
    %1223 = vmatpush.xpose.msra.mxu0 0.0
    %1224 = vmatpush.xpose.msra.mxu0 0.0
    %1225 = vmatpush.xpose.msra.mxu0 0.0
    %1226 = vmatpush.xpose.msra.mxu0 0.0
    %1227 = vmatpush.xpose.msra.mxu0 0.0
    %1228 = vmatpush.xpose.msra.mxu0 0.0
    %1229 = vmatpush.xpose.msra.mxu0 0.0
    %1230 = vmatpush.xpose.msra.mxu0 0.0
    %1231 = vmatpush.xpose.msra.mxu0 %v1214
    %1232 = vmatmul.f32.gmra.mxu0 %v1212
    %v1233 = vpop.f32.mrf.mxu0
    %v1234 = vadd.f32 0.0, %v1233
    %1235 = vdwg.mxu0
    %v1236 = vmul.f32 %v1038, 0.35355338
    %v1237 = vmul.f32 %v1066, 0.35355338
    %v1238 = vmul.f32 %v1094, 0.35355338
    %v1239 = vmul.f32 %v1122, 0.35355338
    %v1240 = vmul.f32 %v1150, 0.35355338
    %v1241 = vmul.f32 %v1178, 0.35355338
    %v1242 = vmul.f32 %v1206, 0.35355338
    %v1243 = vmul.f32 %v1234, 0.35355338
    %v1244 = vadd.f32 %v1236, %v588
    %v1245 = vadd.f32 %v1237, %v589
    %v1246 = vadd.f32 %v1238, %v590
    %v1247 = vadd.f32 %v1239, %v591
    %v1248 = vadd.f32 %v1240, %v592
    %v1249 = vadd.f32 %v1241, %v593
    %v1250 = vadd.f32 %v1242, %v594
    %v1251 = vadd.f32 %v1243, %v595
    %v1252 = vsel %vm366, %v1244, -inf
    %1253 = vmax.xlane.f32.xlu0 %v1252
    %v1254 = vpop.xlane.xlu0 %1253
    %v1255 = vsel %vm366, %v1245, -inf
    %1256 = vmax.xlane.f32.xlu0 %v1255
    %v1257 = vpop.xlane.xlu0 %1256
    %v1258 = vsel %vm366, %v1246, -inf
    %1259 = vmax.xlane.f32.xlu0 %v1258
    %v1260 = vpop.xlane.xlu0 %1259
    %v1261 = vsel %vm366, %v1247, -inf
    %1262 = vmax.xlane.f32.xlu0 %v1261
    %v1263 = vpop.xlane.xlu0 %1262
    %v1264 = vsel %vm366, %v1248, -inf
    %1265 = vmax.xlane.f32.xlu0 %v1264
    %v1266 = vpop.xlane.xlu0 %1265
    %v1267 = vsel %vm366, %v1249, -inf
    %1268 = vmax.xlane.f32.xlu0 %v1267
    %v1269 = vpop.xlane.xlu0 %1268
    %v1270 = vsel %vm366, %v1250, -inf
    %1271 = vmax.xlane.f32.xlu0 %v1270
    %v1272 = vpop.xlane.xlu0 %1271
    %v1273 = vsel %vm366, %v1251, -inf
    %1274 = vmax.xlane.f32.xlu0 %v1273
    %v1275 = vpop.xlane.xlu0 %1274
    %v1276 = vsub.f32 %v1244, %v1254
    %v1277 = vsub.f32 %v1245, %v1257
    %v1278 = vsub.f32 %v1246, %v1260
    %v1279 = vsub.f32 %v1247, %v1263
    %v1280 = vsub.f32 %v1248, %v1266
    %v1281 = vsub.f32 %v1249, %v1269
    %v1282 = vsub.f32 %v1250, %v1272
    %v1283 = vsub.f32 %v1251, %v1275
    %v1284 = vmul.f32 %v1276, 1.442695
    %v1285 = vpow.pop %v1284
    %v1286 = vmul.f32 %v1277, 1.442695
    %v1287 = vpow.pop %v1286
    %v1288 = vmul.f32 %v1278, 1.442695
    %v1289 = vpow.pop %v1288
    %v1290 = vmul.f32 %v1279, 1.442695
    %v1291 = vpow.pop %v1290
    %v1292 = vmul.f32 %v1280, 1.442695
    %v1293 = vpow.pop %v1292
    %v1294 = vmul.f32 %v1281, 1.442695
    %v1295 = vpow.pop %v1294
    %v1296 = vmul.f32 %v1282, 1.442695
    %v1297 = vpow.pop %v1296
    %v1298 = vmul.f32 %v1283, 1.442695
    %v1299 = vpow.pop %v1298
    %v1300 = vsel %vm366, %v1285, 0.0
    %1301 = vadd.xlane.f32.xlu0 %v1300
    %v1302 = vpop.xlane.xlu0 %1301
    %v1303 = vsel %vm366, %v1287, 0.0
    %1304 = vadd.xlane.f32.xlu0 %v1303
    %v1305 = vpop.xlane.xlu0 %1304
    %v1306 = vsel %vm366, %v1289, 0.0
    %1307 = vadd.xlane.f32.xlu0 %v1306
    %v1308 = vpop.xlane.xlu0 %1307
    %v1309 = vsel %vm366, %v1291, 0.0
    %1310 = vadd.xlane.f32.xlu0 %v1309
    %v1311 = vpop.xlane.xlu0 %1310
    %v1312 = vsel %vm366, %v1293, 0.0
    %1313 = vadd.xlane.f32.xlu0 %v1312
    %v1314 = vpop.xlane.xlu0 %1313
    %v1315 = vsel %vm366, %v1295, 0.0
    %1316 = vadd.xlane.f32.xlu0 %v1315
    %v1317 = vpop.xlane.xlu0 %1316
    %v1318 = vsel %vm366, %v1297, 0.0
    %1319 = vadd.xlane.f32.xlu0 %v1318
    %v1320 = vpop.xlane.xlu0 %1319
    %v1321 = vsel %vm366, %v1299, 0.0
    %1322 = vadd.xlane.f32.xlu0 %v1321
    %v1323 = vpop.xlane.xlu0 %1322
    %v1324 = vrcp.pop %v1302
    %v1325 = vmul.f32 %v1302, %v1324
    %v1326 = vsub.f32 1.0, %v1325
    %v1327 = vmul.f32 %v1324, %v1326
    %v1328 = vadd.f32 %v1324, %v1327
    %vm1329 = vweird.f32 %v1302
    %vm1330 = vweird.f32 %v1324
    %vm1331 = vmor %vm1329, %vm1330
    %v1332 = vsel %vm1331, %v1324, %v1328
    %v1333 = vand.u32 2147483647, %v1302
    %vm1334 = vcmp.eq.f32.partialorder %v1333, 8.507059e+37
    %v1335 = vand.u32 %v1302, 2147483648
    %v1336 = vor.u32 1.1754944e-38, %v1335
    %v1337 = vsel %vm1334, %v1336, %v1332
    %v1338 = vmul.f32 %v1285, %v1337
    %v1339 = vrcp.pop %v1305
    %v1340 = vmul.f32 %v1305, %v1339
    %v1341 = vsub.f32 1.0, %v1340
    %v1342 = vmul.f32 %v1339, %v1341
    %v1343 = vadd.f32 %v1339, %v1342
    %vm1344 = vweird.f32 %v1305
    %vm1345 = vweird.f32 %v1339
    %vm1346 = vmor %vm1344, %vm1345
    %v1347 = vsel %vm1346, %v1339, %v1343
    %v1348 = vand.u32 2147483647, %v1305
    %vm1349 = vcmp.eq.f32.partialorder %v1348, 8.507059e+37
    %v1350 = vand.u32 %v1305, 2147483648
    %v1351 = vor.u32 1.1754944e-38, %v1350
    %v1352 = vsel %vm1349, %v1351, %v1347
    %v1353 = vmul.f32 %v1287, %v1352
    %v1354 = vrcp.pop %v1308
    %v1355 = vmul.f32 %v1308, %v1354
    %v1356 = vsub.f32 1.0, %v1355
    %v1357 = vmul.f32 %v1354, %v1356
    %v1358 = vadd.f32 %v1354, %v1357
    %vm1359 = vweird.f32 %v1308
    %vm1360 = vweird.f32 %v1354
    %vm1361 = vmor %vm1359, %vm1360
    %v1362 = vsel %vm1361, %v1354, %v1358
    %v1363 = vand.u32 2147483647, %v1308
    %vm1364 = vcmp.eq.f32.partialorder %v1363, 8.507059e+37
    %v1365 = vand.u32 %v1308, 2147483648
    %v1366 = vor.u32 1.1754944e-38, %v1365
    %v1367 = vsel %vm1364, %v1366, %v1362
    %v1368 = vmul.f32 %v1289, %v1367
    %v1369 = vrcp.pop %v1311
    %v1370 = vmul.f32 %v1311, %v1369
    %v1371 = vsub.f32 1.0, %v1370
    %v1372 = vmul.f32 %v1369, %v1371
    %v1373 = vadd.f32 %v1369, %v1372
    %vm1374 = vweird.f32 %v1311
    %vm1375 = vweird.f32 %v1369
    %vm1376 = vmor %vm1374, %vm1375
    %v1377 = vsel %vm1376, %v1369, %v1373
    %v1378 = vand.u32 2147483647, %v1311
    %vm1379 = vcmp.eq.f32.partialorder %v1378, 8.507059e+37
    %v1380 = vand.u32 %v1311, 2147483648
    %v1381 = vor.u32 1.1754944e-38, %v1380
    %v1382 = vsel %vm1379, %v1381, %v1377
    %v1383 = vmul.f32 %v1291, %v1382
    %v1384 = vrcp.pop %v1314
    %v1385 = vmul.f32 %v1314, %v1384
    %v1386 = vsub.f32 1.0, %v1385
    %v1387 = vmul.f32 %v1384, %v1386
    %v1388 = vadd.f32 %v1384, %v1387
    %vm1389 = vweird.f32 %v1314
    %vm1390 = vweird.f32 %v1384
    %vm1391 = vmor %vm1389, %vm1390
    %v1392 = vsel %vm1391, %v1384, %v1388
    %v1393 = vand.u32 2147483647, %v1314
    %vm1394 = vcmp.eq.f32.partialorder %v1393, 8.507059e+37
    %v1395 = vand.u32 %v1314, 2147483648
    %v1396 = vor.u32 1.1754944e-38, %v1395
    %v1397 = vsel %vm1394, %v1396, %v1392
    %v1398 = vmul.f32 %v1293, %v1397
    %v1399 = vrcp.pop %v1317
    %v1400 = vmul.f32 %v1317, %v1399
    %v1401 = vsub.f32 1.0, %v1400
    %v1402 = vmul.f32 %v1399, %v1401
    %v1403 = vadd.f32 %v1399, %v1402
    %vm1404 = vweird.f32 %v1317
    %vm1405 = vweird.f32 %v1399
    %vm1406 = vmor %vm1404, %vm1405
    %v1407 = vsel %vm1406, %v1399, %v1403
    %v1408 = vand.u32 2147483647, %v1317
    %vm1409 = vcmp.eq.f32.partialorder %v1408, 8.507059e+37
    %v1410 = vand.u32 %v1317, 2147483648
    %v1411 = vor.u32 1.1754944e-38, %v1410
    %v1412 = vsel %vm1409, %v1411, %v1407
    %v1413 = vmul.f32 %v1295, %v1412
    %v1414 = vrcp.pop %v1320
    %v1415 = vmul.f32 %v1320, %v1414
    %v1416 = vsub.f32 1.0, %v1415
    %v1417 = vmul.f32 %v1414, %v1416
    %v1418 = vadd.f32 %v1414, %v1417
    %vm1419 = vweird.f32 %v1320
    %vm1420 = vweird.f32 %v1414
    %vm1421 = vmor %vm1419, %vm1420
    %v1422 = vsel %vm1421, %v1414, %v1418
    %v1423 = vand.u32 2147483647, %v1320
    %vm1424 = vcmp.eq.f32.partialorder %v1423, 8.507059e+37
    %v1425 = vand.u32 %v1320, 2147483648
    %v1426 = vor.u32 1.1754944e-38, %v1425
    %v1427 = vsel %vm1424, %v1426, %v1422
    %v1428 = vmul.f32 %v1297, %v1427
    %v1429 = vrcp.pop %v1323
    %v1430 = vmul.f32 %v1323, %v1429
    %v1431 = vsub.f32 1.0, %v1430
    %v1432 = vmul.f32 %v1429, %v1431
    %v1433 = vadd.f32 %v1429, %v1432
    %vm1434 = vweird.f32 %v1323
    %vm1435 = vweird.f32 %v1429
    %vm1436 = vmor %vm1434, %vm1435
    %v1437 = vsel %vm1436, %v1429, %v1433
    %v1438 = vand.u32 2147483647, %v1323
    %vm1439 = vcmp.eq.f32.partialorder %v1438, 8.507059e+37
    %v1440 = vand.u32 %v1323, 2147483648
    %v1441 = vor.u32 1.1754944e-38, %v1440
    %v1442 = vsel %vm1439, %v1441, %v1437
    %v1443 = vmul.f32 %v1299, %v1442
    %1444 = vrot.lane.b32.xlu0 %v344, 56
    %v1445 = vpop.permute.xlu0 %1444
    %v1448 = vsel %vm366, %v1338, 0
    %1450 = vmatpush.msra.mxu0 0.0
    %1451 = vmatpush.msra.mxu0 0.0
    %1452 = vmatpush.msra.mxu0 0.0
    %1453 = vmatpush.msra.mxu0 0.0
    %1454 = vmatpush.msra.mxu0 0.0
    %1455 = vmatpush.msra.mxu0 0.0
    %1456 = vmatpush.msra.mxu0 0.0
    %1457 = vmatpush.msra.mxu0 0.0
    %1458 = vmatpush.msra.mxu0 0.0
    %1459 = vmatpush.msra.mxu0 0.0
    %1460 = vmatpush.msra.mxu0 0.0
    %1461 = vmatpush.msra.mxu0 0.0
    %1462 = vmatpush.msra.mxu0 0.0
    %1463 = vmatpush.msra.mxu0 0.0
    %1464 = vmatpush.msra.mxu0 0.0
    %1465 = vmatpush.msra.mxu0 %v1445
    %1466 = vmatmul.f32.gmra.mxu0 %v1448
    %v1467 = vpop.f32.mrf.mxu0
    %v1468 = vadd.f32 0.0, %v1467
    %1469 = vdwg.mxu0
    %1470 = vrot.lane.b32.xlu0 %v346, 56
    %v1471 = vpop.permute.xlu0 %1470
    %v1474 = vsel %vm366, %v1353, 0
    %1476 = vmatpush.msra.mxu0 0.0
    %1477 = vmatpush.msra.mxu0 0.0
    %1478 = vmatpush.msra.mxu0 0.0
    %1479 = vmatpush.msra.mxu0 0.0
    %1480 = vmatpush.msra.mxu0 0.0
    %1481 = vmatpush.msra.mxu0 0.0
    %1482 = vmatpush.msra.mxu0 0.0
    %1483 = vmatpush.msra.mxu0 0.0
    %1484 = vmatpush.msra.mxu0 0.0
    %1485 = vmatpush.msra.mxu0 0.0
    %1486 = vmatpush.msra.mxu0 0.0
    %1487 = vmatpush.msra.mxu0 0.0
    %1488 = vmatpush.msra.mxu0 0.0
    %1489 = vmatpush.msra.mxu0 0.0
    %1490 = vmatpush.msra.mxu0 0.0
    %1491 = vmatpush.msra.mxu0 %v1471
    %1492 = vmatmul.f32.gmra.mxu0 %v1474
    %v1493 = vpop.f32.mrf.mxu0
    %v1494 = vadd.f32 0.0, %v1493
    %1495 = vdwg.mxu0
    %1496 = vrot.lane.b32.xlu0 %v349, 56
    %v1497 = vpop.permute.xlu0 %1496
    %v1500 = vsel %vm366, %v1368, 0
    %1502 = vmatpush.msra.mxu0 0.0
    %1503 = vmatpush.msra.mxu0 0.0
    %1504 = vmatpush.msra.mxu0 0.0
    %1505 = vmatpush.msra.mxu0 0.0
    %1506 = vmatpush.msra.mxu0 0.0
    %1507 = vmatpush.msra.mxu0 0.0
    %1508 = vmatpush.msra.mxu0 0.0
    %1509 = vmatpush.msra.mxu0 0.0
    %1510 = vmatpush.msra.mxu0 0.0
    %1511 = vmatpush.msra.mxu0 0.0
    %1512 = vmatpush.msra.mxu0 0.0
    %1513 = vmatpush.msra.mxu0 0.0
    %1514 = vmatpush.msra.mxu0 0.0
    %1515 = vmatpush.msra.mxu0 0.0
    %1516 = vmatpush.msra.mxu0 0.0
    %1517 = vmatpush.msra.mxu0 %v1497
    %1518 = vmatmul.f32.gmra.mxu0 %v1500
    %v1519 = vpop.f32.mrf.mxu0
    %v1520 = vadd.f32 0.0, %v1519
    %1521 = vdwg.mxu0
    %1522 = vrot.lane.b32.xlu0 %v351, 56
    %v1523 = vpop.permute.xlu0 %1522
    %v1526 = vsel %vm366, %v1383, 0
    %1528 = vmatpush.msra.mxu0 0.0
    %1529 = vmatpush.msra.mxu0 0.0
    %1530 = vmatpush.msra.mxu0 0.0
    %1531 = vmatpush.msra.mxu0 0.0
    %1532 = vmatpush.msra.mxu0 0.0
    %1533 = vmatpush.msra.mxu0 0.0
    %1534 = vmatpush.msra.mxu0 0.0
    %1535 = vmatpush.msra.mxu0 0.0
    %1536 = vmatpush.msra.mxu0 0.0
    %1537 = vmatpush.msra.mxu0 0.0
    %1538 = vmatpush.msra.mxu0 0.0
    %1539 = vmatpush.msra.mxu0 0.0
    %1540 = vmatpush.msra.mxu0 0.0
    %1541 = vmatpush.msra.mxu0 0.0
    %1542 = vmatpush.msra.mxu0 0.0
    %1543 = vmatpush.msra.mxu0 %v1523
    %1544 = vmatmul.f32.gmra.mxu0 %v1526
    %v1545 = vpop.f32.mrf.mxu0
    %v1546 = vadd.f32 0.0, %v1545
    %1547 = vdwg.mxu0
    %1548 = vrot.lane.b32.xlu0 %v354, 56
    %v1549 = vpop.permute.xlu0 %1548
    %v1552 = vsel %vm366, %v1398, 0
    %1554 = vmatpush.msra.mxu0 0.0
    %1555 = vmatpush.msra.mxu0 0.0
    %1556 = vmatpush.msra.mxu0 0.0
    %1557 = vmatpush.msra.mxu0 0.0
    %1558 = vmatpush.msra.mxu0 0.0
    %1559 = vmatpush.msra.mxu0 0.0
    %1560 = vmatpush.msra.mxu0 0.0
    %1561 = vmatpush.msra.mxu0 0.0
    %1562 = vmatpush.msra.mxu0 0.0
    %1563 = vmatpush.msra.mxu0 0.0
    %1564 = vmatpush.msra.mxu0 0.0
    %1565 = vmatpush.msra.mxu0 0.0
    %1566 = vmatpush.msra.mxu0 0.0
    %1567 = vmatpush.msra.mxu0 0.0
    %1568 = vmatpush.msra.mxu0 0.0
    %1569 = vmatpush.msra.mxu0 %v1549
    %1570 = vmatmul.f32.gmra.mxu0 %v1552
    %v1571 = vpop.f32.mrf.mxu0
    %v1572 = vadd.f32 0.0, %v1571
    %1573 = vdwg.mxu0
    %1574 = vrot.lane.b32.xlu0 %v356, 56
    %v1575 = vpop.permute.xlu0 %1574
    %v1578 = vsel %vm366, %v1413, 0
    %1580 = vmatpush.msra.mxu0 0.0
    %1581 = vmatpush.msra.mxu0 0.0
    %1582 = vmatpush.msra.mxu0 0.0
    %1583 = vmatpush.msra.mxu0 0.0
    %1584 = vmatpush.msra.mxu0 0.0
    %1585 = vmatpush.msra.mxu0 0.0
    %1586 = vmatpush.msra.mxu0 0.0
    %1587 = vmatpush.msra.mxu0 0.0
    %1588 = vmatpush.msra.mxu0 0.0
    %1589 = vmatpush.msra.mxu0 0.0
    %1590 = vmatpush.msra.mxu0 0.0
    %1591 = vmatpush.msra.mxu0 0.0
    %1592 = vmatpush.msra.mxu0 0.0
    %1593 = vmatpush.msra.mxu0 0.0
    %1594 = vmatpush.msra.mxu0 0.0
    %1595 = vmatpush.msra.mxu0 %v1575
    %1596 = vmatmul.f32.gmra.mxu0 %v1578
    %v1597 = vpop.f32.mrf.mxu0
    %v1598 = vadd.f32 0.0, %v1597
    %1599 = vdwg.mxu0
    %1600 = vrot.lane.b32.xlu0 %v359, 56
    %v1601 = vpop.permute.xlu0 %1600
    %v1604 = vsel %vm366, %v1428, 0
    %1606 = vmatpush.msra.mxu0 0.0
    %1607 = vmatpush.msra.mxu0 0.0
    %1608 = vmatpush.msra.mxu0 0.0
    %1609 = vmatpush.msra.mxu0 0.0
    %1610 = vmatpush.msra.mxu0 0.0
    %1611 = vmatpush.msra.mxu0 0.0
    %1612 = vmatpush.msra.mxu0 0.0
    %1613 = vmatpush.msra.mxu0 0.0
    %1614 = vmatpush.msra.mxu0 0.0
    %1615 = vmatpush.msra.mxu0 0.0
    %1616 = vmatpush.msra.mxu0 0.0
    %1617 = vmatpush.msra.mxu0 0.0
    %1618 = vmatpush.msra.mxu0 0.0
    %1619 = vmatpush.msra.mxu0 0.0
    %1620 = vmatpush.msra.mxu0 0.0
    %1621 = vmatpush.msra.mxu0 %v1601
    %1622 = vmatmul.f32.gmra.mxu0 %v1604
    %v1623 = vpop.f32.mrf.mxu0
    %v1624 = vadd.f32 0.0, %v1623
    %1625 = vdwg.mxu0
    %1626 = vrot.lane.b32.xlu0 %v361, 56
    %v1627 = vpop.permute.xlu0 %1626
    %v1630 = vsel %vm366, %v1443, 0
    %1632 = vmatpush.msra.mxu0 0.0
    %1633 = vmatpush.msra.mxu0 0.0
    %1634 = vmatpush.msra.mxu0 0.0
    %1635 = vmatpush.msra.mxu0 0.0
    %1636 = vmatpush.msra.mxu0 0.0
    %1637 = vmatpush.msra.mxu0 0.0
    %1638 = vmatpush.msra.mxu0 0.0
    %1639 = vmatpush.msra.mxu0 0.0
    %1640 = vmatpush.msra.mxu0 0.0
    %1641 = vmatpush.msra.mxu0 0.0
    %1642 = vmatpush.msra.mxu0 0.0
    %1643 = vmatpush.msra.mxu0 0.0
    %1644 = vmatpush.msra.mxu0 0.0
    %1645 = vmatpush.msra.mxu0 0.0
    %1646 = vmatpush.msra.mxu0 0.0
    %1647 = vmatpush.msra.mxu0 %v1627
    %1648 = vmatmul.f32.gmra.mxu0 %v1630
    %v1649 = vpop.f32.mrf.mxu0
    %v1650 = vadd.f32 0.0, %v1649
    %1651 = vdwg.mxu0
    %1652 = vrot.lane.b32.xlu0 %v344, 112
    %v1653 = vpop.permute.xlu0 %1652
    %1654 = vrot.lane.b32.xlu0 %v344, 80
    %v1655 = vpop.permute.xlu0 %1654
    %v1656 = vsel %vm366, %v1653, 0
    %v1658 = vsel %vm366, %v1655, 0
    %1660 = vmatpush.xpose.msra.mxu0 0.0
    %1661 = vmatpush.xpose.msra.mxu0 0.0
    %1662 = vmatpush.xpose.msra.mxu0 0.0
    %1663 = vmatpush.xpose.msra.mxu0 0.0
    %1664 = vmatpush.xpose.msra.mxu0 0.0
    %1665 = vmatpush.xpose.msra.mxu0 0.0
    %1666 = vmatpush.xpose.msra.mxu0 0.0
    %1667 = vmatpush.xpose.msra.mxu0 0.0
    %1668 = vmatpush.xpose.msra.mxu0 0.0
    %1669 = vmatpush.xpose.msra.mxu0 0.0
    %1670 = vmatpush.xpose.msra.mxu0 0.0
    %1671 = vmatpush.xpose.msra.mxu0 0.0
    %1672 = vmatpush.xpose.msra.mxu0 0.0
    %1673 = vmatpush.xpose.msra.mxu0 0.0
    %1674 = vmatpush.xpose.msra.mxu0 0.0
    %1675 = vmatpush.xpose.msra.mxu0 %v1658
    %1676 = vmatmul.f32.gmra.mxu0 %v1656
    %v1677 = vpop.f32.mrf.mxu0
    %v1678 = vadd.f32 0.0, %v1677
    %1679 = vdwg.mxu0
    %1680 = vrot.lane.b32.xlu0 %v346, 112
    %v1681 = vpop.permute.xlu0 %1680
    %1682 = vrot.lane.b32.xlu0 %v346, 80
    %v1683 = vpop.permute.xlu0 %1682
    %v1684 = vsel %vm366, %v1681, 0
    %v1686 = vsel %vm366, %v1683, 0
    %1688 = vmatpush.xpose.msra.mxu0 0.0
    %1689 = vmatpush.xpose.msra.mxu0 0.0
    %1690 = vmatpush.xpose.msra.mxu0 0.0
    %1691 = vmatpush.xpose.msra.mxu0 0.0
    %1692 = vmatpush.xpose.msra.mxu0 0.0
    %1693 = vmatpush.xpose.msra.mxu0 0.0
    %1694 = vmatpush.xpose.msra.mxu0 0.0
    %1695 = vmatpush.xpose.msra.mxu0 0.0
    %1696 = vmatpush.xpose.msra.mxu0 0.0
    %1697 = vmatpush.xpose.msra.mxu0 0.0
    %1698 = vmatpush.xpose.msra.mxu0 0.0
    %1699 = vmatpush.xpose.msra.mxu0 0.0
    %1700 = vmatpush.xpose.msra.mxu0 0.0
    %1701 = vmatpush.xpose.msra.mxu0 0.0
    %1702 = vmatpush.xpose.msra.mxu0 0.0
    %1703 = vmatpush.xpose.msra.mxu0 %v1686
    %1704 = vmatmul.f32.gmra.mxu0 %v1684
    %v1705 = vpop.f32.mrf.mxu0
    %v1706 = vadd.f32 0.0, %v1705
    %1707 = vdwg.mxu0
    %1708 = vrot.lane.b32.xlu0 %v349, 112
    %v1709 = vpop.permute.xlu0 %1708
    %1710 = vrot.lane.b32.xlu0 %v349, 80
    %v1711 = vpop.permute.xlu0 %1710
    %v1712 = vsel %vm366, %v1709, 0
    %v1714 = vsel %vm366, %v1711, 0
    %1716 = vmatpush.xpose.msra.mxu0 0.0
    %1717 = vmatpush.xpose.msra.mxu0 0.0
    %1718 = vmatpush.xpose.msra.mxu0 0.0
    %1719 = vmatpush.xpose.msra.mxu0 0.0
    %1720 = vmatpush.xpose.msra.mxu0 0.0
    %1721 = vmatpush.xpose.msra.mxu0 0.0
    %1722 = vmatpush.xpose.msra.mxu0 0.0
    %1723 = vmatpush.xpose.msra.mxu0 0.0
    %1724 = vmatpush.xpose.msra.mxu0 0.0
    %1725 = vmatpush.xpose.msra.mxu0 0.0
    %1726 = vmatpush.xpose.msra.mxu0 0.0
    %1727 = vmatpush.xpose.msra.mxu0 0.0
    %1728 = vmatpush.xpose.msra.mxu0 0.0
    %1729 = vmatpush.xpose.msra.mxu0 0.0
    %1730 = vmatpush.xpose.msra.mxu0 0.0
    %1731 = vmatpush.xpose.msra.mxu0 %v1714
    %1732 = vmatmul.f32.gmra.mxu0 %v1712
    %v1733 = vpop.f32.mrf.mxu0
    %v1734 = vadd.f32 0.0, %v1733
    %1735 = vdwg.mxu0
    %1736 = vrot.lane.b32.xlu0 %v351, 112
    %v1737 = vpop.permute.xlu0 %1736
    %1738 = vrot.lane.b32.xlu0 %v351, 80
    %v1739 = vpop.permute.xlu0 %1738
    %v1740 = vsel %vm366, %v1737, 0
    %v1742 = vsel %vm366, %v1739, 0
    %1744 = vmatpush.xpose.msra.mxu0 0.0
    %1745 = vmatpush.xpose.msra.mxu0 0.0
    %1746 = vmatpush.xpose.msra.mxu0 0.0
    %1747 = vmatpush.xpose.msra.mxu0 0.0
    %1748 = vmatpush.xpose.msra.mxu0 0.0
    %1749 = vmatpush.xpose.msra.mxu0 0.0
    %1750 = vmatpush.xpose.msra.mxu0 0.0
    %1751 = vmatpush.xpose.msra.mxu0 0.0
    %1752 = vmatpush.xpose.msra.mxu0 0.0
    %1753 = vmatpush.xpose.msra.mxu0 0.0
    %1754 = vmatpush.xpose.msra.mxu0 0.0
    %1755 = vmatpush.xpose.msra.mxu0 0.0
    %1756 = vmatpush.xpose.msra.mxu0 0.0
    %1757 = vmatpush.xpose.msra.mxu0 0.0
    %1758 = vmatpush.xpose.msra.mxu0 0.0
    %1759 = vmatpush.xpose.msra.mxu0 %v1742
    %1760 = vmatmul.f32.gmra.mxu0 %v1740
    %v1761 = vpop.f32.mrf.mxu0
    %v1762 = vadd.f32 0.0, %v1761
    %1763 = vdwg.mxu0
    %1764 = vrot.lane.b32.xlu0 %v354, 112
    %v1765 = vpop.permute.xlu0 %1764
    %1766 = vrot.lane.b32.xlu0 %v354, 80
    %v1767 = vpop.permute.xlu0 %1766
    %v1768 = vsel %vm366, %v1765, 0
    %v1770 = vsel %vm366, %v1767, 0
    %1772 = vmatpush.xpose.msra.mxu0 0.0
    %1773 = vmatpush.xpose.msra.mxu0 0.0
    %1774 = vmatpush.xpose.msra.mxu0 0.0
    %1775 = vmatpush.xpose.msra.mxu0 0.0
    %1776 = vmatpush.xpose.msra.mxu0 0.0
    %1777 = vmatpush.xpose.msra.mxu0 0.0
    %1778 = vmatpush.xpose.msra.mxu0 0.0
    %1779 = vmatpush.xpose.msra.mxu0 0.0
    %1780 = vmatpush.xpose.msra.mxu0 0.0
    %1781 = vmatpush.xpose.msra.mxu0 0.0
    %1782 = vmatpush.xpose.msra.mxu0 0.0
    %1783 = vmatpush.xpose.msra.mxu0 0.0
    %1784 = vmatpush.xpose.msra.mxu0 0.0
    %1785 = vmatpush.xpose.msra.mxu0 0.0
    %1786 = vmatpush.xpose.msra.mxu0 0.0
    %1787 = vmatpush.xpose.msra.mxu0 %v1770
    %1788 = vmatmul.f32.gmra.mxu0 %v1768
    %v1789 = vpop.f32.mrf.mxu0
    %v1790 = vadd.f32 0.0, %v1789
    %1791 = vdwg.mxu0
    %1792 = vrot.lane.b32.xlu0 %v356, 112
    %v1793 = vpop.permute.xlu0 %1792
    %1794 = vrot.lane.b32.xlu0 %v356, 80
    %v1795 = vpop.permute.xlu0 %1794
    %v1796 = vsel %vm366, %v1793, 0
    %v1798 = vsel %vm366, %v1795, 0
    %1800 = vmatpush.xpose.msra.mxu0 0.0
    %1801 = vmatpush.xpose.msra.mxu0 0.0
    %1802 = vmatpush.xpose.msra.mxu0 0.0
    %1803 = vmatpush.xpose.msra.mxu0 0.0
    %1804 = vmatpush.xpose.msra.mxu0 0.0
    %1805 = vmatpush.xpose.msra.mxu0 0.0
    %1806 = vmatpush.xpose.msra.mxu0 0.0
    %1807 = vmatpush.xpose.msra.mxu0 0.0
    %1808 = vmatpush.xpose.msra.mxu0 0.0
    %1809 = vmatpush.xpose.msra.mxu0 0.0
    %1810 = vmatpush.xpose.msra.mxu0 0.0
    %1811 = vmatpush.xpose.msra.mxu0 0.0
    %1812 = vmatpush.xpose.msra.mxu0 0.0
    %1813 = vmatpush.xpose.msra.mxu0 0.0
    %1814 = vmatpush.xpose.msra.mxu0 0.0
    %1815 = vmatpush.xpose.msra.mxu0 %v1798
    %1816 = vmatmul.f32.gmra.mxu0 %v1796
    %v1817 = vpop.f32.mrf.mxu0
    %v1818 = vadd.f32 0.0, %v1817
    %1819 = vdwg.mxu0
    %1820 = vrot.lane.b32.xlu0 %v359, 112
    %v1821 = vpop.permute.xlu0 %1820
    %1822 = vrot.lane.b32.xlu0 %v359, 80
    %v1823 = vpop.permute.xlu0 %1822
    %v1824 = vsel %vm366, %v1821, 0
    %v1826 = vsel %vm366, %v1823, 0
    %1828 = vmatpush.xpose.msra.mxu0 0.0
    %1829 = vmatpush.xpose.msra.mxu0 0.0
    %1830 = vmatpush.xpose.msra.mxu0 0.0
    %1831 = vmatpush.xpose.msra.mxu0 0.0
    %1832 = vmatpush.xpose.msra.mxu0 0.0
    %1833 = vmatpush.xpose.msra.mxu0 0.0
    %1834 = vmatpush.xpose.msra.mxu0 0.0
    %1835 = vmatpush.xpose.msra.mxu0 0.0
    %1836 = vmatpush.xpose.msra.mxu0 0.0
    %1837 = vmatpush.xpose.msra.mxu0 0.0
    %1838 = vmatpush.xpose.msra.mxu0 0.0
    %1839 = vmatpush.xpose.msra.mxu0 0.0
    %1840 = vmatpush.xpose.msra.mxu0 0.0
    %1841 = vmatpush.xpose.msra.mxu0 0.0
    %1842 = vmatpush.xpose.msra.mxu0 0.0
    %1843 = vmatpush.xpose.msra.mxu0 %v1826
    %1844 = vmatmul.f32.gmra.mxu0 %v1824
    %v1845 = vpop.f32.mrf.mxu0
    %v1846 = vadd.f32 0.0, %v1845
    %1847 = vdwg.mxu0
    %1848 = vrot.lane.b32.xlu0 %v361, 112
    %v1849 = vpop.permute.xlu0 %1848
    %1850 = vrot.lane.b32.xlu0 %v361, 80
    %v1851 = vpop.permute.xlu0 %1850
    %v1852 = vsel %vm366, %v1849, 0
    %v1854 = vsel %vm366, %v1851, 0
    %1856 = vmatpush.xpose.msra.mxu0 0.0
    %1857 = vmatpush.xpose.msra.mxu0 0.0
    %1858 = vmatpush.xpose.msra.mxu0 0.0
    %1859 = vmatpush.xpose.msra.mxu0 0.0
    %1860 = vmatpush.xpose.msra.mxu0 0.0
    %1861 = vmatpush.xpose.msra.mxu0 0.0
    %1862 = vmatpush.xpose.msra.mxu0 0.0
    %1863 = vmatpush.xpose.msra.mxu0 0.0
    %1864 = vmatpush.xpose.msra.mxu0 0.0
    %1865 = vmatpush.xpose.msra.mxu0 0.0
    %1866 = vmatpush.xpose.msra.mxu0 0.0
    %1867 = vmatpush.xpose.msra.mxu0 0.0
    %1868 = vmatpush.xpose.msra.mxu0 0.0
    %1869 = vmatpush.xpose.msra.mxu0 0.0
    %1870 = vmatpush.xpose.msra.mxu0 0.0
    %1871 = vmatpush.xpose.msra.mxu0 %v1854
    %1872 = vmatmul.f32.gmra.mxu0 %v1852
    %v1873 = vpop.f32.mrf.mxu0
    %v1874 = vadd.f32 0.0, %v1873
    %1875 = vdwg.mxu0
    %v1876 = vmul.f32 %v1678, 0.35355338
    %v1877 = vmul.f32 %v1706, 0.35355338
    %v1878 = vmul.f32 %v1734, 0.35355338
    %v1879 = vmul.f32 %v1762, 0.35355338
    %v1880 = vmul.f32 %v1790, 0.35355338
    %v1881 = vmul.f32 %v1818, 0.35355338
    %v1882 = vmul.f32 %v1846, 0.35355338
    %v1883 = vmul.f32 %v1874, 0.35355338
    %v1884 = vadd.f32 %v1876, %v588
    %v1885 = vadd.f32 %v1877, %v589
    %v1886 = vadd.f32 %v1878, %v590
    %v1887 = vadd.f32 %v1879, %v591
    %v1888 = vadd.f32 %v1880, %v592
    %v1889 = vadd.f32 %v1881, %v593
    %v1890 = vadd.f32 %v1882, %v594
    %v1891 = vadd.f32 %v1883, %v595
    %v1892 = vsel %vm366, %v1884, -inf
    %1893 = vmax.xlane.f32.xlu0 %v1892
    %v1894 = vpop.xlane.xlu0 %1893
    %v1895 = vsel %vm366, %v1885, -inf
    %1896 = vmax.xlane.f32.xlu0 %v1895
    %v1897 = vpop.xlane.xlu0 %1896
    %v1898 = vsel %vm366, %v1886, -inf
    %1899 = vmax.xlane.f32.xlu0 %v1898
    %v1900 = vpop.xlane.xlu0 %1899
    %v1901 = vsel %vm366, %v1887, -inf
    %1902 = vmax.xlane.f32.xlu0 %v1901
    %v1903 = vpop.xlane.xlu0 %1902
    %v1904 = vsel %vm366, %v1888, -inf
    %1905 = vmax.xlane.f32.xlu0 %v1904
    %v1906 = vpop.xlane.xlu0 %1905
    %v1907 = vsel %vm366, %v1889, -inf
    %1908 = vmax.xlane.f32.xlu0 %v1907
    %v1909 = vpop.xlane.xlu0 %1908
    %v1910 = vsel %vm366, %v1890, -inf
    %1911 = vmax.xlane.f32.xlu0 %v1910
    %v1912 = vpop.xlane.xlu0 %1911
    %v1913 = vsel %vm366, %v1891, -inf
    %1914 = vmax.xlane.f32.xlu0 %v1913
    %v1915 = vpop.xlane.xlu0 %1914
    %v1916 = vsub.f32 %v1884, %v1894
    %v1917 = vsub.f32 %v1885, %v1897
    %v1918 = vsub.f32 %v1886, %v1900
    %v1919 = vsub.f32 %v1887, %v1903
    %v1920 = vsub.f32 %v1888, %v1906
    %v1921 = vsub.f32 %v1889, %v1909
    %v1922 = vsub.f32 %v1890, %v1912
    %v1923 = vsub.f32 %v1891, %v1915
    %v1924 = vmul.f32 %v1916, 1.442695
    %v1925 = vpow.pop %v1924
    %v1926 = vmul.f32 %v1917, 1.442695
    %v1927 = vpow.pop %v1926
    %v1928 = vmul.f32 %v1918, 1.442695
    %v1929 = vpow.pop %v1928
    %v1930 = vmul.f32 %v1919, 1.442695
    %v1931 = vpow.pop %v1930
    %v1932 = vmul.f32 %v1920, 1.442695
    %v1933 = vpow.pop %v1932
    %v1934 = vmul.f32 %v1921, 1.442695
    %v1935 = vpow.pop %v1934
    %v1936 = vmul.f32 %v1922, 1.442695
    %v1937 = vpow.pop %v1936
    %v1938 = vmul.f32 %v1923, 1.442695
    %v1939 = vpow.pop %v1938
    %v1940 = vsel %vm366, %v1925, 0.0
    %1941 = vadd.xlane.f32.xlu0 %v1940
    %v1942 = vpop.xlane.xlu0 %1941
    %v1943 = vsel %vm366, %v1927, 0.0
    %1944 = vadd.xlane.f32.xlu0 %v1943
    %v1945 = vpop.xlane.xlu0 %1944
    %v1946 = vsel %vm366, %v1929, 0.0
    %1947 = vadd.xlane.f32.xlu0 %v1946
    %v1948 = vpop.xlane.xlu0 %1947
    %v1949 = vsel %vm366, %v1931, 0.0
    %1950 = vadd.xlane.f32.xlu0 %v1949
    %v1951 = vpop.xlane.xlu0 %1950
    %v1952 = vsel %vm366, %v1933, 0.0
    %1953 = vadd.xlane.f32.xlu0 %v1952
    %v1954 = vpop.xlane.xlu0 %1953
    %v1955 = vsel %vm366, %v1935, 0.0
    %1956 = vadd.xlane.f32.xlu0 %v1955
    %v1957 = vpop.xlane.xlu0 %1956
    %v1958 = vsel %vm366, %v1937, 0.0
    %1959 = vadd.xlane.f32.xlu0 %v1958
    %v1960 = vpop.xlane.xlu0 %1959
    %v1961 = vsel %vm366, %v1939, 0.0
    %1962 = vadd.xlane.f32.xlu0 %v1961
    %v1963 = vpop.xlane.xlu0 %1962
    %v1964 = vrcp.pop %v1942
    %v1965 = vmul.f32 %v1942, %v1964
    %v1966 = vsub.f32 1.0, %v1965
    %v1967 = vmul.f32 %v1964, %v1966
    %v1968 = vadd.f32 %v1964, %v1967
    %vm1969 = vweird.f32 %v1942
    %vm1970 = vweird.f32 %v1964
    %vm1971 = vmor %vm1969, %vm1970
    %v1972 = vsel %vm1971, %v1964, %v1968
    %v1973 = vand.u32 2147483647, %v1942
    %vm1974 = vcmp.eq.f32.partialorder %v1973, 8.507059e+37
    %v1975 = vand.u32 %v1942, 2147483648
    %v1976 = vor.u32 1.1754944e-38, %v1975
    %v1977 = vsel %vm1974, %v1976, %v1972
    %v1978 = vmul.f32 %v1925, %v1977
    %v1979 = vrcp.pop %v1945
    %v1980 = vmul.f32 %v1945, %v1979
    %v1981 = vsub.f32 1.0, %v1980
    %v1982 = vmul.f32 %v1979, %v1981
    %v1983 = vadd.f32 %v1979, %v1982
    %vm1984 = vweird.f32 %v1945
    %vm1985 = vweird.f32 %v1979
    %vm1986 = vmor %vm1984, %vm1985
    %v1987 = vsel %vm1986, %v1979, %v1983
    %v1988 = vand.u32 2147483647, %v1945
    %vm1989 = vcmp.eq.f32.partialorder %v1988, 8.507059e+37
    %v1990 = vand.u32 %v1945, 2147483648
    %v1991 = vor.u32 1.1754944e-38, %v1990
    %v1992 = vsel %vm1989, %v1991, %v1987
    %v1993 = vmul.f32 %v1927, %v1992
    %v1994 = vrcp.pop %v1948
    %v1995 = vmul.f32 %v1948, %v1994
    %v1996 = vsub.f32 1.0, %v1995
    %v1997 = vmul.f32 %v1994, %v1996
    %v1998 = vadd.f32 %v1994, %v1997
    %vm1999 = vweird.f32 %v1948
    %vm2000 = vweird.f32 %v1994
    %vm2001 = vmor %vm1999, %vm2000
    %v2002 = vsel %vm2001, %v1994, %v1998
    %v2003 = vand.u32 2147483647, %v1948
    %vm2004 = vcmp.eq.f32.partialorder %v2003, 8.507059e+37
    %v2005 = vand.u32 %v1948, 2147483648
    %v2006 = vor.u32 1.1754944e-38, %v2005
    %v2007 = vsel %vm2004, %v2006, %v2002
    %v2008 = vmul.f32 %v1929, %v2007
    %v2009 = vrcp.pop %v1951
    %v2010 = vmul.f32 %v1951, %v2009
    %v2011 = vsub.f32 1.0, %v2010
    %v2012 = vmul.f32 %v2009, %v2011
    %v2013 = vadd.f32 %v2009, %v2012
    %vm2014 = vweird.f32 %v1951
    %vm2015 = vweird.f32 %v2009
    %vm2016 = vmor %vm2014, %vm2015
    %v2017 = vsel %vm2016, %v2009, %v2013
    %v2018 = vand.u32 2147483647, %v1951
    %vm2019 = vcmp.eq.f32.partialorder %v2018, 8.507059e+37
    %v2020 = vand.u32 %v1951, 2147483648
    %v2021 = vor.u32 1.1754944e-38, %v2020
    %v2022 = vsel %vm2019, %v2021, %v2017
    %v2023 = vmul.f32 %v1931, %v2022
    %v2024 = vrcp.pop %v1954
    %v2025 = vmul.f32 %v1954, %v2024
    %v2026 = vsub.f32 1.0, %v2025
    %v2027 = vmul.f32 %v2024, %v2026
    %v2028 = vadd.f32 %v2024, %v2027
    %vm2029 = vweird.f32 %v1954
    %vm2030 = vweird.f32 %v2024
    %vm2031 = vmor %vm2029, %vm2030
    %v2032 = vsel %vm2031, %v2024, %v2028
    %v2033 = vand.u32 2147483647, %v1954
    %vm2034 = vcmp.eq.f32.partialorder %v2033, 8.507059e+37
    %v2035 = vand.u32 %v1954, 2147483648
    %v2036 = vor.u32 1.1754944e-38, %v2035
    %v2037 = vsel %vm2034, %v2036, %v2032
    %v2038 = vmul.f32 %v1933, %v2037
    %v2039 = vrcp.pop %v1957
    %v2040 = vmul.f32 %v1957, %v2039
    %v2041 = vsub.f32 1.0, %v2040
    %v2042 = vmul.f32 %v2039, %v2041
    %v2043 = vadd.f32 %v2039, %v2042
    %vm2044 = vweird.f32 %v1957
    %vm2045 = vweird.f32 %v2039
    %vm2046 = vmor %vm2044, %vm2045
    %v2047 = vsel %vm2046, %v2039, %v2043
    %v2048 = vand.u32 2147483647, %v1957
    %vm2049 = vcmp.eq.f32.partialorder %v2048, 8.507059e+37
    %v2050 = vand.u32 %v1957, 2147483648
    %v2051 = vor.u32 1.1754944e-38, %v2050
    %v2052 = vsel %vm2049, %v2051, %v2047
    %v2053 = vmul.f32 %v1935, %v2052
    %v2054 = vrcp.pop %v1960
    %v2055 = vmul.f32 %v1960, %v2054
    %v2056 = vsub.f32 1.0, %v2055
    %v2057 = vmul.f32 %v2054, %v2056
    %v2058 = vadd.f32 %v2054, %v2057
    %vm2059 = vweird.f32 %v1960
    %vm2060 = vweird.f32 %v2054
    %vm2061 = vmor %vm2059, %vm2060
    %v2062 = vsel %vm2061, %v2054, %v2058
    %v2063 = vand.u32 2147483647, %v1960
    %vm2064 = vcmp.eq.f32.partialorder %v2063, 8.507059e+37
    %v2065 = vand.u32 %v1960, 2147483648
    %v2066 = vor.u32 1.1754944e-38, %v2065
    %v2067 = vsel %vm2064, %v2066, %v2062
    %v2068 = vmul.f32 %v1937, %v2067
    %v2069 = vrcp.pop %v1963
    %v2070 = vmul.f32 %v1963, %v2069
    %v2071 = vsub.f32 1.0, %v2070
    %v2072 = vmul.f32 %v2069, %v2071
    %v2073 = vadd.f32 %v2069, %v2072
    %vm2074 = vweird.f32 %v1963
    %vm2075 = vweird.f32 %v2069
    %vm2076 = vmor %vm2074, %vm2075
    %v2077 = vsel %vm2076, %v2069, %v2073
    %v2078 = vand.u32 2147483647, %v1963
    %vm2079 = vcmp.eq.f32.partialorder %v2078, 8.507059e+37
    %v2080 = vand.u32 %v1963, 2147483648
    %v2081 = vor.u32 1.1754944e-38, %v2080
    %v2082 = vsel %vm2079, %v2081, %v2077
    %v2083 = vmul.f32 %v1939, %v2082
    %2084 = vrot.lane.b32.xlu0 %v344, 48
    %v2085 = vpop.permute.xlu0 %2084
    %v2088 = vsel %vm366, %v1978, 0
    %2090 = vmatpush.msra.mxu0 0.0
    %2091 = vmatpush.msra.mxu0 0.0
    %2092 = vmatpush.msra.mxu0 0.0
    %2093 = vmatpush.msra.mxu0 0.0
    %2094 = vmatpush.msra.mxu0 0.0
    %2095 = vmatpush.msra.mxu0 0.0
    %2096 = vmatpush.msra.mxu0 0.0
    %2097 = vmatpush.msra.mxu0 0.0
    %2098 = vmatpush.msra.mxu0 0.0
    %2099 = vmatpush.msra.mxu0 0.0
    %2100 = vmatpush.msra.mxu0 0.0
    %2101 = vmatpush.msra.mxu0 0.0
    %2102 = vmatpush.msra.mxu0 0.0
    %2103 = vmatpush.msra.mxu0 0.0
    %2104 = vmatpush.msra.mxu0 0.0
    %2105 = vmatpush.msra.mxu0 %v2085
    %2106 = vmatmul.f32.gmra.mxu0 %v2088
    %v2107 = vpop.f32.mrf.mxu0
    %v2108 = vadd.f32 0.0, %v2107
    %2109 = vdwg.mxu0
    %2110 = vrot.lane.b32.xlu0 %v346, 48
    %v2111 = vpop.permute.xlu0 %2110
    %v2114 = vsel %vm366, %v1993, 0
    %2116 = vmatpush.msra.mxu0 0.0
    %2117 = vmatpush.msra.mxu0 0.0
    %2118 = vmatpush.msra.mxu0 0.0
    %2119 = vmatpush.msra.mxu0 0.0
    %2120 = vmatpush.msra.mxu0 0.0
    %2121 = vmatpush.msra.mxu0 0.0
    %2122 = vmatpush.msra.mxu0 0.0
    %2123 = vmatpush.msra.mxu0 0.0
    %2124 = vmatpush.msra.mxu0 0.0
    %2125 = vmatpush.msra.mxu0 0.0
    %2126 = vmatpush.msra.mxu0 0.0
    %2127 = vmatpush.msra.mxu0 0.0
    %2128 = vmatpush.msra.mxu0 0.0
    %2129 = vmatpush.msra.mxu0 0.0
    %2130 = vmatpush.msra.mxu0 0.0
    %2131 = vmatpush.msra.mxu0 %v2111
    %2132 = vmatmul.f32.gmra.mxu0 %v2114
    %v2133 = vpop.f32.mrf.mxu0
    %v2134 = vadd.f32 0.0, %v2133
    %2135 = vdwg.mxu0
    %2136 = vrot.lane.b32.xlu0 %v349, 48
    %v2137 = vpop.permute.xlu0 %2136
    %v2140 = vsel %vm366, %v2008, 0
    %2142 = vmatpush.msra.mxu0 0.0
    %2143 = vmatpush.msra.mxu0 0.0
    %2144 = vmatpush.msra.mxu0 0.0
    %2145 = vmatpush.msra.mxu0 0.0
    %2146 = vmatpush.msra.mxu0 0.0
    %2147 = vmatpush.msra.mxu0 0.0
    %2148 = vmatpush.msra.mxu0 0.0
    %2149 = vmatpush.msra.mxu0 0.0
    %2150 = vmatpush.msra.mxu0 0.0
    %2151 = vmatpush.msra.mxu0 0.0
    %2152 = vmatpush.msra.mxu0 0.0
    %2153 = vmatpush.msra.mxu0 0.0
    %2154 = vmatpush.msra.mxu0 0.0
    %2155 = vmatpush.msra.mxu0 0.0
    %2156 = vmatpush.msra.mxu0 0.0
    %2157 = vmatpush.msra.mxu0 %v2137
    %2158 = vmatmul.f32.gmra.mxu0 %v2140
    %v2159 = vpop.f32.mrf.mxu0
    %v2160 = vadd.f32 0.0, %v2159
    %2161 = vdwg.mxu0
    %2162 = vrot.lane.b32.xlu0 %v351, 48
    %v2163 = vpop.permute.xlu0 %2162
    %v2166 = vsel %vm366, %v2023, 0
    %2168 = vmatpush.msra.mxu0 0.0
    %2169 = vmatpush.msra.mxu0 0.0
    %2170 = vmatpush.msra.mxu0 0.0
    %2171 = vmatpush.msra.mxu0 0.0
    %2172 = vmatpush.msra.mxu0 0.0
    %2173 = vmatpush.msra.mxu0 0.0
    %2174 = vmatpush.msra.mxu0 0.0
    %2175 = vmatpush.msra.mxu0 0.0
    %2176 = vmatpush.msra.mxu0 0.0
    %2177 = vmatpush.msra.mxu0 0.0
    %2178 = vmatpush.msra.mxu0 0.0
    %2179 = vmatpush.msra.mxu0 0.0
    %2180 = vmatpush.msra.mxu0 0.0
    %2181 = vmatpush.msra.mxu0 0.0
    %2182 = vmatpush.msra.mxu0 0.0
    %2183 = vmatpush.msra.mxu0 %v2163
    %2184 = vmatmul.f32.gmra.mxu0 %v2166
    %v2185 = vpop.f32.mrf.mxu0
    %v2186 = vadd.f32 0.0, %v2185
    %2187 = vdwg.mxu0
    %2188 = vrot.lane.b32.xlu0 %v354, 48
    %v2189 = vpop.permute.xlu0 %2188
    %v2192 = vsel %vm366, %v2038, 0
    %2194 = vmatpush.msra.mxu0 0.0
    %2195 = vmatpush.msra.mxu0 0.0
    %2196 = vmatpush.msra.mxu0 0.0
    %2197 = vmatpush.msra.mxu0 0.0
    %2198 = vmatpush.msra.mxu0 0.0
    %2199 = vmatpush.msra.mxu0 0.0
    %2200 = vmatpush.msra.mxu0 0.0
    %2201 = vmatpush.msra.mxu0 0.0
    %2202 = vmatpush.msra.mxu0 0.0
    %2203 = vmatpush.msra.mxu0 0.0
    %2204 = vmatpush.msra.mxu0 0.0
    %2205 = vmatpush.msra.mxu0 0.0
    %2206 = vmatpush.msra.mxu0 0.0
    %2207 = vmatpush.msra.mxu0 0.0
    %2208 = vmatpush.msra.mxu0 0.0
    %2209 = vmatpush.msra.mxu0 %v2189
    %2210 = vmatmul.f32.gmra.mxu0 %v2192
    %v2211 = vpop.f32.mrf.mxu0
    %v2212 = vadd.f32 0.0, %v2211
    %2213 = vdwg.mxu0
    %2214 = vrot.lane.b32.xlu0 %v356, 48
    %v2215 = vpop.permute.xlu0 %2214
    %v2218 = vsel %vm366, %v2053, 0
    %2220 = vmatpush.msra.mxu0 0.0
    %2221 = vmatpush.msra.mxu0 0.0
    %2222 = vmatpush.msra.mxu0 0.0
    %2223 = vmatpush.msra.mxu0 0.0
    %2224 = vmatpush.msra.mxu0 0.0
    %2225 = vmatpush.msra.mxu0 0.0
    %2226 = vmatpush.msra.mxu0 0.0
    %2227 = vmatpush.msra.mxu0 0.0
    %2228 = vmatpush.msra.mxu0 0.0
    %2229 = vmatpush.msra.mxu0 0.0
    %2230 = vmatpush.msra.mxu0 0.0
    %2231 = vmatpush.msra.mxu0 0.0
    %2232 = vmatpush.msra.mxu0 0.0
    %2233 = vmatpush.msra.mxu0 0.0
    %2234 = vmatpush.msra.mxu0 0.0
    %2235 = vmatpush.msra.mxu0 %v2215
    %2236 = vmatmul.f32.gmra.mxu0 %v2218
    %v2237 = vpop.f32.mrf.mxu0
    %v2238 = vadd.f32 0.0, %v2237
    %2239 = vdwg.mxu0
    %2240 = vrot.lane.b32.xlu0 %v359, 48
    %v2241 = vpop.permute.xlu0 %2240
    %v2244 = vsel %vm366, %v2068, 0
    %2246 = vmatpush.msra.mxu0 0.0
    %2247 = vmatpush.msra.mxu0 0.0
    %2248 = vmatpush.msra.mxu0 0.0
    %2249 = vmatpush.msra.mxu0 0.0
    %2250 = vmatpush.msra.mxu0 0.0
    %2251 = vmatpush.msra.mxu0 0.0
    %2252 = vmatpush.msra.mxu0 0.0
    %2253 = vmatpush.msra.mxu0 0.0
    %2254 = vmatpush.msra.mxu0 0.0
    %2255 = vmatpush.msra.mxu0 0.0
    %2256 = vmatpush.msra.mxu0 0.0
    %2257 = vmatpush.msra.mxu0 0.0
    %2258 = vmatpush.msra.mxu0 0.0
    %2259 = vmatpush.msra.mxu0 0.0
    %2260 = vmatpush.msra.mxu0 0.0
    %2261 = vmatpush.msra.mxu0 %v2241
    %2262 = vmatmul.f32.gmra.mxu0 %v2244
    %v2263 = vpop.f32.mrf.mxu0
    %v2264 = vadd.f32 0.0, %v2263
    %2265 = vdwg.mxu0
    %2266 = vrot.lane.b32.xlu0 %v361, 48
    %v2267 = vpop.permute.xlu0 %2266
    %v2270 = vsel %vm366, %v2083, 0
    %2272 = vmatpush.msra.mxu0 0.0
    %2273 = vmatpush.msra.mxu0 0.0
    %2274 = vmatpush.msra.mxu0 0.0
    %2275 = vmatpush.msra.mxu0 0.0
    %2276 = vmatpush.msra.mxu0 0.0
    %2277 = vmatpush.msra.mxu0 0.0
    %2278 = vmatpush.msra.mxu0 0.0
    %2279 = vmatpush.msra.mxu0 0.0
    %2280 = vmatpush.msra.mxu0 0.0
    %2281 = vmatpush.msra.mxu0 0.0
    %2282 = vmatpush.msra.mxu0 0.0
    %2283 = vmatpush.msra.mxu0 0.0
    %2284 = vmatpush.msra.mxu0 0.0
    %2285 = vmatpush.msra.mxu0 0.0
    %2286 = vmatpush.msra.mxu0 0.0
    %2287 = vmatpush.msra.mxu0 %v2267
    %2288 = vmatmul.f32.gmra.mxu0 %v2270
    %v2289 = vpop.f32.mrf.mxu0
    %v2290 = vadd.f32 0.0, %v2289
    %2291 = vdwg.mxu0
    %2292 = vrot.lane.b32.xlu0 %v344, 104
    %v2293 = vpop.permute.xlu0 %2292
    %2294 = vrot.lane.b32.xlu0 %v344, 72
    %v2295 = vpop.permute.xlu0 %2294
    %v2296 = vsel %vm366, %v2293, 0
    %v2298 = vsel %vm366, %v2295, 0
    %2300 = vmatpush.xpose.msra.mxu0 0.0
    %2301 = vmatpush.xpose.msra.mxu0 0.0
    %2302 = vmatpush.xpose.msra.mxu0 0.0
    %2303 = vmatpush.xpose.msra.mxu0 0.0
    %2304 = vmatpush.xpose.msra.mxu0 0.0
    %2305 = vmatpush.xpose.msra.mxu0 0.0
    %2306 = vmatpush.xpose.msra.mxu0 0.0
    %2307 = vmatpush.xpose.msra.mxu0 0.0
    %2308 = vmatpush.xpose.msra.mxu0 0.0
    %2309 = vmatpush.xpose.msra.mxu0 0.0
    %2310 = vmatpush.xpose.msra.mxu0 0.0
    %2311 = vmatpush.xpose.msra.mxu0 0.0
    %2312 = vmatpush.xpose.msra.mxu0 0.0
    %2313 = vmatpush.xpose.msra.mxu0 0.0
    %2314 = vmatpush.xpose.msra.mxu0 0.0
    %2315 = vmatpush.xpose.msra.mxu0 %v2298
    %2316 = vmatmul.f32.gmra.mxu0 %v2296
    %v2317 = vpop.f32.mrf.mxu0
    %v2318 = vadd.f32 0.0, %v2317
    %2319 = vdwg.mxu0
    %2320 = vrot.lane.b32.xlu0 %v346, 104
    %v2321 = vpop.permute.xlu0 %2320
    %2322 = vrot.lane.b32.xlu0 %v346, 72
    %v2323 = vpop.permute.xlu0 %2322
    %v2324 = vsel %vm366, %v2321, 0
    %v2326 = vsel %vm366, %v2323, 0
    %2328 = vmatpush.xpose.msra.mxu0 0.0
    %2329 = vmatpush.xpose.msra.mxu0 0.0
    %2330 = vmatpush.xpose.msra.mxu0 0.0
    %2331 = vmatpush.xpose.msra.mxu0 0.0
    %2332 = vmatpush.xpose.msra.mxu0 0.0
    %2333 = vmatpush.xpose.msra.mxu0 0.0
    %2334 = vmatpush.xpose.msra.mxu0 0.0
    %2335 = vmatpush.xpose.msra.mxu0 0.0
    %2336 = vmatpush.xpose.msra.mxu0 0.0
    %2337 = vmatpush.xpose.msra.mxu0 0.0
    %2338 = vmatpush.xpose.msra.mxu0 0.0
    %2339 = vmatpush.xpose.msra.mxu0 0.0
    %2340 = vmatpush.xpose.msra.mxu0 0.0
    %2341 = vmatpush.xpose.msra.mxu0 0.0
    %2342 = vmatpush.xpose.msra.mxu0 0.0
    %2343 = vmatpush.xpose.msra.mxu0 %v2326
    %2344 = vmatmul.f32.gmra.mxu0 %v2324
    %v2345 = vpop.f32.mrf.mxu0
    %v2346 = vadd.f32 0.0, %v2345
    %2347 = vdwg.mxu0
    %2348 = vrot.lane.b32.xlu0 %v349, 104
    %v2349 = vpop.permute.xlu0 %2348
    %2350 = vrot.lane.b32.xlu0 %v349, 72
    %v2351 = vpop.permute.xlu0 %2350
    %v2352 = vsel %vm366, %v2349, 0
    %v2354 = vsel %vm366, %v2351, 0
    %2356 = vmatpush.xpose.msra.mxu0 0.0
    %2357 = vmatpush.xpose.msra.mxu0 0.0
    %2358 = vmatpush.xpose.msra.mxu0 0.0
    %2359 = vmatpush.xpose.msra.mxu0 0.0
    %2360 = vmatpush.xpose.msra.mxu0 0.0
    %2361 = vmatpush.xpose.msra.mxu0 0.0
    %2362 = vmatpush.xpose.msra.mxu0 0.0
    %2363 = vmatpush.xpose.msra.mxu0 0.0
    %2364 = vmatpush.xpose.msra.mxu0 0.0
    %2365 = vmatpush.xpose.msra.mxu0 0.0
    %2366 = vmatpush.xpose.msra.mxu0 0.0
    %2367 = vmatpush.xpose.msra.mxu0 0.0
    %2368 = vmatpush.xpose.msra.mxu0 0.0
    %2369 = vmatpush.xpose.msra.mxu0 0.0
    %2370 = vmatpush.xpose.msra.mxu0 0.0
    %2371 = vmatpush.xpose.msra.mxu0 %v2354
    %2372 = vmatmul.f32.gmra.mxu0 %v2352
    %v2373 = vpop.f32.mrf.mxu0
    %v2374 = vadd.f32 0.0, %v2373
    %2375 = vdwg.mxu0
    %2376 = vrot.lane.b32.xlu0 %v351, 104
    %v2377 = vpop.permute.xlu0 %2376
    %2378 = vrot.lane.b32.xlu0 %v351, 72
    %v2379 = vpop.permute.xlu0 %2378
    %v2380 = vsel %vm366, %v2377, 0
    %v2382 = vsel %vm366, %v2379, 0
    %2384 = vmatpush.xpose.msra.mxu0 0.0
    %2385 = vmatpush.xpose.msra.mxu0 0.0
    %2386 = vmatpush.xpose.msra.mxu0 0.0
    %2387 = vmatpush.xpose.msra.mxu0 0.0
    %2388 = vmatpush.xpose.msra.mxu0 0.0
    %2389 = vmatpush.xpose.msra.mxu0 0.0
    %2390 = vmatpush.xpose.msra.mxu0 0.0
    %2391 = vmatpush.xpose.msra.mxu0 0.0
    %2392 = vmatpush.xpose.msra.mxu0 0.0
    %2393 = vmatpush.xpose.msra.mxu0 0.0
    %2394 = vmatpush.xpose.msra.mxu0 0.0
    %2395 = vmatpush.xpose.msra.mxu0 0.0
    %2396 = vmatpush.xpose.msra.mxu0 0.0
    %2397 = vmatpush.xpose.msra.mxu0 0.0
    %2398 = vmatpush.xpose.msra.mxu0 0.0
    %2399 = vmatpush.xpose.msra.mxu0 %v2382
    %2400 = vmatmul.f32.gmra.mxu0 %v2380
    %v2401 = vpop.f32.mrf.mxu0
    %v2402 = vadd.f32 0.0, %v2401
    %2403 = vdwg.mxu0
    %2404 = vrot.lane.b32.xlu0 %v354, 104
    %v2405 = vpop.permute.xlu0 %2404
    %2406 = vrot.lane.b32.xlu0 %v354, 72
    %v2407 = vpop.permute.xlu0 %2406
    %v2408 = vsel %vm366, %v2405, 0
    %v2410 = vsel %vm366, %v2407, 0
    %2412 = vmatpush.xpose.msra.mxu0 0.0
    %2413 = vmatpush.xpose.msra.mxu0 0.0
    %2414 = vmatpush.xpose.msra.mxu0 0.0
    %2415 = vmatpush.xpose.msra.mxu0 0.0
    %2416 = vmatpush.xpose.msra.mxu0 0.0
    %2417 = vmatpush.xpose.msra.mxu0 0.0
    %2418 = vmatpush.xpose.msra.mxu0 0.0
    %2419 = vmatpush.xpose.msra.mxu0 0.0
    %2420 = vmatpush.xpose.msra.mxu0 0.0
    %2421 = vmatpush.xpose.msra.mxu0 0.0
    %2422 = vmatpush.xpose.msra.mxu0 0.0
    %2423 = vmatpush.xpose.msra.mxu0 0.0
    %2424 = vmatpush.xpose.msra.mxu0 0.0
    %2425 = vmatpush.xpose.msra.mxu0 0.0
    %2426 = vmatpush.xpose.msra.mxu0 0.0
    %2427 = vmatpush.xpose.msra.mxu0 %v2410
    %2428 = vmatmul.f32.gmra.mxu0 %v2408
    %v2429 = vpop.f32.mrf.mxu0
    %v2430 = vadd.f32 0.0, %v2429
    %2431 = vdwg.mxu0
    %2432 = vrot.lane.b32.xlu0 %v356, 104
    %v2433 = vpop.permute.xlu0 %2432
    %2434 = vrot.lane.b32.xlu0 %v356, 72
    %v2435 = vpop.permute.xlu0 %2434
    %v2436 = vsel %vm366, %v2433, 0
    %v2438 = vsel %vm366, %v2435, 0
    %2440 = vmatpush.xpose.msra.mxu0 0.0
    %2441 = vmatpush.xpose.msra.mxu0 0.0
    %2442 = vmatpush.xpose.msra.mxu0 0.0
    %2443 = vmatpush.xpose.msra.mxu0 0.0
    %2444 = vmatpush.xpose.msra.mxu0 0.0
    %2445 = vmatpush.xpose.msra.mxu0 0.0
    %2446 = vmatpush.xpose.msra.mxu0 0.0
    %2447 = vmatpush.xpose.msra.mxu0 0.0
    %2448 = vmatpush.xpose.msra.mxu0 0.0
    %2449 = vmatpush.xpose.msra.mxu0 0.0
    %2450 = vmatpush.xpose.msra.mxu0 0.0
    %2451 = vmatpush.xpose.msra.mxu0 0.0
    %2452 = vmatpush.xpose.msra.mxu0 0.0
    %2453 = vmatpush.xpose.msra.mxu0 0.0
    %2454 = vmatpush.xpose.msra.mxu0 0.0
    %2455 = vmatpush.xpose.msra.mxu0 %v2438
    %2456 = vmatmul.f32.gmra.mxu0 %v2436
    %v2457 = vpop.f32.mrf.mxu0
    %v2458 = vadd.f32 0.0, %v2457
    %2459 = vdwg.mxu0
    %2460 = vrot.lane.b32.xlu0 %v359, 104
    %v2461 = vpop.permute.xlu0 %2460
    %2462 = vrot.lane.b32.xlu0 %v359, 72
    %v2463 = vpop.permute.xlu0 %2462
    %v2464 = vsel %vm366, %v2461, 0
    %v2466 = vsel %vm366, %v2463, 0
    %2468 = vmatpush.xpose.msra.mxu0 0.0
    %2469 = vmatpush.xpose.msra.mxu0 0.0
    %2470 = vmatpush.xpose.msra.mxu0 0.0
    %2471 = vmatpush.xpose.msra.mxu0 0.0
    %2472 = vmatpush.xpose.msra.mxu0 0.0
    %2473 = vmatpush.xpose.msra.mxu0 0.0
    %2474 = vmatpush.xpose.msra.mxu0 0.0
    %2475 = vmatpush.xpose.msra.mxu0 0.0
    %2476 = vmatpush.xpose.msra.mxu0 0.0
    %2477 = vmatpush.xpose.msra.mxu0 0.0
    %2478 = vmatpush.xpose.msra.mxu0 0.0
    %2479 = vmatpush.xpose.msra.mxu0 0.0
    %2480 = vmatpush.xpose.msra.mxu0 0.0
    %2481 = vmatpush.xpose.msra.mxu0 0.0
    %2482 = vmatpush.xpose.msra.mxu0 0.0
    %2483 = vmatpush.xpose.msra.mxu0 %v2466
    %2484 = vmatmul.f32.gmra.mxu0 %v2464
    %v2485 = vpop.f32.mrf.mxu0
    %v2486 = vadd.f32 0.0, %v2485
    %2487 = vdwg.mxu0
    %2488 = vrot.lane.b32.xlu0 %v361, 104
    %v2489 = vpop.permute.xlu0 %2488
    %2490 = vrot.lane.b32.xlu0 %v361, 72
    %v2491 = vpop.permute.xlu0 %2490
    %v2492 = vsel %vm366, %v2489, 0
    %v2494 = vsel %vm366, %v2491, 0
    %2496 = vmatpush.xpose.msra.mxu0 0.0
    %2497 = vmatpush.xpose.msra.mxu0 0.0
    %2498 = vmatpush.xpose.msra.mxu0 0.0
    %2499 = vmatpush.xpose.msra.mxu0 0.0
    %2500 = vmatpush.xpose.msra.mxu0 0.0
    %2501 = vmatpush.xpose.msra.mxu0 0.0
    %2502 = vmatpush.xpose.msra.mxu0 0.0
    %2503 = vmatpush.xpose.msra.mxu0 0.0
    %2504 = vmatpush.xpose.msra.mxu0 0.0
    %2505 = vmatpush.xpose.msra.mxu0 0.0
    %2506 = vmatpush.xpose.msra.mxu0 0.0
    %2507 = vmatpush.xpose.msra.mxu0 0.0
    %2508 = vmatpush.xpose.msra.mxu0 0.0
    %2509 = vmatpush.xpose.msra.mxu0 0.0
    %2510 = vmatpush.xpose.msra.mxu0 0.0
    %2511 = vmatpush.xpose.msra.mxu0 %v2494
    %2512 = vmatmul.f32.gmra.mxu0 %v2492
    %v2513 = vpop.f32.mrf.mxu0
    %v2514 = vadd.f32 0.0, %v2513
    %2515 = vdwg.mxu0
    %v2516 = vmul.f32 %v2318, 0.35355338
    %v2517 = vmul.f32 %v2346, 0.35355338
    %v2518 = vmul.f32 %v2374, 0.35355338
    %v2519 = vmul.f32 %v2402, 0.35355338
    %v2520 = vmul.f32 %v2430, 0.35355338
    %v2521 = vmul.f32 %v2458, 0.35355338
    %v2522 = vmul.f32 %v2486, 0.35355338
    %v2523 = vmul.f32 %v2514, 0.35355338
    %v2524 = vadd.f32 %v2516, %v588
    %v2525 = vadd.f32 %v2517, %v589
    %v2526 = vadd.f32 %v2518, %v590
    %v2527 = vadd.f32 %v2519, %v591
    %v2528 = vadd.f32 %v2520, %v592
    %v2529 = vadd.f32 %v2521, %v593
    %v2530 = vadd.f32 %v2522, %v594
    %v2531 = vadd.f32 %v2523, %v595
    %v2532 = vsel %vm366, %v2524, -inf
    %2533 = vmax.xlane.f32.xlu0 %v2532
    %v2534 = vpop.xlane.xlu0 %2533
    %v2535 = vsel %vm366, %v2525, -inf
    %2536 = vmax.xlane.f32.xlu0 %v2535
    %v2537 = vpop.xlane.xlu0 %2536
    %v2538 = vsel %vm366, %v2526, -inf
    %2539 = vmax.xlane.f32.xlu0 %v2538
    %v2540 = vpop.xlane.xlu0 %2539
    %v2541 = vsel %vm366, %v2527, -inf
    %2542 = vmax.xlane.f32.xlu0 %v2541
    %v2543 = vpop.xlane.xlu0 %2542
    %v2544 = vsel %vm366, %v2528, -inf
    %2545 = vmax.xlane.f32.xlu0 %v2544
    %v2546 = vpop.xlane.xlu0 %2545
    %v2547 = vsel %vm366, %v2529, -inf
    %2548 = vmax.xlane.f32.xlu0 %v2547
    %v2549 = vpop.xlane.xlu0 %2548
    %v2550 = vsel %vm366, %v2530, -inf
    %2551 = vmax.xlane.f32.xlu0 %v2550
    %v2552 = vpop.xlane.xlu0 %2551
    %v2553 = vsel %vm366, %v2531, -inf
    %2554 = vmax.xlane.f32.xlu0 %v2553
    %v2555 = vpop.xlane.xlu0 %2554
    %v2556 = vsub.f32 %v2524, %v2534
    %v2557 = vsub.f32 %v2525, %v2537
    %v2558 = vsub.f32 %v2526, %v2540
    %v2559 = vsub.f32 %v2527, %v2543
    %v2560 = vsub.f32 %v2528, %v2546
    %v2561 = vsub.f32 %v2529, %v2549
    %v2562 = vsub.f32 %v2530, %v2552
    %v2563 = vsub.f32 %v2531, %v2555
    %v2564 = vmul.f32 %v2556, 1.442695
    %v2565 = vpow.pop %v2564
    %v2566 = vmul.f32 %v2557, 1.442695
    %v2567 = vpow.pop %v2566
    %v2568 = vmul.f32 %v2558, 1.442695
    %v2569 = vpow.pop %v2568
    %v2570 = vmul.f32 %v2559, 1.442695
    %v2571 = vpow.pop %v2570
    %v2572 = vmul.f32 %v2560, 1.442695
    %v2573 = vpow.pop %v2572
    %v2574 = vmul.f32 %v2561, 1.442695
    %v2575 = vpow.pop %v2574
    %v2576 = vmul.f32 %v2562, 1.442695
    %v2577 = vpow.pop %v2576
    %v2578 = vmul.f32 %v2563, 1.442695
    %v2579 = vpow.pop %v2578
    %v2580 = vsel %vm366, %v2565, 0.0
    %2581 = vadd.xlane.f32.xlu0 %v2580
    %v2582 = vpop.xlane.xlu0 %2581
    %v2583 = vsel %vm366, %v2567, 0.0
    %2584 = vadd.xlane.f32.xlu0 %v2583
    %v2585 = vpop.xlane.xlu0 %2584
    %v2586 = vsel %vm366, %v2569, 0.0
    %2587 = vadd.xlane.f32.xlu0 %v2586
    %v2588 = vpop.xlane.xlu0 %2587
    %v2589 = vsel %vm366, %v2571, 0.0
    %2590 = vadd.xlane.f32.xlu0 %v2589
    %v2591 = vpop.xlane.xlu0 %2590
    %v2592 = vsel %vm366, %v2573, 0.0
    %2593 = vadd.xlane.f32.xlu0 %v2592
    %v2594 = vpop.xlane.xlu0 %2593
    %v2595 = vsel %vm366, %v2575, 0.0
    %2596 = vadd.xlane.f32.xlu0 %v2595
    %v2597 = vpop.xlane.xlu0 %2596
    %v2598 = vsel %vm366, %v2577, 0.0
    %2599 = vadd.xlane.f32.xlu0 %v2598
    %v2600 = vpop.xlane.xlu0 %2599
    %v2601 = vsel %vm366, %v2579, 0.0
    %2602 = vadd.xlane.f32.xlu0 %v2601
    %v2603 = vpop.xlane.xlu0 %2602
    %v2604 = vrcp.pop %v2582
    %v2605 = vmul.f32 %v2582, %v2604
    %v2606 = vsub.f32 1.0, %v2605
    %v2607 = vmul.f32 %v2604, %v2606
    %v2608 = vadd.f32 %v2604, %v2607
    %vm2609 = vweird.f32 %v2582
    %vm2610 = vweird.f32 %v2604
    %vm2611 = vmor %vm2609, %vm2610
    %v2612 = vsel %vm2611, %v2604, %v2608
    %v2613 = vand.u32 2147483647, %v2582
    %vm2614 = vcmp.eq.f32.partialorder %v2613, 8.507059e+37
    %v2615 = vand.u32 %v2582, 2147483648
    %v2616 = vor.u32 1.1754944e-38, %v2615
    %v2617 = vsel %vm2614, %v2616, %v2612
    %v2618 = vmul.f32 %v2565, %v2617
    %v2619 = vrcp.pop %v2585
    %v2620 = vmul.f32 %v2585, %v2619
    %v2621 = vsub.f32 1.0, %v2620
    %v2622 = vmul.f32 %v2619, %v2621
    %v2623 = vadd.f32 %v2619, %v2622
    %vm2624 = vweird.f32 %v2585
    %vm2625 = vweird.f32 %v2619
    %vm2626 = vmor %vm2624, %vm2625
    %v2627 = vsel %vm2626, %v2619, %v2623
    %v2628 = vand.u32 2147483647, %v2585
    %vm2629 = vcmp.eq.f32.partialorder %v2628, 8.507059e+37
    %v2630 = vand.u32 %v2585, 2147483648
    %v2631 = vor.u32 1.1754944e-38, %v2630
    %v2632 = vsel %vm2629, %v2631, %v2627
    %v2633 = vmul.f32 %v2567, %v2632
    %v2634 = vrcp.pop %v2588
    %v2635 = vmul.f32 %v2588, %v2634
    %v2636 = vsub.f32 1.0, %v2635
    %v2637 = vmul.f32 %v2634, %v2636
    %v2638 = vadd.f32 %v2634, %v2637
    %vm2639 = vweird.f32 %v2588
    %vm2640 = vweird.f32 %v2634
    %vm2641 = vmor %vm2639, %vm2640
    %v2642 = vsel %vm2641, %v2634, %v2638
    %v2643 = vand.u32 2147483647, %v2588
    %vm2644 = vcmp.eq.f32.partialorder %v2643, 8.507059e+37
    %v2645 = vand.u32 %v2588, 2147483648
    %v2646 = vor.u32 1.1754944e-38, %v2645
    %v2647 = vsel %vm2644, %v2646, %v2642
    %v2648 = vmul.f32 %v2569, %v2647
    %v2649 = vrcp.pop %v2591
    %v2650 = vmul.f32 %v2591, %v2649
    %v2651 = vsub.f32 1.0, %v2650
    %v2652 = vmul.f32 %v2649, %v2651
    %v2653 = vadd.f32 %v2649, %v2652
    %vm2654 = vweird.f32 %v2591
    %vm2655 = vweird.f32 %v2649
    %vm2656 = vmor %vm2654, %vm2655
    %v2657 = vsel %vm2656, %v2649, %v2653
    %v2658 = vand.u32 2147483647, %v2591
    %vm2659 = vcmp.eq.f32.partialorder %v2658, 8.507059e+37
    %v2660 = vand.u32 %v2591, 2147483648
    %v2661 = vor.u32 1.1754944e-38, %v2660
    %v2662 = vsel %vm2659, %v2661, %v2657
    %v2663 = vmul.f32 %v2571, %v2662
    %v2664 = vrcp.pop %v2594
    %v2665 = vmul.f32 %v2594, %v2664
    %v2666 = vsub.f32 1.0, %v2665
    %v2667 = vmul.f32 %v2664, %v2666
    %v2668 = vadd.f32 %v2664, %v2667
    %vm2669 = vweird.f32 %v2594
    %vm2670 = vweird.f32 %v2664
    %vm2671 = vmor %vm2669, %vm2670
    %v2672 = vsel %vm2671, %v2664, %v2668
    %v2673 = vand.u32 2147483647, %v2594
    %vm2674 = vcmp.eq.f32.partialorder %v2673, 8.507059e+37
    %v2675 = vand.u32 %v2594, 2147483648
    %v2676 = vor.u32 1.1754944e-38, %v2675
    %v2677 = vsel %vm2674, %v2676, %v2672
    %v2678 = vmul.f32 %v2573, %v2677
    %v2679 = vrcp.pop %v2597
    %v2680 = vmul.f32 %v2597, %v2679
    %v2681 = vsub.f32 1.0, %v2680
    %v2682 = vmul.f32 %v2679, %v2681
    %v2683 = vadd.f32 %v2679, %v2682
    %vm2684 = vweird.f32 %v2597
    %vm2685 = vweird.f32 %v2679
    %vm2686 = vmor %vm2684, %vm2685
    %v2687 = vsel %vm2686, %v2679, %v2683
    %v2688 = vand.u32 2147483647, %v2597
    %vm2689 = vcmp.eq.f32.partialorder %v2688, 8.507059e+37
    %v2690 = vand.u32 %v2597, 2147483648
    %v2691 = vor.u32 1.1754944e-38, %v2690
    %v2692 = vsel %vm2689, %v2691, %v2687
    %v2693 = vmul.f32 %v2575, %v2692
    %v2694 = vrcp.pop %v2600
    %v2695 = vmul.f32 %v2600, %v2694
    %v2696 = vsub.f32 1.0, %v2695
    %v2697 = vmul.f32 %v2694, %v2696
    %v2698 = vadd.f32 %v2694, %v2697
    %vm2699 = vweird.f32 %v2600
    %vm2700 = vweird.f32 %v2694
    %vm2701 = vmor %vm2699, %vm2700
    %v2702 = vsel %vm2701, %v2694, %v2698
    %v2703 = vand.u32 2147483647, %v2600
    %vm2704 = vcmp.eq.f32.partialorder %v2703, 8.507059e+37
    %v2705 = vand.u32 %v2600, 2147483648
    %v2706 = vor.u32 1.1754944e-38, %v2705
    %v2707 = vsel %vm2704, %v2706, %v2702
    %v2708 = vmul.f32 %v2577, %v2707
    %v2709 = vrcp.pop %v2603
    %v2710 = vmul.f32 %v2603, %v2709
    %v2711 = vsub.f32 1.0, %v2710
    %v2712 = vmul.f32 %v2709, %v2711
    %v2713 = vadd.f32 %v2709, %v2712
    %vm2714 = vweird.f32 %v2603
    %vm2715 = vweird.f32 %v2709
    %vm2716 = vmor %vm2714, %vm2715
    %v2717 = vsel %vm2716, %v2709, %v2713
    %v2718 = vand.u32 2147483647, %v2603
    %vm2719 = vcmp.eq.f32.partialorder %v2718, 8.507059e+37
    %v2720 = vand.u32 %v2603, 2147483648
    %v2721 = vor.u32 1.1754944e-38, %v2720
    %v2722 = vsel %vm2719, %v2721, %v2717
    %v2723 = vmul.f32 %v2579, %v2722
    %2724 = vrot.lane.b32.xlu0 %v344, 40
    %v2725 = vpop.permute.xlu0 %2724
    %v2728 = vsel %vm366, %v2618, 0
    %2730 = vmatpush.msra.mxu0 0.0
    %2731 = vmatpush.msra.mxu0 0.0
    %2732 = vmatpush.msra.mxu0 0.0
    %2733 = vmatpush.msra.mxu0 0.0
    %2734 = vmatpush.msra.mxu0 0.0
    %2735 = vmatpush.msra.mxu0 0.0
    %2736 = vmatpush.msra.mxu0 0.0
    %2737 = vmatpush.msra.mxu0 0.0
    %2738 = vmatpush.msra.mxu0 0.0
    %2739 = vmatpush.msra.mxu0 0.0
    %2740 = vmatpush.msra.mxu0 0.0
    %2741 = vmatpush.msra.mxu0 0.0
    %2742 = vmatpush.msra.mxu0 0.0
    %2743 = vmatpush.msra.mxu0 0.0
    %2744 = vmatpush.msra.mxu0 0.0
    %2745 = vmatpush.msra.mxu0 %v2725
    %2746 = vmatmul.f32.gmra.mxu0 %v2728
    %v2747 = vpop.f32.mrf.mxu0
    %v2748 = vadd.f32 0.0, %v2747
    %2749 = vdwg.mxu0
    %2750 = vrot.lane.b32.xlu0 %v346, 40
    %v2751 = vpop.permute.xlu0 %2750
    %v2754 = vsel %vm366, %v2633, 0
    %2756 = vmatpush.msra.mxu0 0.0
    %2757 = vmatpush.msra.mxu0 0.0
    %2758 = vmatpush.msra.mxu0 0.0
    %2759 = vmatpush.msra.mxu0 0.0
    %2760 = vmatpush.msra.mxu0 0.0
    %2761 = vmatpush.msra.mxu0 0.0
    %2762 = vmatpush.msra.mxu0 0.0
    %2763 = vmatpush.msra.mxu0 0.0
    %2764 = vmatpush.msra.mxu0 0.0
    %2765 = vmatpush.msra.mxu0 0.0
    %2766 = vmatpush.msra.mxu0 0.0
    %2767 = vmatpush.msra.mxu0 0.0
    %2768 = vmatpush.msra.mxu0 0.0
    %2769 = vmatpush.msra.mxu0 0.0
    %2770 = vmatpush.msra.mxu0 0.0
    %2771 = vmatpush.msra.mxu0 %v2751
    %2772 = vmatmul.f32.gmra.mxu0 %v2754
    %v2773 = vpop.f32.mrf.mxu0
    %v2774 = vadd.f32 0.0, %v2773
    %2775 = vdwg.mxu0
    %2776 = vrot.lane.b32.xlu0 %v349, 40
    %v2777 = vpop.permute.xlu0 %2776
    %v2780 = vsel %vm366, %v2648, 0
    %2782 = vmatpush.msra.mxu0 0.0
    %2783 = vmatpush.msra.mxu0 0.0
    %2784 = vmatpush.msra.mxu0 0.0
    %2785 = vmatpush.msra.mxu0 0.0
    %2786 = vmatpush.msra.mxu0 0.0
    %2787 = vmatpush.msra.mxu0 0.0
    %2788 = vmatpush.msra.mxu0 0.0
    %2789 = vmatpush.msra.mxu0 0.0
    %2790 = vmatpush.msra.mxu0 0.0
    %2791 = vmatpush.msra.mxu0 0.0
    %2792 = vmatpush.msra.mxu0 0.0
    %2793 = vmatpush.msra.mxu0 0.0
    %2794 = vmatpush.msra.mxu0 0.0
    %2795 = vmatpush.msra.mxu0 0.0
    %2796 = vmatpush.msra.mxu0 0.0
    %2797 = vmatpush.msra.mxu0 %v2777
    %2798 = vmatmul.f32.gmra.mxu0 %v2780
    %v2799 = vpop.f32.mrf.mxu0
    %v2800 = vadd.f32 0.0, %v2799
    %2801 = vdwg.mxu0
    %2802 = vrot.lane.b32.xlu0 %v351, 40
    %v2803 = vpop.permute.xlu0 %2802
    %v2806 = vsel %vm366, %v2663, 0
    %2808 = vmatpush.msra.mxu0 0.0
    %2809 = vmatpush.msra.mxu0 0.0
    %2810 = vmatpush.msra.mxu0 0.0
    %2811 = vmatpush.msra.mxu0 0.0
    %2812 = vmatpush.msra.mxu0 0.0
    %2813 = vmatpush.msra.mxu0 0.0
    %2814 = vmatpush.msra.mxu0 0.0
    %2815 = vmatpush.msra.mxu0 0.0
    %2816 = vmatpush.msra.mxu0 0.0
    %2817 = vmatpush.msra.mxu0 0.0
    %2818 = vmatpush.msra.mxu0 0.0
    %2819 = vmatpush.msra.mxu0 0.0
    %2820 = vmatpush.msra.mxu0 0.0
    %2821 = vmatpush.msra.mxu0 0.0
    %2822 = vmatpush.msra.mxu0 0.0
    %2823 = vmatpush.msra.mxu0 %v2803
    %2824 = vmatmul.f32.gmra.mxu0 %v2806
    %v2825 = vpop.f32.mrf.mxu0
    %v2826 = vadd.f32 0.0, %v2825
    %2827 = vdwg.mxu0
    %2828 = vrot.lane.b32.xlu0 %v354, 40
    %v2829 = vpop.permute.xlu0 %2828
    %v2832 = vsel %vm366, %v2678, 0
    %2834 = vmatpush.msra.mxu0 0.0
    %2835 = vmatpush.msra.mxu0 0.0
    %2836 = vmatpush.msra.mxu0 0.0
    %2837 = vmatpush.msra.mxu0 0.0
    %2838 = vmatpush.msra.mxu0 0.0
    %2839 = vmatpush.msra.mxu0 0.0
    %2840 = vmatpush.msra.mxu0 0.0
    %2841 = vmatpush.msra.mxu0 0.0
    %2842 = vmatpush.msra.mxu0 0.0
    %2843 = vmatpush.msra.mxu0 0.0
    %2844 = vmatpush.msra.mxu0 0.0
    %2845 = vmatpush.msra.mxu0 0.0
    %2846 = vmatpush.msra.mxu0 0.0
    %2847 = vmatpush.msra.mxu0 0.0
    %2848 = vmatpush.msra.mxu0 0.0
    %2849 = vmatpush.msra.mxu0 %v2829
    %2850 = vmatmul.f32.gmra.mxu0 %v2832
    %v2851 = vpop.f32.mrf.mxu0
    %v2852 = vadd.f32 0.0, %v2851
    %2853 = vdwg.mxu0
    %2854 = vrot.lane.b32.xlu0 %v356, 40
    %v2855 = vpop.permute.xlu0 %2854
    %v2858 = vsel %vm366, %v2693, 0
    %2860 = vmatpush.msra.mxu0 0.0
    %2861 = vmatpush.msra.mxu0 0.0
    %2862 = vmatpush.msra.mxu0 0.0
    %2863 = vmatpush.msra.mxu0 0.0
    %2864 = vmatpush.msra.mxu0 0.0
    %2865 = vmatpush.msra.mxu0 0.0
    %2866 = vmatpush.msra.mxu0 0.0
    %2867 = vmatpush.msra.mxu0 0.0
    %2868 = vmatpush.msra.mxu0 0.0
    %2869 = vmatpush.msra.mxu0 0.0
    %2870 = vmatpush.msra.mxu0 0.0
    %2871 = vmatpush.msra.mxu0 0.0
    %2872 = vmatpush.msra.mxu0 0.0
    %2873 = vmatpush.msra.mxu0 0.0
    %2874 = vmatpush.msra.mxu0 0.0
    %2875 = vmatpush.msra.mxu0 %v2855
    %2876 = vmatmul.f32.gmra.mxu0 %v2858
    %v2877 = vpop.f32.mrf.mxu0
    %v2878 = vadd.f32 0.0, %v2877
    %2879 = vdwg.mxu0
    %2880 = vrot.lane.b32.xlu0 %v359, 40
    %v2881 = vpop.permute.xlu0 %2880
    %v2884 = vsel %vm366, %v2708, 0
    %2886 = vmatpush.msra.mxu0 0.0
    %2887 = vmatpush.msra.mxu0 0.0
    %2888 = vmatpush.msra.mxu0 0.0
    %2889 = vmatpush.msra.mxu0 0.0
    %2890 = vmatpush.msra.mxu0 0.0
    %2891 = vmatpush.msra.mxu0 0.0
    %2892 = vmatpush.msra.mxu0 0.0
    %2893 = vmatpush.msra.mxu0 0.0
    %2894 = vmatpush.msra.mxu0 0.0
    %2895 = vmatpush.msra.mxu0 0.0
    %2896 = vmatpush.msra.mxu0 0.0
    %2897 = vmatpush.msra.mxu0 0.0
    %2898 = vmatpush.msra.mxu0 0.0
    %2899 = vmatpush.msra.mxu0 0.0
    %2900 = vmatpush.msra.mxu0 0.0
    %2901 = vmatpush.msra.mxu0 %v2881
    %2902 = vmatmul.f32.gmra.mxu0 %v2884
    %v2903 = vpop.f32.mrf.mxu0
    %v2904 = vadd.f32 0.0, %v2903
    %2905 = vdwg.mxu0
    %2906 = vrot.lane.b32.xlu0 %v361, 40
    %v2907 = vpop.permute.xlu0 %2906
    %v2910 = vsel %vm366, %v2723, 0
    %2912 = vmatpush.msra.mxu0 0.0
    %2913 = vmatpush.msra.mxu0 0.0
    %2914 = vmatpush.msra.mxu0 0.0
    %2915 = vmatpush.msra.mxu0 0.0
    %2916 = vmatpush.msra.mxu0 0.0
    %2917 = vmatpush.msra.mxu0 0.0
    %2918 = vmatpush.msra.mxu0 0.0
    %2919 = vmatpush.msra.mxu0 0.0
    %2920 = vmatpush.msra.mxu0 0.0
    %2921 = vmatpush.msra.mxu0 0.0
    %2922 = vmatpush.msra.mxu0 0.0
    %2923 = vmatpush.msra.mxu0 0.0
    %2924 = vmatpush.msra.mxu0 0.0
    %2925 = vmatpush.msra.mxu0 0.0
    %2926 = vmatpush.msra.mxu0 0.0
    %2927 = vmatpush.msra.mxu0 %v2907
    %2928 = vmatmul.f32.gmra.mxu0 %v2910
    %v2929 = vpop.f32.mrf.mxu0
    %v2930 = vadd.f32 0.0, %v2929
    %2931 = vdwg.mxu0
    %2940 = vrot.lane.b32.xlu0 %v1468, 8
    %v2941 = vpop.permute.xlu0 %2940
    %2942 = vrot.lane.b32.xlu0 %v1494, 8
    %v2943 = vpop.permute.xlu0 %2942
    %2944 = vrot.lane.b32.xlu0 %v1520, 8
    %v2945 = vpop.permute.xlu0 %2944
    %2946 = vrot.lane.b32.xlu0 %v1546, 8
    %v2947 = vpop.permute.xlu0 %2946
    %2948 = vrot.lane.b32.xlu0 %v1572, 8
    %v2949 = vpop.permute.xlu0 %2948
    %2950 = vrot.lane.b32.xlu0 %v1598, 8
    %v2951 = vpop.permute.xlu0 %2950
    %2952 = vrot.lane.b32.xlu0 %v1624, 8
    %v2953 = vpop.permute.xlu0 %2952
    %2954 = vrot.lane.b32.xlu0 %v1650, 8
    %v2955 = vpop.permute.xlu0 %2954
    %2972 = vrot.lane.b32.xlu0 %v2108, 16
    %v2973 = vpop.permute.xlu0 %2972
    %2974 = vrot.lane.b32.xlu0 %v2134, 16
    %v2975 = vpop.permute.xlu0 %2974
    %2976 = vrot.lane.b32.xlu0 %v2160, 16
    %v2977 = vpop.permute.xlu0 %2976
    %2978 = vrot.lane.b32.xlu0 %v2186, 16
    %v2979 = vpop.permute.xlu0 %2978
    %2980 = vrot.lane.b32.xlu0 %v2212, 16
    %v2981 = vpop.permute.xlu0 %2980
    %2982 = vrot.lane.b32.xlu0 %v2238, 16
    %v2983 = vpop.permute.xlu0 %2982
    %2984 = vrot.lane.b32.xlu0 %v2264, 16
    %v2985 = vpop.permute.xlu0 %2984
    %2986 = vrot.lane.b32.xlu0 %v2290, 16
    %v2987 = vpop.permute.xlu0 %2986
    %3004 = vrot.lane.b32.xlu0 %v2748, 24
    %v3005 = vpop.permute.xlu0 %3004
    %3006 = vrot.lane.b32.xlu0 %v2774, 24
    %v3007 = vpop.permute.xlu0 %3006
    %3008 = vrot.lane.b32.xlu0 %v2800, 24
    %v3009 = vpop.permute.xlu0 %3008
    %3010 = vrot.lane.b32.xlu0 %v2826, 24
    %v3011 = vpop.permute.xlu0 %3010
    %3012 = vrot.lane.b32.xlu0 %v2852, 24
    %v3013 = vpop.permute.xlu0 %3012
    %3014 = vrot.lane.b32.xlu0 %v2878, 24
    %v3015 = vpop.permute.xlu0 %3014
    %3016 = vrot.lane.b32.xlu0 %v2904, 24
    %v3017 = vpop.permute.xlu0 %3016
    %3018 = vrot.lane.b32.xlu0 %v2930, 24
    %v3019 = vpop.permute.xlu0 %3018
    %v3028 = vsel %vm366, %v828, %v2941
    %v3029 = vsel %vm366, %v854, %v2943
    %v3030 = vsel %vm366, %v880, %v2945
    %v3031 = vsel %vm366, %v906, %v2947
    %v3032 = vsel %vm366, %v932, %v2949
    %v3033 = vsel %vm366, %v958, %v2951
    %v3034 = vsel %vm366, %v984, %v2953
    %v3035 = vsel %vm366, %v1010, %v2955
    %vm3036 = vcmask 130048
    %v3037 = vsel %vm3036, %v3028, %v2973
    %v3038 = vsel %vm3036, %v3029, %v2975
    %v3039 = vsel %vm3036, %v3030, %v2977
    %v3040 = vsel %vm3036, %v3031, %v2979
    %v3041 = vsel %vm3036, %v3032, %v2981
    %v3042 = vsel %vm3036, %v3033, %v2983
    %v3043 = vsel %vm3036, %v3034, %v2985
    %v3044 = vsel %vm3036, %v3035, %v2987
    %vm3045 = vcmask 195584
    %v3046 = vsel %vm3045, %v3037, %v3005
    %v3047 = vsel %vm3045, %v3038, %v3007
    %v3048 = vsel %vm3045, %v3039, %v3009
    %v3049 = vsel %vm3045, %v3040, %v3011
    %v3050 = vsel %vm3045, %v3041, %v3013
    %v3051 = vsel %vm3045, %v3042, %v3015
    %v3052 = vsel %vm3045, %v3043, %v3017
    %v3053 = vsel %vm3045, %v3044, %v3019
    %v3054 = vpack.c.bf16 %v3047, %v3046
    %v3055 = vpack.c.bf16 %v3049, %v3048
    %v3056 = vpack.c.bf16 %v3051, %v3050
    %v3057 = vpack.c.bf16 %v3053, %v3052
    %v3058 = vld [vmem:[%s7] sm:$0xf]
    %v3059 = vld [vmem:[%s7 + $0x4] sm:$0xf]
    %v3060 = vld [vmem:[%s7 + $0x8] sm:$0xf]
    %v3061 = vld [vmem:[%s7 + $0xc] sm:$0xf]
    %v3062 = vld [vmem:[%s8] sm:$0x1]
    %v3064 = vperm.slane %v3062, 0
    %v3070 = vunpack.c.l.b16 %v3058
    %v3071 = vunpack.c.l.b16 %v3059
    %v3072 = vunpack.c.l.b16 %v3060
    %v3073 = vunpack.c.l.b16 %v3061
    %v3074 = vpack.c.b16 %v3071, %v3070
    %v3075 = vpack.c.b16 %v3073, %v3072
    %v3079 = vsel %vm83, %v3054, 0
    %v3082 = vsel %vm83, %v3055, 0
    %v3085 = vsel %vm83, %v3056, 0
    %v3088 = vsel %vm83, %v3057, 0
    %3090 = vmatpush.bf16.msra.mxu0 0
    %3091 = vmatpush.bf16.msra.mxu0 0
    %3092 = vmatpush.bf16.msra.mxu0 0
    %3093 = vmatpush.bf16.msra.mxu0 0
    %3094 = vmatpush.bf16.msra.mxu0 0
    %3095 = vmatpush.bf16.msra.mxu0 0
    %3096 = vmatpush.bf16.msra.mxu0 %v3075
    %3097 = vmatpush.bf16.msra.mxu0 %v3074
    %3098 = vmatmul.bf16.gmra.mxu0 %v3079
    %v3099 = vpop.f32.mrf.mxu0
    %v3100 = vadd.f32 %v3064, %v3099
    %v3101 = vpop.f32.mrf.mxu0
    %v3102 = vadd.f32 %v3064, %v3101
    %3103 = vmatmul.bf16.gmra.mxu0 %v3082
    %v3104 = vpop.f32.mrf.mxu0
    %v3105 = vadd.f32 %v3064, %v3104
    %v3106 = vpop.f32.mrf.mxu0
    %v3107 = vadd.f32 %v3064, %v3106
    %3108 = vmatmul.bf16.gmra.mxu0 %v3085
    %v3109 = vpop.f32.mrf.mxu0
    %v3110 = vadd.f32 %v3064, %v3109
    %v3111 = vpop.f32.mrf.mxu0
    %v3112 = vadd.f32 %v3064, %v3111
    %3113 = vmatmul.bf16.gmra.mxu0 %v3088
    %v3114 = vpop.f32.mrf.mxu0
    %v3115 = vadd.f32 %v3064, %v3114
    %v3116 = vpop.f32.mrf.mxu0
    %v3117 = vadd.f32 %v3064, %v3116
    %3118 = vdwg.mxu0
    %v3119 = vadd.f32 %v281, %v3100
    %v3120 = vadd.f32 %v282, %v3102
    %v3121 = vadd.f32 %v283, %v3105
    %v3122 = vadd.f32 %v284, %v3107
    %v3123 = vadd.f32 %v285, %v3110
    %v3124 = vadd.f32 %v286, %v3112
    %v3125 = vadd.f32 %v287, %v3115
    %v3126 = vadd.f32 %v288, %v3117
    %v3127 = vld [vmem:[%s9] sm:$0x1]
    %v3128 = vld [vmem:[%s10] sm:$0x1]
    %v3129 = vsel %vm83, %v3119, 0.0
    %3130 = vadd.xlane.f32.xlu0 %v3129
    %v3131 = vpop.xlane.xlu0 %3130
    %v3132 = vsel %vm83, %v3120, 0.0
    %3133 = vadd.xlane.f32.xlu0 %v3132
    %v3134 = vpop.xlane.xlu0 %3133
    %v3135 = vsel %vm83, %v3121, 0.0
    %3136 = vadd.xlane.f32.xlu0 %v3135
    %v3137 = vpop.xlane.xlu0 %3136
    %v3138 = vsel %vm83, %v3122, 0.0
    %3139 = vadd.xlane.f32.xlu0 %v3138
    %v3140 = vpop.xlane.xlu0 %3139
    %v3141 = vsel %vm83, %v3123, 0.0
    %3142 = vadd.xlane.f32.xlu0 %v3141
    %v3143 = vpop.xlane.xlu0 %3142
    %v3144 = vsel %vm83, %v3124, 0.0
    %3145 = vadd.xlane.f32.xlu0 %v3144
    %v3146 = vpop.xlane.xlu0 %3145
    %v3147 = vsel %vm83, %v3125, 0.0
    %3148 = vadd.xlane.f32.xlu0 %v3147
    %v3149 = vpop.xlane.xlu0 %3148
    %v3150 = vsel %vm83, %v3126, 0.0
    %3151 = vadd.xlane.f32.xlu0 %v3150
    %v3152 = vpop.xlane.xlu0 %3151
    %v3153 = vmul.f32 %v3131, %v114
    %v3154 = vmul.f32 %v3134, %v114
    %v3155 = vmul.f32 %v3137, %v114
    %v3156 = vmul.f32 %v3140, %v114
    %v3157 = vmul.f32 %v3143, %v114
    %v3158 = vmul.f32 %v3146, %v114
    %v3159 = vmul.f32 %v3149, %v114
    %v3160 = vmul.f32 %v3152, %v114
    %v3161 = vsub.f32 %v3119, %v3153
    %v3162 = vsub.f32 %v3120, %v3154
    %v3163 = vsub.f32 %v3121, %v3155
    %v3164 = vsub.f32 %v3122, %v3156
    %v3165 = vsub.f32 %v3123, %v3157
    %v3166 = vsub.f32 %v3124, %v3158
    %v3167 = vsub.f32 %v3125, %v3159
    %v3168 = vsub.f32 %v3126, %v3160
    %v3169 = vmul.f32 %v3161, %v3161
    %v3170 = vmul.f32 %v3162, %v3162
    %v3171 = vmul.f32 %v3163, %v3163
    %v3172 = vmul.f32 %v3164, %v3164
    %v3173 = vmul.f32 %v3165, %v3165
    %v3174 = vmul.f32 %v3166, %v3166
    %v3175 = vmul.f32 %v3167, %v3167
    %v3176 = vmul.f32 %v3168, %v3168
    %v3177 = vsel %vm83, %v3169, 0.0
    %3178 = vadd.xlane.f32.xlu0 %v3177
    %v3179 = vpop.xlane.xlu0 %3178
    %v3180 = vsel %vm83, %v3170, 0.0
    %3181 = vadd.xlane.f32.xlu0 %v3180
    %v3182 = vpop.xlane.xlu0 %3181
    %v3183 = vsel %vm83, %v3171, 0.0
    %3184 = vadd.xlane.f32.xlu0 %v3183
    %v3185 = vpop.xlane.xlu0 %3184
    %v3186 = vsel %vm83, %v3172, 0.0
    %3187 = vadd.xlane.f32.xlu0 %v3186
    %v3188 = vpop.xlane.xlu0 %3187
    %v3189 = vsel %vm83, %v3173, 0.0
    %3190 = vadd.xlane.f32.xlu0 %v3189
    %v3191 = vpop.xlane.xlu0 %3190
    %v3192 = vsel %vm83, %v3174, 0.0
    %3193 = vadd.xlane.f32.xlu0 %v3192
    %v3194 = vpop.xlane.xlu0 %3193
    %v3195 = vsel %vm83, %v3175, 0.0
    %3196 = vadd.xlane.f32.xlu0 %v3195
    %v3197 = vpop.xlane.xlu0 %3196
    %v3198 = vsel %vm83, %v3176, 0.0
    %3199 = vadd.xlane.f32.xlu0 %v3198
    %v3200 = vpop.xlane.xlu0 %3199
    %v3201 = vmul.f32 %v3179, %v114
    %v3202 = vmul.f32 %v3182, %v114
    %v3203 = vmul.f32 %v3185, %v114
    %v3204 = vmul.f32 %v3188, %v114
    %v3205 = vmul.f32 %v3191, %v114
    %v3206 = vmul.f32 %v3194, %v114
    %v3207 = vmul.f32 %v3197, %v114
    %v3208 = vmul.f32 %v3200, %v114
    %v3209 = vadd.f32 %v3201, 1e-12
    %v3210 = vadd.f32 %v3202, 1e-12
    %v3211 = vadd.f32 %v3203, 1e-12
    %v3212 = vadd.f32 %v3204, 1e-12
    %v3213 = vadd.f32 %v3205, 1e-12
    %v3214 = vadd.f32 %v3206, 1e-12
    %v3215 = vadd.f32 %v3207, 1e-12
    %v3216 = vadd.f32 %v3208, 1e-12
    %v3217 = vrsqrt.pop %v3209
    %v3218 = vmul.f32 %v3217, %v3209
    %v3219 = vmul.f32 %v3218, %v3217
    %v3220 = vmul.f32 0.5, %v3219
    %v3221 = vsub.f32 1.5, %v3220
    %v3222 = vmul.f32 %v3217, %v3221
    %vm3223 = vweird.f32 %v3209
    %vm3224 = vweird.f32 %v3217
    %vm3225 = vmor %vm3223, %vm3224
    %v3226 = vsel %vm3225, %v3217, %v3222
    %v3227 = vrsqrt.pop %v3210
    %v3228 = vmul.f32 %v3227, %v3210
    %v3229 = vmul.f32 %v3228, %v3227
    %v3230 = vmul.f32 0.5, %v3229
    %v3231 = vsub.f32 1.5, %v3230
    %v3232 = vmul.f32 %v3227, %v3231
    %vm3233 = vweird.f32 %v3210
    %vm3234 = vweird.f32 %v3227
    %vm3235 = vmor %vm3233, %vm3234
    %v3236 = vsel %vm3235, %v3227, %v3232
    %v3237 = vrsqrt.pop %v3211
    %v3238 = vmul.f32 %v3237, %v3211
    %v3239 = vmul.f32 %v3238, %v3237
    %v3240 = vmul.f32 0.5, %v3239
    %v3241 = vsub.f32 1.5, %v3240
    %v3242 = vmul.f32 %v3237, %v3241
    %vm3243 = vweird.f32 %v3211
    %vm3244 = vweird.f32 %v3237
    %vm3245 = vmor %vm3243, %vm3244
    %v3246 = vsel %vm3245, %v3237, %v3242
    %v3247 = vrsqrt.pop %v3212
    %v3248 = vmul.f32 %v3247, %v3212
    %v3249 = vmul.f32 %v3248, %v3247
    %v3250 = vmul.f32 0.5, %v3249
    %v3251 = vsub.f32 1.5, %v3250
    %v3252 = vmul.f32 %v3247, %v3251
    %vm3253 = vweird.f32 %v3212
    %vm3254 = vweird.f32 %v3247
    %vm3255 = vmor %vm3253, %vm3254
    %v3256 = vsel %vm3255, %v3247, %v3252
    %v3257 = vrsqrt.pop %v3213
    %v3258 = vmul.f32 %v3257, %v3213
    %v3259 = vmul.f32 %v3258, %v3257
    %v3260 = vmul.f32 0.5, %v3259
    %v3261 = vsub.f32 1.5, %v3260
    %v3262 = vmul.f32 %v3257, %v3261
    %vm3263 = vweird.f32 %v3213
    %vm3264 = vweird.f32 %v3257
    %vm3265 = vmor %vm3263, %vm3264
    %v3266 = vsel %vm3265, %v3257, %v3262
    %v3267 = vrsqrt.pop %v3214
    %v3268 = vmul.f32 %v3267, %v3214
    %v3269 = vmul.f32 %v3268, %v3267
    %v3270 = vmul.f32 0.5, %v3269
    %v3271 = vsub.f32 1.5, %v3270
    %v3272 = vmul.f32 %v3267, %v3271
    %vm3273 = vweird.f32 %v3214
    %vm3274 = vweird.f32 %v3267
    %vm3275 = vmor %vm3273, %vm3274
    %v3276 = vsel %vm3275, %v3267, %v3272
    %v3277 = vrsqrt.pop %v3215
    %v3278 = vmul.f32 %v3277, %v3215
    %v3279 = vmul.f32 %v3278, %v3277
    %v3280 = vmul.f32 0.5, %v3279
    %v3281 = vsub.f32 1.5, %v3280
    %v3282 = vmul.f32 %v3277, %v3281
    %vm3283 = vweird.f32 %v3215
    %vm3284 = vweird.f32 %v3277
    %vm3285 = vmor %vm3283, %vm3284
    %v3286 = vsel %vm3285, %v3277, %v3282
    %v3287 = vrsqrt.pop %v3216
    %v3288 = vmul.f32 %v3287, %v3216
    %v3289 = vmul.f32 %v3288, %v3287
    %v3290 = vmul.f32 0.5, %v3289
    %v3291 = vsub.f32 1.5, %v3290
    %v3292 = vmul.f32 %v3287, %v3291
    %vm3293 = vweird.f32 %v3216
    %vm3294 = vweird.f32 %v3287
    %vm3295 = vmor %vm3293, %vm3294
    %v3296 = vsel %vm3295, %v3287, %v3292
    %v3297 = vmul.f32 %v3161, %v3226
    %v3298 = vmul.f32 %v3162, %v3236
    %v3299 = vmul.f32 %v3163, %v3246
    %v3300 = vmul.f32 %v3164, %v3256
    %v3301 = vmul.f32 %v3165, %v3266
    %v3302 = vmul.f32 %v3166, %v3276
    %v3303 = vmul.f32 %v3167, %v3286
    %v3304 = vmul.f32 %v3168, %v3296
    %v3306 = vperm.slane %v3127, 0
    %v3308 = vmul.f32 %v3297, %v3306
    %v3309 = vmul.f32 %v3298, %v3306
    %v3310 = vmul.f32 %v3299, %v3306
    %v3311 = vmul.f32 %v3300, %v3306
    %v3312 = vmul.f32 %v3301, %v3306
    %v3313 = vmul.f32 %v3302, %v3306
    %v3314 = vmul.f32 %v3303, %v3306
    %v3315 = vmul.f32 %v3304, %v3306
    %v3317 = vperm.slane %v3128, 0
    %v3319 = vadd.f32 %v3308, %v3317
    %v3320 = vadd.f32 %v3309, %v3317
    %v3321 = vadd.f32 %v3310, %v3317
    %v3322 = vadd.f32 %v3311, %v3317
    %v3323 = vadd.f32 %v3312, %v3317
    %v3324 = vadd.f32 %v3313, %v3317
    %v3325 = vadd.f32 %v3314, %v3317
    %v3326 = vadd.f32 %v3315, %v3317
    %v3327 = vpack.c.bf16 %v3320, %v3319
    %v3328 = vpack.c.bf16 %v3322, %v3321
    %v3329 = vpack.c.bf16 %v3324, %v3323
    %v3330 = vpack.c.bf16 %v3326, %v3325
    %v3331 = vld [vmem:[%s11] sm:$0xf]
    %v3332 = vld [vmem:[%s11 + $0x4] sm:$0xf]
    %v3333 = vld [vmem:[%s11 + $0x8] sm:$0xf]
    %v3334 = vld [vmem:[%s11 + $0xc] sm:$0xf]
    %v3335 = vld [vmem:[%s12] sm:$0x1]
    %v3337 = vperm.slane %v3335, 0
    %v3343 = vunpack.c.l.b16 %v3331
    %v3344 = vunpack.c.l.b16 %v3332
    %v3345 = vunpack.c.l.b16 %v3333
    %v3346 = vunpack.c.l.b16 %v3334
    %v3347 = vpack.c.b16 %v3344, %v3343
    %v3348 = vpack.c.b16 %v3346, %v3345
    %v3352 = vsel %vm83, %v3327, 0
    %v3355 = vsel %vm83, %v3328, 0
    %v3358 = vsel %vm83, %v3329, 0
    %v3361 = vsel %vm83, %v3330, 0
    %3363 = vmatpush.bf16.msra.mxu0 0
    %3364 = vmatpush.bf16.msra.mxu0 0
    %3365 = vmatpush.bf16.msra.mxu0 0
    %3366 = vmatpush.bf16.msra.mxu0 0
    %3367 = vmatpush.bf16.msra.mxu0 0
    %3368 = vmatpush.bf16.msra.mxu0 0
    %3369 = vmatpush.bf16.msra.mxu0 %v3348
    %3370 = vmatpush.bf16.msra.mxu0 %v3347
    %3371 = vmatmul.bf16.gmra.mxu0 %v3352
    %v3372 = vpop.f32.mrf.mxu0
    %v3373 = vadd.f32 %v3337, %v3372
    %v3374 = vpop.f32.mrf.mxu0
    %v3375 = vadd.f32 %v3337, %v3374
    %3376 = vmatmul.bf16.gmra.mxu0 %v3355
    %v3377 = vpop.f32.mrf.mxu0
    %v3378 = vadd.f32 %v3337, %v3377
    %v3379 = vpop.f32.mrf.mxu0
    %v3380 = vadd.f32 %v3337, %v3379
    %3381 = vmatmul.bf16.gmra.mxu0 %v3358
    %v3382 = vpop.f32.mrf.mxu0
    %v3383 = vadd.f32 %v3337, %v3382
    %v3384 = vpop.f32.mrf.mxu0
    %v3385 = vadd.f32 %v3337, %v3384
    %3386 = vmatmul.bf16.gmra.mxu0 %v3361
    %v3387 = vpop.f32.mrf.mxu0
    %v3388 = vadd.f32 %v3337, %v3387
    %v3389 = vpop.f32.mrf.mxu0
    %v3390 = vadd.f32 %v3337, %v3389
    %3391 = vdwg.mxu0
    %v3392 = vmul.f32 %v3373, 0.5
    %v3393 = vmul.f32 %v3375, 0.5
    %v3394 = vmul.f32 %v3378, 0.5
    %v3395 = vmul.f32 %v3380, 0.5
    %v3396 = vmul.f32 %v3383, 0.5
    %v3397 = vmul.f32 %v3385, 0.5
    %v3398 = vmul.f32 %v3388, 0.5
    %v3399 = vmul.f32 %v3390, 0.5
    %v3400 = vmul.f32 %v3373, 0.044715
    %v3401 = vmul.f32 %v3375, 0.044715
    %v3402 = vmul.f32 %v3378, 0.044715
    %v3403 = vmul.f32 %v3380, 0.044715
    %v3404 = vmul.f32 %v3383, 0.044715
    %v3405 = vmul.f32 %v3385, 0.044715
    %v3406 = vmul.f32 %v3388, 0.044715
    %v3407 = vmul.f32 %v3390, 0.044715
    %v3408 = vmul.f32 %v3400, %v3373
    %v3409 = vmul.f32 %v3401, %v3375
    %v3410 = vmul.f32 %v3402, %v3378
    %v3411 = vmul.f32 %v3403, %v3380
    %v3412 = vmul.f32 %v3404, %v3383
    %v3413 = vmul.f32 %v3405, %v3385
    %v3414 = vmul.f32 %v3406, %v3388
    %v3415 = vmul.f32 %v3407, %v3390
    %v3416 = vmul.f32 %v3408, %v3373
    %v3417 = vmul.f32 %v3409, %v3375
    %v3418 = vmul.f32 %v3410, %v3378
    %v3419 = vmul.f32 %v3411, %v3380
    %v3420 = vmul.f32 %v3412, %v3383
    %v3421 = vmul.f32 %v3413, %v3385
    %v3422 = vmul.f32 %v3414, %v3388
    %v3423 = vmul.f32 %v3415, %v3390
    %v3424 = vadd.f32 %v3373, %v3416
    %v3425 = vadd.f32 %v3375, %v3417
    %v3426 = vadd.f32 %v3378, %v3418
    %v3427 = vadd.f32 %v3380, %v3419
    %v3428 = vadd.f32 %v3383, %v3420
    %v3429 = vadd.f32 %v3385, %v3421
    %v3430 = vadd.f32 %v3388, %v3422
    %v3431 = vadd.f32 %v3390, %v3423
    %v3432 = vmul.f32 %v3424, 0.7978846
    %v3433 = vmul.f32 %v3425, 0.7978846
    %v3434 = vmul.f32 %v3426, 0.7978846
    %v3435 = vmul.f32 %v3427, 0.7978846
    %v3436 = vmul.f32 %v3428, 0.7978846
    %v3437 = vmul.f32 %v3429, 0.7978846
    %v3438 = vmul.f32 %v3430, 0.7978846
    %v3439 = vmul.f32 %v3431, 0.7978846
    %v3440 = vtanh.pop %v3432
    %v3441 = vtanh.pop %v3433
    %v3442 = vtanh.pop %v3434
    %v3443 = vtanh.pop %v3435
    %v3444 = vtanh.pop %v3436
    %v3445 = vtanh.pop %v3437
    %v3446 = vtanh.pop %v3438
    %v3447 = vtanh.pop %v3439
    %v3448 = vadd.f32 %v3440, 1.0
    %v3449 = vadd.f32 %v3441, 1.0
    %v3450 = vadd.f32 %v3442, 1.0
    %v3451 = vadd.f32 %v3443, 1.0
    %v3452 = vadd.f32 %v3444, 1.0
    %v3453 = vadd.f32 %v3445, 1.0
    %v3454 = vadd.f32 %v3446, 1.0
    %v3455 = vadd.f32 %v3447, 1.0
    %v3456 = vmul.f32 %v3392, %v3448
    %v3457 = vmul.f32 %v3393, %v3449
    %v3458 = vmul.f32 %v3394, %v3450
    %v3459 = vmul.f32 %v3395, %v3451
    %v3460 = vmul.f32 %v3396, %v3452
    %v3461 = vmul.f32 %v3397, %v3453
    %v3462 = vmul.f32 %v3398, %v3454
    %v3463 = vmul.f32 %v3399, %v3455
    %v3464 = vpack.c.bf16 %v3457, %v3456
    %v3465 = vpack.c.bf16 %v3459, %v3458
    %v3466 = vpack.c.bf16 %v3461, %v3460
    %v3467 = vpack.c.bf16 %v3463, %v3462
    %v3468 = vld [vmem:[%s13] sm:$0xf]
    %v3469 = vld [vmem:[%s13 + $0x4] sm:$0xf]
    %v3470 = vld [vmem:[%s13 + $0x8] sm:$0xf]
    %v3471 = vld [vmem:[%s13 + $0xc] sm:$0xf]
    %v3472 = vld [vmem:[%s13 + $0x10] sm:$0xf]
    %v3473 = vld [vmem:[%s13 + $0x14] sm:$0xf]
    %v3474 = vld [vmem:[%s13 + $0x18] sm:$0xf]
    %v3475 = vld [vmem:[%s13 + $0x1c] sm:$0xf]
    %v3476 = vld [vmem:[%s14] sm:$0x1]
    %v3478 = vperm.slane %v3476, 0
    %v3488 = vunpack.c.l.b16 %v3468
    %v3489 = vunpack.c.l.b16 %v3469
    %v3490 = vunpack.c.l.b16 %v3470
    %v3491 = vunpack.c.l.b16 %v3471
    %v3492 = vunpack.c.l.b16 %v3472
    %v3493 = vunpack.c.l.b16 %v3473
    %v3494 = vunpack.c.l.b16 %v3474
    %v3495 = vunpack.c.l.b16 %v3475
    %v3496 = vpack.c.b16 %v3489, %v3488
    %v3497 = vpack.c.b16 %v3491, %v3490
    %v3498 = vpack.c.b16 %v3493, %v3492
    %v3499 = vpack.c.b16 %v3495, %v3494
    %vm3504 = vcmask 523264
    %v3506 = vsel %vm3504, %v3464, 0
    %v3509 = vsel %vm3504, %v3465, 0
    %v3512 = vsel %vm3504, %v3466, 0
    %v3515 = vsel %vm3504, %v3467, 0
    %3517 = vmatpush.bf16.msra.mxu0 0
    %3518 = vmatpush.bf16.msra.mxu0 0
    %3519 = vmatpush.bf16.msra.mxu0 0
    %3520 = vmatpush.bf16.msra.mxu0 0
    %3521 = vmatpush.bf16.msra.mxu0 %v3499
    %3522 = vmatpush.bf16.msra.mxu0 %v3498
    %3523 = vmatpush.bf16.msra.mxu0 %v3497
    %3524 = vmatpush.bf16.msra.mxu0 %v3496
    %3525 = vmatmul.bf16.gmra.mxu0 %v3506
    %v3526 = vpop.f32.mrf.mxu0
    %v3527 = vadd.f32 %v3478, %v3526
    %v3528 = vpop.f32.mrf.mxu0
    %v3529 = vadd.f32 %v3478, %v3528
    %3530 = vmatmul.bf16.gmra.mxu0 %v3509
    %v3531 = vpop.f32.mrf.mxu0
    %v3532 = vadd.f32 %v3478, %v3531
    %v3533 = vpop.f32.mrf.mxu0
    %v3534 = vadd.f32 %v3478, %v3533
    %3535 = vmatmul.bf16.gmra.mxu0 %v3512
    %v3536 = vpop.f32.mrf.mxu0
    %v3537 = vadd.f32 %v3478, %v3536
    %v3538 = vpop.f32.mrf.mxu0
    %v3539 = vadd.f32 %v3478, %v3538
    %3540 = vmatmul.bf16.gmra.mxu0 %v3515
    %v3541 = vpop.f32.mrf.mxu0
    %v3542 = vadd.f32 %v3478, %v3541
    %v3543 = vpop.f32.mrf.mxu0
    %v3544 = vadd.f32 %v3478, %v3543
    %3545 = vdwg.mxu0
    %v3546 = vadd.f32 %v3319, %v3527
    %v3547 = vadd.f32 %v3320, %v3529
    %v3548 = vadd.f32 %v3321, %v3532
    %v3549 = vadd.f32 %v3322, %v3534
    %v3550 = vadd.f32 %v3323, %v3537
    %v3551 = vadd.f32 %v3324, %v3539
    %v3552 = vadd.f32 %v3325, %v3542
    %v3553 = vadd.f32 %v3326, %v3544
    %v3554 = vld [vmem:[%s15] sm:$0x1]
    %v3555 = vld [vmem:[%s16] sm:$0x1]
    %v3556 = vsel %vm83, %v3546, 0.0
    %3557 = vadd.xlane.f32.xlu0 %v3556
    %v3558 = vpop.xlane.xlu0 %3557
    %v3559 = vsel %vm83, %v3547, 0.0
    %3560 = vadd.xlane.f32.xlu0 %v3559
    %v3561 = vpop.xlane.xlu0 %3560
    %v3562 = vsel %vm83, %v3548, 0.0
    %3563 = vadd.xlane.f32.xlu0 %v3562
    %v3564 = vpop.xlane.xlu0 %3563
    %v3565 = vsel %vm83, %v3549, 0.0
    %3566 = vadd.xlane.f32.xlu0 %v3565
    %v3567 = vpop.xlane.xlu0 %3566
    %v3568 = vsel %vm83, %v3550, 0.0
    %3569 = vadd.xlane.f32.xlu0 %v3568
    %v3570 = vpop.xlane.xlu0 %3569
    %v3571 = vsel %vm83, %v3551, 0.0
    %3572 = vadd.xlane.f32.xlu0 %v3571
    %v3573 = vpop.xlane.xlu0 %3572
    %v3574 = vsel %vm83, %v3552, 0.0
    %3575 = vadd.xlane.f32.xlu0 %v3574
    %v3576 = vpop.xlane.xlu0 %3575
    %v3577 = vsel %vm83, %v3553, 0.0
    %3578 = vadd.xlane.f32.xlu0 %v3577
    %v3579 = vpop.xlane.xlu0 %3578
    %v3580 = vmul.f32 %v3558, %v114
    %v3581 = vmul.f32 %v3561, %v114
    %v3582 = vmul.f32 %v3564, %v114
    %v3583 = vmul.f32 %v3567, %v114
    %v3584 = vmul.f32 %v3570, %v114
    %v3585 = vmul.f32 %v3573, %v114
    %v3586 = vmul.f32 %v3576, %v114
    %v3587 = vmul.f32 %v3579, %v114
    %v3588 = vsub.f32 %v3546, %v3580
    %v3589 = vsub.f32 %v3547, %v3581
    %v3590 = vsub.f32 %v3548, %v3582
    %v3591 = vsub.f32 %v3549, %v3583
    %v3592 = vsub.f32 %v3550, %v3584
    %v3593 = vsub.f32 %v3551, %v3585
    %v3594 = vsub.f32 %v3552, %v3586
    %v3595 = vsub.f32 %v3553, %v3587
    %v3596 = vmul.f32 %v3588, %v3588
    %v3597 = vmul.f32 %v3589, %v3589
    %v3598 = vmul.f32 %v3590, %v3590
    %v3599 = vmul.f32 %v3591, %v3591
    %v3600 = vmul.f32 %v3592, %v3592
    %v3601 = vmul.f32 %v3593, %v3593
    %v3602 = vmul.f32 %v3594, %v3594
    %v3603 = vmul.f32 %v3595, %v3595
    %v3604 = vsel %vm83, %v3596, 0.0
    %3605 = vadd.xlane.f32.xlu0 %v3604
    %v3606 = vpop.xlane.xlu0 %3605
    %v3607 = vsel %vm83, %v3597, 0.0
    %3608 = vadd.xlane.f32.xlu0 %v3607
    %v3609 = vpop.xlane.xlu0 %3608
    %v3610 = vsel %vm83, %v3598, 0.0
    %3611 = vadd.xlane.f32.xlu0 %v3610
    %v3612 = vpop.xlane.xlu0 %3611
    %v3613 = vsel %vm83, %v3599, 0.0
    %3614 = vadd.xlane.f32.xlu0 %v3613
    %v3615 = vpop.xlane.xlu0 %3614
    %v3616 = vsel %vm83, %v3600, 0.0
    %3617 = vadd.xlane.f32.xlu0 %v3616
    %v3618 = vpop.xlane.xlu0 %3617
    %v3619 = vsel %vm83, %v3601, 0.0
    %3620 = vadd.xlane.f32.xlu0 %v3619
    %v3621 = vpop.xlane.xlu0 %3620
    %v3622 = vsel %vm83, %v3602, 0.0
    %3623 = vadd.xlane.f32.xlu0 %v3622
    %v3624 = vpop.xlane.xlu0 %3623
    %v3625 = vsel %vm83, %v3603, 0.0
    %3626 = vadd.xlane.f32.xlu0 %v3625
    %v3627 = vpop.xlane.xlu0 %3626
    %v3628 = vmul.f32 %v3606, %v114
    %v3629 = vmul.f32 %v3609, %v114
    %v3630 = vmul.f32 %v3612, %v114
    %v3631 = vmul.f32 %v3615, %v114
    %v3632 = vmul.f32 %v3618, %v114
    %v3633 = vmul.f32 %v3621, %v114
    %v3634 = vmul.f32 %v3624, %v114
    %v3635 = vmul.f32 %v3627, %v114
    %v3636 = vadd.f32 %v3628, 1e-12
    %v3637 = vadd.f32 %v3629, 1e-12
    %v3638 = vadd.f32 %v3630, 1e-12
    %v3639 = vadd.f32 %v3631, 1e-12
    %v3640 = vadd.f32 %v3632, 1e-12
    %v3641 = vadd.f32 %v3633, 1e-12
    %v3642 = vadd.f32 %v3634, 1e-12
    %v3643 = vadd.f32 %v3635, 1e-12
    %v3644 = vrsqrt.pop %v3636
    %v3645 = vmul.f32 %v3644, %v3636
    %v3646 = vmul.f32 %v3645, %v3644
    %v3647 = vmul.f32 0.5, %v3646
    %v3648 = vsub.f32 1.5, %v3647
    %v3649 = vmul.f32 %v3644, %v3648
    %vm3650 = vweird.f32 %v3636
    %vm3651 = vweird.f32 %v3644
    %vm3652 = vmor %vm3650, %vm3651
    %v3653 = vsel %vm3652, %v3644, %v3649
    %v3654 = vrsqrt.pop %v3637
    %v3655 = vmul.f32 %v3654, %v3637
    %v3656 = vmul.f32 %v3655, %v3654
    %v3657 = vmul.f32 0.5, %v3656
    %v3658 = vsub.f32 1.5, %v3657
    %v3659 = vmul.f32 %v3654, %v3658
    %vm3660 = vweird.f32 %v3637
    %vm3661 = vweird.f32 %v3654
    %vm3662 = vmor %vm3660, %vm3661
    %v3663 = vsel %vm3662, %v3654, %v3659
    %v3664 = vrsqrt.pop %v3638
    %v3665 = vmul.f32 %v3664, %v3638
    %v3666 = vmul.f32 %v3665, %v3664
    %v3667 = vmul.f32 0.5, %v3666
    %v3668 = vsub.f32 1.5, %v3667
    %v3669 = vmul.f32 %v3664, %v3668
    %vm3670 = vweird.f32 %v3638
    %vm3671 = vweird.f32 %v3664
    %vm3672 = vmor %vm3670, %vm3671
    %v3673 = vsel %vm3672, %v3664, %v3669
    %v3674 = vrsqrt.pop %v3639
    %v3675 = vmul.f32 %v3674, %v3639
    %v3676 = vmul.f32 %v3675, %v3674
    %v3677 = vmul.f32 0.5, %v3676
    %v3678 = vsub.f32 1.5, %v3677
    %v3679 = vmul.f32 %v3674, %v3678
    %vm3680 = vweird.f32 %v3639
    %vm3681 = vweird.f32 %v3674
    %vm3682 = vmor %vm3680, %vm3681
    %v3683 = vsel %vm3682, %v3674, %v3679
    %v3684 = vrsqrt.pop %v3640
    %v3685 = vmul.f32 %v3684, %v3640
    %v3686 = vmul.f32 %v3685, %v3684
    %v3687 = vmul.f32 0.5, %v3686
    %v3688 = vsub.f32 1.5, %v3687
    %v3689 = vmul.f32 %v3684, %v3688
    %vm3690 = vweird.f32 %v3640
    %vm3691 = vweird.f32 %v3684
    %vm3692 = vmor %vm3690, %vm3691
    %v3693 = vsel %vm3692, %v3684, %v3689
    %v3694 = vrsqrt.pop %v3641
    %v3695 = vmul.f32 %v3694, %v3641
    %v3696 = vmul.f32 %v3695, %v3694
    %v3697 = vmul.f32 0.5, %v3696
    %v3698 = vsub.f32 1.5, %v3697
    %v3699 = vmul.f32 %v3694, %v3698
    %vm3700 = vweird.f32 %v3641
    %vm3701 = vweird.f32 %v3694
    %vm3702 = vmor %vm3700, %vm3701
    %v3703 = vsel %vm3702, %v3694, %v3699
    %v3704 = vrsqrt.pop %v3642
    %v3705 = vmul.f32 %v3704, %v3642
    %v3706 = vmul.f32 %v3705, %v3704
    %v3707 = vmul.f32 0.5, %v3706
    %v3708 = vsub.f32 1.5, %v3707
    %v3709 = vmul.f32 %v3704, %v3708
    %vm3710 = vweird.f32 %v3642
    %vm3711 = vweird.f32 %v3704
    %vm3712 = vmor %vm3710, %vm3711
    %v3713 = vsel %vm3712, %v3704, %v3709
    %v3714 = vrsqrt.pop %v3643
    %v3715 = vmul.f32 %v3714, %v3643
    %v3716 = vmul.f32 %v3715, %v3714
    %v3717 = vmul.f32 0.5, %v3716
    %v3718 = vsub.f32 1.5, %v3717
    %v3719 = vmul.f32 %v3714, %v3718
    %vm3720 = vweird.f32 %v3643
    %vm3721 = vweird.f32 %v3714
    %vm3722 = vmor %vm3720, %vm3721
    %v3723 = vsel %vm3722, %v3714, %v3719
    %v3724 = vmul.f32 %v3588, %v3653
    %v3725 = vmul.f32 %v3589, %v3663
    %v3726 = vmul.f32 %v3590, %v3673
    %v3727 = vmul.f32 %v3591, %v3683
    %v3728 = vmul.f32 %v3592, %v3693
    %v3729 = vmul.f32 %v3593, %v3703
    %v3730 = vmul.f32 %v3594, %v3713
    %v3731 = vmul.f32 %v3595, %v3723
    %v3733 = vperm.slane %v3554, 0
    %v3735 = vmul.f32 %v3724, %v3733
    %v3736 = vmul.f32 %v3725, %v3733
    %v3737 = vmul.f32 %v3726, %v3733
    %v3738 = vmul.f32 %v3727, %v3733
    %v3739 = vmul.f32 %v3728, %v3733
    %v3740 = vmul.f32 %v3729, %v3733
    %v3741 = vmul.f32 %v3730, %v3733
    %v3742 = vmul.f32 %v3731, %v3733
    %v3744 = vperm.slane %v3555, 0
    %v3746 = vadd.f32 %v3735, %v3744
    %v3747 = vadd.f32 %v3736, %v3744
    %v3748 = vadd.f32 %v3737, %v3744
    %v3749 = vadd.f32 %v3738, %v3744
    %v3750 = vadd.f32 %v3739, %v3744
    %v3751 = vadd.f32 %v3740, %v3744
    %v3752 = vadd.f32 %v3741, %v3744
    %v3753 = vadd.f32 %v3742, %v3744
    %v3754 = vpack.c.bf16 %v3747, %v3746
    %v3755 = vpack.c.bf16 %v3749, %v3748
    %v3756 = vpack.c.bf16 %v3751, %v3750
    %v3757 = vpack.c.bf16 %v3753, %v3752
    %s3758 = scalar_lea.vmem %s5, 16
    %v3759 = vld [vmem:[%s3758] sm:$0xf]
    %v3760 = vld [vmem:[%s3758 + $0x4] sm:$0xf]
    %v3761 = vld [vmem:[%s3758 + $0x8] sm:$0xf]
    %v3762 = vld [vmem:[%s3758 + $0xc] sm:$0xf]
    %s3763 = scalar_lea.vmem %s6, 1
    %v3764 = vld [vmem:[%s3763] sm:$0x1]
    %v3766 = vperm.slane %v3764, 0
    %v3772 = vunpack.c.l.b16 %v3759
    %v3773 = vunpack.c.l.b16 %v3760
    %v3774 = vunpack.c.l.b16 %v3761
    %v3775 = vunpack.c.l.b16 %v3762
    %v3776 = vpack.c.b16 %v3773, %v3772
    %v3777 = vpack.c.b16 %v3775, %v3774
    %v3781 = vsel %vm83, %v3754, 0
    %v3784 = vsel %vm83, %v3755, 0
    %v3787 = vsel %vm83, %v3756, 0
    %v3790 = vsel %vm83, %v3757, 0
    %3792 = vmatpush.bf16.msra.mxu0 0
    %3793 = vmatpush.bf16.msra.mxu0 0
    %3794 = vmatpush.bf16.msra.mxu0 0
    %3795 = vmatpush.bf16.msra.mxu0 0
    %3796 = vmatpush.bf16.msra.mxu0 0
    %3797 = vmatpush.bf16.msra.mxu0 0
    %3798 = vmatpush.bf16.msra.mxu0 %v3777
    %3799 = vmatpush.bf16.msra.mxu0 %v3776
    %3800 = vmatmul.bf16.gmra.mxu0 %v3781
    %v3801 = vpop.f32.mrf.mxu0
    %v3802 = vadd.f32 %v3766, %v3801
    %v3803 = vpop.f32.mrf.mxu0
    %v3804 = vadd.f32 %v3766, %v3803
    %3805 = vmatmul.bf16.gmra.mxu0 %v3784
    %v3806 = vpop.f32.mrf.mxu0
    %v3807 = vadd.f32 %v3766, %v3806
    %v3808 = vpop.f32.mrf.mxu0
    %v3809 = vadd.f32 %v3766, %v3808
    %3810 = vmatmul.bf16.gmra.mxu0 %v3787
    %v3811 = vpop.f32.mrf.mxu0
    %v3812 = vadd.f32 %v3766, %v3811
    %v3813 = vpop.f32.mrf.mxu0
    %v3814 = vadd.f32 %v3766, %v3813
    %3815 = vmatmul.bf16.gmra.mxu0 %v3790
    %v3816 = vpop.f32.mrf.mxu0
    %v3817 = vadd.f32 %v3766, %v3816
    %v3818 = vpop.f32.mrf.mxu0
    %v3819 = vadd.f32 %v3766, %v3818
    %3820 = vdwg.mxu0
    %3822 = vrot.lane.b32.xlu0 %v3802, 96
    %v3823 = vpop.permute.xlu0 %3822
    %v3824 = vsel %vm366, %v3802, 0
    %v3826 = vsel %vm366, %v3823, 0
    %3828 = vmatpush.xpose.msra.mxu0 0.0
    %3829 = vmatpush.xpose.msra.mxu0 0.0
    %3830 = vmatpush.xpose.msra.mxu0 0.0
    %3831 = vmatpush.xpose.msra.mxu0 0.0
    %3832 = vmatpush.xpose.msra.mxu0 0.0
    %3833 = vmatpush.xpose.msra.mxu0 0.0
    %3834 = vmatpush.xpose.msra.mxu0 0.0
    %3835 = vmatpush.xpose.msra.mxu0 0.0
    %3836 = vmatpush.xpose.msra.mxu0 0.0
    %3837 = vmatpush.xpose.msra.mxu0 0.0
    %3838 = vmatpush.xpose.msra.mxu0 0.0
    %3839 = vmatpush.xpose.msra.mxu0 0.0
    %3840 = vmatpush.xpose.msra.mxu0 0.0
    %3841 = vmatpush.xpose.msra.mxu0 0.0
    %3842 = vmatpush.xpose.msra.mxu0 0.0
    %3843 = vmatpush.xpose.msra.mxu0 %v3826
    %3844 = vmatmul.f32.gmra.mxu0 %v3824
    %v3845 = vpop.f32.mrf.mxu0
    %v3846 = vadd.f32 0.0, %v3845
    %3847 = vdwg.mxu0
    %3849 = vrot.lane.b32.xlu0 %v3804, 96
    %v3850 = vpop.permute.xlu0 %3849
    %v3851 = vsel %vm366, %v3804, 0
    %v3853 = vsel %vm366, %v3850, 0
    %3855 = vmatpush.xpose.msra.mxu0 0.0
    %3856 = vmatpush.xpose.msra.mxu0 0.0
    %3857 = vmatpush.xpose.msra.mxu0 0.0
    %3858 = vmatpush.xpose.msra.mxu0 0.0
    %3859 = vmatpush.xpose.msra.mxu0 0.0
    %3860 = vmatpush.xpose.msra.mxu0 0.0
    %3861 = vmatpush.xpose.msra.mxu0 0.0
    %3862 = vmatpush.xpose.msra.mxu0 0.0
    %3863 = vmatpush.xpose.msra.mxu0 0.0
    %3864 = vmatpush.xpose.msra.mxu0 0.0
    %3865 = vmatpush.xpose.msra.mxu0 0.0
    %3866 = vmatpush.xpose.msra.mxu0 0.0
    %3867 = vmatpush.xpose.msra.mxu0 0.0
    %3868 = vmatpush.xpose.msra.mxu0 0.0
    %3869 = vmatpush.xpose.msra.mxu0 0.0
    %3870 = vmatpush.xpose.msra.mxu0 %v3853
    %3871 = vmatmul.f32.gmra.mxu0 %v3851
    %v3872 = vpop.f32.mrf.mxu0
    %v3873 = vadd.f32 0.0, %v3872
    %3874 = vdwg.mxu0
    %3876 = vrot.lane.b32.xlu0 %v3807, 96
    %v3877 = vpop.permute.xlu0 %3876
    %v3878 = vsel %vm366, %v3807, 0
    %v3880 = vsel %vm366, %v3877, 0
    %3882 = vmatpush.xpose.msra.mxu0 0.0
    %3883 = vmatpush.xpose.msra.mxu0 0.0
    %3884 = vmatpush.xpose.msra.mxu0 0.0
    %3885 = vmatpush.xpose.msra.mxu0 0.0
    %3886 = vmatpush.xpose.msra.mxu0 0.0
    %3887 = vmatpush.xpose.msra.mxu0 0.0
    %3888 = vmatpush.xpose.msra.mxu0 0.0
    %3889 = vmatpush.xpose.msra.mxu0 0.0
    %3890 = vmatpush.xpose.msra.mxu0 0.0
    %3891 = vmatpush.xpose.msra.mxu0 0.0
    %3892 = vmatpush.xpose.msra.mxu0 0.0
    %3893 = vmatpush.xpose.msra.mxu0 0.0
    %3894 = vmatpush.xpose.msra.mxu0 0.0
    %3895 = vmatpush.xpose.msra.mxu0 0.0
    %3896 = vmatpush.xpose.msra.mxu0 0.0
    %3897 = vmatpush.xpose.msra.mxu0 %v3880
    %3898 = vmatmul.f32.gmra.mxu0 %v3878
    %v3899 = vpop.f32.mrf.mxu0
    %v3900 = vadd.f32 0.0, %v3899
    %3901 = vdwg.mxu0
    %3903 = vrot.lane.b32.xlu0 %v3809, 96
    %v3904 = vpop.permute.xlu0 %3903
    %v3905 = vsel %vm366, %v3809, 0
    %v3907 = vsel %vm366, %v3904, 0
    %3909 = vmatpush.xpose.msra.mxu0 0.0
    %3910 = vmatpush.xpose.msra.mxu0 0.0
    %3911 = vmatpush.xpose.msra.mxu0 0.0
    %3912 = vmatpush.xpose.msra.mxu0 0.0
    %3913 = vmatpush.xpose.msra.mxu0 0.0
    %3914 = vmatpush.xpose.msra.mxu0 0.0
    %3915 = vmatpush.xpose.msra.mxu0 0.0
    %3916 = vmatpush.xpose.msra.mxu0 0.0
    %3917 = vmatpush.xpose.msra.mxu0 0.0
    %3918 = vmatpush.xpose.msra.mxu0 0.0
    %3919 = vmatpush.xpose.msra.mxu0 0.0
    %3920 = vmatpush.xpose.msra.mxu0 0.0
    %3921 = vmatpush.xpose.msra.mxu0 0.0
    %3922 = vmatpush.xpose.msra.mxu0 0.0
    %3923 = vmatpush.xpose.msra.mxu0 0.0
    %3924 = vmatpush.xpose.msra.mxu0 %v3907
    %3925 = vmatmul.f32.gmra.mxu0 %v3905
    %v3926 = vpop.f32.mrf.mxu0
    %v3927 = vadd.f32 0.0, %v3926
    %3928 = vdwg.mxu0
    %3930 = vrot.lane.b32.xlu0 %v3812, 96
    %v3931 = vpop.permute.xlu0 %3930
    %v3932 = vsel %vm366, %v3812, 0
    %v3934 = vsel %vm366, %v3931, 0
    %3936 = vmatpush.xpose.msra.mxu0 0.0
    %3937 = vmatpush.xpose.msra.mxu0 0.0
    %3938 = vmatpush.xpose.msra.mxu0 0.0
    %3939 = vmatpush.xpose.msra.mxu0 0.0
    %3940 = vmatpush.xpose.msra.mxu0 0.0
    %3941 = vmatpush.xpose.msra.mxu0 0.0
    %3942 = vmatpush.xpose.msra.mxu0 0.0
    %3943 = vmatpush.xpose.msra.mxu0 0.0
    %3944 = vmatpush.xpose.msra.mxu0 0.0
    %3945 = vmatpush.xpose.msra.mxu0 0.0
    %3946 = vmatpush.xpose.msra.mxu0 0.0
    %3947 = vmatpush.xpose.msra.mxu0 0.0
    %3948 = vmatpush.xpose.msra.mxu0 0.0
    %3949 = vmatpush.xpose.msra.mxu0 0.0
    %3950 = vmatpush.xpose.msra.mxu0 0.0
    %3951 = vmatpush.xpose.msra.mxu0 %v3934
    %3952 = vmatmul.f32.gmra.mxu0 %v3932
    %v3953 = vpop.f32.mrf.mxu0
    %v3954 = vadd.f32 0.0, %v3953
    %3955 = vdwg.mxu0
    %3957 = vrot.lane.b32.xlu0 %v3814, 96
    %v3958 = vpop.permute.xlu0 %3957
    %v3959 = vsel %vm366, %v3814, 0
    %v3961 = vsel %vm366, %v3958, 0
    %3963 = vmatpush.xpose.msra.mxu0 0.0
    %3964 = vmatpush.xpose.msra.mxu0 0.0
    %3965 = vmatpush.xpose.msra.mxu0 0.0
    %3966 = vmatpush.xpose.msra.mxu0 0.0
    %3967 = vmatpush.xpose.msra.mxu0 0.0
    %3968 = vmatpush.xpose.msra.mxu0 0.0
    %3969 = vmatpush.xpose.msra.mxu0 0.0
    %3970 = vmatpush.xpose.msra.mxu0 0.0
    %3971 = vmatpush.xpose.msra.mxu0 0.0
    %3972 = vmatpush.xpose.msra.mxu0 0.0
    %3973 = vmatpush.xpose.msra.mxu0 0.0
    %3974 = vmatpush.xpose.msra.mxu0 0.0
    %3975 = vmatpush.xpose.msra.mxu0 0.0
    %3976 = vmatpush.xpose.msra.mxu0 0.0
    %3977 = vmatpush.xpose.msra.mxu0 0.0
    %3978 = vmatpush.xpose.msra.mxu0 %v3961
    %3979 = vmatmul.f32.gmra.mxu0 %v3959
    %v3980 = vpop.f32.mrf.mxu0
    %v3981 = vadd.f32 0.0, %v3980
    %3982 = vdwg.mxu0
    %3984 = vrot.lane.b32.xlu0 %v3817, 96
    %v3985 = vpop.permute.xlu0 %3984
    %v3986 = vsel %vm366, %v3817, 0
    %v3988 = vsel %vm366, %v3985, 0
    %3990 = vmatpush.xpose.msra.mxu0 0.0
    %3991 = vmatpush.xpose.msra.mxu0 0.0
    %3992 = vmatpush.xpose.msra.mxu0 0.0
    %3993 = vmatpush.xpose.msra.mxu0 0.0
    %3994 = vmatpush.xpose.msra.mxu0 0.0
    %3995 = vmatpush.xpose.msra.mxu0 0.0
    %3996 = vmatpush.xpose.msra.mxu0 0.0
    %3997 = vmatpush.xpose.msra.mxu0 0.0
    %3998 = vmatpush.xpose.msra.mxu0 0.0
    %3999 = vmatpush.xpose.msra.mxu0 0.0
    %4000 = vmatpush.xpose.msra.mxu0 0.0
    %4001 = vmatpush.xpose.msra.mxu0 0.0
    %4002 = vmatpush.xpose.msra.mxu0 0.0
    %4003 = vmatpush.xpose.msra.mxu0 0.0
    %4004 = vmatpush.xpose.msra.mxu0 0.0
    %4005 = vmatpush.xpose.msra.mxu0 %v3988
    %4006 = vmatmul.f32.gmra.mxu0 %v3986
    %v4007 = vpop.f32.mrf.mxu0
    %v4008 = vadd.f32 0.0, %v4007
    %4009 = vdwg.mxu0
    %4011 = vrot.lane.b32.xlu0 %v3819, 96
    %v4012 = vpop.permute.xlu0 %4011
    %v4013 = vsel %vm366, %v3819, 0
    %v4015 = vsel %vm366, %v4012, 0
    %4017 = vmatpush.xpose.msra.mxu0 0.0
    %4018 = vmatpush.xpose.msra.mxu0 0.0
    %4019 = vmatpush.xpose.msra.mxu0 0.0
    %4020 = vmatpush.xpose.msra.mxu0 0.0
    %4021 = vmatpush.xpose.msra.mxu0 0.0
    %4022 = vmatpush.xpose.msra.mxu0 0.0
    %4023 = vmatpush.xpose.msra.mxu0 0.0
    %4024 = vmatpush.xpose.msra.mxu0 0.0
    %4025 = vmatpush.xpose.msra.mxu0 0.0
    %4026 = vmatpush.xpose.msra.mxu0 0.0
    %4027 = vmatpush.xpose.msra.mxu0 0.0
    %4028 = vmatpush.xpose.msra.mxu0 0.0
    %4029 = vmatpush.xpose.msra.mxu0 0.0
    %4030 = vmatpush.xpose.msra.mxu0 0.0
    %4031 = vmatpush.xpose.msra.mxu0 0.0
    %4032 = vmatpush.xpose.msra.mxu0 %v4015
    %4033 = vmatmul.f32.gmra.mxu0 %v4013
    %v4034 = vpop.f32.mrf.mxu0
    %v4035 = vadd.f32 0.0, %v4034
    %4036 = vdwg.mxu0
    %v4037 = vmul.f32 %v3846, 0.35355338
    %v4038 = vmul.f32 %v3873, 0.35355338
    %v4039 = vmul.f32 %v3900, 0.35355338
    %v4040 = vmul.f32 %v3927, 0.35355338
    %v4041 = vmul.f32 %v3954, 0.35355338
    %v4042 = vmul.f32 %v3981, 0.35355338
    %v4043 = vmul.f32 %v4008, 0.35355338
    %v4044 = vmul.f32 %v4035, 0.35355338
    %v4045 = vadd.f32 %v4037, %v588
    %v4046 = vadd.f32 %v4038, %v589
    %v4047 = vadd.f32 %v4039, %v590
    %v4048 = vadd.f32 %v4040, %v591
    %v4049 = vadd.f32 %v4041, %v592
    %v4050 = vadd.f32 %v4042, %v593
    %v4051 = vadd.f32 %v4043, %v594
    %v4052 = vadd.f32 %v4044, %v595
    %v4053 = vsel %vm366, %v4045, -inf
    %4054 = vmax.xlane.f32.xlu0 %v4053
    %v4055 = vpop.xlane.xlu0 %4054
    %v4056 = vsel %vm366, %v4046, -inf
    %4057 = vmax.xlane.f32.xlu0 %v4056
    %v4058 = vpop.xlane.xlu0 %4057
    %v4059 = vsel %vm366, %v4047, -inf
    %4060 = vmax.xlane.f32.xlu0 %v4059
    %v4061 = vpop.xlane.xlu0 %4060
    %v4062 = vsel %vm366, %v4048, -inf
    %4063 = vmax.xlane.f32.xlu0 %v4062
    %v4064 = vpop.xlane.xlu0 %4063
    %v4065 = vsel %vm366, %v4049, -inf
    %4066 = vmax.xlane.f32.xlu0 %v4065
    %v4067 = vpop.xlane.xlu0 %4066
    %v4068 = vsel %vm366, %v4050, -inf
    %4069 = vmax.xlane.f32.xlu0 %v4068
    %v4070 = vpop.xlane.xlu0 %4069
    %v4071 = vsel %vm366, %v4051, -inf
    %4072 = vmax.xlane.f32.xlu0 %v4071
    %v4073 = vpop.xlane.xlu0 %4072
    %v4074 = vsel %vm366, %v4052, -inf
    %4075 = vmax.xlane.f32.xlu0 %v4074
    %v4076 = vpop.xlane.xlu0 %4075
    %v4077 = vsub.f32 %v4045, %v4055
    %v4078 = vsub.f32 %v4046, %v4058
    %v4079 = vsub.f32 %v4047, %v4061
    %v4080 = vsub.f32 %v4048, %v4064
    %v4081 = vsub.f32 %v4049, %v4067
    %v4082 = vsub.f32 %v4050, %v4070
    %v4083 = vsub.f32 %v4051, %v4073
    %v4084 = vsub.f32 %v4052, %v4076
    %v4085 = vmul.f32 %v4077, 1.442695
    %v4086 = vpow.pop %v4085
    %v4087 = vmul.f32 %v4078, 1.442695
    %v4088 = vpow.pop %v4087
    %v4089 = vmul.f32 %v4079, 1.442695
    %v4090 = vpow.pop %v4089
    %v4091 = vmul.f32 %v4080, 1.442695
    %v4092 = vpow.pop %v4091
    %v4093 = vmul.f32 %v4081, 1.442695
    %v4094 = vpow.pop %v4093
    %v4095 = vmul.f32 %v4082, 1.442695
    %v4096 = vpow.pop %v4095
    %v4097 = vmul.f32 %v4083, 1.442695
    %v4098 = vpow.pop %v4097
    %v4099 = vmul.f32 %v4084, 1.442695
    %v4100 = vpow.pop %v4099
    %v4101 = vsel %vm366, %v4086, 0.0
    %4102 = vadd.xlane.f32.xlu0 %v4101
    %v4103 = vpop.xlane.xlu0 %4102
    %v4104 = vsel %vm366, %v4088, 0.0
    %4105 = vadd.xlane.f32.xlu0 %v4104
    %v4106 = vpop.xlane.xlu0 %4105
    %v4107 = vsel %vm366, %v4090, 0.0
    %4108 = vadd.xlane.f32.xlu0 %v4107
    %v4109 = vpop.xlane.xlu0 %4108
    %v4110 = vsel %vm366, %v4092, 0.0
    %4111 = vadd.xlane.f32.xlu0 %v4110
    %v4112 = vpop.xlane.xlu0 %4111
    %v4113 = vsel %vm366, %v4094, 0.0
    %4114 = vadd.xlane.f32.xlu0 %v4113
    %v4115 = vpop.xlane.xlu0 %4114
    %v4116 = vsel %vm366, %v4096, 0.0
    %4117 = vadd.xlane.f32.xlu0 %v4116
    %v4118 = vpop.xlane.xlu0 %4117
    %v4119 = vsel %vm366, %v4098, 0.0
    %4120 = vadd.xlane.f32.xlu0 %v4119
    %v4121 = vpop.xlane.xlu0 %4120
    %v4122 = vsel %vm366, %v4100, 0.0
    %4123 = vadd.xlane.f32.xlu0 %v4122
    %v4124 = vpop.xlane.xlu0 %4123
    %v4125 = vrcp.pop %v4103
    %v4126 = vmul.f32 %v4103, %v4125
    %v4127 = vsub.f32 1.0, %v4126
    %v4128 = vmul.f32 %v4125, %v4127
    %v4129 = vadd.f32 %v4125, %v4128
    %vm4130 = vweird.f32 %v4103
    %vm4131 = vweird.f32 %v4125
    %vm4132 = vmor %vm4130, %vm4131
    %v4133 = vsel %vm4132, %v4125, %v4129
    %v4134 = vand.u32 2147483647, %v4103
    %vm4135 = vcmp.eq.f32.partialorder %v4134, 8.507059e+37
    %v4136 = vand.u32 %v4103, 2147483648
    %v4137 = vor.u32 1.1754944e-38, %v4136
    %v4138 = vsel %vm4135, %v4137, %v4133
    %v4139 = vmul.f32 %v4086, %v4138
    %v4140 = vrcp.pop %v4106
    %v4141 = vmul.f32 %v4106, %v4140
    %v4142 = vsub.f32 1.0, %v4141
    %v4143 = vmul.f32 %v4140, %v4142
    %v4144 = vadd.f32 %v4140, %v4143
    %vm4145 = vweird.f32 %v4106
    %vm4146 = vweird.f32 %v4140
    %vm4147 = vmor %vm4145, %vm4146
    %v4148 = vsel %vm4147, %v4140, %v4144
    %v4149 = vand.u32 2147483647, %v4106
    %vm4150 = vcmp.eq.f32.partialorder %v4149, 8.507059e+37
    %v4151 = vand.u32 %v4106, 2147483648
    %v4152 = vor.u32 1.1754944e-38, %v4151
    %v4153 = vsel %vm4150, %v4152, %v4148
    %v4154 = vmul.f32 %v4088, %v4153
    %v4155 = vrcp.pop %v4109
    %v4156 = vmul.f32 %v4109, %v4155
    %v4157 = vsub.f32 1.0, %v4156
    %v4158 = vmul.f32 %v4155, %v4157
    %v4159 = vadd.f32 %v4155, %v4158
    %vm4160 = vweird.f32 %v4109
    %vm4161 = vweird.f32 %v4155
    %vm4162 = vmor %vm4160, %vm4161
    %v4163 = vsel %vm4162, %v4155, %v4159
    %v4164 = vand.u32 2147483647, %v4109
    %vm4165 = vcmp.eq.f32.partialorder %v4164, 8.507059e+37
    %v4166 = vand.u32 %v4109, 2147483648
    %v4167 = vor.u32 1.1754944e-38, %v4166
    %v4168 = vsel %vm4165, %v4167, %v4163
    %v4169 = vmul.f32 %v4090, %v4168
    %v4170 = vrcp.pop %v4112
    %v4171 = vmul.f32 %v4112, %v4170
    %v4172 = vsub.f32 1.0, %v4171
    %v4173 = vmul.f32 %v4170, %v4172
    %v4174 = vadd.f32 %v4170, %v4173
    %vm4175 = vweird.f32 %v4112
    %vm4176 = vweird.f32 %v4170
    %vm4177 = vmor %vm4175, %vm4176
    %v4178 = vsel %vm4177, %v4170, %v4174
    %v4179 = vand.u32 2147483647, %v4112
    %vm4180 = vcmp.eq.f32.partialorder %v4179, 8.507059e+37
    %v4181 = vand.u32 %v4112, 2147483648
    %v4182 = vor.u32 1.1754944e-38, %v4181
    %v4183 = vsel %vm4180, %v4182, %v4178
    %v4184 = vmul.f32 %v4092, %v4183
    %v4185 = vrcp.pop %v4115
    %v4186 = vmul.f32 %v4115, %v4185
    %v4187 = vsub.f32 1.0, %v4186
    %v4188 = vmul.f32 %v4185, %v4187
    %v4189 = vadd.f32 %v4185, %v4188
    %vm4190 = vweird.f32 %v4115
    %vm4191 = vweird.f32 %v4185
    %vm4192 = vmor %vm4190, %vm4191
    %v4193 = vsel %vm4192, %v4185, %v4189
    %v4194 = vand.u32 2147483647, %v4115
    %vm4195 = vcmp.eq.f32.partialorder %v4194, 8.507059e+37
    %v4196 = vand.u32 %v4115, 2147483648
    %v4197 = vor.u32 1.1754944e-38, %v4196
    %v4198 = vsel %vm4195, %v4197, %v4193
    %v4199 = vmul.f32 %v4094, %v4198
    %v4200 = vrcp.pop %v4118
    %v4201 = vmul.f32 %v4118, %v4200
    %v4202 = vsub.f32 1.0, %v4201
    %v4203 = vmul.f32 %v4200, %v4202
    %v4204 = vadd.f32 %v4200, %v4203
    %vm4205 = vweird.f32 %v4118
    %vm4206 = vweird.f32 %v4200
    %vm4207 = vmor %vm4205, %vm4206
    %v4208 = vsel %vm4207, %v4200, %v4204
    %v4209 = vand.u32 2147483647, %v4118
    %vm4210 = vcmp.eq.f32.partialorder %v4209, 8.507059e+37
    %v4211 = vand.u32 %v4118, 2147483648
    %v4212 = vor.u32 1.1754944e-38, %v4211
    %v4213 = vsel %vm4210, %v4212, %v4208
    %v4214 = vmul.f32 %v4096, %v4213
    %v4215 = vrcp.pop %v4121
    %v4216 = vmul.f32 %v4121, %v4215
    %v4217 = vsub.f32 1.0, %v4216
    %v4218 = vmul.f32 %v4215, %v4217
    %v4219 = vadd.f32 %v4215, %v4218
    %vm4220 = vweird.f32 %v4121
    %vm4221 = vweird.f32 %v4215
    %vm4222 = vmor %vm4220, %vm4221
    %v4223 = vsel %vm4222, %v4215, %v4219
    %v4224 = vand.u32 2147483647, %v4121
    %vm4225 = vcmp.eq.f32.partialorder %v4224, 8.507059e+37
    %v4226 = vand.u32 %v4121, 2147483648
    %v4227 = vor.u32 1.1754944e-38, %v4226
    %v4228 = vsel %vm4225, %v4227, %v4223
    %v4229 = vmul.f32 %v4098, %v4228
    %v4230 = vrcp.pop %v4124
    %v4231 = vmul.f32 %v4124, %v4230
    %v4232 = vsub.f32 1.0, %v4231
    %v4233 = vmul.f32 %v4230, %v4232
    %v4234 = vadd.f32 %v4230, %v4233
    %vm4235 = vweird.f32 %v4124
    %vm4236 = vweird.f32 %v4230
    %vm4237 = vmor %vm4235, %vm4236
    %v4238 = vsel %vm4237, %v4230, %v4234
    %v4239 = vand.u32 2147483647, %v4124
    %vm4240 = vcmp.eq.f32.partialorder %v4239, 8.507059e+37
    %v4241 = vand.u32 %v4124, 2147483648
    %v4242 = vor.u32 1.1754944e-38, %v4241
    %v4243 = vsel %vm4240, %v4242, %v4238
    %v4244 = vmul.f32 %v4100, %v4243
    %4245 = vrot.lane.b32.xlu0 %v3802, 64
    %v4246 = vpop.permute.xlu0 %4245
    %v4249 = vsel %vm366, %v4139, 0
    %4251 = vmatpush.msra.mxu0 0.0
    %4252 = vmatpush.msra.mxu0 0.0
    %4253 = vmatpush.msra.mxu0 0.0
    %4254 = vmatpush.msra.mxu0 0.0
    %4255 = vmatpush.msra.mxu0 0.0
    %4256 = vmatpush.msra.mxu0 0.0
    %4257 = vmatpush.msra.mxu0 0.0
    %4258 = vmatpush.msra.mxu0 0.0
    %4259 = vmatpush.msra.mxu0 0.0
    %4260 = vmatpush.msra.mxu0 0.0
    %4261 = vmatpush.msra.mxu0 0.0
    %4262 = vmatpush.msra.mxu0 0.0
    %4263 = vmatpush.msra.mxu0 0.0
    %4264 = vmatpush.msra.mxu0 0.0
    %4265 = vmatpush.msra.mxu0 0.0
    %4266 = vmatpush.msra.mxu0 %v4246
    %4267 = vmatmul.f32.gmra.mxu0 %v4249
    %v4268 = vpop.f32.mrf.mxu0
    %v4269 = vadd.f32 0.0, %v4268
    %4270 = vdwg.mxu0
    %4271 = vrot.lane.b32.xlu0 %v3804, 64
    %v4272 = vpop.permute.xlu0 %4271
    %v4275 = vsel %vm366, %v4154, 0
    %4277 = vmatpush.msra.mxu0 0.0
    %4278 = vmatpush.msra.mxu0 0.0
    %4279 = vmatpush.msra.mxu0 0.0
    %4280 = vmatpush.msra.mxu0 0.0
    %4281 = vmatpush.msra.mxu0 0.0
    %4282 = vmatpush.msra.mxu0 0.0
    %4283 = vmatpush.msra.mxu0 0.0
    %4284 = vmatpush.msra.mxu0 0.0
    %4285 = vmatpush.msra.mxu0 0.0
    %4286 = vmatpush.msra.mxu0 0.0
    %4287 = vmatpush.msra.mxu0 0.0
    %4288 = vmatpush.msra.mxu0 0.0
    %4289 = vmatpush.msra.mxu0 0.0
    %4290 = vmatpush.msra.mxu0 0.0
    %4291 = vmatpush.msra.mxu0 0.0
    %4292 = vmatpush.msra.mxu0 %v4272
    %4293 = vmatmul.f32.gmra.mxu0 %v4275
    %v4294 = vpop.f32.mrf.mxu0
    %v4295 = vadd.f32 0.0, %v4294
    %4296 = vdwg.mxu0
    %4297 = vrot.lane.b32.xlu0 %v3807, 64
    %v4298 = vpop.permute.xlu0 %4297
    %v4301 = vsel %vm366, %v4169, 0
    %4303 = vmatpush.msra.mxu0 0.0
    %4304 = vmatpush.msra.mxu0 0.0
    %4305 = vmatpush.msra.mxu0 0.0
    %4306 = vmatpush.msra.mxu0 0.0
    %4307 = vmatpush.msra.mxu0 0.0
    %4308 = vmatpush.msra.mxu0 0.0
    %4309 = vmatpush.msra.mxu0 0.0
    %4310 = vmatpush.msra.mxu0 0.0
    %4311 = vmatpush.msra.mxu0 0.0
    %4312 = vmatpush.msra.mxu0 0.0
    %4313 = vmatpush.msra.mxu0 0.0
    %4314 = vmatpush.msra.mxu0 0.0
    %4315 = vmatpush.msra.mxu0 0.0
    %4316 = vmatpush.msra.mxu0 0.0
    %4317 = vmatpush.msra.mxu0 0.0
    %4318 = vmatpush.msra.mxu0 %v4298
    %4319 = vmatmul.f32.gmra.mxu0 %v4301
    %v4320 = vpop.f32.mrf.mxu0
    %v4321 = vadd.f32 0.0, %v4320
    %4322 = vdwg.mxu0
    %4323 = vrot.lane.b32.xlu0 %v3809, 64
    %v4324 = vpop.permute.xlu0 %4323
    %v4327 = vsel %vm366, %v4184, 0
    %4329 = vmatpush.msra.mxu0 0.0
    %4330 = vmatpush.msra.mxu0 0.0
    %4331 = vmatpush.msra.mxu0 0.0
    %4332 = vmatpush.msra.mxu0 0.0
    %4333 = vmatpush.msra.mxu0 0.0
    %4334 = vmatpush.msra.mxu0 0.0
    %4335 = vmatpush.msra.mxu0 0.0
    %4336 = vmatpush.msra.mxu0 0.0
    %4337 = vmatpush.msra.mxu0 0.0
    %4338 = vmatpush.msra.mxu0 0.0
    %4339 = vmatpush.msra.mxu0 0.0
    %4340 = vmatpush.msra.mxu0 0.0
    %4341 = vmatpush.msra.mxu0 0.0
    %4342 = vmatpush.msra.mxu0 0.0
    %4343 = vmatpush.msra.mxu0 0.0
    %4344 = vmatpush.msra.mxu0 %v4324
    %4345 = vmatmul.f32.gmra.mxu0 %v4327
    %v4346 = vpop.f32.mrf.mxu0
    %v4347 = vadd.f32 0.0, %v4346
    %4348 = vdwg.mxu0
    %4349 = vrot.lane.b32.xlu0 %v3812, 64
    %v4350 = vpop.permute.xlu0 %4349
    %v4353 = vsel %vm366, %v4199, 0
    %4355 = vmatpush.msra.mxu0 0.0
    %4356 = vmatpush.msra.mxu0 0.0
    %4357 = vmatpush.msra.mxu0 0.0
    %4358 = vmatpush.msra.mxu0 0.0
    %4359 = vmatpush.msra.mxu0 0.0
    %4360 = vmatpush.msra.mxu0 0.0
    %4361 = vmatpush.msra.mxu0 0.0
    %4362 = vmatpush.msra.mxu0 0.0
    %4363 = vmatpush.msra.mxu0 0.0
    %4364 = vmatpush.msra.mxu0 0.0
    %4365 = vmatpush.msra.mxu0 0.0
    %4366 = vmatpush.msra.mxu0 0.0
    %4367 = vmatpush.msra.mxu0 0.0
    %4368 = vmatpush.msra.mxu0 0.0
    %4369 = vmatpush.msra.mxu0 0.0
    %4370 = vmatpush.msra.mxu0 %v4350
    %4371 = vmatmul.f32.gmra.mxu0 %v4353
    %v4372 = vpop.f32.mrf.mxu0
    %v4373 = vadd.f32 0.0, %v4372
    %4374 = vdwg.mxu0
    %4375 = vrot.lane.b32.xlu0 %v3814, 64
    %v4376 = vpop.permute.xlu0 %4375
    %v4379 = vsel %vm366, %v4214, 0
    %4381 = vmatpush.msra.mxu0 0.0
    %4382 = vmatpush.msra.mxu0 0.0
    %4383 = vmatpush.msra.mxu0 0.0
    %4384 = vmatpush.msra.mxu0 0.0
    %4385 = vmatpush.msra.mxu0 0.0
    %4386 = vmatpush.msra.mxu0 0.0
    %4387 = vmatpush.msra.mxu0 0.0
    %4388 = vmatpush.msra.mxu0 0.0
    %4389 = vmatpush.msra.mxu0 0.0
    %4390 = vmatpush.msra.mxu0 0.0
    %4391 = vmatpush.msra.mxu0 0.0
    %4392 = vmatpush.msra.mxu0 0.0
    %4393 = vmatpush.msra.mxu0 0.0
    %4394 = vmatpush.msra.mxu0 0.0
    %4395 = vmatpush.msra.mxu0 0.0
    %4396 = vmatpush.msra.mxu0 %v4376
    %4397 = vmatmul.f32.gmra.mxu0 %v4379
    %v4398 = vpop.f32.mrf.mxu0
    %v4399 = vadd.f32 0.0, %v4398
    %4400 = vdwg.mxu0
    %4401 = vrot.lane.b32.xlu0 %v3817, 64
    %v4402 = vpop.permute.xlu0 %4401
    %v4405 = vsel %vm366, %v4229, 0
    %4407 = vmatpush.msra.mxu0 0.0
    %4408 = vmatpush.msra.mxu0 0.0
    %4409 = vmatpush.msra.mxu0 0.0
    %4410 = vmatpush.msra.mxu0 0.0
    %4411 = vmatpush.msra.mxu0 0.0
    %4412 = vmatpush.msra.mxu0 0.0
    %4413 = vmatpush.msra.mxu0 0.0
    %4414 = vmatpush.msra.mxu0 0.0
    %4415 = vmatpush.msra.mxu0 0.0
    %4416 = vmatpush.msra.mxu0 0.0
    %4417 = vmatpush.msra.mxu0 0.0
    %4418 = vmatpush.msra.mxu0 0.0
    %4419 = vmatpush.msra.mxu0 0.0
    %4420 = vmatpush.msra.mxu0 0.0
    %4421 = vmatpush.msra.mxu0 0.0
    %4422 = vmatpush.msra.mxu0 %v4402
    %4423 = vmatmul.f32.gmra.mxu0 %v4405
    %v4424 = vpop.f32.mrf.mxu0
    %v4425 = vadd.f32 0.0, %v4424
    %4426 = vdwg.mxu0
    %4427 = vrot.lane.b32.xlu0 %v3819, 64
    %v4428 = vpop.permute.xlu0 %4427
    %v4431 = vsel %vm366, %v4244, 0
    %4433 = vmatpush.msra.mxu0 0.0
    %4434 = vmatpush.msra.mxu0 0.0
    %4435 = vmatpush.msra.mxu0 0.0
    %4436 = vmatpush.msra.mxu0 0.0
    %4437 = vmatpush.msra.mxu0 0.0
    %4438 = vmatpush.msra.mxu0 0.0
    %4439 = vmatpush.msra.mxu0 0.0
    %4440 = vmatpush.msra.mxu0 0.0
    %4441 = vmatpush.msra.mxu0 0.0
    %4442 = vmatpush.msra.mxu0 0.0
    %4443 = vmatpush.msra.mxu0 0.0
    %4444 = vmatpush.msra.mxu0 0.0
    %4445 = vmatpush.msra.mxu0 0.0
    %4446 = vmatpush.msra.mxu0 0.0
    %4447 = vmatpush.msra.mxu0 0.0
    %4448 = vmatpush.msra.mxu0 %v4428
    %4449 = vmatmul.f32.gmra.mxu0 %v4431
    %v4450 = vpop.f32.mrf.mxu0
    %v4451 = vadd.f32 0.0, %v4450
    %4452 = vdwg.mxu0
    %4453 = vrot.lane.b32.xlu0 %v3802, 120
    %v4454 = vpop.permute.xlu0 %4453
    %4455 = vrot.lane.b32.xlu0 %v3802, 88
    %v4456 = vpop.permute.xlu0 %4455
    %v4457 = vsel %vm366, %v4454, 0
    %v4459 = vsel %vm366, %v4456, 0
    %4461 = vmatpush.xpose.msra.mxu0 0.0
    %4462 = vmatpush.xpose.msra.mxu0 0.0
    %4463 = vmatpush.xpose.msra.mxu0 0.0
    %4464 = vmatpush.xpose.msra.mxu0 0.0
    %4465 = vmatpush.xpose.msra.mxu0 0.0
    %4466 = vmatpush.xpose.msra.mxu0 0.0
    %4467 = vmatpush.xpose.msra.mxu0 0.0
    %4468 = vmatpush.xpose.msra.mxu0 0.0
    %4469 = vmatpush.xpose.msra.mxu0 0.0
    %4470 = vmatpush.xpose.msra.mxu0 0.0
    %4471 = vmatpush.xpose.msra.mxu0 0.0
    %4472 = vmatpush.xpose.msra.mxu0 0.0
    %4473 = vmatpush.xpose.msra.mxu0 0.0
    %4474 = vmatpush.xpose.msra.mxu0 0.0
    %4475 = vmatpush.xpose.msra.mxu0 0.0
    %4476 = vmatpush.xpose.msra.mxu0 %v4459
    %4477 = vmatmul.f32.gmra.mxu0 %v4457
    %v4478 = vpop.f32.mrf.mxu0
    %v4479 = vadd.f32 0.0, %v4478
    %4480 = vdwg.mxu0
    %4481 = vrot.lane.b32.xlu0 %v3804, 120
    %v4482 = vpop.permute.xlu0 %4481
    %4483 = vrot.lane.b32.xlu0 %v3804, 88
    %v4484 = vpop.permute.xlu0 %4483
    %v4485 = vsel %vm366, %v4482, 0
    %v4487 = vsel %vm366, %v4484, 0
    %4489 = vmatpush.xpose.msra.mxu0 0.0
    %4490 = vmatpush.xpose.msra.mxu0 0.0
    %4491 = vmatpush.xpose.msra.mxu0 0.0
    %4492 = vmatpush.xpose.msra.mxu0 0.0
    %4493 = vmatpush.xpose.msra.mxu0 0.0
    %4494 = vmatpush.xpose.msra.mxu0 0.0
    %4495 = vmatpush.xpose.msra.mxu0 0.0
    %4496 = vmatpush.xpose.msra.mxu0 0.0
    %4497 = vmatpush.xpose.msra.mxu0 0.0
    %4498 = vmatpush.xpose.msra.mxu0 0.0
    %4499 = vmatpush.xpose.msra.mxu0 0.0
    %4500 = vmatpush.xpose.msra.mxu0 0.0
    %4501 = vmatpush.xpose.msra.mxu0 0.0
    %4502 = vmatpush.xpose.msra.mxu0 0.0
    %4503 = vmatpush.xpose.msra.mxu0 0.0
    %4504 = vmatpush.xpose.msra.mxu0 %v4487
    %4505 = vmatmul.f32.gmra.mxu0 %v4485
    %v4506 = vpop.f32.mrf.mxu0
    %v4507 = vadd.f32 0.0, %v4506
    %4508 = vdwg.mxu0
    %4509 = vrot.lane.b32.xlu0 %v3807, 120
    %v4510 = vpop.permute.xlu0 %4509
    %4511 = vrot.lane.b32.xlu0 %v3807, 88
    %v4512 = vpop.permute.xlu0 %4511
    %v4513 = vsel %vm366, %v4510, 0
    %v4515 = vsel %vm366, %v4512, 0
    %4517 = vmatpush.xpose.msra.mxu0 0.0
    %4518 = vmatpush.xpose.msra.mxu0 0.0
    %4519 = vmatpush.xpose.msra.mxu0 0.0
    %4520 = vmatpush.xpose.msra.mxu0 0.0
    %4521 = vmatpush.xpose.msra.mxu0 0.0
    %4522 = vmatpush.xpose.msra.mxu0 0.0
    %4523 = vmatpush.xpose.msra.mxu0 0.0
    %4524 = vmatpush.xpose.msra.mxu0 0.0
    %4525 = vmatpush.xpose.msra.mxu0 0.0
    %4526 = vmatpush.xpose.msra.mxu0 0.0
    %4527 = vmatpush.xpose.msra.mxu0 0.0
    %4528 = vmatpush.xpose.msra.mxu0 0.0
    %4529 = vmatpush.xpose.msra.mxu0 0.0
    %4530 = vmatpush.xpose.msra.mxu0 0.0
    %4531 = vmatpush.xpose.msra.mxu0 0.0
    %4532 = vmatpush.xpose.msra.mxu0 %v4515
    %4533 = vmatmul.f32.gmra.mxu0 %v4513
    %v4534 = vpop.f32.mrf.mxu0
    %v4535 = vadd.f32 0.0, %v4534
    %4536 = vdwg.mxu0
    %4537 = vrot.lane.b32.xlu0 %v3809, 120
    %v4538 = vpop.permute.xlu0 %4537
    %4539 = vrot.lane.b32.xlu0 %v3809, 88
    %v4540 = vpop.permute.xlu0 %4539
    %v4541 = vsel %vm366, %v4538, 0
    %v4543 = vsel %vm366, %v4540, 0
    %4545 = vmatpush.xpose.msra.mxu0 0.0
    %4546 = vmatpush.xpose.msra.mxu0 0.0
    %4547 = vmatpush.xpose.msra.mxu0 0.0
    %4548 = vmatpush.xpose.msra.mxu0 0.0
    %4549 = vmatpush.xpose.msra.mxu0 0.0
    %4550 = vmatpush.xpose.msra.mxu0 0.0
    %4551 = vmatpush.xpose.msra.mxu0 0.0
    %4552 = vmatpush.xpose.msra.mxu0 0.0
    %4553 = vmatpush.xpose.msra.mxu0 0.0
    %4554 = vmatpush.xpose.msra.mxu0 0.0
    %4555 = vmatpush.xpose.msra.mxu0 0.0
    %4556 = vmatpush.xpose.msra.mxu0 0.0
    %4557 = vmatpush.xpose.msra.mxu0 0.0
    %4558 = vmatpush.xpose.msra.mxu0 0.0
    %4559 = vmatpush.xpose.msra.mxu0 0.0
    %4560 = vmatpush.xpose.msra.mxu0 %v4543
    %4561 = vmatmul.f32.gmra.mxu0 %v4541
    %v4562 = vpop.f32.mrf.mxu0
    %v4563 = vadd.f32 0.0, %v4562
    %4564 = vdwg.mxu0
    %4565 = vrot.lane.b32.xlu0 %v3812, 120
    %v4566 = vpop.permute.xlu0 %4565
    %4567 = vrot.lane.b32.xlu0 %v3812, 88
    %v4568 = vpop.permute.xlu0 %4567
    %v4569 = vsel %vm366, %v4566, 0
    %v4571 = vsel %vm366, %v4568, 0
    %4573 = vmatpush.xpose.msra.mxu0 0.0
    %4574 = vmatpush.xpose.msra.mxu0 0.0
    %4575 = vmatpush.xpose.msra.mxu0 0.0
    %4576 = vmatpush.xpose.msra.mxu0 0.0
    %4577 = vmatpush.xpose.msra.mxu0 0.0
    %4578 = vmatpush.xpose.msra.mxu0 0.0
    %4579 = vmatpush.xpose.msra.mxu0 0.0
    %4580 = vmatpush.xpose.msra.mxu0 0.0
    %4581 = vmatpush.xpose.msra.mxu0 0.0
    %4582 = vmatpush.xpose.msra.mxu0 0.0
    %4583 = vmatpush.xpose.msra.mxu0 0.0
    %4584 = vmatpush.xpose.msra.mxu0 0.0
    %4585 = vmatpush.xpose.msra.mxu0 0.0
    %4586 = vmatpush.xpose.msra.mxu0 0.0
    %4587 = vmatpush.xpose.msra.mxu0 0.0
    %4588 = vmatpush.xpose.msra.mxu0 %v4571
    %4589 = vmatmul.f32.gmra.mxu0 %v4569
    %v4590 = vpop.f32.mrf.mxu0
    %v4591 = vadd.f32 0.0, %v4590
    %4592 = vdwg.mxu0
    %4593 = vrot.lane.b32.xlu0 %v3814, 120
    %v4594 = vpop.permute.xlu0 %4593
    %4595 = vrot.lane.b32.xlu0 %v3814, 88
    %v4596 = vpop.permute.xlu0 %4595
    %v4597 = vsel %vm366, %v4594, 0
    %v4599 = vsel %vm366, %v4596, 0
    %4601 = vmatpush.xpose.msra.mxu0 0.0
    %4602 = vmatpush.xpose.msra.mxu0 0.0
    %4603 = vmatpush.xpose.msra.mxu0 0.0
    %4604 = vmatpush.xpose.msra.mxu0 0.0
    %4605 = vmatpush.xpose.msra.mxu0 0.0
    %4606 = vmatpush.xpose.msra.mxu0 0.0
    %4607 = vmatpush.xpose.msra.mxu0 0.0
    %4608 = vmatpush.xpose.msra.mxu0 0.0
    %4609 = vmatpush.xpose.msra.mxu0 0.0
    %4610 = vmatpush.xpose.msra.mxu0 0.0
    %4611 = vmatpush.xpose.msra.mxu0 0.0
    %4612 = vmatpush.xpose.msra.mxu0 0.0
    %4613 = vmatpush.xpose.msra.mxu0 0.0
    %4614 = vmatpush.xpose.msra.mxu0 0.0
    %4615 = vmatpush.xpose.msra.mxu0 0.0
    %4616 = vmatpush.xpose.msra.mxu0 %v4599
    %4617 = vmatmul.f32.gmra.mxu0 %v4597
    %v4618 = vpop.f32.mrf.mxu0
    %v4619 = vadd.f32 0.0, %v4618
    %4620 = vdwg.mxu0
    %4621 = vrot.lane.b32.xlu0 %v3817, 120
    %v4622 = vpop.permute.xlu0 %4621
    %4623 = vrot.lane.b32.xlu0 %v3817, 88
    %v4624 = vpop.permute.xlu0 %4623
    %v4625 = vsel %vm366, %v4622, 0
    %v4627 = vsel %vm366, %v4624, 0
    %4629 = vmatpush.xpose.msra.mxu0 0.0
    %4630 = vmatpush.xpose.msra.mxu0 0.0
    %4631 = vmatpush.xpose.msra.mxu0 0.0
    %4632 = vmatpush.xpose.msra.mxu0 0.0
    %4633 = vmatpush.xpose.msra.mxu0 0.0
    %4634 = vmatpush.xpose.msra.mxu0 0.0
    %4635 = vmatpush.xpose.msra.mxu0 0.0
    %4636 = vmatpush.xpose.msra.mxu0 0.0
    %4637 = vmatpush.xpose.msra.mxu0 0.0
    %4638 = vmatpush.xpose.msra.mxu0 0.0
    %4639 = vmatpush.xpose.msra.mxu0 0.0
    %4640 = vmatpush.xpose.msra.mxu0 0.0
    %4641 = vmatpush.xpose.msra.mxu0 0.0
    %4642 = vmatpush.xpose.msra.mxu0 0.0
    %4643 = vmatpush.xpose.msra.mxu0 0.0
    %4644 = vmatpush.xpose.msra.mxu0 %v4627
    %4645 = vmatmul.f32.gmra.mxu0 %v4625
    %v4646 = vpop.f32.mrf.mxu0
    %v4647 = vadd.f32 0.0, %v4646
    %4648 = vdwg.mxu0
    %4649 = vrot.lane.b32.xlu0 %v3819, 120
    %v4650 = vpop.permute.xlu0 %4649
    %4651 = vrot.lane.b32.xlu0 %v3819, 88
    %v4652 = vpop.permute.xlu0 %4651
    %v4653 = vsel %vm366, %v4650, 0
    %v4655 = vsel %vm366, %v4652, 0
    %4657 = vmatpush.xpose.msra.mxu0 0.0
    %4658 = vmatpush.xpose.msra.mxu0 0.0
    %4659 = vmatpush.xpose.msra.mxu0 0.0
    %4660 = vmatpush.xpose.msra.mxu0 0.0
    %4661 = vmatpush.xpose.msra.mxu0 0.0
    %4662 = vmatpush.xpose.msra.mxu0 0.0
    %4663 = vmatpush.xpose.msra.mxu0 0.0
    %4664 = vmatpush.xpose.msra.mxu0 0.0
    %4665 = vmatpush.xpose.msra.mxu0 0.0
    %4666 = vmatpush.xpose.msra.mxu0 0.0
    %4667 = vmatpush.xpose.msra.mxu0 0.0
    %4668 = vmatpush.xpose.msra.mxu0 0.0
    %4669 = vmatpush.xpose.msra.mxu0 0.0
    %4670 = vmatpush.xpose.msra.mxu0 0.0
    %4671 = vmatpush.xpose.msra.mxu0 0.0
    %4672 = vmatpush.xpose.msra.mxu0 %v4655
    %4673 = vmatmul.f32.gmra.mxu0 %v4653
    %v4674 = vpop.f32.mrf.mxu0
    %v4675 = vadd.f32 0.0, %v4674
    %4676 = vdwg.mxu0
    %v4677 = vmul.f32 %v4479, 0.35355338
    %v4678 = vmul.f32 %v4507, 0.35355338
    %v4679 = vmul.f32 %v4535, 0.35355338
    %v4680 = vmul.f32 %v4563, 0.35355338
    %v4681 = vmul.f32 %v4591, 0.35355338
    %v4682 = vmul.f32 %v4619, 0.35355338
    %v4683 = vmul.f32 %v4647, 0.35355338
    %v4684 = vmul.f32 %v4675, 0.35355338
    %v4685 = vadd.f32 %v4677, %v588
    %v4686 = vadd.f32 %v4678, %v589
    %v4687 = vadd.f32 %v4679, %v590
    %v4688 = vadd.f32 %v4680, %v591
    %v4689 = vadd.f32 %v4681, %v592
    %v4690 = vadd.f32 %v4682, %v593
    %v4691 = vadd.f32 %v4683, %v594
    %v4692 = vadd.f32 %v4684, %v595
    %v4693 = vsel %vm366, %v4685, -inf
    %4694 = vmax.xlane.f32.xlu0 %v4693
    %v4695 = vpop.xlane.xlu0 %4694
    %v4696 = vsel %vm366, %v4686, -inf
    %4697 = vmax.xlane.f32.xlu0 %v4696
    %v4698 = vpop.xlane.xlu0 %4697
    %v4699 = vsel %vm366, %v4687, -inf
    %4700 = vmax.xlane.f32.xlu0 %v4699
    %v4701 = vpop.xlane.xlu0 %4700
    %v4702 = vsel %vm366, %v4688, -inf
    %4703 = vmax.xlane.f32.xlu0 %v4702
    %v4704 = vpop.xlane.xlu0 %4703
    %v4705 = vsel %vm366, %v4689, -inf
    %4706 = vmax.xlane.f32.xlu0 %v4705
    %v4707 = vpop.xlane.xlu0 %4706
    %v4708 = vsel %vm366, %v4690, -inf
    %4709 = vmax.xlane.f32.xlu0 %v4708
    %v4710 = vpop.xlane.xlu0 %4709
    %v4711 = vsel %vm366, %v4691, -inf
    %4712 = vmax.xlane.f32.xlu0 %v4711
    %v4713 = vpop.xlane.xlu0 %4712
    %v4714 = vsel %vm366, %v4692, -inf
    %4715 = vmax.xlane.f32.xlu0 %v4714
    %v4716 = vpop.xlane.xlu0 %4715
    %v4717 = vsub.f32 %v4685, %v4695
    %v4718 = vsub.f32 %v4686, %v4698
    %v4719 = vsub.f32 %v4687, %v4701
    %v4720 = vsub.f32 %v4688, %v4704
    %v4721 = vsub.f32 %v4689, %v4707
    %v4722 = vsub.f32 %v4690, %v4710
    %v4723 = vsub.f32 %v4691, %v4713
    %v4724 = vsub.f32 %v4692, %v4716
    %v4725 = vmul.f32 %v4717, 1.442695
    %v4726 = vpow.pop %v4725
    %v4727 = vmul.f32 %v4718, 1.442695
    %v4728 = vpow.pop %v4727
    %v4729 = vmul.f32 %v4719, 1.442695
    %v4730 = vpow.pop %v4729
    %v4731 = vmul.f32 %v4720, 1.442695
    %v4732 = vpow.pop %v4731
    %v4733 = vmul.f32 %v4721, 1.442695
    %v4734 = vpow.pop %v4733
    %v4735 = vmul.f32 %v4722, 1.442695
    %v4736 = vpow.pop %v4735
    %v4737 = vmul.f32 %v4723, 1.442695
    %v4738 = vpow.pop %v4737
    %v4739 = vmul.f32 %v4724, 1.442695
    %v4740 = vpow.pop %v4739
    %v4741 = vsel %vm366, %v4726, 0.0
    %4742 = vadd.xlane.f32.xlu0 %v4741
    %v4743 = vpop.xlane.xlu0 %4742
    %v4744 = vsel %vm366, %v4728, 0.0
    %4745 = vadd.xlane.f32.xlu0 %v4744
    %v4746 = vpop.xlane.xlu0 %4745
    %v4747 = vsel %vm366, %v4730, 0.0
    %4748 = vadd.xlane.f32.xlu0 %v4747
    %v4749 = vpop.xlane.xlu0 %4748
    %v4750 = vsel %vm366, %v4732, 0.0
    %4751 = vadd.xlane.f32.xlu0 %v4750
    %v4752 = vpop.xlane.xlu0 %4751
    %v4753 = vsel %vm366, %v4734, 0.0
    %4754 = vadd.xlane.f32.xlu0 %v4753
    %v4755 = vpop.xlane.xlu0 %4754
    %v4756 = vsel %vm366, %v4736, 0.0
    %4757 = vadd.xlane.f32.xlu0 %v4756
    %v4758 = vpop.xlane.xlu0 %4757
    %v4759 = vsel %vm366, %v4738, 0.0
    %4760 = vadd.xlane.f32.xlu0 %v4759
    %v4761 = vpop.xlane.xlu0 %4760
    %v4762 = vsel %vm366, %v4740, 0.0
    %4763 = vadd.xlane.f32.xlu0 %v4762
    %v4764 = vpop.xlane.xlu0 %4763
    %v4765 = vrcp.pop %v4743
    %v4766 = vmul.f32 %v4743, %v4765
    %v4767 = vsub.f32 1.0, %v4766
    %v4768 = vmul.f32 %v4765, %v4767
    %v4769 = vadd.f32 %v4765, %v4768
    %vm4770 = vweird.f32 %v4743
    %vm4771 = vweird.f32 %v4765
    %vm4772 = vmor %vm4770, %vm4771
    %v4773 = vsel %vm4772, %v4765, %v4769
    %v4774 = vand.u32 2147483647, %v4743
    %vm4775 = vcmp.eq.f32.partialorder %v4774, 8.507059e+37
    %v4776 = vand.u32 %v4743, 2147483648
    %v4777 = vor.u32 1.1754944e-38, %v4776
    %v4778 = vsel %vm4775, %v4777, %v4773
    %v4779 = vmul.f32 %v4726, %v4778
    %v4780 = vrcp.pop %v4746
    %v4781 = vmul.f32 %v4746, %v4780
    %v4782 = vsub.f32 1.0, %v4781
    %v4783 = vmul.f32 %v4780, %v4782
    %v4784 = vadd.f32 %v4780, %v4783
    %vm4785 = vweird.f32 %v4746
    %vm4786 = vweird.f32 %v4780
    %vm4787 = vmor %vm4785, %vm4786
    %v4788 = vsel %vm4787, %v4780, %v4784
    %v4789 = vand.u32 2147483647, %v4746
    %vm4790 = vcmp.eq.f32.partialorder %v4789, 8.507059e+37
    %v4791 = vand.u32 %v4746, 2147483648
    %v4792 = vor.u32 1.1754944e-38, %v4791
    %v4793 = vsel %vm4790, %v4792, %v4788
    %v4794 = vmul.f32 %v4728, %v4793
    %v4795 = vrcp.pop %v4749
    %v4796 = vmul.f32 %v4749, %v4795
    %v4797 = vsub.f32 1.0, %v4796
    %v4798 = vmul.f32 %v4795, %v4797
    %v4799 = vadd.f32 %v4795, %v4798
    %vm4800 = vweird.f32 %v4749
    %vm4801 = vweird.f32 %v4795
    %vm4802 = vmor %vm4800, %vm4801
    %v4803 = vsel %vm4802, %v4795, %v4799
    %v4804 = vand.u32 2147483647, %v4749
    %vm4805 = vcmp.eq.f32.partialorder %v4804, 8.507059e+37
    %v4806 = vand.u32 %v4749, 2147483648
    %v4807 = vor.u32 1.1754944e-38, %v4806
    %v4808 = vsel %vm4805, %v4807, %v4803
    %v4809 = vmul.f32 %v4730, %v4808
    %v4810 = vrcp.pop %v4752
    %v4811 = vmul.f32 %v4752, %v4810
    %v4812 = vsub.f32 1.0, %v4811
    %v4813 = vmul.f32 %v4810, %v4812
    %v4814 = vadd.f32 %v4810, %v4813
    %vm4815 = vweird.f32 %v4752
    %vm4816 = vweird.f32 %v4810
    %vm4817 = vmor %vm4815, %vm4816
    %v4818 = vsel %vm4817, %v4810, %v4814
    %v4819 = vand.u32 2147483647, %v4752
    %vm4820 = vcmp.eq.f32.partialorder %v4819, 8.507059e+37
    %v4821 = vand.u32 %v4752, 2147483648
    %v4822 = vor.u32 1.1754944e-38, %v4821
    %v4823 = vsel %vm4820, %v4822, %v4818
    %v4824 = vmul.f32 %v4732, %v4823
    %v4825 = vrcp.pop %v4755
    %v4826 = vmul.f32 %v4755, %v4825
    %v4827 = vsub.f32 1.0, %v4826
    %v4828 = vmul.f32 %v4825, %v4827
    %v4829 = vadd.f32 %v4825, %v4828
    %vm4830 = vweird.f32 %v4755
    %vm4831 = vweird.f32 %v4825
    %vm4832 = vmor %vm4830, %vm4831
    %v4833 = vsel %vm4832, %v4825, %v4829
    %v4834 = vand.u32 2147483647, %v4755
    %vm4835 = vcmp.eq.f32.partialorder %v4834, 8.507059e+37
    %v4836 = vand.u32 %v4755, 2147483648
    %v4837 = vor.u32 1.1754944e-38, %v4836
    %v4838 = vsel %vm4835, %v4837, %v4833
    %v4839 = vmul.f32 %v4734, %v4838
    %v4840 = vrcp.pop %v4758
    %v4841 = vmul.f32 %v4758, %v4840
    %v4842 = vsub.f32 1.0, %v4841
    %v4843 = vmul.f32 %v4840, %v4842
    %v4844 = vadd.f32 %v4840, %v4843
    %vm4845 = vweird.f32 %v4758
    %vm4846 = vweird.f32 %v4840
    %vm4847 = vmor %vm4845, %vm4846
    %v4848 = vsel %vm4847, %v4840, %v4844
    %v4849 = vand.u32 2147483647, %v4758
    %vm4850 = vcmp.eq.f32.partialorder %v4849, 8.507059e+37
    %v4851 = vand.u32 %v4758, 2147483648
    %v4852 = vor.u32 1.1754944e-38, %v4851
    %v4853 = vsel %vm4850, %v4852, %v4848
    %v4854 = vmul.f32 %v4736, %v4853
    %v4855 = vrcp.pop %v4761
    %v4856 = vmul.f32 %v4761, %v4855
    %v4857 = vsub.f32 1.0, %v4856
    %v4858 = vmul.f32 %v4855, %v4857
    %v4859 = vadd.f32 %v4855, %v4858
    %vm4860 = vweird.f32 %v4761
    %vm4861 = vweird.f32 %v4855
    %vm4862 = vmor %vm4860, %vm4861
    %v4863 = vsel %vm4862, %v4855, %v4859
    %v4864 = vand.u32 2147483647, %v4761
    %vm4865 = vcmp.eq.f32.partialorder %v4864, 8.507059e+37
    %v4866 = vand.u32 %v4761, 2147483648
    %v4867 = vor.u32 1.1754944e-38, %v4866
    %v4868 = vsel %vm4865, %v4867, %v4863
    %v4869 = vmul.f32 %v4738, %v4868
    %v4870 = vrcp.pop %v4764
    %v4871 = vmul.f32 %v4764, %v4870
    %v4872 = vsub.f32 1.0, %v4871
    %v4873 = vmul.f32 %v4870, %v4872
    %v4874 = vadd.f32 %v4870, %v4873
    %vm4875 = vweird.f32 %v4764
    %vm4876 = vweird.f32 %v4870
    %vm4877 = vmor %vm4875, %vm4876
    %v4878 = vsel %vm4877, %v4870, %v4874
    %v4879 = vand.u32 2147483647, %v4764
    %vm4880 = vcmp.eq.f32.partialorder %v4879, 8.507059e+37
    %v4881 = vand.u32 %v4764, 2147483648
    %v4882 = vor.u32 1.1754944e-38, %v4881
    %v4883 = vsel %vm4880, %v4882, %v4878
    %v4884 = vmul.f32 %v4740, %v4883
    %4885 = vrot.lane.b32.xlu0 %v3802, 56
    %v4886 = vpop.permute.xlu0 %4885
    %v4889 = vsel %vm366, %v4779, 0
    %4891 = vmatpush.msra.mxu0 0.0
    %4892 = vmatpush.msra.mxu0 0.0
    %4893 = vmatpush.msra.mxu0 0.0
    %4894 = vmatpush.msra.mxu0 0.0
    %4895 = vmatpush.msra.mxu0 0.0
    %4896 = vmatpush.msra.mxu0 0.0
    %4897 = vmatpush.msra.mxu0 0.0
    %4898 = vmatpush.msra.mxu0 0.0
    %4899 = vmatpush.msra.mxu0 0.0
    %4900 = vmatpush.msra.mxu0 0.0
    %4901 = vmatpush.msra.mxu0 0.0
    %4902 = vmatpush.msra.mxu0 0.0
    %4903 = vmatpush.msra.mxu0 0.0
    %4904 = vmatpush.msra.mxu0 0.0
    %4905 = vmatpush.msra.mxu0 0.0
    %4906 = vmatpush.msra.mxu0 %v4886
    %4907 = vmatmul.f32.gmra.mxu0 %v4889
    %v4908 = vpop.f32.mrf.mxu0
    %v4909 = vadd.f32 0.0, %v4908
    %4910 = vdwg.mxu0
    %4911 = vrot.lane.b32.xlu0 %v3804, 56
    %v4912 = vpop.permute.xlu0 %4911
    %v4915 = vsel %vm366, %v4794, 0
    %4917 = vmatpush.msra.mxu0 0.0
    %4918 = vmatpush.msra.mxu0 0.0
    %4919 = vmatpush.msra.mxu0 0.0
    %4920 = vmatpush.msra.mxu0 0.0
    %4921 = vmatpush.msra.mxu0 0.0
    %4922 = vmatpush.msra.mxu0 0.0
    %4923 = vmatpush.msra.mxu0 0.0
    %4924 = vmatpush.msra.mxu0 0.0
    %4925 = vmatpush.msra.mxu0 0.0
    %4926 = vmatpush.msra.mxu0 0.0
    %4927 = vmatpush.msra.mxu0 0.0
    %4928 = vmatpush.msra.mxu0 0.0
    %4929 = vmatpush.msra.mxu0 0.0
    %4930 = vmatpush.msra.mxu0 0.0
    %4931 = vmatpush.msra.mxu0 0.0
    %4932 = vmatpush.msra.mxu0 %v4912
    %4933 = vmatmul.f32.gmra.mxu0 %v4915
    %v4934 = vpop.f32.mrf.mxu0
    %v4935 = vadd.f32 0.0, %v4934
    %4936 = vdwg.mxu0
    %4937 = vrot.lane.b32.xlu0 %v3807, 56
    %v4938 = vpop.permute.xlu0 %4937
    %v4941 = vsel %vm366, %v4809, 0
    %4943 = vmatpush.msra.mxu0 0.0
    %4944 = vmatpush.msra.mxu0 0.0
    %4945 = vmatpush.msra.mxu0 0.0
    %4946 = vmatpush.msra.mxu0 0.0
    %4947 = vmatpush.msra.mxu0 0.0
    %4948 = vmatpush.msra.mxu0 0.0
    %4949 = vmatpush.msra.mxu0 0.0
    %4950 = vmatpush.msra.mxu0 0.0
    %4951 = vmatpush.msra.mxu0 0.0
    %4952 = vmatpush.msra.mxu0 0.0
    %4953 = vmatpush.msra.mxu0 0.0
    %4954 = vmatpush.msra.mxu0 0.0
    %4955 = vmatpush.msra.mxu0 0.0
    %4956 = vmatpush.msra.mxu0 0.0
    %4957 = vmatpush.msra.mxu0 0.0
    %4958 = vmatpush.msra.mxu0 %v4938
    %4959 = vmatmul.f32.gmra.mxu0 %v4941
    %v4960 = vpop.f32.mrf.mxu0
    %v4961 = vadd.f32 0.0, %v4960
    %4962 = vdwg.mxu0
    %4963 = vrot.lane.b32.xlu0 %v3809, 56
    %v4964 = vpop.permute.xlu0 %4963
    %v4967 = vsel %vm366, %v4824, 0
    %4969 = vmatpush.msra.mxu0 0.0
    %4970 = vmatpush.msra.mxu0 0.0
    %4971 = vmatpush.msra.mxu0 0.0
    %4972 = vmatpush.msra.mxu0 0.0
    %4973 = vmatpush.msra.mxu0 0.0
    %4974 = vmatpush.msra.mxu0 0.0
    %4975 = vmatpush.msra.mxu0 0.0
    %4976 = vmatpush.msra.mxu0 0.0
    %4977 = vmatpush.msra.mxu0 0.0
    %4978 = vmatpush.msra.mxu0 0.0
    %4979 = vmatpush.msra.mxu0 0.0
    %4980 = vmatpush.msra.mxu0 0.0
    %4981 = vmatpush.msra.mxu0 0.0
    %4982 = vmatpush.msra.mxu0 0.0
    %4983 = vmatpush.msra.mxu0 0.0
    %4984 = vmatpush.msra.mxu0 %v4964
    %4985 = vmatmul.f32.gmra.mxu0 %v4967
    %v4986 = vpop.f32.mrf.mxu0
    %v4987 = vadd.f32 0.0, %v4986
    %4988 = vdwg.mxu0
    %4989 = vrot.lane.b32.xlu0 %v3812, 56
    %v4990 = vpop.permute.xlu0 %4989
    %v4993 = vsel %vm366, %v4839, 0
    %4995 = vmatpush.msra.mxu0 0.0
    %4996 = vmatpush.msra.mxu0 0.0
    %4997 = vmatpush.msra.mxu0 0.0
    %4998 = vmatpush.msra.mxu0 0.0
    %4999 = vmatpush.msra.mxu0 0.0
    %5000 = vmatpush.msra.mxu0 0.0
    %5001 = vmatpush.msra.mxu0 0.0
    %5002 = vmatpush.msra.mxu0 0.0
    %5003 = vmatpush.msra.mxu0 0.0
    %5004 = vmatpush.msra.mxu0 0.0
    %5005 = vmatpush.msra.mxu0 0.0
    %5006 = vmatpush.msra.mxu0 0.0
    %5007 = vmatpush.msra.mxu0 0.0
    %5008 = vmatpush.msra.mxu0 0.0
    %5009 = vmatpush.msra.mxu0 0.0
    %5010 = vmatpush.msra.mxu0 %v4990
    %5011 = vmatmul.f32.gmra.mxu0 %v4993
    %v5012 = vpop.f32.mrf.mxu0
    %v5013 = vadd.f32 0.0, %v5012
    %5014 = vdwg.mxu0
    %5015 = vrot.lane.b32.xlu0 %v3814, 56
    %v5016 = vpop.permute.xlu0 %5015
    %v5019 = vsel %vm366, %v4854, 0
    %5021 = vmatpush.msra.mxu0 0.0
    %5022 = vmatpush.msra.mxu0 0.0
    %5023 = vmatpush.msra.mxu0 0.0
    %5024 = vmatpush.msra.mxu0 0.0
    %5025 = vmatpush.msra.mxu0 0.0
    %5026 = vmatpush.msra.mxu0 0.0
    %5027 = vmatpush.msra.mxu0 0.0
    %5028 = vmatpush.msra.mxu0 0.0
    %5029 = vmatpush.msra.mxu0 0.0
    %5030 = vmatpush.msra.mxu0 0.0
    %5031 = vmatpush.msra.mxu0 0.0
    %5032 = vmatpush.msra.mxu0 0.0
    %5033 = vmatpush.msra.mxu0 0.0
    %5034 = vmatpush.msra.mxu0 0.0
    %5035 = vmatpush.msra.mxu0 0.0
    %5036 = vmatpush.msra.mxu0 %v5016
    %5037 = vmatmul.f32.gmra.mxu0 %v5019
    %v5038 = vpop.f32.mrf.mxu0
    %v5039 = vadd.f32 0.0, %v5038
    %5040 = vdwg.mxu0
    %5041 = vrot.lane.b32.xlu0 %v3817, 56
    %v5042 = vpop.permute.xlu0 %5041
    %v5045 = vsel %vm366, %v4869, 0
    %5047 = vmatpush.msra.mxu0 0.0
    %5048 = vmatpush.msra.mxu0 0.0
    %5049 = vmatpush.msra.mxu0 0.0
    %5050 = vmatpush.msra.mxu0 0.0
    %5051 = vmatpush.msra.mxu0 0.0
    %5052 = vmatpush.msra.mxu0 0.0
    %5053 = vmatpush.msra.mxu0 0.0
    %5054 = vmatpush.msra.mxu0 0.0
    %5055 = vmatpush.msra.mxu0 0.0
    %5056 = vmatpush.msra.mxu0 0.0
    %5057 = vmatpush.msra.mxu0 0.0
    %5058 = vmatpush.msra.mxu0 0.0
    %5059 = vmatpush.msra.mxu0 0.0
    %5060 = vmatpush.msra.mxu0 0.0
    %5061 = vmatpush.msra.mxu0 0.0
    %5062 = vmatpush.msra.mxu0 %v5042
    %5063 = vmatmul.f32.gmra.mxu0 %v5045
    %v5064 = vpop.f32.mrf.mxu0
    %v5065 = vadd.f32 0.0, %v5064
    %5066 = vdwg.mxu0
    %5067 = vrot.lane.b32.xlu0 %v3819, 56
    %v5068 = vpop.permute.xlu0 %5067
    %v5071 = vsel %vm366, %v4884, 0
    %5073 = vmatpush.msra.mxu0 0.0
    %5074 = vmatpush.msra.mxu0 0.0
    %5075 = vmatpush.msra.mxu0 0.0
    %5076 = vmatpush.msra.mxu0 0.0
    %5077 = vmatpush.msra.mxu0 0.0
    %5078 = vmatpush.msra.mxu0 0.0
    %5079 = vmatpush.msra.mxu0 0.0
    %5080 = vmatpush.msra.mxu0 0.0
    %5081 = vmatpush.msra.mxu0 0.0
    %5082 = vmatpush.msra.mxu0 0.0
    %5083 = vmatpush.msra.mxu0 0.0
    %5084 = vmatpush.msra.mxu0 0.0
    %5085 = vmatpush.msra.mxu0 0.0
    %5086 = vmatpush.msra.mxu0 0.0
    %5087 = vmatpush.msra.mxu0 0.0
    %5088 = vmatpush.msra.mxu0 %v5068
    %5089 = vmatmul.f32.gmra.mxu0 %v5071
    %v5090 = vpop.f32.mrf.mxu0
    %v5091 = vadd.f32 0.0, %v5090
    %5092 = vdwg.mxu0
    %5093 = vrot.lane.b32.xlu0 %v3802, 112
    %v5094 = vpop.permute.xlu0 %5093
    %5095 = vrot.lane.b32.xlu0 %v3802, 80
    %v5096 = vpop.permute.xlu0 %5095
    %v5097 = vsel %vm366, %v5094, 0
    %v5099 = vsel %vm366, %v5096, 0
    %5101 = vmatpush.xpose.msra.mxu0 0.0
    %5102 = vmatpush.xpose.msra.mxu0 0.0
    %5103 = vmatpush.xpose.msra.mxu0 0.0
    %5104 = vmatpush.xpose.msra.mxu0 0.0
    %5105 = vmatpush.xpose.msra.mxu0 0.0
    %5106 = vmatpush.xpose.msra.mxu0 0.0
    %5107 = vmatpush.xpose.msra.mxu0 0.0
    %5108 = vmatpush.xpose.msra.mxu0 0.0
    %5109 = vmatpush.xpose.msra.mxu0 0.0
    %5110 = vmatpush.xpose.msra.mxu0 0.0
    %5111 = vmatpush.xpose.msra.mxu0 0.0
    %5112 = vmatpush.xpose.msra.mxu0 0.0
    %5113 = vmatpush.xpose.msra.mxu0 0.0
    %5114 = vmatpush.xpose.msra.mxu0 0.0
    %5115 = vmatpush.xpose.msra.mxu0 0.0
    %5116 = vmatpush.xpose.msra.mxu0 %v5099
    %5117 = vmatmul.f32.gmra.mxu0 %v5097
    %v5118 = vpop.f32.mrf.mxu0
    %v5119 = vadd.f32 0.0, %v5118
    %5120 = vdwg.mxu0
    %5121 = vrot.lane.b32.xlu0 %v3804, 112
    %v5122 = vpop.permute.xlu0 %5121
    %5123 = vrot.lane.b32.xlu0 %v3804, 80
    %v5124 = vpop.permute.xlu0 %5123
    %v5125 = vsel %vm366, %v5122, 0
    %v5127 = vsel %vm366, %v5124, 0
    %5129 = vmatpush.xpose.msra.mxu0 0.0
    %5130 = vmatpush.xpose.msra.mxu0 0.0
    %5131 = vmatpush.xpose.msra.mxu0 0.0
    %5132 = vmatpush.xpose.msra.mxu0 0.0
    %5133 = vmatpush.xpose.msra.mxu0 0.0
    %5134 = vmatpush.xpose.msra.mxu0 0.0
    %5135 = vmatpush.xpose.msra.mxu0 0.0
    %5136 = vmatpush.xpose.msra.mxu0 0.0
    %5137 = vmatpush.xpose.msra.mxu0 0.0
    %5138 = vmatpush.xpose.msra.mxu0 0.0
    %5139 = vmatpush.xpose.msra.mxu0 0.0
    %5140 = vmatpush.xpose.msra.mxu0 0.0
    %5141 = vmatpush.xpose.msra.mxu0 0.0
    %5142 = vmatpush.xpose.msra.mxu0 0.0
    %5143 = vmatpush.xpose.msra.mxu0 0.0
    %5144 = vmatpush.xpose.msra.mxu0 %v5127
    %5145 = vmatmul.f32.gmra.mxu0 %v5125
    %v5146 = vpop.f32.mrf.mxu0
    %v5147 = vadd.f32 0.0, %v5146
    %5148 = vdwg.mxu0
    %5149 = vrot.lane.b32.xlu0 %v3807, 112
    %v5150 = vpop.permute.xlu0 %5149
    %5151 = vrot.lane.b32.xlu0 %v3807, 80
    %v5152 = vpop.permute.xlu0 %5151
    %v5153 = vsel %vm366, %v5150, 0
    %v5155 = vsel %vm366, %v5152, 0
    %5157 = vmatpush.xpose.msra.mxu0 0.0
    %5158 = vmatpush.xpose.msra.mxu0 0.0
    %5159 = vmatpush.xpose.msra.mxu0 0.0
    %5160 = vmatpush.xpose.msra.mxu0 0.0
    %5161 = vmatpush.xpose.msra.mxu0 0.0
    %5162 = vmatpush.xpose.msra.mxu0 0.0
    %5163 = vmatpush.xpose.msra.mxu0 0.0
    %5164 = vmatpush.xpose.msra.mxu0 0.0
    %5165 = vmatpush.xpose.msra.mxu0 0.0
    %5166 = vmatpush.xpose.msra.mxu0 0.0
    %5167 = vmatpush.xpose.msra.mxu0 0.0
    %5168 = vmatpush.xpose.msra.mxu0 0.0
    %5169 = vmatpush.xpose.msra.mxu0 0.0
    %5170 = vmatpush.xpose.msra.mxu0 0.0
    %5171 = vmatpush.xpose.msra.mxu0 0.0
    %5172 = vmatpush.xpose.msra.mxu0 %v5155
    %5173 = vmatmul.f32.gmra.mxu0 %v5153
    %v5174 = vpop.f32.mrf.mxu0
    %v5175 = vadd.f32 0.0, %v5174
    %5176 = vdwg.mxu0
    %5177 = vrot.lane.b32.xlu0 %v3809, 112
    %v5178 = vpop.permute.xlu0 %5177
    %5179 = vrot.lane.b32.xlu0 %v3809, 80
    %v5180 = vpop.permute.xlu0 %5179
    %v5181 = vsel %vm366, %v5178, 0
    %v5183 = vsel %vm366, %v5180, 0
    %5185 = vmatpush.xpose.msra.mxu0 0.0
    %5186 = vmatpush.xpose.msra.mxu0 0.0
    %5187 = vmatpush.xpose.msra.mxu0 0.0
    %5188 = vmatpush.xpose.msra.mxu0 0.0
    %5189 = vmatpush.xpose.msra.mxu0 0.0
    %5190 = vmatpush.xpose.msra.mxu0 0.0
    %5191 = vmatpush.xpose.msra.mxu0 0.0
    %5192 = vmatpush.xpose.msra.mxu0 0.0
    %5193 = vmatpush.xpose.msra.mxu0 0.0
    %5194 = vmatpush.xpose.msra.mxu0 0.0
    %5195 = vmatpush.xpose.msra.mxu0 0.0
    %5196 = vmatpush.xpose.msra.mxu0 0.0
    %5197 = vmatpush.xpose.msra.mxu0 0.0
    %5198 = vmatpush.xpose.msra.mxu0 0.0
    %5199 = vmatpush.xpose.msra.mxu0 0.0
    %5200 = vmatpush.xpose.msra.mxu0 %v5183
    %5201 = vmatmul.f32.gmra.mxu0 %v5181
    %v5202 = vpop.f32.mrf.mxu0
    %v5203 = vadd.f32 0.0, %v5202
    %5204 = vdwg.mxu0
    %5205 = vrot.lane.b32.xlu0 %v3812, 112
    %v5206 = vpop.permute.xlu0 %5205
    %5207 = vrot.lane.b32.xlu0 %v3812, 80
    %v5208 = vpop.permute.xlu0 %5207
    %v5209 = vsel %vm366, %v5206, 0
    %v5211 = vsel %vm366, %v5208, 0
    %5213 = vmatpush.xpose.msra.mxu0 0.0
    %5214 = vmatpush.xpose.msra.mxu0 0.0
    %5215 = vmatpush.xpose.msra.mxu0 0.0
    %5216 = vmatpush.xpose.msra.mxu0 0.0
    %5217 = vmatpush.xpose.msra.mxu0 0.0
    %5218 = vmatpush.xpose.msra.mxu0 0.0
    %5219 = vmatpush.xpose.msra.mxu0 0.0
    %5220 = vmatpush.xpose.msra.mxu0 0.0
    %5221 = vmatpush.xpose.msra.mxu0 0.0
    %5222 = vmatpush.xpose.msra.mxu0 0.0
    %5223 = vmatpush.xpose.msra.mxu0 0.0
    %5224 = vmatpush.xpose.msra.mxu0 0.0
    %5225 = vmatpush.xpose.msra.mxu0 0.0
    %5226 = vmatpush.xpose.msra.mxu0 0.0
    %5227 = vmatpush.xpose.msra.mxu0 0.0
    %5228 = vmatpush.xpose.msra.mxu0 %v5211
    %5229 = vmatmul.f32.gmra.mxu0 %v5209
    %v5230 = vpop.f32.mrf.mxu0
    %v5231 = vadd.f32 0.0, %v5230
    %5232 = vdwg.mxu0
    %5233 = vrot.lane.b32.xlu0 %v3814, 112
    %v5234 = vpop.permute.xlu0 %5233
    %5235 = vrot.lane.b32.xlu0 %v3814, 80
    %v5236 = vpop.permute.xlu0 %5235
    %v5237 = vsel %vm366, %v5234, 0
    %v5239 = vsel %vm366, %v5236, 0
    %5241 = vmatpush.xpose.msra.mxu0 0.0
    %5242 = vmatpush.xpose.msra.mxu0 0.0
    %5243 = vmatpush.xpose.msra.mxu0 0.0
    %5244 = vmatpush.xpose.msra.mxu0 0.0
    %5245 = vmatpush.xpose.msra.mxu0 0.0
    %5246 = vmatpush.xpose.msra.mxu0 0.0
    %5247 = vmatpush.xpose.msra.mxu0 0.0
    %5248 = vmatpush.xpose.msra.mxu0 0.0
    %5249 = vmatpush.xpose.msra.mxu0 0.0
    %5250 = vmatpush.xpose.msra.mxu0 0.0
    %5251 = vmatpush.xpose.msra.mxu0 0.0
    %5252 = vmatpush.xpose.msra.mxu0 0.0
    %5253 = vmatpush.xpose.msra.mxu0 0.0
    %5254 = vmatpush.xpose.msra.mxu0 0.0
    %5255 = vmatpush.xpose.msra.mxu0 0.0
    %5256 = vmatpush.xpose.msra.mxu0 %v5239
    %5257 = vmatmul.f32.gmra.mxu0 %v5237
    %v5258 = vpop.f32.mrf.mxu0
    %v5259 = vadd.f32 0.0, %v5258
    %5260 = vdwg.mxu0
    %5261 = vrot.lane.b32.xlu0 %v3817, 112
    %v5262 = vpop.permute.xlu0 %5261
    %5263 = vrot.lane.b32.xlu0 %v3817, 80
    %v5264 = vpop.permute.xlu0 %5263
    %v5265 = vsel %vm366, %v5262, 0
    %v5267 = vsel %vm366, %v5264, 0
    %5269 = vmatpush.xpose.msra.mxu0 0.0
    %5270 = vmatpush.xpose.msra.mxu0 0.0
    %5271 = vmatpush.xpose.msra.mxu0 0.0
    %5272 = vmatpush.xpose.msra.mxu0 0.0
    %5273 = vmatpush.xpose.msra.mxu0 0.0
    %5274 = vmatpush.xpose.msra.mxu0 0.0
    %5275 = vmatpush.xpose.msra.mxu0 0.0
    %5276 = vmatpush.xpose.msra.mxu0 0.0
    %5277 = vmatpush.xpose.msra.mxu0 0.0
    %5278 = vmatpush.xpose.msra.mxu0 0.0
    %5279 = vmatpush.xpose.msra.mxu0 0.0
    %5280 = vmatpush.xpose.msra.mxu0 0.0
    %5281 = vmatpush.xpose.msra.mxu0 0.0
    %5282 = vmatpush.xpose.msra.mxu0 0.0
    %5283 = vmatpush.xpose.msra.mxu0 0.0
    %5284 = vmatpush.xpose.msra.mxu0 %v5267
    %5285 = vmatmul.f32.gmra.mxu0 %v5265
    %v5286 = vpop.f32.mrf.mxu0
    %v5287 = vadd.f32 0.0, %v5286
    %5288 = vdwg.mxu0
    %5289 = vrot.lane.b32.xlu0 %v3819, 112
    %v5290 = vpop.permute.xlu0 %5289
    %5291 = vrot.lane.b32.xlu0 %v3819, 80
    %v5292 = vpop.permute.xlu0 %5291
    %v5293 = vsel %vm366, %v5290, 0
    %v5295 = vsel %vm366, %v5292, 0
    %5297 = vmatpush.xpose.msra.mxu0 0.0
    %5298 = vmatpush.xpose.msra.mxu0 0.0
    %5299 = vmatpush.xpose.msra.mxu0 0.0
    %5300 = vmatpush.xpose.msra.mxu0 0.0
    %5301 = vmatpush.xpose.msra.mxu0 0.0
    %5302 = vmatpush.xpose.msra.mxu0 0.0
    %5303 = vmatpush.xpose.msra.mxu0 0.0
    %5304 = vmatpush.xpose.msra.mxu0 0.0
    %5305 = vmatpush.xpose.msra.mxu0 0.0
    %5306 = vmatpush.xpose.msra.mxu0 0.0
    %5307 = vmatpush.xpose.msra.mxu0 0.0
    %5308 = vmatpush.xpose.msra.mxu0 0.0
    %5309 = vmatpush.xpose.msra.mxu0 0.0
    %5310 = vmatpush.xpose.msra.mxu0 0.0
    %5311 = vmatpush.xpose.msra.mxu0 0.0
    %5312 = vmatpush.xpose.msra.mxu0 %v5295
    %5313 = vmatmul.f32.gmra.mxu0 %v5293
    %v5314 = vpop.f32.mrf.mxu0
    %v5315 = vadd.f32 0.0, %v5314
    %5316 = vdwg.mxu0
    %v5317 = vmul.f32 %v5119, 0.35355338
    %v5318 = vmul.f32 %v5147, 0.35355338
    %v5319 = vmul.f32 %v5175, 0.35355338
    %v5320 = vmul.f32 %v5203, 0.35355338
    %v5321 = vmul.f32 %v5231, 0.35355338
    %v5322 = vmul.f32 %v5259, 0.35355338
    %v5323 = vmul.f32 %v5287, 0.35355338
    %v5324 = vmul.f32 %v5315, 0.35355338
    %v5325 = vadd.f32 %v5317, %v588
    %v5326 = vadd.f32 %v5318, %v589
    %v5327 = vadd.f32 %v5319, %v590
    %v5328 = vadd.f32 %v5320, %v591
    %v5329 = vadd.f32 %v5321, %v592
    %v5330 = vadd.f32 %v5322, %v593
    %v5331 = vadd.f32 %v5323, %v594
    %v5332 = vadd.f32 %v5324, %v595
    %v5333 = vsel %vm366, %v5325, -inf
    %5334 = vmax.xlane.f32.xlu0 %v5333
    %v5335 = vpop.xlane.xlu0 %5334
    %v5336 = vsel %vm366, %v5326, -inf
    %5337 = vmax.xlane.f32.xlu0 %v5336
    %v5338 = vpop.xlane.xlu0 %5337
    %v5339 = vsel %vm366, %v5327, -inf
    %5340 = vmax.xlane.f32.xlu0 %v5339
    %v5341 = vpop.xlane.xlu0 %5340
    %v5342 = vsel %vm366, %v5328, -inf
    %5343 = vmax.xlane.f32.xlu0 %v5342
    %v5344 = vpop.xlane.xlu0 %5343
    %v5345 = vsel %vm366, %v5329, -inf
    %5346 = vmax.xlane.f32.xlu0 %v5345
    %v5347 = vpop.xlane.xlu0 %5346
    %v5348 = vsel %vm366, %v5330, -inf
    %5349 = vmax.xlane.f32.xlu0 %v5348
    %v5350 = vpop.xlane.xlu0 %5349
    %v5351 = vsel %vm366, %v5331, -inf
    %5352 = vmax.xlane.f32.xlu0 %v5351
    %v5353 = vpop.xlane.xlu0 %5352
    %v5354 = vsel %vm366, %v5332, -inf
    %5355 = vmax.xlane.f32.xlu0 %v5354
    %v5356 = vpop.xlane.xlu0 %5355
    %v5357 = vsub.f32 %v5325, %v5335
    %v5358 = vsub.f32 %v5326, %v5338
    %v5359 = vsub.f32 %v5327, %v5341
    %v5360 = vsub.f32 %v5328, %v5344
    %v5361 = vsub.f32 %v5329, %v5347
    %v5362 = vsub.f32 %v5330, %v5350
    %v5363 = vsub.f32 %v5331, %v5353
    %v5364 = vsub.f32 %v5332, %v5356
    %v5365 = vmul.f32 %v5357, 1.442695
    %v5366 = vpow.pop %v5365
    %v5367 = vmul.f32 %v5358, 1.442695
    %v5368 = vpow.pop %v5367
    %v5369 = vmul.f32 %v5359, 1.442695
    %v5370 = vpow.pop %v5369
    %v5371 = vmul.f32 %v5360, 1.442695
    %v5372 = vpow.pop %v5371
    %v5373 = vmul.f32 %v5361, 1.442695
    %v5374 = vpow.pop %v5373
    %v5375 = vmul.f32 %v5362, 1.442695
    %v5376 = vpow.pop %v5375
    %v5377 = vmul.f32 %v5363, 1.442695
    %v5378 = vpow.pop %v5377
    %v5379 = vmul.f32 %v5364, 1.442695
    %v5380 = vpow.pop %v5379
    %v5381 = vsel %vm366, %v5366, 0.0
    %5382 = vadd.xlane.f32.xlu0 %v5381
    %v5383 = vpop.xlane.xlu0 %5382
    %v5384 = vsel %vm366, %v5368, 0.0
    %5385 = vadd.xlane.f32.xlu0 %v5384
    %v5386 = vpop.xlane.xlu0 %5385
    %v5387 = vsel %vm366, %v5370, 0.0
    %5388 = vadd.xlane.f32.xlu0 %v5387
    %v5389 = vpop.xlane.xlu0 %5388
    %v5390 = vsel %vm366, %v5372, 0.0
    %5391 = vadd.xlane.f32.xlu0 %v5390
    %v5392 = vpop.xlane.xlu0 %5391
    %v5393 = vsel %vm366, %v5374, 0.0
    %5394 = vadd.xlane.f32.xlu0 %v5393
    %v5395 = vpop.xlane.xlu0 %5394
    %v5396 = vsel %vm366, %v5376, 0.0
    %5397 = vadd.xlane.f32.xlu0 %v5396
    %v5398 = vpop.xlane.xlu0 %5397
    %v5399 = vsel %vm366, %v5378, 0.0
    %5400 = vadd.xlane.f32.xlu0 %v5399
    %v5401 = vpop.xlane.xlu0 %5400
    %v5402 = vsel %vm366, %v5380, 0.0
    %5403 = vadd.xlane.f32.xlu0 %v5402
    %v5404 = vpop.xlane.xlu0 %5403
    %v5405 = vrcp.pop %v5383
    %v5406 = vmul.f32 %v5383, %v5405
    %v5407 = vsub.f32 1.0, %v5406
    %v5408 = vmul.f32 %v5405, %v5407
    %v5409 = vadd.f32 %v5405, %v5408
    %vm5410 = vweird.f32 %v5383
    %vm5411 = vweird.f32 %v5405
    %vm5412 = vmor %vm5410, %vm5411
    %v5413 = vsel %vm5412, %v5405, %v5409
    %v5414 = vand.u32 2147483647, %v5383
    %vm5415 = vcmp.eq.f32.partialorder %v5414, 8.507059e+37
    %v5416 = vand.u32 %v5383, 2147483648
    %v5417 = vor.u32 1.1754944e-38, %v5416
    %v5418 = vsel %vm5415, %v5417, %v5413
    %v5419 = vmul.f32 %v5366, %v5418
    %v5420 = vrcp.pop %v5386
    %v5421 = vmul.f32 %v5386, %v5420
    %v5422 = vsub.f32 1.0, %v5421
    %v5423 = vmul.f32 %v5420, %v5422
    %v5424 = vadd.f32 %v5420, %v5423
    %vm5425 = vweird.f32 %v5386
    %vm5426 = vweird.f32 %v5420
    %vm5427 = vmor %vm5425, %vm5426
    %v5428 = vsel %vm5427, %v5420, %v5424
    %v5429 = vand.u32 2147483647, %v5386
    %vm5430 = vcmp.eq.f32.partialorder %v5429, 8.507059e+37
    %v5431 = vand.u32 %v5386, 2147483648
    %v5432 = vor.u32 1.1754944e-38, %v5431
    %v5433 = vsel %vm5430, %v5432, %v5428
    %v5434 = vmul.f32 %v5368, %v5433
    %v5435 = vrcp.pop %v5389
    %v5436 = vmul.f32 %v5389, %v5435
    %v5437 = vsub.f32 1.0, %v5436
    %v5438 = vmul.f32 %v5435, %v5437
    %v5439 = vadd.f32 %v5435, %v5438
    %vm5440 = vweird.f32 %v5389
    %vm5441 = vweird.f32 %v5435
    %vm5442 = vmor %vm5440, %vm5441
    %v5443 = vsel %vm5442, %v5435, %v5439
    %v5444 = vand.u32 2147483647, %v5389
    %vm5445 = vcmp.eq.f32.partialorder %v5444, 8.507059e+37
    %v5446 = vand.u32 %v5389, 2147483648
    %v5447 = vor.u32 1.1754944e-38, %v5446
    %v5448 = vsel %vm5445, %v5447, %v5443
    %v5449 = vmul.f32 %v5370, %v5448
    %v5450 = vrcp.pop %v5392
    %v5451 = vmul.f32 %v5392, %v5450
    %v5452 = vsub.f32 1.0, %v5451
    %v5453 = vmul.f32 %v5450, %v5452
    %v5454 = vadd.f32 %v5450, %v5453
    %vm5455 = vweird.f32 %v5392
    %vm5456 = vweird.f32 %v5450
    %vm5457 = vmor %vm5455, %vm5456
    %v5458 = vsel %vm5457, %v5450, %v5454
    %v5459 = vand.u32 2147483647, %v5392
    %vm5460 = vcmp.eq.f32.partialorder %v5459, 8.507059e+37
    %v5461 = vand.u32 %v5392, 2147483648
    %v5462 = vor.u32 1.1754944e-38, %v5461
    %v5463 = vsel %vm5460, %v5462, %v5458
    %v5464 = vmul.f32 %v5372, %v5463
    %v5465 = vrcp.pop %v5395
    %v5466 = vmul.f32 %v5395, %v5465
    %v5467 = vsub.f32 1.0, %v5466
    %v5468 = vmul.f32 %v5465, %v5467
    %v5469 = vadd.f32 %v5465, %v5468
    %vm5470 = vweird.f32 %v5395
    %vm5471 = vweird.f32 %v5465
    %vm5472 = vmor %vm5470, %vm5471
    %v5473 = vsel %vm5472, %v5465, %v5469
    %v5474 = vand.u32 2147483647, %v5395
    %vm5475 = vcmp.eq.f32.partialorder %v5474, 8.507059e+37
    %v5476 = vand.u32 %v5395, 2147483648
    %v5477 = vor.u32 1.1754944e-38, %v5476
    %v5478 = vsel %vm5475, %v5477, %v5473
    %v5479 = vmul.f32 %v5374, %v5478
    %v5480 = vrcp.pop %v5398
    %v5481 = vmul.f32 %v5398, %v5480
    %v5482 = vsub.f32 1.0, %v5481
    %v5483 = vmul.f32 %v5480, %v5482
    %v5484 = vadd.f32 %v5480, %v5483
    %vm5485 = vweird.f32 %v5398
    %vm5486 = vweird.f32 %v5480
    %vm5487 = vmor %vm5485, %vm5486
    %v5488 = vsel %vm5487, %v5480, %v5484
    %v5489 = vand.u32 2147483647, %v5398
    %vm5490 = vcmp.eq.f32.partialorder %v5489, 8.507059e+37
    %v5491 = vand.u32 %v5398, 2147483648
    %v5492 = vor.u32 1.1754944e-38, %v5491
    %v5493 = vsel %vm5490, %v5492, %v5488
    %v5494 = vmul.f32 %v5376, %v5493
    %v5495 = vrcp.pop %v5401
    %v5496 = vmul.f32 %v5401, %v5495
    %v5497 = vsub.f32 1.0, %v5496
    %v5498 = vmul.f32 %v5495, %v5497
    %v5499 = vadd.f32 %v5495, %v5498
    %vm5500 = vweird.f32 %v5401
    %vm5501 = vweird.f32 %v5495
    %vm5502 = vmor %vm5500, %vm5501
    %v5503 = vsel %vm5502, %v5495, %v5499
    %v5504 = vand.u32 2147483647, %v5401
    %vm5505 = vcmp.eq.f32.partialorder %v5504, 8.507059e+37
    %v5506 = vand.u32 %v5401, 2147483648
    %v5507 = vor.u32 1.1754944e-38, %v5506
    %v5508 = vsel %vm5505, %v5507, %v5503
    %v5509 = vmul.f32 %v5378, %v5508
    %v5510 = vrcp.pop %v5404
    %v5511 = vmul.f32 %v5404, %v5510
    %v5512 = vsub.f32 1.0, %v5511
    %v5513 = vmul.f32 %v5510, %v5512
    %v5514 = vadd.f32 %v5510, %v5513
    %vm5515 = vweird.f32 %v5404
    %vm5516 = vweird.f32 %v5510
    %vm5517 = vmor %vm5515, %vm5516
    %v5518 = vsel %vm5517, %v5510, %v5514
    %v5519 = vand.u32 2147483647, %v5404
    %vm5520 = vcmp.eq.f32.partialorder %v5519, 8.507059e+37
    %v5521 = vand.u32 %v5404, 2147483648
    %v5522 = vor.u32 1.1754944e-38, %v5521
    %v5523 = vsel %vm5520, %v5522, %v5518
    %v5524 = vmul.f32 %v5380, %v5523
    %5525 = vrot.lane.b32.xlu0 %v3802, 48
    %v5526 = vpop.permute.xlu0 %5525
    %v5529 = vsel %vm366, %v5419, 0
    %5531 = vmatpush.msra.mxu0 0.0
    %5532 = vmatpush.msra.mxu0 0.0
    %5533 = vmatpush.msra.mxu0 0.0
    %5534 = vmatpush.msra.mxu0 0.0
    %5535 = vmatpush.msra.mxu0 0.0
    %5536 = vmatpush.msra.mxu0 0.0
    %5537 = vmatpush.msra.mxu0 0.0
    %5538 = vmatpush.msra.mxu0 0.0
    %5539 = vmatpush.msra.mxu0 0.0
    %5540 = vmatpush.msra.mxu0 0.0
    %5541 = vmatpush.msra.mxu0 0.0
    %5542 = vmatpush.msra.mxu0 0.0
    %5543 = vmatpush.msra.mxu0 0.0
    %5544 = vmatpush.msra.mxu0 0.0
    %5545 = vmatpush.msra.mxu0 0.0
    %5546 = vmatpush.msra.mxu0 %v5526
    %5547 = vmatmul.f32.gmra.mxu0 %v5529
    %v5548 = vpop.f32.mrf.mxu0
    %v5549 = vadd.f32 0.0, %v5548
    %5550 = vdwg.mxu0
    %5551 = vrot.lane.b32.xlu0 %v3804, 48
    %v5552 = vpop.permute.xlu0 %5551
    %v5555 = vsel %vm366, %v5434, 0
    %5557 = vmatpush.msra.mxu0 0.0
    %5558 = vmatpush.msra.mxu0 0.0
    %5559 = vmatpush.msra.mxu0 0.0
    %5560 = vmatpush.msra.mxu0 0.0
    %5561 = vmatpush.msra.mxu0 0.0
    %5562 = vmatpush.msra.mxu0 0.0
    %5563 = vmatpush.msra.mxu0 0.0
    %5564 = vmatpush.msra.mxu0 0.0
    %5565 = vmatpush.msra.mxu0 0.0
    %5566 = vmatpush.msra.mxu0 0.0
    %5567 = vmatpush.msra.mxu0 0.0
    %5568 = vmatpush.msra.mxu0 0.0
    %5569 = vmatpush.msra.mxu0 0.0
    %5570 = vmatpush.msra.mxu0 0.0
    %5571 = vmatpush.msra.mxu0 0.0
    %5572 = vmatpush.msra.mxu0 %v5552
    %5573 = vmatmul.f32.gmra.mxu0 %v5555
    %v5574 = vpop.f32.mrf.mxu0
    %v5575 = vadd.f32 0.0, %v5574
    %5576 = vdwg.mxu0
    %5577 = vrot.lane.b32.xlu0 %v3807, 48
    %v5578 = vpop.permute.xlu0 %5577
    %v5581 = vsel %vm366, %v5449, 0
    %5583 = vmatpush.msra.mxu0 0.0
    %5584 = vmatpush.msra.mxu0 0.0
    %5585 = vmatpush.msra.mxu0 0.0
    %5586 = vmatpush.msra.mxu0 0.0
    %5587 = vmatpush.msra.mxu0 0.0
    %5588 = vmatpush.msra.mxu0 0.0
    %5589 = vmatpush.msra.mxu0 0.0
    %5590 = vmatpush.msra.mxu0 0.0
    %5591 = vmatpush.msra.mxu0 0.0
    %5592 = vmatpush.msra.mxu0 0.0
    %5593 = vmatpush.msra.mxu0 0.0
    %5594 = vmatpush.msra.mxu0 0.0
    %5595 = vmatpush.msra.mxu0 0.0
    %5596 = vmatpush.msra.mxu0 0.0
    %5597 = vmatpush.msra.mxu0 0.0
    %5598 = vmatpush.msra.mxu0 %v5578
    %5599 = vmatmul.f32.gmra.mxu0 %v5581
    %v5600 = vpop.f32.mrf.mxu0
    %v5601 = vadd.f32 0.0, %v5600
    %5602 = vdwg.mxu0
    %5603 = vrot.lane.b32.xlu0 %v3809, 48
    %v5604 = vpop.permute.xlu0 %5603
    %v5607 = vsel %vm366, %v5464, 0
    %5609 = vmatpush.msra.mxu0 0.0
    %5610 = vmatpush.msra.mxu0 0.0
    %5611 = vmatpush.msra.mxu0 0.0
    %5612 = vmatpush.msra.mxu0 0.0
    %5613 = vmatpush.msra.mxu0 0.0
    %5614 = vmatpush.msra.mxu0 0.0
    %5615 = vmatpush.msra.mxu0 0.0
    %5616 = vmatpush.msra.mxu0 0.0
    %5617 = vmatpush.msra.mxu0 0.0
    %5618 = vmatpush.msra.mxu0 0.0
    %5619 = vmatpush.msra.mxu0 0.0
    %5620 = vmatpush.msra.mxu0 0.0
    %5621 = vmatpush.msra.mxu0 0.0
    %5622 = vmatpush.msra.mxu0 0.0
    %5623 = vmatpush.msra.mxu0 0.0
    %5624 = vmatpush.msra.mxu0 %v5604
    %5625 = vmatmul.f32.gmra.mxu0 %v5607
    %v5626 = vpop.f32.mrf.mxu0
    %v5627 = vadd.f32 0.0, %v5626
    %5628 = vdwg.mxu0
    %5629 = vrot.lane.b32.xlu0 %v3812, 48
    %v5630 = vpop.permute.xlu0 %5629
    %v5633 = vsel %vm366, %v5479, 0
    %5635 = vmatpush.msra.mxu0 0.0
    %5636 = vmatpush.msra.mxu0 0.0
    %5637 = vmatpush.msra.mxu0 0.0
    %5638 = vmatpush.msra.mxu0 0.0
    %5639 = vmatpush.msra.mxu0 0.0
    %5640 = vmatpush.msra.mxu0 0.0
    %5641 = vmatpush.msra.mxu0 0.0
    %5642 = vmatpush.msra.mxu0 0.0
    %5643 = vmatpush.msra.mxu0 0.0
    %5644 = vmatpush.msra.mxu0 0.0
    %5645 = vmatpush.msra.mxu0 0.0
    %5646 = vmatpush.msra.mxu0 0.0
    %5647 = vmatpush.msra.mxu0 0.0
    %5648 = vmatpush.msra.mxu0 0.0
    %5649 = vmatpush.msra.mxu0 0.0
    %5650 = vmatpush.msra.mxu0 %v5630
    %5651 = vmatmul.f32.gmra.mxu0 %v5633
    %v5652 = vpop.f32.mrf.mxu0
    %v5653 = vadd.f32 0.0, %v5652
    %5654 = vdwg.mxu0
    %5655 = vrot.lane.b32.xlu0 %v3814, 48
    %v5656 = vpop.permute.xlu0 %5655
    %v5659 = vsel %vm366, %v5494, 0
    %5661 = vmatpush.msra.mxu0 0.0
    %5662 = vmatpush.msra.mxu0 0.0
    %5663 = vmatpush.msra.mxu0 0.0
    %5664 = vmatpush.msra.mxu0 0.0
    %5665 = vmatpush.msra.mxu0 0.0
    %5666 = vmatpush.msra.mxu0 0.0
    %5667 = vmatpush.msra.mxu0 0.0
    %5668 = vmatpush.msra.mxu0 0.0
    %5669 = vmatpush.msra.mxu0 0.0
    %5670 = vmatpush.msra.mxu0 0.0
    %5671 = vmatpush.msra.mxu0 0.0
    %5672 = vmatpush.msra.mxu0 0.0
    %5673 = vmatpush.msra.mxu0 0.0
    %5674 = vmatpush.msra.mxu0 0.0
    %5675 = vmatpush.msra.mxu0 0.0
    %5676 = vmatpush.msra.mxu0 %v5656
    %5677 = vmatmul.f32.gmra.mxu0 %v5659
    %v5678 = vpop.f32.mrf.mxu0
    %v5679 = vadd.f32 0.0, %v5678
    %5680 = vdwg.mxu0
    %5681 = vrot.lane.b32.xlu0 %v3817, 48
    %v5682 = vpop.permute.xlu0 %5681
    %v5685 = vsel %vm366, %v5509, 0
    %5687 = vmatpush.msra.mxu0 0.0
    %5688 = vmatpush.msra.mxu0 0.0
    %5689 = vmatpush.msra.mxu0 0.0
    %5690 = vmatpush.msra.mxu0 0.0
    %5691 = vmatpush.msra.mxu0 0.0
    %5692 = vmatpush.msra.mxu0 0.0
    %5693 = vmatpush.msra.mxu0 0.0
    %5694 = vmatpush.msra.mxu0 0.0
    %5695 = vmatpush.msra.mxu0 0.0
    %5696 = vmatpush.msra.mxu0 0.0
    %5697 = vmatpush.msra.mxu0 0.0
    %5698 = vmatpush.msra.mxu0 0.0
    %5699 = vmatpush.msra.mxu0 0.0
    %5700 = vmatpush.msra.mxu0 0.0
    %5701 = vmatpush.msra.mxu0 0.0
    %5702 = vmatpush.msra.mxu0 %v5682
    %5703 = vmatmul.f32.gmra.mxu0 %v5685
    %v5704 = vpop.f32.mrf.mxu0
    %v5705 = vadd.f32 0.0, %v5704
    %5706 = vdwg.mxu0
    %5707 = vrot.lane.b32.xlu0 %v3819, 48
    %v5708 = vpop.permute.xlu0 %5707
    %v5711 = vsel %vm366, %v5524, 0
    %5713 = vmatpush.msra.mxu0 0.0
    %5714 = vmatpush.msra.mxu0 0.0
    %5715 = vmatpush.msra.mxu0 0.0
    %5716 = vmatpush.msra.mxu0 0.0
    %5717 = vmatpush.msra.mxu0 0.0
    %5718 = vmatpush.msra.mxu0 0.0
    %5719 = vmatpush.msra.mxu0 0.0
    %5720 = vmatpush.msra.mxu0 0.0
    %5721 = vmatpush.msra.mxu0 0.0
    %5722 = vmatpush.msra.mxu0 0.0
    %5723 = vmatpush.msra.mxu0 0.0
    %5724 = vmatpush.msra.mxu0 0.0
    %5725 = vmatpush.msra.mxu0 0.0
    %5726 = vmatpush.msra.mxu0 0.0
    %5727 = vmatpush.msra.mxu0 0.0
    %5728 = vmatpush.msra.mxu0 %v5708
    %5729 = vmatmul.f32.gmra.mxu0 %v5711
    %v5730 = vpop.f32.mrf.mxu0
    %v5731 = vadd.f32 0.0, %v5730
    %5732 = vdwg.mxu0
    %5733 = vrot.lane.b32.xlu0 %v3802, 104
    %v5734 = vpop.permute.xlu0 %5733
    %5735 = vrot.lane.b32.xlu0 %v3802, 72
    %v5736 = vpop.permute.xlu0 %5735
    %v5737 = vsel %vm366, %v5734, 0
    %v5739 = vsel %vm366, %v5736, 0
    %5741 = vmatpush.xpose.msra.mxu0 0.0
    %5742 = vmatpush.xpose.msra.mxu0 0.0
    %5743 = vmatpush.xpose.msra.mxu0 0.0
    %5744 = vmatpush.xpose.msra.mxu0 0.0
    %5745 = vmatpush.xpose.msra.mxu0 0.0
    %5746 = vmatpush.xpose.msra.mxu0 0.0
    %5747 = vmatpush.xpose.msra.mxu0 0.0
    %5748 = vmatpush.xpose.msra.mxu0 0.0
    %5749 = vmatpush.xpose.msra.mxu0 0.0
    %5750 = vmatpush.xpose.msra.mxu0 0.0
    %5751 = vmatpush.xpose.msra.mxu0 0.0
    %5752 = vmatpush.xpose.msra.mxu0 0.0
    %5753 = vmatpush.xpose.msra.mxu0 0.0
    %5754 = vmatpush.xpose.msra.mxu0 0.0
    %5755 = vmatpush.xpose.msra.mxu0 0.0
    %5756 = vmatpush.xpose.msra.mxu0 %v5739
    %5757 = vmatmul.f32.gmra.mxu0 %v5737
    %v5758 = vpop.f32.mrf.mxu0
    %v5759 = vadd.f32 0.0, %v5758
    %5760 = vdwg.mxu0
    %5761 = vrot.lane.b32.xlu0 %v3804, 104
    %v5762 = vpop.permute.xlu0 %5761
    %5763 = vrot.lane.b32.xlu0 %v3804, 72
    %v5764 = vpop.permute.xlu0 %5763
    %v5765 = vsel %vm366, %v5762, 0
    %v5767 = vsel %vm366, %v5764, 0
    %5769 = vmatpush.xpose.msra.mxu0 0.0
    %5770 = vmatpush.xpose.msra.mxu0 0.0
    %5771 = vmatpush.xpose.msra.mxu0 0.0
    %5772 = vmatpush.xpose.msra.mxu0 0.0
    %5773 = vmatpush.xpose.msra.mxu0 0.0
    %5774 = vmatpush.xpose.msra.mxu0 0.0
    %5775 = vmatpush.xpose.msra.mxu0 0.0
    %5776 = vmatpush.xpose.msra.mxu0 0.0
    %5777 = vmatpush.xpose.msra.mxu0 0.0
    %5778 = vmatpush.xpose.msra.mxu0 0.0
    %5779 = vmatpush.xpose.msra.mxu0 0.0
    %5780 = vmatpush.xpose.msra.mxu0 0.0
    %5781 = vmatpush.xpose.msra.mxu0 0.0
    %5782 = vmatpush.xpose.msra.mxu0 0.0
    %5783 = vmatpush.xpose.msra.mxu0 0.0
    %5784 = vmatpush.xpose.msra.mxu0 %v5767
    %5785 = vmatmul.f32.gmra.mxu0 %v5765
    %v5786 = vpop.f32.mrf.mxu0
    %v5787 = vadd.f32 0.0, %v5786
    %5788 = vdwg.mxu0
    %5789 = vrot.lane.b32.xlu0 %v3807, 104
    %v5790 = vpop.permute.xlu0 %5789
    %5791 = vrot.lane.b32.xlu0 %v3807, 72
    %v5792 = vpop.permute.xlu0 %5791
    %v5793 = vsel %vm366, %v5790, 0
    %v5795 = vsel %vm366, %v5792, 0
    %5797 = vmatpush.xpose.msra.mxu0 0.0
    %5798 = vmatpush.xpose.msra.mxu0 0.0
    %5799 = vmatpush.xpose.msra.mxu0 0.0
    %5800 = vmatpush.xpose.msra.mxu0 0.0
    %5801 = vmatpush.xpose.msra.mxu0 0.0
    %5802 = vmatpush.xpose.msra.mxu0 0.0
    %5803 = vmatpush.xpose.msra.mxu0 0.0
    %5804 = vmatpush.xpose.msra.mxu0 0.0
    %5805 = vmatpush.xpose.msra.mxu0 0.0
    %5806 = vmatpush.xpose.msra.mxu0 0.0
    %5807 = vmatpush.xpose.msra.mxu0 0.0
    %5808 = vmatpush.xpose.msra.mxu0 0.0
    %5809 = vmatpush.xpose.msra.mxu0 0.0
    %5810 = vmatpush.xpose.msra.mxu0 0.0
    %5811 = vmatpush.xpose.msra.mxu0 0.0
    %5812 = vmatpush.xpose.msra.mxu0 %v5795
    %5813 = vmatmul.f32.gmra.mxu0 %v5793
    %v5814 = vpop.f32.mrf.mxu0
    %v5815 = vadd.f32 0.0, %v5814
    %5816 = vdwg.mxu0
    %5817 = vrot.lane.b32.xlu0 %v3809, 104
    %v5818 = vpop.permute.xlu0 %5817
    %5819 = vrot.lane.b32.xlu0 %v3809, 72
    %v5820 = vpop.permute.xlu0 %5819
    %v5821 = vsel %vm366, %v5818, 0
    %v5823 = vsel %vm366, %v5820, 0
    %5825 = vmatpush.xpose.msra.mxu0 0.0
    %5826 = vmatpush.xpose.msra.mxu0 0.0
    %5827 = vmatpush.xpose.msra.mxu0 0.0
    %5828 = vmatpush.xpose.msra.mxu0 0.0
    %5829 = vmatpush.xpose.msra.mxu0 0.0
    %5830 = vmatpush.xpose.msra.mxu0 0.0
    %5831 = vmatpush.xpose.msra.mxu0 0.0
    %5832 = vmatpush.xpose.msra.mxu0 0.0
    %5833 = vmatpush.xpose.msra.mxu0 0.0
    %5834 = vmatpush.xpose.msra.mxu0 0.0
    %5835 = vmatpush.xpose.msra.mxu0 0.0
    %5836 = vmatpush.xpose.msra.mxu0 0.0
    %5837 = vmatpush.xpose.msra.mxu0 0.0
    %5838 = vmatpush.xpose.msra.mxu0 0.0
    %5839 = vmatpush.xpose.msra.mxu0 0.0
    %5840 = vmatpush.xpose.msra.mxu0 %v5823
    %5841 = vmatmul.f32.gmra.mxu0 %v5821
    %v5842 = vpop.f32.mrf.mxu0
    %v5843 = vadd.f32 0.0, %v5842
    %5844 = vdwg.mxu0
    %5845 = vrot.lane.b32.xlu0 %v3812, 104
    %v5846 = vpop.permute.xlu0 %5845
    %5847 = vrot.lane.b32.xlu0 %v3812, 72
    %v5848 = vpop.permute.xlu0 %5847
    %v5849 = vsel %vm366, %v5846, 0
    %v5851 = vsel %vm366, %v5848, 0
    %5853 = vmatpush.xpose.msra.mxu0 0.0
    %5854 = vmatpush.xpose.msra.mxu0 0.0
    %5855 = vmatpush.xpose.msra.mxu0 0.0
    %5856 = vmatpush.xpose.msra.mxu0 0.0
    %5857 = vmatpush.xpose.msra.mxu0 0.0
    %5858 = vmatpush.xpose.msra.mxu0 0.0
    %5859 = vmatpush.xpose.msra.mxu0 0.0
    %5860 = vmatpush.xpose.msra.mxu0 0.0
    %5861 = vmatpush.xpose.msra.mxu0 0.0
    %5862 = vmatpush.xpose.msra.mxu0 0.0
    %5863 = vmatpush.xpose.msra.mxu0 0.0
    %5864 = vmatpush.xpose.msra.mxu0 0.0
    %5865 = vmatpush.xpose.msra.mxu0 0.0
    %5866 = vmatpush.xpose.msra.mxu0 0.0
    %5867 = vmatpush.xpose.msra.mxu0 0.0
    %5868 = vmatpush.xpose.msra.mxu0 %v5851
    %5869 = vmatmul.f32.gmra.mxu0 %v5849
    %v5870 = vpop.f32.mrf.mxu0
    %v5871 = vadd.f32 0.0, %v5870
    %5872 = vdwg.mxu0
    %5873 = vrot.lane.b32.xlu0 %v3814, 104
    %v5874 = vpop.permute.xlu0 %5873
    %5875 = vrot.lane.b32.xlu0 %v3814, 72
    %v5876 = vpop.permute.xlu0 %5875
    %v5877 = vsel %vm366, %v5874, 0
    %v5879 = vsel %vm366, %v5876, 0
    %5881 = vmatpush.xpose.msra.mxu0 0.0
    %5882 = vmatpush.xpose.msra.mxu0 0.0
    %5883 = vmatpush.xpose.msra.mxu0 0.0
    %5884 = vmatpush.xpose.msra.mxu0 0.0
    %5885 = vmatpush.xpose.msra.mxu0 0.0
    %5886 = vmatpush.xpose.msra.mxu0 0.0
    %5887 = vmatpush.xpose.msra.mxu0 0.0
    %5888 = vmatpush.xpose.msra.mxu0 0.0
    %5889 = vmatpush.xpose.msra.mxu0 0.0
    %5890 = vmatpush.xpose.msra.mxu0 0.0
    %5891 = vmatpush.xpose.msra.mxu0 0.0
    %5892 = vmatpush.xpose.msra.mxu0 0.0
    %5893 = vmatpush.xpose.msra.mxu0 0.0
    %5894 = vmatpush.xpose.msra.mxu0 0.0
    %5895 = vmatpush.xpose.msra.mxu0 0.0
    %5896 = vmatpush.xpose.msra.mxu0 %v5879
    %5897 = vmatmul.f32.gmra.mxu0 %v5877
    %v5898 = vpop.f32.mrf.mxu0
    %v5899 = vadd.f32 0.0, %v5898
    %5900 = vdwg.mxu0
    %5901 = vrot.lane.b32.xlu0 %v3817, 104
    %v5902 = vpop.permute.xlu0 %5901
    %5903 = vrot.lane.b32.xlu0 %v3817, 72
    %v5904 = vpop.permute.xlu0 %5903
    %v5905 = vsel %vm366, %v5902, 0
    %v5907 = vsel %vm366, %v5904, 0
    %5909 = vmatpush.xpose.msra.mxu0 0.0
    %5910 = vmatpush.xpose.msra.mxu0 0.0
    %5911 = vmatpush.xpose.msra.mxu0 0.0
    %5912 = vmatpush.xpose.msra.mxu0 0.0
    %5913 = vmatpush.xpose.msra.mxu0 0.0
    %5914 = vmatpush.xpose.msra.mxu0 0.0
    %5915 = vmatpush.xpose.msra.mxu0 0.0
    %5916 = vmatpush.xpose.msra.mxu0 0.0
    %5917 = vmatpush.xpose.msra.mxu0 0.0
    %5918 = vmatpush.xpose.msra.mxu0 0.0
    %5919 = vmatpush.xpose.msra.mxu0 0.0
    %5920 = vmatpush.xpose.msra.mxu0 0.0
    %5921 = vmatpush.xpose.msra.mxu0 0.0
    %5922 = vmatpush.xpose.msra.mxu0 0.0
    %5923 = vmatpush.xpose.msra.mxu0 0.0
    %5924 = vmatpush.xpose.msra.mxu0 %v5907
    %5925 = vmatmul.f32.gmra.mxu0 %v5905
    %v5926 = vpop.f32.mrf.mxu0
    %v5927 = vadd.f32 0.0, %v5926
    %5928 = vdwg.mxu0
    %5929 = vrot.lane.b32.xlu0 %v3819, 104
    %v5930 = vpop.permute.xlu0 %5929
    %5931 = vrot.lane.b32.xlu0 %v3819, 72
    %v5932 = vpop.permute.xlu0 %5931
    %v5933 = vsel %vm366, %v5930, 0
    %v5935 = vsel %vm366, %v5932, 0
    %5937 = vmatpush.xpose.msra.mxu0 0.0
    %5938 = vmatpush.xpose.msra.mxu0 0.0
    %5939 = vmatpush.xpose.msra.mxu0 0.0
    %5940 = vmatpush.xpose.msra.mxu0 0.0
    %5941 = vmatpush.xpose.msra.mxu0 0.0
    %5942 = vmatpush.xpose.msra.mxu0 0.0
    %5943 = vmatpush.xpose.msra.mxu0 0.0
    %5944 = vmatpush.xpose.msra.mxu0 0.0
    %5945 = vmatpush.xpose.msra.mxu0 0.0
    %5946 = vmatpush.xpose.msra.mxu0 0.0
    %5947 = vmatpush.xpose.msra.mxu0 0.0
    %5948 = vmatpush.xpose.msra.mxu0 0.0
    %5949 = vmatpush.xpose.msra.mxu0 0.0
    %5950 = vmatpush.xpose.msra.mxu0 0.0
    %5951 = vmatpush.xpose.msra.mxu0 0.0
    %5952 = vmatpush.xpose.msra.mxu0 %v5935
    %5953 = vmatmul.f32.gmra.mxu0 %v5933
    %v5954 = vpop.f32.mrf.mxu0
    %v5955 = vadd.f32 0.0, %v5954
    %5956 = vdwg.mxu0
    %v5957 = vmul.f32 %v5759, 0.35355338
    %v5958 = vmul.f32 %v5787, 0.35355338
    %v5959 = vmul.f32 %v5815, 0.35355338
    %v5960 = vmul.f32 %v5843, 0.35355338
    %v5961 = vmul.f32 %v5871, 0.35355338
    %v5962 = vmul.f32 %v5899, 0.35355338
    %v5963 = vmul.f32 %v5927, 0.35355338
    %v5964 = vmul.f32 %v5955, 0.35355338
    %v5965 = vadd.f32 %v5957, %v588
    %v5966 = vadd.f32 %v5958, %v589
    %v5967 = vadd.f32 %v5959, %v590
    %v5968 = vadd.f32 %v5960, %v591
    %v5969 = vadd.f32 %v5961, %v592
    %v5970 = vadd.f32 %v5962, %v593
    %v5971 = vadd.f32 %v5963, %v594
    %v5972 = vadd.f32 %v5964, %v595
    %v5973 = vsel %vm366, %v5965, -inf
    %5974 = vmax.xlane.f32.xlu0 %v5973
    %v5975 = vpop.xlane.xlu0 %5974
    %v5976 = vsel %vm366, %v5966, -inf
    %5977 = vmax.xlane.f32.xlu0 %v5976
    %v5978 = vpop.xlane.xlu0 %5977
    %v5979 = vsel %vm366, %v5967, -inf
    %5980 = vmax.xlane.f32.xlu0 %v5979
    %v5981 = vpop.xlane.xlu0 %5980
    %v5982 = vsel %vm366, %v5968, -inf
    %5983 = vmax.xlane.f32.xlu0 %v5982
    %v5984 = vpop.xlane.xlu0 %5983
    %v5985 = vsel %vm366, %v5969, -inf
    %5986 = vmax.xlane.f32.xlu0 %v5985
    %v5987 = vpop.xlane.xlu0 %5986
    %v5988 = vsel %vm366, %v5970, -inf
    %5989 = vmax.xlane.f32.xlu0 %v5988
    %v5990 = vpop.xlane.xlu0 %5989
    %v5991 = vsel %vm366, %v5971, -inf
    %5992 = vmax.xlane.f32.xlu0 %v5991
    %v5993 = vpop.xlane.xlu0 %5992
    %v5994 = vsel %vm366, %v5972, -inf
    %5995 = vmax.xlane.f32.xlu0 %v5994
    %v5996 = vpop.xlane.xlu0 %5995
    %v5997 = vsub.f32 %v5965, %v5975
    %v5998 = vsub.f32 %v5966, %v5978
    %v5999 = vsub.f32 %v5967, %v5981
    %v6000 = vsub.f32 %v5968, %v5984
    %v6001 = vsub.f32 %v5969, %v5987
    %v6002 = vsub.f32 %v5970, %v5990
    %v6003 = vsub.f32 %v5971, %v5993
    %v6004 = vsub.f32 %v5972, %v5996
    %v6005 = vmul.f32 %v5997, 1.442695
    %v6006 = vpow.pop %v6005
    %v6007 = vmul.f32 %v5998, 1.442695
    %v6008 = vpow.pop %v6007
    %v6009 = vmul.f32 %v5999, 1.442695
    %v6010 = vpow.pop %v6009
    %v6011 = vmul.f32 %v6000, 1.442695
    %v6012 = vpow.pop %v6011
    %v6013 = vmul.f32 %v6001, 1.442695
    %v6014 = vpow.pop %v6013
    %v6015 = vmul.f32 %v6002, 1.442695
    %v6016 = vpow.pop %v6015
    %v6017 = vmul.f32 %v6003, 1.442695
    %v6018 = vpow.pop %v6017
    %v6019 = vmul.f32 %v6004, 1.442695
    %v6020 = vpow.pop %v6019
    %v6021 = vsel %vm366, %v6006, 0.0
    %6022 = vadd.xlane.f32.xlu0 %v6021
    %v6023 = vpop.xlane.xlu0 %6022
    %v6024 = vsel %vm366, %v6008, 0.0
    %6025 = vadd.xlane.f32.xlu0 %v6024
    %v6026 = vpop.xlane.xlu0 %6025
    %v6027 = vsel %vm366, %v6010, 0.0
    %6028 = vadd.xlane.f32.xlu0 %v6027
    %v6029 = vpop.xlane.xlu0 %6028
    %v6030 = vsel %vm366, %v6012, 0.0
    %6031 = vadd.xlane.f32.xlu0 %v6030
    %v6032 = vpop.xlane.xlu0 %6031
    %v6033 = vsel %vm366, %v6014, 0.0
    %6034 = vadd.xlane.f32.xlu0 %v6033
    %v6035 = vpop.xlane.xlu0 %6034
    %v6036 = vsel %vm366, %v6016, 0.0
    %6037 = vadd.xlane.f32.xlu0 %v6036
    %v6038 = vpop.xlane.xlu0 %6037
    %v6039 = vsel %vm366, %v6018, 0.0
    %6040 = vadd.xlane.f32.xlu0 %v6039
    %v6041 = vpop.xlane.xlu0 %6040
    %v6042 = vsel %vm366, %v6020, 0.0
    %6043 = vadd.xlane.f32.xlu0 %v6042
    %v6044 = vpop.xlane.xlu0 %6043
    %v6045 = vrcp.pop %v6023
    %v6046 = vmul.f32 %v6023, %v6045
    %v6047 = vsub.f32 1.0, %v6046
    %v6048 = vmul.f32 %v6045, %v6047
    %v6049 = vadd.f32 %v6045, %v6048
    %vm6050 = vweird.f32 %v6023
    %vm6051 = vweird.f32 %v6045
    %vm6052 = vmor %vm6050, %vm6051
    %v6053 = vsel %vm6052, %v6045, %v6049
    %v6054 = vand.u32 2147483647, %v6023
    %vm6055 = vcmp.eq.f32.partialorder %v6054, 8.507059e+37
    %v6056 = vand.u32 %v6023, 2147483648
    %v6057 = vor.u32 1.1754944e-38, %v6056
    %v6058 = vsel %vm6055, %v6057, %v6053
    %v6059 = vmul.f32 %v6006, %v6058
    %v6060 = vrcp.pop %v6026
    %v6061 = vmul.f32 %v6026, %v6060
    %v6062 = vsub.f32 1.0, %v6061
    %v6063 = vmul.f32 %v6060, %v6062
    %v6064 = vadd.f32 %v6060, %v6063
    %vm6065 = vweird.f32 %v6026
    %vm6066 = vweird.f32 %v6060
    %vm6067 = vmor %vm6065, %vm6066
    %v6068 = vsel %vm6067, %v6060, %v6064
    %v6069 = vand.u32 2147483647, %v6026
    %vm6070 = vcmp.eq.f32.partialorder %v6069, 8.507059e+37
    %v6071 = vand.u32 %v6026, 2147483648
    %v6072 = vor.u32 1.1754944e-38, %v6071
    %v6073 = vsel %vm6070, %v6072, %v6068
    %v6074 = vmul.f32 %v6008, %v6073
    %v6075 = vrcp.pop %v6029
    %v6076 = vmul.f32 %v6029, %v6075
    %v6077 = vsub.f32 1.0, %v6076
    %v6078 = vmul.f32 %v6075, %v6077
    %v6079 = vadd.f32 %v6075, %v6078
    %vm6080 = vweird.f32 %v6029
    %vm6081 = vweird.f32 %v6075
    %vm6082 = vmor %vm6080, %vm6081
    %v6083 = vsel %vm6082, %v6075, %v6079
    %v6084 = vand.u32 2147483647, %v6029
    %vm6085 = vcmp.eq.f32.partialorder %v6084, 8.507059e+37
    %v6086 = vand.u32 %v6029, 2147483648
    %v6087 = vor.u32 1.1754944e-38, %v6086
    %v6088 = vsel %vm6085, %v6087, %v6083
    %v6089 = vmul.f32 %v6010, %v6088
    %v6090 = vrcp.pop %v6032
    %v6091 = vmul.f32 %v6032, %v6090
    %v6092 = vsub.f32 1.0, %v6091
    %v6093 = vmul.f32 %v6090, %v6092
    %v6094 = vadd.f32 %v6090, %v6093
    %vm6095 = vweird.f32 %v6032
    %vm6096 = vweird.f32 %v6090
    %vm6097 = vmor %vm6095, %vm6096
    %v6098 = vsel %vm6097, %v6090, %v6094
    %v6099 = vand.u32 2147483647, %v6032
    %vm6100 = vcmp.eq.f32.partialorder %v6099, 8.507059e+37
    %v6101 = vand.u32 %v6032, 2147483648
    %v6102 = vor.u32 1.1754944e-38, %v6101
    %v6103 = vsel %vm6100, %v6102, %v6098
    %v6104 = vmul.f32 %v6012, %v6103
    %v6105 = vrcp.pop %v6035
    %v6106 = vmul.f32 %v6035, %v6105
    %v6107 = vsub.f32 1.0, %v6106
    %v6108 = vmul.f32 %v6105, %v6107
    %v6109 = vadd.f32 %v6105, %v6108
    %vm6110 = vweird.f32 %v6035
    %vm6111 = vweird.f32 %v6105
    %vm6112 = vmor %vm6110, %vm6111
    %v6113 = vsel %vm6112, %v6105, %v6109
    %v6114 = vand.u32 2147483647, %v6035
    %vm6115 = vcmp.eq.f32.partialorder %v6114, 8.507059e+37
    %v6116 = vand.u32 %v6035, 2147483648
    %v6117 = vor.u32 1.1754944e-38, %v6116
    %v6118 = vsel %vm6115, %v6117, %v6113
    %v6119 = vmul.f32 %v6014, %v6118
    %v6120 = vrcp.pop %v6038
    %v6121 = vmul.f32 %v6038, %v6120
    %v6122 = vsub.f32 1.0, %v6121
    %v6123 = vmul.f32 %v6120, %v6122
    %v6124 = vadd.f32 %v6120, %v6123
    %vm6125 = vweird.f32 %v6038
    %vm6126 = vweird.f32 %v6120
    %vm6127 = vmor %vm6125, %vm6126
    %v6128 = vsel %vm6127, %v6120, %v6124
    %v6129 = vand.u32 2147483647, %v6038
    %vm6130 = vcmp.eq.f32.partialorder %v6129, 8.507059e+37
    %v6131 = vand.u32 %v6038, 2147483648
    %v6132 = vor.u32 1.1754944e-38, %v6131
    %v6133 = vsel %vm6130, %v6132, %v6128
    %v6134 = vmul.f32 %v6016, %v6133
    %v6135 = vrcp.pop %v6041
    %v6136 = vmul.f32 %v6041, %v6135
    %v6137 = vsub.f32 1.0, %v6136
    %v6138 = vmul.f32 %v6135, %v6137
    %v6139 = vadd.f32 %v6135, %v6138
    %vm6140 = vweird.f32 %v6041
    %vm6141 = vweird.f32 %v6135
    %vm6142 = vmor %vm6140, %vm6141
    %v6143 = vsel %vm6142, %v6135, %v6139
    %v6144 = vand.u32 2147483647, %v6041
    %vm6145 = vcmp.eq.f32.partialorder %v6144, 8.507059e+37
    %v6146 = vand.u32 %v6041, 2147483648
    %v6147 = vor.u32 1.1754944e-38, %v6146
    %v6148 = vsel %vm6145, %v6147, %v6143
    %v6149 = vmul.f32 %v6018, %v6148
    %v6150 = vrcp.pop %v6044
    %v6151 = vmul.f32 %v6044, %v6150
    %v6152 = vsub.f32 1.0, %v6151
    %v6153 = vmul.f32 %v6150, %v6152
    %v6154 = vadd.f32 %v6150, %v6153
    %vm6155 = vweird.f32 %v6044
    %vm6156 = vweird.f32 %v6150
    %vm6157 = vmor %vm6155, %vm6156
    %v6158 = vsel %vm6157, %v6150, %v6154
    %v6159 = vand.u32 2147483647, %v6044
    %vm6160 = vcmp.eq.f32.partialorder %v6159, 8.507059e+37
    %v6161 = vand.u32 %v6044, 2147483648
    %v6162 = vor.u32 1.1754944e-38, %v6161
    %v6163 = vsel %vm6160, %v6162, %v6158
    %v6164 = vmul.f32 %v6020, %v6163
    %6165 = vrot.lane.b32.xlu0 %v3802, 40
    %v6166 = vpop.permute.xlu0 %6165
    %v6169 = vsel %vm366, %v6059, 0
    %6171 = vmatpush.msra.mxu0 0.0
    %6172 = vmatpush.msra.mxu0 0.0
    %6173 = vmatpush.msra.mxu0 0.0
    %6174 = vmatpush.msra.mxu0 0.0
    %6175 = vmatpush.msra.mxu0 0.0
    %6176 = vmatpush.msra.mxu0 0.0
    %6177 = vmatpush.msra.mxu0 0.0
    %6178 = vmatpush.msra.mxu0 0.0
    %6179 = vmatpush.msra.mxu0 0.0
    %6180 = vmatpush.msra.mxu0 0.0
    %6181 = vmatpush.msra.mxu0 0.0
    %6182 = vmatpush.msra.mxu0 0.0
    %6183 = vmatpush.msra.mxu0 0.0
    %6184 = vmatpush.msra.mxu0 0.0
    %6185 = vmatpush.msra.mxu0 0.0
    %6186 = vmatpush.msra.mxu0 %v6166
    %6187 = vmatmul.f32.gmra.mxu0 %v6169
    %v6188 = vpop.f32.mrf.mxu0
    %v6189 = vadd.f32 0.0, %v6188
    %6190 = vdwg.mxu0
    %6191 = vrot.lane.b32.xlu0 %v3804, 40
    %v6192 = vpop.permute.xlu0 %6191
    %v6195 = vsel %vm366, %v6074, 0
    %6197 = vmatpush.msra.mxu0 0.0
    %6198 = vmatpush.msra.mxu0 0.0
    %6199 = vmatpush.msra.mxu0 0.0
    %6200 = vmatpush.msra.mxu0 0.0
    %6201 = vmatpush.msra.mxu0 0.0
    %6202 = vmatpush.msra.mxu0 0.0
    %6203 = vmatpush.msra.mxu0 0.0
    %6204 = vmatpush.msra.mxu0 0.0
    %6205 = vmatpush.msra.mxu0 0.0
    %6206 = vmatpush.msra.mxu0 0.0
    %6207 = vmatpush.msra.mxu0 0.0
    %6208 = vmatpush.msra.mxu0 0.0
    %6209 = vmatpush.msra.mxu0 0.0
    %6210 = vmatpush.msra.mxu0 0.0
    %6211 = vmatpush.msra.mxu0 0.0
    %6212 = vmatpush.msra.mxu0 %v6192
    %6213 = vmatmul.f32.gmra.mxu0 %v6195
    %v6214 = vpop.f32.mrf.mxu0
    %v6215 = vadd.f32 0.0, %v6214
    %6216 = vdwg.mxu0
    %6217 = vrot.lane.b32.xlu0 %v3807, 40
    %v6218 = vpop.permute.xlu0 %6217
    %v6221 = vsel %vm366, %v6089, 0
    %6223 = vmatpush.msra.mxu0 0.0
    %6224 = vmatpush.msra.mxu0 0.0
    %6225 = vmatpush.msra.mxu0 0.0
    %6226 = vmatpush.msra.mxu0 0.0
    %6227 = vmatpush.msra.mxu0 0.0
    %6228 = vmatpush.msra.mxu0 0.0
    %6229 = vmatpush.msra.mxu0 0.0
    %6230 = vmatpush.msra.mxu0 0.0
    %6231 = vmatpush.msra.mxu0 0.0
    %6232 = vmatpush.msra.mxu0 0.0
    %6233 = vmatpush.msra.mxu0 0.0
    %6234 = vmatpush.msra.mxu0 0.0
    %6235 = vmatpush.msra.mxu0 0.0
    %6236 = vmatpush.msra.mxu0 0.0
    %6237 = vmatpush.msra.mxu0 0.0
    %6238 = vmatpush.msra.mxu0 %v6218
    %6239 = vmatmul.f32.gmra.mxu0 %v6221
    %v6240 = vpop.f32.mrf.mxu0
    %v6241 = vadd.f32 0.0, %v6240
    %6242 = vdwg.mxu0
    %6243 = vrot.lane.b32.xlu0 %v3809, 40
    %v6244 = vpop.permute.xlu0 %6243
    %v6247 = vsel %vm366, %v6104, 0
    %6249 = vmatpush.msra.mxu0 0.0
    %6250 = vmatpush.msra.mxu0 0.0
    %6251 = vmatpush.msra.mxu0 0.0
    %6252 = vmatpush.msra.mxu0 0.0
    %6253 = vmatpush.msra.mxu0 0.0
    %6254 = vmatpush.msra.mxu0 0.0
    %6255 = vmatpush.msra.mxu0 0.0
    %6256 = vmatpush.msra.mxu0 0.0
    %6257 = vmatpush.msra.mxu0 0.0
    %6258 = vmatpush.msra.mxu0 0.0
    %6259 = vmatpush.msra.mxu0 0.0
    %6260 = vmatpush.msra.mxu0 0.0
    %6261 = vmatpush.msra.mxu0 0.0
    %6262 = vmatpush.msra.mxu0 0.0
    %6263 = vmatpush.msra.mxu0 0.0
    %6264 = vmatpush.msra.mxu0 %v6244
    %6265 = vmatmul.f32.gmra.mxu0 %v6247
    %v6266 = vpop.f32.mrf.mxu0
    %v6267 = vadd.f32 0.0, %v6266
    %6268 = vdwg.mxu0
    %6269 = vrot.lane.b32.xlu0 %v3812, 40
    %v6270 = vpop.permute.xlu0 %6269
    %v6273 = vsel %vm366, %v6119, 0
    %6275 = vmatpush.msra.mxu0 0.0
    %6276 = vmatpush.msra.mxu0 0.0
    %6277 = vmatpush.msra.mxu0 0.0
    %6278 = vmatpush.msra.mxu0 0.0
    %6279 = vmatpush.msra.mxu0 0.0
    %6280 = vmatpush.msra.mxu0 0.0
    %6281 = vmatpush.msra.mxu0 0.0
    %6282 = vmatpush.msra.mxu0 0.0
    %6283 = vmatpush.msra.mxu0 0.0
    %6284 = vmatpush.msra.mxu0 0.0
    %6285 = vmatpush.msra.mxu0 0.0
    %6286 = vmatpush.msra.mxu0 0.0
    %6287 = vmatpush.msra.mxu0 0.0
    %6288 = vmatpush.msra.mxu0 0.0
    %6289 = vmatpush.msra.mxu0 0.0
    %6290 = vmatpush.msra.mxu0 %v6270
    %6291 = vmatmul.f32.gmra.mxu0 %v6273
    %v6292 = vpop.f32.mrf.mxu0
    %v6293 = vadd.f32 0.0, %v6292
    %6294 = vdwg.mxu0
    %6295 = vrot.lane.b32.xlu0 %v3814, 40
    %v6296 = vpop.permute.xlu0 %6295
    %v6299 = vsel %vm366, %v6134, 0
    %6301 = vmatpush.msra.mxu0 0.0
    %6302 = vmatpush.msra.mxu0 0.0
    %6303 = vmatpush.msra.mxu0 0.0
    %6304 = vmatpush.msra.mxu0 0.0
    %6305 = vmatpush.msra.mxu0 0.0
    %6306 = vmatpush.msra.mxu0 0.0
    %6307 = vmatpush.msra.mxu0 0.0
    %6308 = vmatpush.msra.mxu0 0.0
    %6309 = vmatpush.msra.mxu0 0.0
    %6310 = vmatpush.msra.mxu0 0.0
    %6311 = vmatpush.msra.mxu0 0.0
    %6312 = vmatpush.msra.mxu0 0.0
    %6313 = vmatpush.msra.mxu0 0.0
    %6314 = vmatpush.msra.mxu0 0.0
    %6315 = vmatpush.msra.mxu0 0.0
    %6316 = vmatpush.msra.mxu0 %v6296
    %6317 = vmatmul.f32.gmra.mxu0 %v6299
    %v6318 = vpop.f32.mrf.mxu0
    %v6319 = vadd.f32 0.0, %v6318
    %6320 = vdwg.mxu0
    %6321 = vrot.lane.b32.xlu0 %v3817, 40
    %v6322 = vpop.permute.xlu0 %6321
    %v6325 = vsel %vm366, %v6149, 0
    %6327 = vmatpush.msra.mxu0 0.0
    %6328 = vmatpush.msra.mxu0 0.0
    %6329 = vmatpush.msra.mxu0 0.0
    %6330 = vmatpush.msra.mxu0 0.0
    %6331 = vmatpush.msra.mxu0 0.0
    %6332 = vmatpush.msra.mxu0 0.0
    %6333 = vmatpush.msra.mxu0 0.0
    %6334 = vmatpush.msra.mxu0 0.0
    %6335 = vmatpush.msra.mxu0 0.0
    %6336 = vmatpush.msra.mxu0 0.0
    %6337 = vmatpush.msra.mxu0 0.0
    %6338 = vmatpush.msra.mxu0 0.0
    %6339 = vmatpush.msra.mxu0 0.0
    %6340 = vmatpush.msra.mxu0 0.0
    %6341 = vmatpush.msra.mxu0 0.0
    %6342 = vmatpush.msra.mxu0 %v6322
    %6343 = vmatmul.f32.gmra.mxu0 %v6325
    %v6344 = vpop.f32.mrf.mxu0
    %v6345 = vadd.f32 0.0, %v6344
    %6346 = vdwg.mxu0
    %6347 = vrot.lane.b32.xlu0 %v3819, 40
    %v6348 = vpop.permute.xlu0 %6347
    %v6351 = vsel %vm366, %v6164, 0
    %6353 = vmatpush.msra.mxu0 0.0
    %6354 = vmatpush.msra.mxu0 0.0
    %6355 = vmatpush.msra.mxu0 0.0
    %6356 = vmatpush.msra.mxu0 0.0
    %6357 = vmatpush.msra.mxu0 0.0
    %6358 = vmatpush.msra.mxu0 0.0
    %6359 = vmatpush.msra.mxu0 0.0
    %6360 = vmatpush.msra.mxu0 0.0
    %6361 = vmatpush.msra.mxu0 0.0
    %6362 = vmatpush.msra.mxu0 0.0
    %6363 = vmatpush.msra.mxu0 0.0
    %6364 = vmatpush.msra.mxu0 0.0
    %6365 = vmatpush.msra.mxu0 0.0
    %6366 = vmatpush.msra.mxu0 0.0
    %6367 = vmatpush.msra.mxu0 0.0
    %6368 = vmatpush.msra.mxu0 %v6348
    %6369 = vmatmul.f32.gmra.mxu0 %v6351
    %v6370 = vpop.f32.mrf.mxu0
    %v6371 = vadd.f32 0.0, %v6370
    %6372 = vdwg.mxu0
    %6381 = vrot.lane.b32.xlu0 %v4909, 8
    %v6382 = vpop.permute.xlu0 %6381
    %6383 = vrot.lane.b32.xlu0 %v4935, 8
    %v6384 = vpop.permute.xlu0 %6383
    %6385 = vrot.lane.b32.xlu0 %v4961, 8
    %v6386 = vpop.permute.xlu0 %6385
    %6387 = vrot.lane.b32.xlu0 %v4987, 8
    %v6388 = vpop.permute.xlu0 %6387
    %6389 = vrot.lane.b32.xlu0 %v5013, 8
    %v6390 = vpop.permute.xlu0 %6389
    %6391 = vrot.lane.b32.xlu0 %v5039, 8
    %v6392 = vpop.permute.xlu0 %6391
    %6393 = vrot.lane.b32.xlu0 %v5065, 8
    %v6394 = vpop.permute.xlu0 %6393
    %6395 = vrot.lane.b32.xlu0 %v5091, 8
    %v6396 = vpop.permute.xlu0 %6395
    %6413 = vrot.lane.b32.xlu0 %v5549, 16
    %v6414 = vpop.permute.xlu0 %6413
    %6415 = vrot.lane.b32.xlu0 %v5575, 16
    %v6416 = vpop.permute.xlu0 %6415
    %6417 = vrot.lane.b32.xlu0 %v5601, 16
    %v6418 = vpop.permute.xlu0 %6417
    %6419 = vrot.lane.b32.xlu0 %v5627, 16
    %v6420 = vpop.permute.xlu0 %6419
    %6421 = vrot.lane.b32.xlu0 %v5653, 16
    %v6422 = vpop.permute.xlu0 %6421
    %6423 = vrot.lane.b32.xlu0 %v5679, 16
    %v6424 = vpop.permute.xlu0 %6423
    %6425 = vrot.lane.b32.xlu0 %v5705, 16
    %v6426 = vpop.permute.xlu0 %6425
    %6427 = vrot.lane.b32.xlu0 %v5731, 16
    %v6428 = vpop.permute.xlu0 %6427
    %6445 = vrot.lane.b32.xlu0 %v6189, 24
    %v6446 = vpop.permute.xlu0 %6445
    %6447 = vrot.lane.b32.xlu0 %v6215, 24
    %v6448 = vpop.permute.xlu0 %6447
    %6449 = vrot.lane.b32.xlu0 %v6241, 24
    %v6450 = vpop.permute.xlu0 %6449
    %6451 = vrot.lane.b32.xlu0 %v6267, 24
    %v6452 = vpop.permute.xlu0 %6451
    %6453 = vrot.lane.b32.xlu0 %v6293, 24
    %v6454 = vpop.permute.xlu0 %6453
    %6455 = vrot.lane.b32.xlu0 %v6319, 24
    %v6456 = vpop.permute.xlu0 %6455
    %6457 = vrot.lane.b32.xlu0 %v6345, 24
    %v6458 = vpop.permute.xlu0 %6457
    %6459 = vrot.lane.b32.xlu0 %v6371, 24
    %v6460 = vpop.permute.xlu0 %6459
    %v6469 = vsel %vm366, %v4269, %v6382
    %v6470 = vsel %vm366, %v4295, %v6384
    %v6471 = vsel %vm366, %v4321, %v6386
    %v6472 = vsel %vm366, %v4347, %v6388
    %v6473 = vsel %vm366, %v4373, %v6390
    %v6474 = vsel %vm366, %v4399, %v6392
    %v6475 = vsel %vm366, %v4425, %v6394
    %v6476 = vsel %vm366, %v4451, %v6396
    %v6477 = vsel %vm3036, %v6469, %v6414
    %v6478 = vsel %vm3036, %v6470, %v6416
    %v6479 = vsel %vm3036, %v6471, %v6418
    %v6480 = vsel %vm3036, %v6472, %v6420
    %v6481 = vsel %vm3036, %v6473, %v6422
    %v6482 = vsel %vm3036, %v6474, %v6424
    %v6483 = vsel %vm3036, %v6475, %v6426
    %v6484 = vsel %vm3036, %v6476, %v6428
    %v6485 = vsel %vm3045, %v6477, %v6446
    %v6486 = vsel %vm3045, %v6478, %v6448
    %v6487 = vsel %vm3045, %v6479, %v6450
    %v6488 = vsel %vm3045, %v6480, %v6452
    %v6489 = vsel %vm3045, %v6481, %v6454
    %v6490 = vsel %vm3045, %v6482, %v6456
    %v6491 = vsel %vm3045, %v6483, %v6458
    %v6492 = vsel %vm3045, %v6484, %v6460
    %v6493 = vpack.c.bf16 %v6486, %v6485
    %v6494 = vpack.c.bf16 %v6488, %v6487
    %v6495 = vpack.c.bf16 %v6490, %v6489
    %v6496 = vpack.c.bf16 %v6492, %v6491
    %s6497 = scalar_lea.vmem %s7, 16
    %v6498 = vld [vmem:[%s6497] sm:$0xf]
    %v6499 = vld [vmem:[%s6497 + $0x4] sm:$0xf]
    %v6500 = vld [vmem:[%s6497 + $0x8] sm:$0xf]
    %v6501 = vld [vmem:[%s6497 + $0xc] sm:$0xf]
    %s6502 = scalar_lea.vmem %s8, 1
    %v6503 = vld [vmem:[%s6502] sm:$0x1]
    %v6505 = vperm.slane %v6503, 0
    %v6511 = vunpack.c.l.b16 %v6498
    %v6512 = vunpack.c.l.b16 %v6499
    %v6513 = vunpack.c.l.b16 %v6500
    %v6514 = vunpack.c.l.b16 %v6501
    %v6515 = vpack.c.b16 %v6512, %v6511
    %v6516 = vpack.c.b16 %v6514, %v6513
    %v6520 = vsel %vm83, %v6493, 0
    %v6523 = vsel %vm83, %v6494, 0
    %v6526 = vsel %vm83, %v6495, 0
    %v6529 = vsel %vm83, %v6496, 0
    %6531 = vmatpush.bf16.msra.mxu0 0
    %6532 = vmatpush.bf16.msra.mxu0 0
    %6533 = vmatpush.bf16.msra.mxu0 0
    %6534 = vmatpush.bf16.msra.mxu0 0
    %6535 = vmatpush.bf16.msra.mxu0 0
    %6536 = vmatpush.bf16.msra.mxu0 0
    %6537 = vmatpush.bf16.msra.mxu0 %v6516
    %6538 = vmatpush.bf16.msra.mxu0 %v6515
    %6539 = vmatmul.bf16.gmra.mxu0 %v6520
    %v6540 = vpop.f32.mrf.mxu0
    %v6541 = vadd.f32 %v6505, %v6540
    %v6542 = vpop.f32.mrf.mxu0
    %v6543 = vadd.f32 %v6505, %v6542
    %6544 = vmatmul.bf16.gmra.mxu0 %v6523
    %v6545 = vpop.f32.mrf.mxu0
    %v6546 = vadd.f32 %v6505, %v6545
    %v6547 = vpop.f32.mrf.mxu0
    %v6548 = vadd.f32 %v6505, %v6547
    %6549 = vmatmul.bf16.gmra.mxu0 %v6526
    %v6550 = vpop.f32.mrf.mxu0
    %v6551 = vadd.f32 %v6505, %v6550
    %v6552 = vpop.f32.mrf.mxu0
    %v6553 = vadd.f32 %v6505, %v6552
    %6554 = vmatmul.bf16.gmra.mxu0 %v6529
    %v6555 = vpop.f32.mrf.mxu0
    %v6556 = vadd.f32 %v6505, %v6555
    %v6557 = vpop.f32.mrf.mxu0
    %v6558 = vadd.f32 %v6505, %v6557
    %6559 = vdwg.mxu0
    %v6560 = vadd.f32 %v3746, %v6541
    %v6561 = vadd.f32 %v3747, %v6543
    %v6562 = vadd.f32 %v3748, %v6546
    %v6563 = vadd.f32 %v3749, %v6548
    %v6564 = vadd.f32 %v3750, %v6551
    %v6565 = vadd.f32 %v3751, %v6553
    %v6566 = vadd.f32 %v3752, %v6556
    %v6567 = vadd.f32 %v3753, %v6558
    %s6568 = scalar_lea.vmem %s9, 1
    %v6569 = vld [vmem:[%s6568] sm:$0x1]
    %s6570 = scalar_lea.vmem %s10, 1
    %v6571 = vld [vmem:[%s6570] sm:$0x1]
    %v6572 = vsel %vm83, %v6560, 0.0
    %6573 = vadd.xlane.f32.xlu0 %v6572
    %v6574 = vpop.xlane.xlu0 %6573
    %v6575 = vsel %vm83, %v6561, 0.0
    %6576 = vadd.xlane.f32.xlu0 %v6575
    %v6577 = vpop.xlane.xlu0 %6576
    %v6578 = vsel %vm83, %v6562, 0.0
    %6579 = vadd.xlane.f32.xlu0 %v6578
    %v6580 = vpop.xlane.xlu0 %6579
    %v6581 = vsel %vm83, %v6563, 0.0
    %6582 = vadd.xlane.f32.xlu0 %v6581
    %v6583 = vpop.xlane.xlu0 %6582
    %v6584 = vsel %vm83, %v6564, 0.0
    %6585 = vadd.xlane.f32.xlu0 %v6584
    %v6586 = vpop.xlane.xlu0 %6585
    %v6587 = vsel %vm83, %v6565, 0.0
    %6588 = vadd.xlane.f32.xlu0 %v6587
    %v6589 = vpop.xlane.xlu0 %6588
    %v6590 = vsel %vm83, %v6566, 0.0
    %6591 = vadd.xlane.f32.xlu0 %v6590
    %v6592 = vpop.xlane.xlu0 %6591
    %v6593 = vsel %vm83, %v6567, 0.0
    %6594 = vadd.xlane.f32.xlu0 %v6593
    %v6595 = vpop.xlane.xlu0 %6594
    %v6596 = vmul.f32 %v6574, %v114
    %v6597 = vmul.f32 %v6577, %v114
    %v6598 = vmul.f32 %v6580, %v114
    %v6599 = vmul.f32 %v6583, %v114
    %v6600 = vmul.f32 %v6586, %v114
    %v6601 = vmul.f32 %v6589, %v114
    %v6602 = vmul.f32 %v6592, %v114
    %v6603 = vmul.f32 %v6595, %v114
    %v6604 = vsub.f32 %v6560, %v6596
    %v6605 = vsub.f32 %v6561, %v6597
    %v6606 = vsub.f32 %v6562, %v6598
    %v6607 = vsub.f32 %v6563, %v6599
    %v6608 = vsub.f32 %v6564, %v6600
    %v6609 = vsub.f32 %v6565, %v6601
    %v6610 = vsub.f32 %v6566, %v6602
    %v6611 = vsub.f32 %v6567, %v6603
    %v6612 = vmul.f32 %v6604, %v6604
    %v6613 = vmul.f32 %v6605, %v6605
    %v6614 = vmul.f32 %v6606, %v6606
    %v6615 = vmul.f32 %v6607, %v6607
    %v6616 = vmul.f32 %v6608, %v6608
    %v6617 = vmul.f32 %v6609, %v6609
    %v6618 = vmul.f32 %v6610, %v6610
    %v6619 = vmul.f32 %v6611, %v6611
    %v6620 = vsel %vm83, %v6612, 0.0
    %6621 = vadd.xlane.f32.xlu0 %v6620
    %v6622 = vpop.xlane.xlu0 %6621
    %v6623 = vsel %vm83, %v6613, 0.0
    %6624 = vadd.xlane.f32.xlu0 %v6623
    %v6625 = vpop.xlane.xlu0 %6624
    %v6626 = vsel %vm83, %v6614, 0.0
    %6627 = vadd.xlane.f32.xlu0 %v6626
    %v6628 = vpop.xlane.xlu0 %6627
    %v6629 = vsel %vm83, %v6615, 0.0
    %6630 = vadd.xlane.f32.xlu0 %v6629
    %v6631 = vpop.xlane.xlu0 %6630
    %v6632 = vsel %vm83, %v6616, 0.0
    %6633 = vadd.xlane.f32.xlu0 %v6632
    %v6634 = vpop.xlane.xlu0 %6633
    %v6635 = vsel %vm83, %v6617, 0.0
    %6636 = vadd.xlane.f32.xlu0 %v6635
    %v6637 = vpop.xlane.xlu0 %6636
    %v6638 = vsel %vm83, %v6618, 0.0
    %6639 = vadd.xlane.f32.xlu0 %v6638
    %v6640 = vpop.xlane.xlu0 %6639
    %v6641 = vsel %vm83, %v6619, 0.0
    %6642 = vadd.xlane.f32.xlu0 %v6641
    %v6643 = vpop.xlane.xlu0 %6642
    %v6644 = vmul.f32 %v6622, %v114
    %v6645 = vmul.f32 %v6625, %v114
    %v6646 = vmul.f32 %v6628, %v114
    %v6647 = vmul.f32 %v6631, %v114
    %v6648 = vmul.f32 %v6634, %v114
    %v6649 = vmul.f32 %v6637, %v114
    %v6650 = vmul.f32 %v6640, %v114
    %v6651 = vmul.f32 %v6643, %v114
    %v6652 = vadd.f32 %v6644, 1e-12
    %v6653 = vadd.f32 %v6645, 1e-12
    %v6654 = vadd.f32 %v6646, 1e-12
    %v6655 = vadd.f32 %v6647, 1e-12
    %v6656 = vadd.f32 %v6648, 1e-12
    %v6657 = vadd.f32 %v6649, 1e-12
    %v6658 = vadd.f32 %v6650, 1e-12
    %v6659 = vadd.f32 %v6651, 1e-12
    %v6660 = vrsqrt.pop %v6652
    %v6661 = vmul.f32 %v6660, %v6652
    %v6662 = vmul.f32 %v6661, %v6660
    %v6663 = vmul.f32 0.5, %v6662
    %v6664 = vsub.f32 1.5, %v6663
    %v6665 = vmul.f32 %v6660, %v6664
    %vm6666 = vweird.f32 %v6652
    %vm6667 = vweird.f32 %v6660
    %vm6668 = vmor %vm6666, %vm6667
    %v6669 = vsel %vm6668, %v6660, %v6665
    %v6670 = vrsqrt.pop %v6653
    %v6671 = vmul.f32 %v6670, %v6653
    %v6672 = vmul.f32 %v6671, %v6670
    %v6673 = vmul.f32 0.5, %v6672
    %v6674 = vsub.f32 1.5, %v6673
    %v6675 = vmul.f32 %v6670, %v6674
    %vm6676 = vweird.f32 %v6653
    %vm6677 = vweird.f32 %v6670
    %vm6678 = vmor %vm6676, %vm6677
    %v6679 = vsel %vm6678, %v6670, %v6675
    %v6680 = vrsqrt.pop %v6654
    %v6681 = vmul.f32 %v6680, %v6654
    %v6682 = vmul.f32 %v6681, %v6680
    %v6683 = vmul.f32 0.5, %v6682
    %v6684 = vsub.f32 1.5, %v6683
    %v6685 = vmul.f32 %v6680, %v6684
    %vm6686 = vweird.f32 %v6654
    %vm6687 = vweird.f32 %v6680
    %vm6688 = vmor %vm6686, %vm6687
    %v6689 = vsel %vm6688, %v6680, %v6685
    %v6690 = vrsqrt.pop %v6655
    %v6691 = vmul.f32 %v6690, %v6655
    %v6692 = vmul.f32 %v6691, %v6690
    %v6693 = vmul.f32 0.5, %v6692
    %v6694 = vsub.f32 1.5, %v6693
    %v6695 = vmul.f32 %v6690, %v6694
    %vm6696 = vweird.f32 %v6655
    %vm6697 = vweird.f32 %v6690
    %vm6698 = vmor %vm6696, %vm6697
    %v6699 = vsel %vm6698, %v6690, %v6695
    %v6700 = vrsqrt.pop %v6656
    %v6701 = vmul.f32 %v6700, %v6656
    %v6702 = vmul.f32 %v6701, %v6700
    %v6703 = vmul.f32 0.5, %v6702
    %v6704 = vsub.f32 1.5, %v6703
    %v6705 = vmul.f32 %v6700, %v6704
    %vm6706 = vweird.f32 %v6656
    %vm6707 = vweird.f32 %v6700
    %vm6708 = vmor %vm6706, %vm6707
    %v6709 = vsel %vm6708, %v6700, %v6705
    %v6710 = vrsqrt.pop %v6657
    %v6711 = vmul.f32 %v6710, %v6657
    %v6712 = vmul.f32 %v6711, %v6710
    %v6713 = vmul.f32 0.5, %v6712
    %v6714 = vsub.f32 1.5, %v6713
    %v6715 = vmul.f32 %v6710, %v6714
    %vm6716 = vweird.f32 %v6657
    %vm6717 = vweird.f32 %v6710
    %vm6718 = vmor %vm6716, %vm6717
    %v6719 = vsel %vm6718, %v6710, %v6715
    %v6720 = vrsqrt.pop %v6658
    %v6721 = vmul.f32 %v6720, %v6658
    %v6722 = vmul.f32 %v6721, %v6720
    %v6723 = vmul.f32 0.5, %v6722
    %v6724 = vsub.f32 1.5, %v6723
    %v6725 = vmul.f32 %v6720, %v6724
    %vm6726 = vweird.f32 %v6658
    %vm6727 = vweird.f32 %v6720
    %vm6728 = vmor %vm6726, %vm6727
    %v6729 = vsel %vm6728, %v6720, %v6725
    %v6730 = vrsqrt.pop %v6659
    %v6731 = vmul.f32 %v6730, %v6659
    %v6732 = vmul.f32 %v6731, %v6730
    %v6733 = vmul.f32 0.5, %v6732
    %v6734 = vsub.f32 1.5, %v6733
    %v6735 = vmul.f32 %v6730, %v6734
    %vm6736 = vweird.f32 %v6659
    %vm6737 = vweird.f32 %v6730
    %vm6738 = vmor %vm6736, %vm6737
    %v6739 = vsel %vm6738, %v6730, %v6735
    %v6740 = vmul.f32 %v6604, %v6669
    %v6741 = vmul.f32 %v6605, %v6679
    %v6742 = vmul.f32 %v6606, %v6689
    %v6743 = vmul.f32 %v6607, %v6699
    %v6744 = vmul.f32 %v6608, %v6709
    %v6745 = vmul.f32 %v6609, %v6719
    %v6746 = vmul.f32 %v6610, %v6729
    %v6747 = vmul.f32 %v6611, %v6739
    %v6749 = vperm.slane %v6569, 0
    %v6751 = vmul.f32 %v6740, %v6749
    %v6752 = vmul.f32 %v6741, %v6749
    %v6753 = vmul.f32 %v6742, %v6749
    %v6754 = vmul.f32 %v6743, %v6749
    %v6755 = vmul.f32 %v6744, %v6749
    %v6756 = vmul.f32 %v6745, %v6749
    %v6757 = vmul.f32 %v6746, %v6749
    %v6758 = vmul.f32 %v6747, %v6749
    %v6760 = vperm.slane %v6571, 0
    %v6762 = vadd.f32 %v6751, %v6760
    %v6763 = vadd.f32 %v6752, %v6760
    %v6764 = vadd.f32 %v6753, %v6760
    %v6765 = vadd.f32 %v6754, %v6760
    %v6766 = vadd.f32 %v6755, %v6760
    %v6767 = vadd.f32 %v6756, %v6760
    %v6768 = vadd.f32 %v6757, %v6760
    %v6769 = vadd.f32 %v6758, %v6760
    %v6770 = vpack.c.bf16 %v6763, %v6762
    %v6771 = vpack.c.bf16 %v6765, %v6764
    %v6772 = vpack.c.bf16 %v6767, %v6766
    %v6773 = vpack.c.bf16 %v6769, %v6768
    %s6774 = scalar_lea.vmem %s11, 16
    %v6775 = vld [vmem:[%s6774] sm:$0xf]
    %v6776 = vld [vmem:[%s6774 + $0x4] sm:$0xf]
    %v6777 = vld [vmem:[%s6774 + $0x8] sm:$0xf]
    %v6778 = vld [vmem:[%s6774 + $0xc] sm:$0xf]
    %s6779 = scalar_lea.vmem %s12, 1
    %v6780 = vld [vmem:[%s6779] sm:$0x1]
    %v6782 = vperm.slane %v6780, 0
    %v6788 = vunpack.c.l.b16 %v6775
    %v6789 = vunpack.c.l.b16 %v6776
    %v6790 = vunpack.c.l.b16 %v6777
    %v6791 = vunpack.c.l.b16 %v6778
    %v6792 = vpack.c.b16 %v6789, %v6788
    %v6793 = vpack.c.b16 %v6791, %v6790
    %v6797 = vsel %vm83, %v6770, 0
    %v6800 = vsel %vm83, %v6771, 0
    %v6803 = vsel %vm83, %v6772, 0
    %v6806 = vsel %vm83, %v6773, 0
    %6808 = vmatpush.bf16.msra.mxu0 0
    %6809 = vmatpush.bf16.msra.mxu0 0
    %6810 = vmatpush.bf16.msra.mxu0 0
    %6811 = vmatpush.bf16.msra.mxu0 0
    %6812 = vmatpush.bf16.msra.mxu0 0
    %6813 = vmatpush.bf16.msra.mxu0 0
    %6814 = vmatpush.bf16.msra.mxu0 %v6793
    %6815 = vmatpush.bf16.msra.mxu0 %v6792
    %6816 = vmatmul.bf16.gmra.mxu0 %v6797
    %v6817 = vpop.f32.mrf.mxu0
    %v6818 = vadd.f32 %v6782, %v6817
    %v6819 = vpop.f32.mrf.mxu0
    %v6820 = vadd.f32 %v6782, %v6819
    %6821 = vmatmul.bf16.gmra.mxu0 %v6800
    %v6822 = vpop.f32.mrf.mxu0
    %v6823 = vadd.f32 %v6782, %v6822
    %v6824 = vpop.f32.mrf.mxu0
    %v6825 = vadd.f32 %v6782, %v6824
    %6826 = vmatmul.bf16.gmra.mxu0 %v6803
    %v6827 = vpop.f32.mrf.mxu0
    %v6828 = vadd.f32 %v6782, %v6827
    %v6829 = vpop.f32.mrf.mxu0
    %v6830 = vadd.f32 %v6782, %v6829
    %6831 = vmatmul.bf16.gmra.mxu0 %v6806
    %v6832 = vpop.f32.mrf.mxu0
    %v6833 = vadd.f32 %v6782, %v6832
    %v6834 = vpop.f32.mrf.mxu0
    %v6835 = vadd.f32 %v6782, %v6834
    %6836 = vdwg.mxu0
    %v6837 = vmul.f32 %v6818, 0.5
    %v6838 = vmul.f32 %v6820, 0.5
    %v6839 = vmul.f32 %v6823, 0.5
    %v6840 = vmul.f32 %v6825, 0.5
    %v6841 = vmul.f32 %v6828, 0.5
    %v6842 = vmul.f32 %v6830, 0.5
    %v6843 = vmul.f32 %v6833, 0.5
    %v6844 = vmul.f32 %v6835, 0.5
    %v6845 = vmul.f32 %v6818, 0.044715
    %v6846 = vmul.f32 %v6820, 0.044715
    %v6847 = vmul.f32 %v6823, 0.044715
    %v6848 = vmul.f32 %v6825, 0.044715
    %v6849 = vmul.f32 %v6828, 0.044715
    %v6850 = vmul.f32 %v6830, 0.044715
    %v6851 = vmul.f32 %v6833, 0.044715
    %v6852 = vmul.f32 %v6835, 0.044715
    %v6853 = vmul.f32 %v6845, %v6818
    %v6854 = vmul.f32 %v6846, %v6820
    %v6855 = vmul.f32 %v6847, %v6823
    %v6856 = vmul.f32 %v6848, %v6825
    %v6857 = vmul.f32 %v6849, %v6828
    %v6858 = vmul.f32 %v6850, %v6830
    %v6859 = vmul.f32 %v6851, %v6833
    %v6860 = vmul.f32 %v6852, %v6835
    %v6861 = vmul.f32 %v6853, %v6818
    %v6862 = vmul.f32 %v6854, %v6820
    %v6863 = vmul.f32 %v6855, %v6823
    %v6864 = vmul.f32 %v6856, %v6825
    %v6865 = vmul.f32 %v6857, %v6828
    %v6866 = vmul.f32 %v6858, %v6830
    %v6867 = vmul.f32 %v6859, %v6833
    %v6868 = vmul.f32 %v6860, %v6835
    %v6869 = vadd.f32 %v6818, %v6861
    %v6870 = vadd.f32 %v6820, %v6862
    %v6871 = vadd.f32 %v6823, %v6863
    %v6872 = vadd.f32 %v6825, %v6864
    %v6873 = vadd.f32 %v6828, %v6865
    %v6874 = vadd.f32 %v6830, %v6866
    %v6875 = vadd.f32 %v6833, %v6867
    %v6876 = vadd.f32 %v6835, %v6868
    %v6877 = vmul.f32 %v6869, 0.7978846
    %v6878 = vmul.f32 %v6870, 0.7978846
    %v6879 = vmul.f32 %v6871, 0.7978846
    %v6880 = vmul.f32 %v6872, 0.7978846
    %v6881 = vmul.f32 %v6873, 0.7978846
    %v6882 = vmul.f32 %v6874, 0.7978846
    %v6883 = vmul.f32 %v6875, 0.7978846
    %v6884 = vmul.f32 %v6876, 0.7978846
    %v6885 = vtanh.pop %v6877
    %v6886 = vtanh.pop %v6878
    %v6887 = vtanh.pop %v6879
    %v6888 = vtanh.pop %v6880
    %v6889 = vtanh.pop %v6881
    %v6890 = vtanh.pop %v6882
    %v6891 = vtanh.pop %v6883
    %v6892 = vtanh.pop %v6884
    %v6893 = vadd.f32 %v6885, 1.0
    %v6894 = vadd.f32 %v6886, 1.0
    %v6895 = vadd.f32 %v6887, 1.0
    %v6896 = vadd.f32 %v6888, 1.0
    %v6897 = vadd.f32 %v6889, 1.0
    %v6898 = vadd.f32 %v6890, 1.0
    %v6899 = vadd.f32 %v6891, 1.0
    %v6900 = vadd.f32 %v6892, 1.0
    %v6901 = vmul.f32 %v6837, %v6893
    %v6902 = vmul.f32 %v6838, %v6894
    %v6903 = vmul.f32 %v6839, %v6895
    %v6904 = vmul.f32 %v6840, %v6896
    %v6905 = vmul.f32 %v6841, %v6897
    %v6906 = vmul.f32 %v6842, %v6898
    %v6907 = vmul.f32 %v6843, %v6899
    %v6908 = vmul.f32 %v6844, %v6900
    %v6909 = vpack.c.bf16 %v6902, %v6901
    %v6910 = vpack.c.bf16 %v6904, %v6903
    %v6911 = vpack.c.bf16 %v6906, %v6905
    %v6912 = vpack.c.bf16 %v6908, %v6907
    %s6913 = scalar_lea.vmem %s13, 32
    %v6914 = vld [vmem:[%s6913] sm:$0xf]
    %v6915 = vld [vmem:[%s6913 + $0x4] sm:$0xf]
    %v6916 = vld [vmem:[%s6913 + $0x8] sm:$0xf]
    %v6917 = vld [vmem:[%s6913 + $0xc] sm:$0xf]
    %v6918 = vld [vmem:[%s6913 + $0x10] sm:$0xf]
    %v6919 = vld [vmem:[%s6913 + $0x14] sm:$0xf]
    %v6920 = vld [vmem:[%s6913 + $0x18] sm:$0xf]
    %v6921 = vld [vmem:[%s6913 + $0x1c] sm:$0xf]
    %s6922 = scalar_lea.vmem %s14, 1
    %v6923 = vld [vmem:[%s6922] sm:$0x1]
    %v6925 = vperm.slane %v6923, 0
    %v6935 = vunpack.c.l.b16 %v6914
    %v6936 = vunpack.c.l.b16 %v6915
    %v6937 = vunpack.c.l.b16 %v6916
    %v6938 = vunpack.c.l.b16 %v6917
    %v6939 = vunpack.c.l.b16 %v6918
    %v6940 = vunpack.c.l.b16 %v6919
    %v6941 = vunpack.c.l.b16 %v6920
    %v6942 = vunpack.c.l.b16 %v6921
    %v6943 = vpack.c.b16 %v6936, %v6935
    %v6944 = vpack.c.b16 %v6938, %v6937
    %v6945 = vpack.c.b16 %v6940, %v6939
    %v6946 = vpack.c.b16 %v6942, %v6941
    %v6952 = vsel %vm3504, %v6909, 0
    %v6955 = vsel %vm3504, %v6910, 0
    %v6958 = vsel %vm3504, %v6911, 0
    %v6961 = vsel %vm3504, %v6912, 0
    %6963 = vmatpush.bf16.msra.mxu0 0
    %6964 = vmatpush.bf16.msra.mxu0 0
    %6965 = vmatpush.bf16.msra.mxu0 0
    %6966 = vmatpush.bf16.msra.mxu0 0
    %6967 = vmatpush.bf16.msra.mxu0 %v6946
    %6968 = vmatpush.bf16.msra.mxu0 %v6945
    %6969 = vmatpush.bf16.msra.mxu0 %v6944
    %6970 = vmatpush.bf16.msra.mxu0 %v6943
    %6971 = vmatmul.bf16.gmra.mxu0 %v6952
    %v6972 = vpop.f32.mrf.mxu0
    %v6973 = vadd.f32 %v6925, %v6972
    %v6974 = vpop.f32.mrf.mxu0
    %v6975 = vadd.f32 %v6925, %v6974
    %6976 = vmatmul.bf16.gmra.mxu0 %v6955
    %v6977 = vpop.f32.mrf.mxu0
    %v6978 = vadd.f32 %v6925, %v6977
    %v6979 = vpop.f32.mrf.mxu0
    %v6980 = vadd.f32 %v6925, %v6979
    %6981 = vmatmul.bf16.gmra.mxu0 %v6958
    %v6982 = vpop.f32.mrf.mxu0
    %v6983 = vadd.f32 %v6925, %v6982
    %v6984 = vpop.f32.mrf.mxu0
    %v6985 = vadd.f32 %v6925, %v6984
    %6986 = vmatmul.bf16.gmra.mxu0 %v6961
    %v6987 = vpop.f32.mrf.mxu0
    %v6988 = vadd.f32 %v6925, %v6987
    %v6989 = vpop.f32.mrf.mxu0
    %v6990 = vadd.f32 %v6925, %v6989
    %6991 = vdwg.mxu0
    %v6992 = vadd.f32 %v6762, %v6973
    %v6993 = vadd.f32 %v6763, %v6975
    %v6994 = vadd.f32 %v6764, %v6978
    %v6995 = vadd.f32 %v6765, %v6980
    %v6996 = vadd.f32 %v6766, %v6983
    %v6997 = vadd.f32 %v6767, %v6985
    %v6998 = vadd.f32 %v6768, %v6988
    %v6999 = vadd.f32 %v6769, %v6990
    %s7000 = scalar_lea.vmem %s15, 1
    %v7001 = vld [vmem:[%s7000] sm:$0x1]
    %s7002 = scalar_lea.vmem %s16, 1
    %v7003 = vld [vmem:[%s7002] sm:$0x1]
    %v7004 = vsel %vm83, %v6992, 0.0
    %7005 = vadd.xlane.f32.xlu0 %v7004
    %v7006 = vpop.xlane.xlu0 %7005
    %v7007 = vsel %vm83, %v6993, 0.0
    %7008 = vadd.xlane.f32.xlu0 %v7007
    %v7009 = vpop.xlane.xlu0 %7008
    %v7010 = vsel %vm83, %v6994, 0.0
    %7011 = vadd.xlane.f32.xlu0 %v7010
    %v7012 = vpop.xlane.xlu0 %7011
    %v7013 = vsel %vm83, %v6995, 0.0
    %7014 = vadd.xlane.f32.xlu0 %v7013
    %v7015 = vpop.xlane.xlu0 %7014
    %v7016 = vsel %vm83, %v6996, 0.0
    %7017 = vadd.xlane.f32.xlu0 %v7016
    %v7018 = vpop.xlane.xlu0 %7017
    %v7019 = vsel %vm83, %v6997, 0.0
    %7020 = vadd.xlane.f32.xlu0 %v7019
    %v7021 = vpop.xlane.xlu0 %7020
    %v7022 = vsel %vm83, %v6998, 0.0
    %7023 = vadd.xlane.f32.xlu0 %v7022
    %v7024 = vpop.xlane.xlu0 %7023
    %v7025 = vsel %vm83, %v6999, 0.0
    %7026 = vadd.xlane.f32.xlu0 %v7025
    %v7027 = vpop.xlane.xlu0 %7026
    %v7028 = vmul.f32 %v7006, %v114
    %v7029 = vmul.f32 %v7009, %v114
    %v7030 = vmul.f32 %v7012, %v114
    %v7031 = vmul.f32 %v7015, %v114
    %v7032 = vmul.f32 %v7018, %v114
    %v7033 = vmul.f32 %v7021, %v114
    %v7034 = vmul.f32 %v7024, %v114
    %v7035 = vmul.f32 %v7027, %v114
    %v7036 = vsub.f32 %v6992, %v7028
    %v7037 = vsub.f32 %v6993, %v7029
    %v7038 = vsub.f32 %v6994, %v7030
    %v7039 = vsub.f32 %v6995, %v7031
    %v7040 = vsub.f32 %v6996, %v7032
    %v7041 = vsub.f32 %v6997, %v7033
    %v7042 = vsub.f32 %v6998, %v7034
    %v7043 = vsub.f32 %v6999, %v7035
    %v7044 = vmul.f32 %v7036, %v7036
    %v7045 = vmul.f32 %v7037, %v7037
    %v7046 = vmul.f32 %v7038, %v7038
    %v7047 = vmul.f32 %v7039, %v7039
    %v7048 = vmul.f32 %v7040, %v7040
    %v7049 = vmul.f32 %v7041, %v7041
    %v7050 = vmul.f32 %v7042, %v7042
    %v7051 = vmul.f32 %v7043, %v7043
    %v7052 = vsel %vm83, %v7044, 0.0
    %7053 = vadd.xlane.f32.xlu0 %v7052
    %v7054 = vpop.xlane.xlu0 %7053
    %v7055 = vsel %vm83, %v7045, 0.0
    %7056 = vadd.xlane.f32.xlu0 %v7055
    %v7057 = vpop.xlane.xlu0 %7056
    %v7058 = vsel %vm83, %v7046, 0.0
    %7059 = vadd.xlane.f32.xlu0 %v7058
    %v7060 = vpop.xlane.xlu0 %7059
    %v7061 = vsel %vm83, %v7047, 0.0
    %7062 = vadd.xlane.f32.xlu0 %v7061
    %v7063 = vpop.xlane.xlu0 %7062
    %v7064 = vsel %vm83, %v7048, 0.0
    %7065 = vadd.xlane.f32.xlu0 %v7064
    %v7066 = vpop.xlane.xlu0 %7065
    %v7067 = vsel %vm83, %v7049, 0.0
    %7068 = vadd.xlane.f32.xlu0 %v7067
    %v7069 = vpop.xlane.xlu0 %7068
    %v7070 = vsel %vm83, %v7050, 0.0
    %7071 = vadd.xlane.f32.xlu0 %v7070
    %v7072 = vpop.xlane.xlu0 %7071
    %v7073 = vsel %vm83, %v7051, 0.0
    %7074 = vadd.xlane.f32.xlu0 %v7073
    %v7075 = vpop.xlane.xlu0 %7074
    %v7076 = vmul.f32 %v7054, %v114
    %v7077 = vmul.f32 %v7057, %v114
    %v7078 = vmul.f32 %v7060, %v114
    %v7079 = vmul.f32 %v7063, %v114
    %v7080 = vmul.f32 %v7066, %v114
    %v7081 = vmul.f32 %v7069, %v114
    %v7082 = vmul.f32 %v7072, %v114
    %v7083 = vmul.f32 %v7075, %v114
    %v7084 = vadd.f32 %v7076, 1e-12
    %v7085 = vadd.f32 %v7077, 1e-12
    %v7086 = vadd.f32 %v7078, 1e-12
    %v7087 = vadd.f32 %v7079, 1e-12
    %v7088 = vadd.f32 %v7080, 1e-12
    %v7089 = vadd.f32 %v7081, 1e-12
    %v7090 = vadd.f32 %v7082, 1e-12
    %v7091 = vadd.f32 %v7083, 1e-12
    %v7092 = vrsqrt.pop %v7084
    %v7093 = vmul.f32 %v7092, %v7084
    %v7094 = vmul.f32 %v7093, %v7092
    %v7095 = vmul.f32 0.5, %v7094
    %v7096 = vsub.f32 1.5, %v7095
    %v7097 = vmul.f32 %v7092, %v7096
    %vm7098 = vweird.f32 %v7084
    %vm7099 = vweird.f32 %v7092
    %vm7100 = vmor %vm7098, %vm7099
    %v7101 = vsel %vm7100, %v7092, %v7097
    %v7102 = vrsqrt.pop %v7085
    %v7103 = vmul.f32 %v7102, %v7085
    %v7104 = vmul.f32 %v7103, %v7102
    %v7105 = vmul.f32 0.5, %v7104
    %v7106 = vsub.f32 1.5, %v7105
    %v7107 = vmul.f32 %v7102, %v7106
    %vm7108 = vweird.f32 %v7085
    %vm7109 = vweird.f32 %v7102
    %vm7110 = vmor %vm7108, %vm7109
    %v7111 = vsel %vm7110, %v7102, %v7107
    %v7112 = vrsqrt.pop %v7086
    %v7113 = vmul.f32 %v7112, %v7086
    %v7114 = vmul.f32 %v7113, %v7112
    %v7115 = vmul.f32 0.5, %v7114
    %v7116 = vsub.f32 1.5, %v7115
    %v7117 = vmul.f32 %v7112, %v7116
    %vm7118 = vweird.f32 %v7086
    %vm7119 = vweird.f32 %v7112
    %vm7120 = vmor %vm7118, %vm7119
    %v7121 = vsel %vm7120, %v7112, %v7117
    %v7122 = vrsqrt.pop %v7087
    %v7123 = vmul.f32 %v7122, %v7087
    %v7124 = vmul.f32 %v7123, %v7122
    %v7125 = vmul.f32 0.5, %v7124
    %v7126 = vsub.f32 1.5, %v7125
    %v7127 = vmul.f32 %v7122, %v7126
    %vm7128 = vweird.f32 %v7087
    %vm7129 = vweird.f32 %v7122
    %vm7130 = vmor %vm7128, %vm7129
    %v7131 = vsel %vm7130, %v7122, %v7127
    %v7132 = vrsqrt.pop %v7088
    %v7133 = vmul.f32 %v7132, %v7088
    %v7134 = vmul.f32 %v7133, %v7132
    %v7135 = vmul.f32 0.5, %v7134
    %v7136 = vsub.f32 1.5, %v7135
    %v7137 = vmul.f32 %v7132, %v7136
    %vm7138 = vweird.f32 %v7088
    %vm7139 = vweird.f32 %v7132
    %vm7140 = vmor %vm7138, %vm7139
    %v7141 = vsel %vm7140, %v7132, %v7137
    %v7142 = vrsqrt.pop %v7089
    %v7143 = vmul.f32 %v7142, %v7089
    %v7144 = vmul.f32 %v7143, %v7142
    %v7145 = vmul.f32 0.5, %v7144
    %v7146 = vsub.f32 1.5, %v7145
    %v7147 = vmul.f32 %v7142, %v7146
    %vm7148 = vweird.f32 %v7089
    %vm7149 = vweird.f32 %v7142
    %vm7150 = vmor %vm7148, %vm7149
    %v7151 = vsel %vm7150, %v7142, %v7147
    %v7152 = vrsqrt.pop %v7090
    %v7153 = vmul.f32 %v7152, %v7090
    %v7154 = vmul.f32 %v7153, %v7152
    %v7155 = vmul.f32 0.5, %v7154
    %v7156 = vsub.f32 1.5, %v7155
    %v7157 = vmul.f32 %v7152, %v7156
    %vm7158 = vweird.f32 %v7090
    %vm7159 = vweird.f32 %v7152
    %vm7160 = vmor %vm7158, %vm7159
    %v7161 = vsel %vm7160, %v7152, %v7157
    %v7162 = vrsqrt.pop %v7091
    %v7163 = vmul.f32 %v7162, %v7091
    %v7164 = vmul.f32 %v7163, %v7162
    %v7165 = vmul.f32 0.5, %v7164
    %v7166 = vsub.f32 1.5, %v7165
    %v7167 = vmul.f32 %v7162, %v7166
    %vm7168 = vweird.f32 %v7091
    %vm7169 = vweird.f32 %v7162
    %vm7170 = vmor %vm7168, %vm7169
    %v7171 = vsel %vm7170, %v7162, %v7167
    %v7172 = vmul.f32 %v7036, %v7101
    %v7173 = vmul.f32 %v7037, %v7111
    %v7174 = vmul.f32 %v7038, %v7121
    %v7175 = vmul.f32 %v7039, %v7131
    %v7176 = vmul.f32 %v7040, %v7141
    %v7177 = vmul.f32 %v7041, %v7151
    %v7178 = vmul.f32 %v7042, %v7161
    %v7179 = vmul.f32 %v7043, %v7171
    %v7181 = vperm.slane %v7001, 0
    %v7183 = vmul.f32 %v7172, %v7181
    %v7184 = vmul.f32 %v7173, %v7181
    %v7185 = vmul.f32 %v7174, %v7181
    %v7186 = vmul.f32 %v7175, %v7181
    %v7187 = vmul.f32 %v7176, %v7181
    %v7188 = vmul.f32 %v7177, %v7181
    %v7189 = vmul.f32 %v7178, %v7181
    %v7190 = vmul.f32 %v7179, %v7181
    %v7192 = vperm.slane %v7003, 0
    %v7194 = vadd.f32 %v7183, %v7192
    %v7195 = vadd.f32 %v7184, %v7192
    %v7196 = vadd.f32 %v7185, %v7192
    %v7197 = vadd.f32 %v7186, %v7192
    %v7198 = vadd.f32 %v7187, %v7192
    %v7199 = vadd.f32 %v7188, %v7192
    %v7200 = vadd.f32 %v7189, %v7192
    %v7201 = vadd.f32 %v7190, %v7192
    %v7202 = vpack.c.bf16 %v7194, %v7194
    %v7203 = vpack.c.bf16 %v7195, %v7195
    %v7204 = vpack.c.bf16 %v7196, %v7196
    %v7205 = vpack.c.bf16 %v7197, %v7197
    %v7206 = vpack.c.bf16 %v7198, %v7198
    %v7207 = vpack.c.bf16 %v7199, %v7199
    %v7208 = vpack.c.bf16 %v7200, %v7200
    %v7209 = vpack.c.bf16 %v7201, %v7201
    %v7210 = vld [vmem:[%s17] sm:$0xf]
    %v7211 = vld [vmem:[%s17 + $0x4] sm:$0xf]
    %v7212 = vld [vmem:[%s17 + $0x8] sm:$0xf]
    %v7213 = vld [vmem:[%s17 + $0xc] sm:$0xf]
    %v7214 = vld [vmem:[%s18] sm:$0x1]
    %v7216 = vperm.slane %v7214, 0
    %v7226 = vunpack.c.l.b16 %v7202
    %v7227 = vunpack.c.l.b16 %v7203
    %v7228 = vunpack.c.l.b16 %v7204
    %v7229 = vunpack.c.l.b16 %v7205
    %v7230 = vunpack.c.l.b16 %v7206
    %v7231 = vunpack.c.l.b16 %v7207
    %v7232 = vunpack.c.l.b16 %v7208
    %v7233 = vunpack.c.l.b16 %v7209
    %v7234 = vrot.slane %v7227, 7
    %vm7235 = vcmask 1041409
    %v7236 = vsel %vm7235, %v7234, %v7226
    %v7237 = vrot.slane %v7228, 6
    %vm7238 = vcmask 1042434
    %v7239 = vsel %vm7238, %v7237, %v7236
    %v7240 = vrot.slane %v7229, 5
    %vm7241 = vcmask 1043459
    %v7242 = vsel %vm7241, %v7240, %v7239
    %v7243 = vrot.slane %v7230, 4
    %vm7244 = vcmask 1044484
    %v7245 = vsel %vm7244, %v7243, %v7242
    %v7246 = vrot.slane %v7231, 3
    %vm7247 = vcmask 1045509
    %v7248 = vsel %vm7247, %v7246, %v7245
    %v7249 = vrot.slane %v7232, 2
    %vm7250 = vcmask 1046534
    %v7251 = vsel %vm7250, %v7249, %v7248
    %v7252 = vrot.slane %v7233, 1
    %vm7253 = vcmask 1047559
    %v7254 = vsel %vm7253, %v7252, %v7251
    %v7255 = vpack.c.b16 %v7254, %v7254
    %v7260 = vunpack.c.l.b16 %v7210
    %v7261 = vunpack.c.l.b16 %v7211
    %v7262 = vunpack.c.l.b16 %v7212
    %v7263 = vunpack.c.l.b16 %v7213
    %v7264 = vpack.c.b16 %v7261, %v7260
    %v7265 = vpack.c.b16 %v7263, %v7262
    %v7269 = vsel %vm83, %v7255, 0
    %7271 = vmatpush.bf16.msra.mxu0 0
    %7272 = vmatpush.bf16.msra.mxu0 0
    %7273 = vmatpush.bf16.msra.mxu0 0
    %7274 = vmatpush.bf16.msra.mxu0 0
    %7275 = vmatpush.bf16.msra.mxu0 0
    %7276 = vmatpush.bf16.msra.mxu0 0
    %7277 = vmatpush.bf16.msra.mxu0 %v7265
    %7278 = vmatpush.bf16.msra.mxu0 %v7264
    %7279 = vmatmul.bf16.gmra.mxu0 %v7269
    %v7280 = vpop.f32.mrf.mxu0
    %v7281 = vadd.f32 %v7216, %v7280
    %v7282 = vpop.f32.mrf.mxu0
    %7283 = vdwg.mxu0
    %v7284 = vtanh.pop %v7281
    %v7285 = vpack.c.bf16 %v7284, %v7284
    %v7286 = vld [vmem:[%s19] sm:$0xf]
    %v7287 = vld [vmem:[%s19 + $0x4] sm:$0xf]
    %v7288 = vld [vmem:[%s19 + $0x8] sm:$0xf]
    %v7289 = vld [vmem:[%s19 + $0xc] sm:$0xf]
    %v7290 = vld [vmem:[%s20] sm:$0x1]
    %v7292 = vperm.slane %v7290, 0
    %v7298 = vunpack.c.l.b16 %v7286
    %v7299 = vunpack.c.l.b16 %v7287
    %v7300 = vunpack.c.l.b16 %v7288
    %v7301 = vunpack.c.l.b16 %v7289
    %v7302 = vpack.c.b16 %v7299, %v7298
    %v7303 = vpack.c.b16 %v7301, %v7300
    %v7307 = vsel %vm83, %v7285, 0
    %7309 = vmatpush.bf16.msra.mxu0 0
    %7310 = vmatpush.bf16.msra.mxu0 0
    %7311 = vmatpush.bf16.msra.mxu0 0
    %7312 = vmatpush.bf16.msra.mxu0 0
    %7313 = vmatpush.bf16.msra.mxu0 0
    %7314 = vmatpush.bf16.msra.mxu0 0
    %7315 = vmatpush.bf16.msra.mxu0 %v7303
    %7316 = vmatpush.bf16.msra.mxu0 %v7302
    %7317 = vmatmul.bf16.gmra.mxu0 %v7307
    %v7318 = vpop.f32.mrf.mxu0
    %v7319 = vadd.f32 %v7292, %v7318
    %v7320 = vpop.f32.mrf.mxu0
    %7321 = vdwg.mxu0
    %v7323 = vrot.slane %v7319, 4
    %v7326 = vrot.slane %v7284, 4
    %v7328 = vld [vmem:[%s21] sm:$0x1]
    %v7330 = vperm.slane %v7328, 0
    %v7332 = vmul.f32 %v7319, %v7330
    %v7333 = vmul.f32 %v7323, %v7330
    %vm7334 = vcmask 257024
    %v7335 = vsel %vm7334, %v7332, 0.0
    %7336 = vadd.xlane.f32.xlu0 %v7335
    %v7337 = vpop.xlane.xlu0 %7336
    %v7338 = vsel %vm7334, %v7333, 0.0
    %7339 = vadd.xlane.f32.xlu0 %v7338
    %v7340 = vpop.xlane.xlu0 %7339
    %v7341 = vld [vmem:[%s2] sm:$0xf]
    %v7342 = vld [vmem:[%s2 + $0x4] sm:$0xf]
    %v7343 = vadd.f32 %v7337, %v7341
    %v7344 = vadd.f32 %v7340, %v7342
    %vm7345 = vcmask 3072
    %v7346 = vsel %vm7345, %v7343, -inf
    %v7347 = vrot.slane %v7346, 4
    %v7348 = vmax.f32 %v7346, %v7347
    %v7349 = vrot.slane %v7348, 2
    %v7350 = vmax.f32 %v7348, %v7349
    %v7351 = vrot.slane %v7350, 1
    %v7352 = vmax.f32 %v7350, %v7351
    %v7353 = vsel %vm7345, %v7344, -inf
    %v7354 = vrot.slane %v7353, 4
    %v7355 = vmax.f32 %v7353, %v7354
    %v7356 = vrot.slane %v7355, 2
    %v7357 = vmax.f32 %v7355, %v7356
    %v7358 = vrot.slane %v7357, 1
    %v7359 = vmax.f32 %v7357, %v7358
    %v7360 = vsub.f32 %v7343, %v7352
    %v7361 = vsub.f32 %v7344, %v7359
    %v7362 = vmul.f32 %v7360, 1.442695
    %v7363 = vpow.pop %v7362
    %v7364 = vmul.f32 %v7361, 1.442695
    %v7365 = vpow.pop %v7364
    %v7366 = vsel %vm7345, %v7363, 0.0
    %v7367 = vrot.slane %v7366, 4
    %v7368 = vadd.f32 %v7366, %v7367
    %v7369 = vrot.slane %v7368, 2
    %v7370 = vadd.f32 %v7368, %v7369
    %v7371 = vrot.slane %v7370, 1
    %v7372 = vadd.f32 %v7370, %v7371
    %v7373 = vsel %vm7345, %v7365, 0.0
    %v7374 = vrot.slane %v7373, 4
    %v7375 = vadd.f32 %v7373, %v7374
    %v7376 = vrot.slane %v7375, 2
    %v7377 = vadd.f32 %v7375, %v7376
    %v7378 = vrot.slane %v7377, 1
    %v7379 = vadd.f32 %v7377, %v7378
    %v7380 = vrcp.pop %v7372
    %v7381 = vmul.f32 %v7372, %v7380
    %v7382 = vsub.f32 1.0, %v7381
    %v7383 = vmul.f32 %v7380, %v7382
    %v7384 = vadd.f32 %v7380, %v7383
    %vm7385 = vweird.f32 %v7372
    %vm7386 = vweird.f32 %v7380
    %vm7387 = vmor %vm7385, %vm7386
    %v7388 = vsel %vm7387, %v7380, %v7384
    %v7389 = vand.u32 2147483647, %v7372
    %vm7390 = vcmp.eq.f32.partialorder %v7389, 8.507059e+37
    %v7391 = vand.u32 %v7372, 2147483648
    %v7392 = vor.u32 1.1754944e-38, %v7391
    %v7393 = vsel %vm7390, %v7392, %v7388
    %v7394 = vmul.f32 %v7363, %v7393
    %v7395 = vrcp.pop %v7379
    %v7396 = vmul.f32 %v7379, %v7395
    %v7397 = vsub.f32 1.0, %v7396
    %v7398 = vmul.f32 %v7395, %v7397
    %v7399 = vadd.f32 %v7395, %v7398
    %vm7400 = vweird.f32 %v7379
    %vm7401 = vweird.f32 %v7395
    %vm7402 = vmor %vm7400, %vm7401
    %v7403 = vsel %vm7402, %v7395, %v7399
    %v7404 = vand.u32 2147483647, %v7379
    %vm7405 = vcmp.eq.f32.partialorder %v7404, 8.507059e+37
    %v7406 = vand.u32 %v7379, 2147483648
    %v7407 = vor.u32 1.1754944e-38, %v7406
    %v7408 = vsel %vm7405, %v7407, %v7403
    %v7409 = vmul.f32 %v7365, %v7408
    %7411 = vset.pattern.permute.xlu0 0
    %7412 = vperm.xlu0 %7411, %v7394
    %v7413 = vpop.permute.xlu0 %7412
    %7416 = vset.pattern.permute.xlu0 0
    %7417 = vperm.xlu0 %7416, %v7409
    %v7418 = vpop.permute.xlu0 %7417
    %v7420 = vmul.f32 %v7413, %v7284
    %v7421 = vmul.f32 %v7418, %v7326
    %v7422 = vsel %vm7334, %v7420, 0.0
    %v7423 = vrot.slane %v7422, 4
    %v7424 = vadd.f32 %v7422, %v7423
    %v7425 = vrot.slane %v7424, 2
    %v7426 = vadd.f32 %v7424, %v7425
    %v7427 = vrot.slane %v7426, 1
    %v7428 = vadd.f32 %v7426, %v7427
    %v7429 = vsel %vm7334, %v7421, 0.0
    %v7430 = vrot.slane %v7429, 4
    %v7431 = vadd.f32 %v7429, %v7430
    %v7432 = vrot.slane %v7431, 2
    %v7433 = vadd.f32 %v7431, %v7432
    %v7434 = vrot.slane %v7433, 1
    %v7435 = vadd.f32 %v7433, %v7434
    %v7438 = vsel %vm7235, %v7435, %v7428
    %vm7440 = vcmask 254976
    %7441 = vst.msk [vmem:[#allocation2] sm:$0x3] %vm7440, %v7438
    // Predicated region
    $region90: #{chinese_bag_bert_encoder.1} parent=1 // pred_check
      _
    $region91: #{chinese_bag_bert_encoder.1} parent=1 // pred_check_branch
      %7443 = sbr.rel (0) target = $region93
    $region92: #{chinese_bag_bert_encoder.1} parent=1 // pred_region
      %7445 = vsyncadd [#allocation3], 0
      %s7447 = sshll.u32 [#allocation2], 4
      %s7448 = int_to_ptr.vmem [resolvable:$true] %s7447
      %s7449 = sshll.u32 %s22, 4
      %s7450 = int_to_ptr.hbm [resolvable:$true] %s7449
      %7452 = dma.vmem_to_hbm [thread:$0]  %s7448, 32, %s7450, [#allocation3]
    $region93: #{chinese_bag_bert_encoder.1} parent=1 // pred_fallthru
      _
    // Predicated region
    $region94: #{chinese_bag_bert_encoder.1} parent=1 // pred_check
      _
    $region95: #{chinese_bag_bert_encoder.1} parent=1 // pred_check_branch
      %7454 = sbr.rel (0) target = $region97
    $region96: #{chinese_bag_bert_encoder.1} parent=1 // pred_region
      %7456 = dma.done [#allocation3], 32
    $region97: #{chinese_bag_bert_encoder.1} parent=1 // pred_fallthru
      _
    %7457 = vsyncpa [#allocation3], 1

</llo_original>
